<compile_context>
chip_gen: v5e
topology: v5e:2x2
jax: 0.10.0
libtpu: 0.0.40
codegen_flags: <defaults>
</compile_context>

<pallas_src>
import functools

import jax
import jax.numpy as jnp
from jax.experimental import pallas as pl
from jax.experimental.pallas import tpu as pltpu

_LANE = 128


def _mlp_classifier_kernel(n_linear, tok_smem, tokens_ref, emb_hbm, *rest):
    """Kernel args:
         tok_smem   : [B, S] int32  scalar-prefetch tokens (SMEM) -> drive gather DMAs
         tokens_ref : [TB, S] int32 batch tile of tokens (VMEM)   -> vectorized mask
         emb_hbm    : [V, E_pad] f32 embedding table left in HBM (pl.ANY)
         rest       : w0, b0, ..., w_{n-1}, b_{n-1}, out_ref, gather_buf, dma_sem
    """
    wb = rest[: 2 * n_linear]
    out_ref = rest[2 * n_linear]
    gather_buf = rest[2 * n_linear + 1]
    dma_sem = rest[2 * n_linear + 2]

    tb, seq = tokens_ref.shape
    row0 = pl.program_id(0) * tb

    # --- real gather: one row DMA per token, HBM -> VMEM ---------------------
    # TODO(synk): double-buffer the gather across grid steps to fully hide DMA
    # latency behind the previous tile's MLP.
    copies = []
    for b in range(tb):
        for s in range(seq):
            tok = tok_smem[row0 + b, s]                 # scalar read from SMEM
            cp = pltpu.make_async_copy(
                emb_hbm.at[pl.ds(tok, 1)],              # [1, E_pad] row in HBM
                gather_buf.at[b, pl.ds(s, 1)],          # [1, E_pad] slot in VMEM
                dma_sem,
            )
            cp.start()
            copies.append(cp)

    # --- mask / lengths (f32 VPU work, overlapped with the gather DMAs) ------
    tokens = tokens_ref[...]                                        # [TB, S] int32
    mask = (tokens != 0).astype(jnp.float32)                        # [TB, S]
    lengths = jnp.maximum(jnp.sum(mask, axis=1, keepdims=True), 1.0)  # clamp(min=1)
    inv_len = pl.reciprocal(lengths, approx=True)                   # EUP slot

    for cp in copies:
        cp.wait()

    emb = gather_buf[...]                                           # [TB, S, E_pad] f32
    x = jnp.sum(emb * mask[:, :, None], axis=1) * inv_len           # masked mean [TB, E_pad]

    # --- MLP: (Linear + ReLU) * hidden, then output Linear (no ReLU) ---------
    for li in range(n_linear):
        w = wb[2 * li][...]                                         # bf16 [in_pad, out_pad]
        b = wb[2 * li + 1][...]                                     # f32  [1, out_pad]
        x = jnp.dot(x.astype(jnp.bfloat16), w,
                    preferred_element_type=jnp.float32) + b
        if li < n_linear - 1:
            x = jnp.maximum(x, 0.0)                                 # ReLU
        # dropout: identity at inference

    out_ref[...] = x


def _pad_last(x, mult=_LANE):
    pad = (-x.shape[-1]) % mult
    if pad == 0:
        return x
    return jnp.pad(x, [(0, 0)] * (x.ndim - 1) + [(0, pad)])


def _pad_first(x, mult=_LANE):
    pad = (-x.shape[0]) % mult
    if pad == 0:
        return x
    return jnp.pad(x, [(0, pad)] + [(0, 0)] * (x.ndim - 1))


def mlp_classifier_forward(tokens, emb_table, weights, biases):
    """weights / biases: [input_layer, hidden..., output_layer]; w_i is [in, out]."""
    assert len(weights) == len(biases) and len(weights) >= 1
    B, S = tokens.shape
    n_linear = len(weights)
    num_classes = weights[-1].shape[1]

    # Batch tile: 8 rows (f32 sublane height). Fall back to gridless if B % 8 != 0.
    TB = 8 if B % 8 == 0 else B

    tokens = tokens.astype(jnp.int32)
    # Embedding table: lane-pad E to a multiple of 128; it stays in HBM (pl.ANY).
    emb_p = _pad_last(emb_table.astype(jnp.float32))                 # [V, E_pad]

    ws, bs = [], []
    for w, b in zip(weights, biases):
        wp = _pad_last(_pad_first(w.astype(jnp.float32)))            # zero-pad to 128s
        ws.append(wp.astype(jnp.bfloat16))                           # bf16 -> MXU
        bs.append(_pad_last(b.astype(jnp.float32).reshape(1, -1)))   # f32 bias [1, out_pad]

    E_pad = emb_p.shape[1]
    C_pad = ws[-1].shape[1]

    # tokens passed twice: scalar-prefetch copy (SMEM, drives the gather DMAs)
    # plus a tiled VMEM copy (vectorized mask / length computation). It is tiny.
    args = [tokens, tokens, emb_p]
    for w, b in zip(ws, bs):
        args += [w, b]

    in_specs = [
        pl.BlockSpec((TB, S), lambda i, tok: (i, 0)),                # token batch tile
        pl.BlockSpec(memory_space=pl.ANY),                           # emb table in HBM
    ]
    for w, b in zip(ws, bs):
        in_specs.append(pl.BlockSpec(w.shape, lambda i, tok: (0, 0)))  # resident weight
        in_specs.append(pl.BlockSpec(b.shape, lambda i, tok: (0, 0)))  # resident bias

    grid_spec = pltpu.PrefetchScalarGridSpec(
        num_scalar_prefetch=1,
        grid=(B // TB,),
        in_specs=in_specs,
        out_specs=pl.BlockSpec((TB, C_pad), lambda i, tok: (i, 0)),  # lane-dense output
        scratch_shapes=[
            pltpu.VMEM((TB, S, E_pad), jnp.float32),                 # gathered rows
            pltpu.SemaphoreType.DMA(()),                             # shared gather sem
        ],
    )

    kernel = functools.partial(_mlp_classifier_kernel, n_linear)
    out = pl.pallas_call(
        kernel,
        out_shape=jax.ShapeDtypeStruct((B, C_pad), jnp.float32),
        grid_spec=grid_spec,
        compiler_params=pltpu.CompilerParams(
            dimension_semantics=("parallel",),
        ),
    )(*args)
    return out[:, :num_classes]


def _init_linear(key, fan_in, fan_out):
    # torch nn.Linear default: U(-1/sqrt(fan_in), 1/sqrt(fan_in)) for W and b
    kw, kb = jax.random.split(key)
    bound = 1.0 / (fan_in ** 0.5)
    w = jax.random.uniform(kw, (fan_in, fan_out), jnp.float32, -bound, bound)
    b = jax.random.uniform(kb, (fan_out,), jnp.float32, -bound, bound)
    return w, b


def _reference_forward(tokens, emb_table, weights, biases):
    # Mirrors the kernel math (bf16 matmul operands, f32 accumulation/pooling).
    emb = emb_table[tokens]                                   # [B, S, E]
    mask = (tokens != 0).astype(jnp.float32)[..., None]       # [B, S, 1]
    sum_emb = (emb * mask).sum(axis=1)
    lengths = jnp.maximum(mask.sum(axis=1), 1.0)
    x = sum_emb / lengths
    n = len(weights)
    for i, (w, b) in enumerate(zip(weights, biases)):
        x = jnp.dot(x.astype(jnp.bfloat16), w.astype(jnp.bfloat16),
                    preferred_element_type=jnp.float32) + b
        if i < n - 1:
            x = jnp.maximum(x, 0.0)
    return x


if __name__ == "__main__":
    # Small, deterministic configuration
    vocab_size = 32
    embedding_dim = 16
    hidden_dim = 32
    num_classes = 4
    num_hidden_layers = 2
    batch, seq = 16, 8

    key = jax.random.PRNGKey(0)
    k_emb, k_tok, k_len, k_in, k_h, k_out = jax.random.split(key, 6)

    # nn.Embedding default init: N(0, 1)
    emb_table = jax.random.normal(k_emb, (vocab_size, embedding_dim), jnp.float32)

    # tokens in [1, vocab) with random padding tails (token id 0 == PAD)
    tokens = jax.random.randint(k_tok, (batch, seq), 1, vocab_size, jnp.int32)
    lens = jax.random.randint(k_len, (batch,), 1, seq + 1, jnp.int32)
    tokens = jnp.where(jnp.arange(seq)[None, :] < lens[:, None], tokens, 0)

    # linear stack: input_layer, (num_hidden_layers-1) hidden, output_layer
    weights, biases = [], []
    w, b = _init_linear(k_in, embedding_dim, hidden_dim)
    weights.append(w); biases.append(b)
    hk = k_h
    for _ in range(num_hidden_layers - 1):
        hk, sub = jax.random.split(hk)
        w, b = _init_linear(sub, hidden_dim, hidden_dim)
        weights.append(w); biases.append(b)
    w, b = _init_linear(k_out, hidden_dim, num_classes)
    weights.append(w); biases.append(b)

    logits = mlp_classifier_forward(tokens, emb_table, weights, biases)
    logits = jax.block_until_ready(logits)

    ref = _reference_forward(tokens, emb_table, weights, biases)
    assert logits.shape == (batch, num_classes)
    # bf16 matmul operands + approx reciprocal -> compare with a loose tolerance
    assert jnp.allclose(logits, ref, atol=2e-2, rtol=2e-2), (logits, ref)

    print("KERNEL_OK")
</pallas_src>

<mosaic_0001>
module attributes {stable_mosaic.version = 11 : i64} {
  func.func @_mlp_classifier_kernel(%arg0: i32, %arg1: memref<16x8xi32, #tpu.memory_space<smem>>, %arg2: memref<8x8xi32, #tpu.memory_space<vmem>>, %arg3: memref<32x128xf32, #tpu.memory_space<any>>, %arg4: memref<128x128xbf16, #tpu.memory_space<vmem>>, %arg5: memref<1x128xf32, #tpu.memory_space<vmem>>, %arg6: memref<128x128xbf16, #tpu.memory_space<vmem>>, %arg7: memref<1x128xf32, #tpu.memory_space<vmem>>, %arg8: memref<128x128xbf16, #tpu.memory_space<vmem>>, %arg9: memref<1x128xf32, #tpu.memory_space<vmem>>, %arg10: memref<8x128xf32, #tpu.memory_space<vmem>>, %arg11: memref<8x8x128xf32, #tpu.memory_space<vmem>>, %arg12: memref<!tpu.dma_semaphore, #tpu.memory_space<semaphore_mem>>) attributes {dimension_semantics = [#tpu.dimension_semantics<parallel>], iteration_bounds = array<i64: 2>, scalar_prefetch = 1 : i64, scratch_operands = 2 : i64, tpu.core_type = #tpu.core_type<tc>, window_params = [{transform_indices = @transform_0, window_bounds = array<i64: 8, 8>}, {}, {pipeline_mode = #tpu.pipeline_mode<synchronous>, transform_indices = @transform_2, window_bounds = array<i64: 128, 128>}, {pipeline_mode = #tpu.pipeline_mode<synchronous>, transform_indices = @transform_3, window_bounds = array<i64: 1, 128>}, {pipeline_mode = #tpu.pipeline_mode<synchronous>, transform_indices = @transform_4, window_bounds = array<i64: 128, 128>}, {pipeline_mode = #tpu.pipeline_mode<synchronous>, transform_indices = @transform_5, window_bounds = array<i64: 1, 128>}, {pipeline_mode = #tpu.pipeline_mode<synchronous>, transform_indices = @transform_6, window_bounds = array<i64: 128, 128>}, {pipeline_mode = #tpu.pipeline_mode<synchronous>, transform_indices = @transform_7, window_bounds = array<i64: 1, 128>}, {transform_indices = @transform_8, window_bounds = array<i64: 8, 128>}]} {
    %c8_i32 = arith.constant 8 : i32
    %0 = arith.muli %arg0, %c8_i32 : i32
    %c0_i32 = arith.constant 0 : i32
    %1 = arith.addi %0, %c0_i32 : i32
    %2 = arith.index_cast %1 : i32 to index
    %c0 = arith.constant 0 : index
    %3 = memref.load %arg1[%2, %c0] : memref<16x8xi32, #tpu.memory_space<smem>>
    %c0_i32_0 = arith.constant 0 : i32
    %c0_i32_1 = arith.constant 0 : i32
    %4 = tpu.memref_slice %arg3[%3, %c0_i32_1] : memref<32x128xf32, #tpu.memory_space<any>> -> memref<1x128xf32, #tpu.memory_space<any>>
    %c0_i32_2 = arith.constant 0 : i32
    %c0_i32_3 = arith.constant 0 : i32
    %5 = tpu.memref_slice %arg11[%c0_i32_0, %c0_i32_2, %c0_i32_3] : memref<8x8x128xf32, #tpu.memory_space<vmem>> -> memref<1x1x128xf32, #tpu.memory_space<vmem>>
    %6 = tpu.memref_squeeze %5 : memref<1x1x128xf32, #tpu.memory_space<vmem>> -> memref<1x128xf32, #tpu.memory_space<vmem>>
    tpu.enqueue_dma source(%4 : memref<1x128xf32, #tpu.memory_space<any>>) target(%6 : memref<1x128xf32, #tpu.memory_space<vmem>>) target_semaphore(%arg12 : memref<!tpu.dma_semaphore, #tpu.memory_space<semaphore_mem>>)
    %c0_i32_4 = arith.constant 0 : i32
    %7 = arith.addi %0, %c0_i32_4 : i32
    %8 = arith.index_cast %7 : i32 to index
    %c1 = arith.constant 1 : index
    %9 = memref.load %arg1[%8, %c1] : memref<16x8xi32, #tpu.memory_space<smem>>
    %c0_i32_5 = arith.constant 0 : i32
    %c0_i32_6 = arith.constant 0 : i32
    %10 = tpu.memref_slice %arg3[%9, %c0_i32_6] : memref<32x128xf32, #tpu.memory_space<any>> -> memref<1x128xf32, #tpu.memory_space<any>>
    %c1_i32 = arith.constant 1 : i32
    %c0_i32_7 = arith.constant 0 : i32
    %11 = tpu.memref_slice %arg11[%c0_i32_5, %c1_i32, %c0_i32_7] : memref<8x8x128xf32, #tpu.memory_space<vmem>> -> memref<1x1x128xf32, #tpu.memory_space<vmem>>
    %12 = tpu.memref_squeeze %11 : memref<1x1x128xf32, #tpu.memory_space<vmem>> -> memref<1x128xf32, #tpu.memory_space<vmem>>
    tpu.enqueue_dma source(%10 : memref<1x128xf32, #tpu.memory_space<any>>) target(%12 : memref<1x128xf32, #tpu.memory_space<vmem>>) target_semaphore(%arg12 : memref<!tpu.dma_semaphore, #tpu.memory_space<semaphore_mem>>)
    %c0_i32_8 = arith.constant 0 : i32
    %13 = arith.addi %0, %c0_i32_8 : i32
    %14 = arith.index_cast %13 : i32 to index
    %c2 = arith.constant 2 : index
    %15 = memref.load %arg1[%14, %c2] : memref<16x8xi32, #tpu.memory_space<smem>>
    %c0_i32_9 = arith.constant 0 : i32
    %c0_i32_10 = arith.constant 0 : i32
    %16 = tpu.memref_slice %arg3[%15, %c0_i32_10] : memref<32x128xf32, #tpu.memory_space<any>> -> memref<1x128xf32, #tpu.memory_space<any>>
    %c2_i32 = arith.constant 2 : i32
    %c0_i32_11 = arith.constant 0 : i32
    %17 = tpu.memref_slice %arg11[%c0_i32_9, %c2_i32, %c0_i32_11] : memref<8x8x128xf32, #tpu.memory_space<vmem>> -> memref<1x1x128xf32, #tpu.memory_space<vmem>>
    %18 = tpu.memref_squeeze %17 : memref<1x1x128xf32, #tpu.memory_space<vmem>> -> memref<1x128xf32, #tpu.memory_space<vmem>>
    tpu.enqueue_dma source(%16 : memref<1x128xf32, #tpu.memory_space<any>>) target(%18 : memref<1x128xf32, #tpu.memory_space<vmem>>) target_semaphore(%arg12 : memref<!tpu.dma_semaphore, #tpu.memory_space<semaphore_mem>>)
    %c0_i32_12 = arith.constant 0 : i32
    %19 = arith.addi %0, %c0_i32_12 : i32
    %20 = arith.index_cast %19 : i32 to index
    %c3 = arith.constant 3 : index
    %21 = memref.load %arg1[%20, %c3] : memref<16x8xi32, #tpu.memory_space<smem>>
    %c0_i32_13 = arith.constant 0 : i32
    %c0_i32_14 = arith.constant 0 : i32
    %22 = tpu.memref_slice %arg3[%21, %c0_i32_14] : memref<32x128xf32, #tpu.memory_space<any>> -> memref<1x128xf32, #tpu.memory_space<any>>
    %c3_i32 = arith.constant 3 : i32
    %c0_i32_15 = arith.constant 0 : i32
    %23 = tpu.memref_slice %arg11[%c0_i32_13, %c3_i32, %c0_i32_15] : memref<8x8x128xf32, #tpu.memory_space<vmem>> -> memref<1x1x128xf32, #tpu.memory_space<vmem>>
    %24 = tpu.memref_squeeze %23 : memref<1x1x128xf32, #tpu.memory_space<vmem>> -> memref<1x128xf32, #tpu.memory_space<vmem>>
    tpu.enqueue_dma source(%22 : memref<1x128xf32, #tpu.memory_space<any>>) target(%24 : memref<1x128xf32, #tpu.memory_space<vmem>>) target_semaphore(%arg12 : memref<!tpu.dma_semaphore, #tpu.memory_space<semaphore_mem>>)
    %c0_i32_16 = arith.constant 0 : i32
    %25 = arith.addi %0, %c0_i32_16 : i32
    %26 = arith.index_cast %25 : i32 to index
    %c4 = arith.constant 4 : index
    %27 = memref.load %arg1[%26, %c4] : memref<16x8xi32, #tpu.memory_space<smem>>
    %c0_i32_17 = arith.constant 0 : i32
    %c0_i32_18 = arith.constant 0 : i32
    %28 = tpu.memref_slice %arg3[%27, %c0_i32_18] : memref<32x128xf32, #tpu.memory_space<any>> -> memref<1x128xf32, #tpu.memory_space<any>>
    %c4_i32 = arith.constant 4 : i32
    %c0_i32_19 = arith.constant 0 : i32
    %29 = tpu.memref_slice %arg11[%c0_i32_17, %c4_i32, %c0_i32_19] : memref<8x8x128xf32, #tpu.memory_space<vmem>> -> memref<1x1x128xf32, #tpu.memory_space<vmem>>
    %30 = tpu.memref_squeeze %29 : memref<1x1x128xf32, #tpu.memory_space<vmem>> -> memref<1x128xf32, #tpu.memory_space<vmem>>
    tpu.enqueue_dma source(%28 : memref<1x128xf32, #tpu.memory_space<any>>) target(%30 : memref<1x128xf32, #tpu.memory_space<vmem>>) target_semaphore(%arg12 : memref<!tpu.dma_semaphore, #tpu.memory_space<semaphore_mem>>)
    %c0_i32_20 = arith.constant 0 : i32
    %31 = arith.addi %0, %c0_i32_20 : i32
    %32 = arith.index_cast %31 : i32 to index
    %c5 = arith.constant 5 : index
    %33 = memref.load %arg1[%32, %c5] : memref<16x8xi32, #tpu.memory_space<smem>>
    %c0_i32_21 = arith.constant 0 : i32
    %c0_i32_22 = arith.constant 0 : i32
    %34 = tpu.memref_slice %arg3[%33, %c0_i32_22] : memref<32x128xf32, #tpu.memory_space<any>> -> memref<1x128xf32, #tpu.memory_space<any>>
    %c5_i32 = arith.constant 5 : i32
    %c0_i32_23 = arith.constant 0 : i32
    %35 = tpu.memref_slice %arg11[%c0_i32_21, %c5_i32, %c0_i32_23] : memref<8x8x128xf32, #tpu.memory_space<vmem>> -> memref<1x1x128xf32, #tpu.memory_space<vmem>>
    %36 = tpu.memref_squeeze %35 : memref<1x1x128xf32, #tpu.memory_space<vmem>> -> memref<1x128xf32, #tpu.memory_space<vmem>>
    tpu.enqueue_dma source(%34 : memref<1x128xf32, #tpu.memory_space<any>>) target(%36 : memref<1x128xf32, #tpu.memory_space<vmem>>) target_semaphore(%arg12 : memref<!tpu.dma_semaphore, #tpu.memory_space<semaphore_mem>>)
    %c0_i32_24 = arith.constant 0 : i32
    %37 = arith.addi %0, %c0_i32_24 : i32
    %38 = arith.index_cast %37 : i32 to index
    %c6 = arith.constant 6 : index
    %39 = memref.load %arg1[%38, %c6] : memref<16x8xi32, #tpu.memory_space<smem>>
    %c0_i32_25 = arith.constant 0 : i32
    %c0_i32_26 = arith.constant 0 : i32
    %40 = tpu.memref_slice %arg3[%39, %c0_i32_26] : memref<32x128xf32, #tpu.memory_space<any>> -> memref<1x128xf32, #tpu.memory_space<any>>
    %c6_i32 = arith.constant 6 : i32
    %c0_i32_27 = arith.constant 0 : i32
    %41 = tpu.memref_slice %arg11[%c0_i32_25, %c6_i32, %c0_i32_27] : memref<8x8x128xf32, #tpu.memory_space<vmem>> -> memref<1x1x128xf32, #tpu.memory_space<vmem>>
    %42 = tpu.memref_squeeze %41 : memref<1x1x128xf32, #tpu.memory_space<vmem>> -> memref<1x128xf32, #tpu.memory_space<vmem>>
    tpu.enqueue_dma source(%40 : memref<1x128xf32, #tpu.memory_space<any>>) target(%42 : memref<1x128xf32, #tpu.memory_space<vmem>>) target_semaphore(%arg12 : memref<!tpu.dma_semaphore, #tpu.memory_space<semaphore_mem>>)
    %c0_i32_28 = arith.constant 0 : i32
    %43 = arith.addi %0, %c0_i32_28 : i32
    %44 = arith.index_cast %43 : i32 to index
    %c7 = arith.constant 7 : index
    %45 = memref.load %arg1[%44, %c7] : memref<16x8xi32, #tpu.memory_space<smem>>
    %c0_i32_29 = arith.constant 0 : i32
    %c0_i32_30 = arith.constant 0 : i32
    %46 = tpu.memref_slice %arg3[%45, %c0_i32_30] : memref<32x128xf32, #tpu.memory_space<any>> -> memref<1x128xf32, #tpu.memory_space<any>>
    %c7_i32 = arith.constant 7 : i32
    %c0_i32_31 = arith.constant 0 : i32
    %47 = tpu.memref_slice %arg11[%c0_i32_29, %c7_i32, %c0_i32_31] : memref<8x8x128xf32, #tpu.memory_space<vmem>> -> memref<1x1x128xf32, #tpu.memory_space<vmem>>
    %48 = tpu.memref_squeeze %47 : memref<1x1x128xf32, #tpu.memory_space<vmem>> -> memref<1x128xf32, #tpu.memory_space<vmem>>
    tpu.enqueue_dma source(%46 : memref<1x128xf32, #tpu.memory_space<any>>) target(%48 : memref<1x128xf32, #tpu.memory_space<vmem>>) target_semaphore(%arg12 : memref<!tpu.dma_semaphore, #tpu.memory_space<semaphore_mem>>)
    %c1_i32_32 = arith.constant 1 : i32
    %49 = arith.addi %0, %c1_i32_32 : i32
    %50 = arith.index_cast %49 : i32 to index
    %c0_33 = arith.constant 0 : index
    %51 = memref.load %arg1[%50, %c0_33] : memref<16x8xi32, #tpu.memory_space<smem>>
    %c1_i32_34 = arith.constant 1 : i32
    %c0_i32_35 = arith.constant 0 : i32
    %52 = tpu.memref_slice %arg3[%51, %c0_i32_35] : memref<32x128xf32, #tpu.memory_space<any>> -> memref<1x128xf32, #tpu.memory_space<any>>
    %c0_i32_36 = arith.constant 0 : i32
    %c0_i32_37 = arith.constant 0 : i32
    %53 = tpu.memref_slice %arg11[%c1_i32_34, %c0_i32_36, %c0_i32_37] : memref<8x8x128xf32, #tpu.memory_space<vmem>> -> memref<1x1x128xf32, #tpu.memory_space<vmem>>
    %54 = tpu.memref_squeeze %53 : memref<1x1x128xf32, #tpu.memory_space<vmem>> -> memref<1x128xf32, #tpu.memory_space<vmem>>
    tpu.enqueue_dma source(%52 : memref<1x128xf32, #tpu.memory_space<any>>) target(%54 : memref<1x128xf32, #tpu.memory_space<vmem>>) target_semaphore(%arg12 : memref<!tpu.dma_semaphore, #tpu.memory_space<semaphore_mem>>)
    %c1_i32_38 = arith.constant 1 : i32
    %55 = arith.addi %0, %c1_i32_38 : i32
    %56 = arith.index_cast %55 : i32 to index
    %c1_39 = arith.constant 1 : index
    %57 = memref.load %arg1[%56, %c1_39] : memref<16x8xi32, #tpu.memory_space<smem>>
    %c1_i32_40 = arith.constant 1 : i32
    %c0_i32_41 = arith.constant 0 : i32
    %58 = tpu.memref_slice %arg3[%57, %c0_i32_41] : memref<32x128xf32, #tpu.memory_space<any>> -> memref<1x128xf32, #tpu.memory_space<any>>
    %c1_i32_42 = arith.constant 1 : i32
    %c0_i32_43 = arith.constant 0 : i32
    %59 = tpu.memref_slice %arg11[%c1_i32_40, %c1_i32_42, %c0_i32_43] : memref<8x8x128xf32, #tpu.memory_space<vmem>> -> memref<1x1x128xf32, #tpu.memory_space<vmem>>
    %60 = tpu.memref_squeeze %59 : memref<1x1x128xf32, #tpu.memory_space<vmem>> -> memref<1x128xf32, #tpu.memory_space<vmem>>
    tpu.enqueue_dma source(%58 : memref<1x128xf32, #tpu.memory_space<any>>) target(%60 : memref<1x128xf32, #tpu.memory_space<vmem>>) target_semaphore(%arg12 : memref<!tpu.dma_semaphore, #tpu.memory_space<semaphore_mem>>)
    %c1_i32_44 = arith.constant 1 : i32
    %61 = arith.addi %0, %c1_i32_44 : i32
    %62 = arith.index_cast %61 : i32 to index
    %c2_45 = arith.constant 2 : index
    %63 = memref.load %arg1[%62, %c2_45] : memref<16x8xi32, #tpu.memory_space<smem>>
    %c1_i32_46 = arith.constant 1 : i32
    %c0_i32_47 = arith.constant 0 : i32
    %64 = tpu.memref_slice %arg3[%63, %c0_i32_47] : memref<32x128xf32, #tpu.memory_space<any>> -> memref<1x128xf32, #tpu.memory_space<any>>
    %c2_i32_48 = arith.constant 2 : i32
    %c0_i32_49 = arith.constant 0 : i32
    %65 = tpu.memref_slice %arg11[%c1_i32_46, %c2_i32_48, %c0_i32_49] : memref<8x8x128xf32, #tpu.memory_space<vmem>> -> memref<1x1x128xf32, #tpu.memory_space<vmem>>
    %66 = tpu.memref_squeeze %65 : memref<1x1x128xf32, #tpu.memory_space<vmem>> -> memref<1x128xf32, #tpu.memory_space<vmem>>
    tpu.enqueue_dma source(%64 : memref<1x128xf32, #tpu.memory_space<any>>) target(%66 : memref<1x128xf32, #tpu.memory_space<vmem>>) target_semaphore(%arg12 : memref<!tpu.dma_semaphore, #tpu.memory_space<semaphore_mem>>)
    %c1_i32_50 = arith.constant 1 : i32
    %67 = arith.addi %0, %c1_i32_50 : i32
    %68 = arith.index_cast %67 : i32 to index
    %c3_51 = arith.constant 3 : index
    %69 = memref.load %arg1[%68, %c3_51] : memref<16x8xi32, #tpu.memory_space<smem>>
    %c1_i32_52 = arith.constant 1 : i32
    %c0_i32_53 = arith.constant 0 : i32
    %70 = tpu.memref_slice %arg3[%69, %c0_i32_53] : memref<32x128xf32, #tpu.memory_space<any>> -> memref<1x128xf32, #tpu.memory_space<any>>
    %c3_i32_54 = arith.constant 3 : i32
    %c0_i32_55 = arith.constant 0 : i32
    %71 = tpu.memref_slice %arg11[%c1_i32_52, %c3_i32_54, %c0_i32_55] : memref<8x8x128xf32, #tpu.memory_space<vmem>> -> memref<1x1x128xf32, #tpu.memory_space<vmem>>
    %72 = tpu.memref_squeeze %71 : memref<1x1x128xf32, #tpu.memory_space<vmem>> -> memref<1x128xf32, #tpu.memory_space<vmem>>
    tpu.enqueue_dma source(%70 : memref<1x128xf32, #tpu.memory_space<any>>) target(%72 : memref<1x128xf32, #tpu.memory_space<vmem>>) target_semaphore(%arg12 : memref<!tpu.dma_semaphore, #tpu.memory_space<semaphore_mem>>)
    %c1_i32_56 = arith.constant 1 : i32
    %73 = arith.addi %0, %c1_i32_56 : i32
    %74 = arith.index_cast %73 : i32 to index
    %c4_57 = arith.constant 4 : index
    %75 = memref.load %arg1[%74, %c4_57] : memref<16x8xi32, #tpu.memory_space<smem>>
    %c1_i32_58 = arith.constant 1 : i32
    %c0_i32_59 = arith.constant 0 : i32
    %76 = tpu.memref_slice %arg3[%75, %c0_i32_59] : memref<32x128xf32, #tpu.memory_space<any>> -> memref<1x128xf32, #tpu.memory_space<any>>
    %c4_i32_60 = arith.constant 4 : i32
    %c0_i32_61 = arith.constant 0 : i32
    %77 = tpu.memref_slice %arg11[%c1_i32_58, %c4_i32_60, %c0_i32_61] : memref<8x8x128xf32, #tpu.memory_space<vmem>> -> memref<1x1x128xf32, #tpu.memory_space<vmem>>
    %78 = tpu.memref_squeeze %77 : memref<1x1x128xf32, #tpu.memory_space<vmem>> -> memref<1x128xf32, #tpu.memory_space<vmem>>
    tpu.enqueue_dma source(%76 : memref<1x128xf32, #tpu.memory_space<any>>) target(%78 : memref<1x128xf32, #tpu.memory_space<vmem>>) target_semaphore(%arg12 : memref<!tpu.dma_semaphore, #tpu.memory_space<semaphore_mem>>)
    %c1_i32_62 = arith.constant 1 : i32
    %79 = arith.addi %0, %c1_i32_62 : i32
    %80 = arith.index_cast %79 : i32 to index
    %c5_63 = arith.constant 5 : index
    %81 = memref.load %arg1[%80, %c5_63] : memref<16x8xi32, #tpu.memory_space<smem>>
    %c1_i32_64 = arith.constant 1 : i32
    %c0_i32_65 = arith.constant 0 : i32
    %82 = tpu.memref_slice %arg3[%81, %c0_i32_65] : memref<32x128xf32, #tpu.memory_space<any>> -> memref<1x128xf32, #tpu.memory_space<any>>
    %c5_i32_66 = arith.constant 5 : i32
    %c0_i32_67 = arith.constant 0 : i32
    %83 = tpu.memref_slice %arg11[%c1_i32_64, %c5_i32_66, %c0_i32_67] : memref<8x8x128xf32, #tpu.memory_space<vmem>> -> memref<1x1x128xf32, #tpu.memory_space<vmem>>
    %84 = tpu.memref_squeeze %83 : memref<1x1x128xf32, #tpu.memory_space<vmem>> -> memref<1x128xf32, #tpu.memory_space<vmem>>
    tpu.enqueue_dma source(%82 : memref<1x128xf32, #tpu.memory_space<any>>) target(%84 : memref<1x128xf32, #tpu.memory_space<vmem>>) target_semaphore(%arg12 : memref<!tpu.dma_semaphore, #tpu.memory_space<semaphore_mem>>)
    %c1_i32_68 = arith.constant 1 : i32
    %85 = arith.addi %0, %c1_i32_68 : i32
    %86 = arith.index_cast %85 : i32 to index
    %c6_69 = arith.constant 6 : index
    %87 = memref.load %arg1[%86, %c6_69] : memref<16x8xi32, #tpu.memory_space<smem>>
    %c1_i32_70 = arith.constant 1 : i32
    %c0_i32_71 = arith.constant 0 : i32
    %88 = tpu.memref_slice %arg3[%87, %c0_i32_71] : memref<32x128xf32, #tpu.memory_space<any>> -> memref<1x128xf32, #tpu.memory_space<any>>
    %c6_i32_72 = arith.constant 6 : i32
    %c0_i32_73 = arith.constant 0 : i32
    %89 = tpu.memref_slice %arg11[%c1_i32_70, %c6_i32_72, %c0_i32_73] : memref<8x8x128xf32, #tpu.memory_space<vmem>> -> memref<1x1x128xf32, #tpu.memory_space<vmem>>
    %90 = tpu.memref_squeeze %89 : memref<1x1x128xf32, #tpu.memory_space<vmem>> -> memref<1x128xf32, #tpu.memory_space<vmem>>
    tpu.enqueue_dma source(%88 : memref<1x128xf32, #tpu.memory_space<any>>) target(%90 : memref<1x128xf32, #tpu.memory_space<vmem>>) target_semaphore(%arg12 : memref<!tpu.dma_semaphore, #tpu.memory_space<semaphore_mem>>)
    %c1_i32_74 = arith.constant 1 : i32
    %91 = arith.addi %0, %c1_i32_74 : i32
    %92 = arith.index_cast %91 : i32 to index
    %c7_75 = arith.constant 7 : index
    %93 = memref.load %arg1[%92, %c7_75] : memref<16x8xi32, #tpu.memory_space<smem>>
    %c1_i32_76 = arith.constant 1 : i32
    %c0_i32_77 = arith.constant 0 : i32
    %94 = tpu.memref_slice %arg3[%93, %c0_i32_77] : memref<32x128xf32, #tpu.memory_space<any>> -> memref<1x128xf32, #tpu.memory_space<any>>
    %c7_i32_78 = arith.constant 7 : i32
    %c0_i32_79 = arith.constant 0 : i32
    %95 = tpu.memref_slice %arg11[%c1_i32_76, %c7_i32_78, %c0_i32_79] : memref<8x8x128xf32, #tpu.memory_space<vmem>> -> memref<1x1x128xf32, #tpu.memory_space<vmem>>
    %96 = tpu.memref_squeeze %95 : memref<1x1x128xf32, #tpu.memory_space<vmem>> -> memref<1x128xf32, #tpu.memory_space<vmem>>
    tpu.enqueue_dma source(%94 : memref<1x128xf32, #tpu.memory_space<any>>) target(%96 : memref<1x128xf32, #tpu.memory_space<vmem>>) target_semaphore(%arg12 : memref<!tpu.dma_semaphore, #tpu.memory_space<semaphore_mem>>)
    %c2_i32_80 = arith.constant 2 : i32
    %97 = arith.addi %0, %c2_i32_80 : i32
    %98 = arith.index_cast %97 : i32 to index
    %c0_81 = arith.constant 0 : index
    %99 = memref.load %arg1[%98, %c0_81] : memref<16x8xi32, #tpu.memory_space<smem>>
    %c2_i32_82 = arith.constant 2 : i32
    %c0_i32_83 = arith.constant 0 : i32
    %100 = tpu.memref_slice %arg3[%99, %c0_i32_83] : memref<32x128xf32, #tpu.memory_space<any>> -> memref<1x128xf32, #tpu.memory_space<any>>
    %c0_i32_84 = arith.constant 0 : i32
    %c0_i32_85 = arith.constant 0 : i32
    %101 = tpu.memref_slice %arg11[%c2_i32_82, %c0_i32_84, %c0_i32_85] : memref<8x8x128xf32, #tpu.memory_space<vmem>> -> memref<1x1x128xf32, #tpu.memory_space<vmem>>
    %102 = tpu.memref_squeeze %101 : memref<1x1x128xf32, #tpu.memory_space<vmem>> -> memref<1x128xf32, #tpu.memory_space<vmem>>
    tpu.enqueue_dma source(%100 : memref<1x128xf32, #tpu.memory_space<any>>) target(%102 : memref<1x128xf32, #tpu.memory_space<vmem>>) target_semaphore(%arg12 : memref<!tpu.dma_semaphore, #tpu.memory_space<semaphore_mem>>)
    %c2_i32_86 = arith.constant 2 : i32
    %103 = arith.addi %0, %c2_i32_86 : i32
    %104 = arith.index_cast %103 : i32 to index
    %c1_87 = arith.constant 1 : index
    %105 = memref.load %arg1[%104, %c1_87] : memref<16x8xi32, #tpu.memory_space<smem>>
    %c2_i32_88 = arith.constant 2 : i32
    %c0_i32_89 = arith.constant 0 : i32
    %106 = tpu.memref_slice %arg3[%105, %c0_i32_89] : memref<32x128xf32, #tpu.memory_space<any>> -> memref<1x128xf32, #tpu.memory_space<any>>
    %c1_i32_90 = arith.constant 1 : i32
    %c0_i32_91 = arith.constant 0 : i32
    %107 = tpu.memref_slice %arg11[%c2_i32_88, %c1_i32_90, %c0_i32_91] : memref<8x8x128xf32, #tpu.memory_space<vmem>> -> memref<1x1x128xf32, #tpu.memory_space<vmem>>
    %108 = tpu.memref_squeeze %107 : memref<1x1x128xf32, #tpu.memory_space<vmem>> -> memref<1x128xf32, #tpu.memory_space<vmem>>
    tpu.enqueue_dma source(%106 : memref<1x128xf32, #tpu.memory_space<any>>) target(%108 : memref<1x128xf32, #tpu.memory_space<vmem>>) target_semaphore(%arg12 : memref<!tpu.dma_semaphore, #tpu.memory_space<semaphore_mem>>)
    %c2_i32_92 = arith.constant 2 : i32
    %109 = arith.addi %0, %c2_i32_92 : i32
    %110 = arith.index_cast %109 : i32 to index
    %c2_93 = arith.constant 2 : index
    %111 = memref.load %arg1[%110, %c2_93] : memref<16x8xi32, #tpu.memory_space<smem>>
    %c2_i32_94 = arith.constant 2 : i32
    %c0_i32_95 = arith.constant 0 : i32
    %112 = tpu.memref_slice %arg3[%111, %c0_i32_95] : memref<32x128xf32, #tpu.memory_space<any>> -> memref<1x128xf32, #tpu.memory_space<any>>
    %c2_i32_96 = arith.constant 2 : i32
    %c0_i32_97 = arith.constant 0 : i32
    %113 = tpu.memref_slice %arg11[%c2_i32_94, %c2_i32_96, %c0_i32_97] : memref<8x8x128xf32, #tpu.memory_space<vmem>> -> memref<1x1x128xf32, #tpu.memory_space<vmem>>
    %114 = tpu.memref_squeeze %113 : memref<1x1x128xf32, #tpu.memory_space<vmem>> -> memref<1x128xf32, #tpu.memory_space<vmem>>
    tpu.enqueue_dma source(%112 : memref<1x128xf32, #tpu.memory_space<any>>) target(%114 : memref<1x128xf32, #tpu.memory_space<vmem>>) target_semaphore(%arg12 : memref<!tpu.dma_semaphore, #tpu.memory_space<semaphore_mem>>)
    %c2_i32_98 = arith.constant 2 : i32
    %115 = arith.addi %0, %c2_i32_98 : i32
    %116 = arith.index_cast %115 : i32 to index
    %c3_99 = arith.constant 3 : index
    %117 = memref.load %arg1[%116, %c3_99] : memref<16x8xi32, #tpu.memory_space<smem>>
    %c2_i32_100 = arith.constant 2 : i32
    %c0_i32_101 = arith.constant 0 : i32
    %118 = tpu.memref_slice %arg3[%117, %c0_i32_101] : memref<32x128xf32, #tpu.memory_space<any>> -> memref<1x128xf32, #tpu.memory_space<any>>
    %c3_i32_102 = arith.constant 3 : i32
    %c0_i32_103 = arith.constant 0 : i32
    %119 = tpu.memref_slice %arg11[%c2_i32_100, %c3_i32_102, %c0_i32_103] : memref<8x8x128xf32, #tpu.memory_space<vmem>> -> memref<1x1x128xf32, #tpu.memory_space<vmem>>
    %120 = tpu.memref_squeeze %119 : memref<1x1x128xf32, #tpu.memory_space<vmem>> -> memref<1x128xf32, #tpu.memory_space<vmem>>
    tpu.enqueue_dma source(%118 : memref<1x128xf32, #tpu.memory_space<any>>) target(%120 : memref<1x128xf32, #tpu.memory_space<vmem>>) target_semaphore(%arg12 : memref<!tpu.dma_semaphore, #tpu.memory_space<semaphore_mem>>)
    %c2_i32_104 = arith.constant 2 : i32
    %121 = arith.addi %0, %c2_i32_104 : i32
    %122 = arith.index_cast %121 : i32 to index
    %c4_105 = arith.constant 4 : index
    %123 = memref.load %arg1[%122, %c4_105] : memref<16x8xi32, #tpu.memory_space<smem>>
    %c2_i32_106 = arith.constant 2 : i32
    %c0_i32_107 = arith.constant 0 : i32
    %124 = tpu.memref_slice %arg3[%123, %c0_i32_107] : memref<32x128xf32, #tpu.memory_space<any>> -> memref<1x128xf32, #tpu.memory_space<any>>
    %c4_i32_108 = arith.constant 4 : i32
    %c0_i32_109 = arith.constant 0 : i32
    %125 = tpu.memref_slice %arg11[%c2_i32_106, %c4_i32_108, %c0_i32_109] : memref<8x8x128xf32, #tpu.memory_space<vmem>> -> memref<1x1x128xf32, #tpu.memory_space<vmem>>
    %126 = tpu.memref_squeeze %125 : memref<1x1x128xf32, #tpu.memory_space<vmem>> -> memref<1x128xf32, #tpu.memory_space<vmem>>
    tpu.enqueue_dma source(%124 : memref<1x128xf32, #tpu.memory_space<any>>) target(%126 : memref<1x128xf32, #tpu.memory_space<vmem>>) target_semaphore(%arg12 : memref<!tpu.dma_semaphore, #tpu.memory_space<semaphore_mem>>)
    %c2_i32_110 = arith.constant 2 : i32
    %127 = arith.addi %0, %c2_i32_110 : i32
    %128 = arith.index_cast %127 : i32 to index
    %c5_111 = arith.constant 5 : index
    %129 = memref.load %arg1[%128, %c5_111] : memref<16x8xi32, #tpu.memory_space<smem>>
    %c2_i32_112 = arith.constant 2 : i32
    %c0_i32_113 = arith.constant 0 : i32
    %130 = tpu.memref_slice %arg3[%129, %c0_i32_113] : memref<32x128xf32, #tpu.memory_space<any>> -> memref<1x128xf32, #tpu.memory_space<any>>
    %c5_i32_114 = arith.constant 5 : i32
    %c0_i32_115 = arith.constant 0 : i32
    %131 = tpu.memref_slice %arg11[%c2_i32_112, %c5_i32_114, %c0_i32_115] : memref<8x8x128xf32, #tpu.memory_space<vmem>> -> memref<1x1x128xf32, #tpu.memory_space<vmem>>
    %132 = tpu.memref_squeeze %131 : memref<1x1x128xf32, #tpu.memory_space<vmem>> -> memref<1x128xf32, #tpu.memory_space<vmem>>
    tpu.enqueue_dma source(%130 : memref<1x128xf32, #tpu.memory_space<any>>) target(%132 : memref<1x128xf32, #tpu.memory_space<vmem>>) target_semaphore(%arg12 : memref<!tpu.dma_semaphore, #tpu.memory_space<semaphore_mem>>)
    %c2_i32_116 = arith.constant 2 : i32
    %133 = arith.addi %0, %c2_i32_116 : i32
    %134 = arith.index_cast %133 : i32 to index
    %c6_117 = arith.constant 6 : index
    %135 = memref.load %arg1[%134, %c6_117] : memref<16x8xi32, #tpu.memory_space<smem>>
    %c2_i32_118 = arith.constant 2 : i32
    %c0_i32_119 = arith.constant 0 : i32
    %136 = tpu.memref_slice %arg3[%135, %c0_i32_119] : memref<32x128xf32, #tpu.memory_space<any>> -> memref<1x128xf32, #tpu.memory_space<any>>
    %c6_i32_120 = arith.constant 6 : i32
    %c0_i32_121 = arith.constant 0 : i32
    %137 = tpu.memref_slice %arg11[%c2_i32_118, %c6_i32_120, %c0_i32_121] : memref<8x8x128xf32, #tpu.memory_space<vmem>> -> memref<1x1x128xf32, #tpu.memory_space<vmem>>
    %138 = tpu.memref_squeeze %137 : memref<1x1x128xf32, #tpu.memory_space<vmem>> -> memref<1x128xf32, #tpu.memory_space<vmem>>
    tpu.enqueue_dma source(%136 : memref<1x128xf32, #tpu.memory_space<any>>) target(%138 : memref<1x128xf32, #tpu.memory_space<vmem>>) target_semaphore(%arg12 : memref<!tpu.dma_semaphore, #tpu.memory_space<semaphore_mem>>)
    %c2_i32_122 = arith.constant 2 : i32
    %139 = arith.addi %0, %c2_i32_122 : i32
    %140 = arith.index_cast %139 : i32 to index
    %c7_123 = arith.constant 7 : index
    %141 = memref.load %arg1[%140, %c7_123] : memref<16x8xi32, #tpu.memory_space<smem>>
    %c2_i32_124 = arith.constant 2 : i32
    %c0_i32_125 = arith.constant 0 : i32
    %142 = tpu.memref_slice %arg3[%141, %c0_i32_125] : memref<32x128xf32, #tpu.memory_space<any>> -> memref<1x128xf32, #tpu.memory_space<any>>
    %c7_i32_126 = arith.constant 7 : i32
    %c0_i32_127 = arith.constant 0 : i32
    %143 = tpu.memref_slice %arg11[%c2_i32_124, %c7_i32_126, %c0_i32_127] : memref<8x8x128xf32, #tpu.memory_space<vmem>> -> memref<1x1x128xf32, #tpu.memory_space<vmem>>
    %144 = tpu.memref_squeeze %143 : memref<1x1x128xf32, #tpu.memory_space<vmem>> -> memref<1x128xf32, #tpu.memory_space<vmem>>
    tpu.enqueue_dma source(%142 : memref<1x128xf32, #tpu.memory_space<any>>) target(%144 : memref<1x128xf32, #tpu.memory_space<vmem>>) target_semaphore(%arg12 : memref<!tpu.dma_semaphore, #tpu.memory_space<semaphore_mem>>)
    %c3_i32_128 = arith.constant 3 : i32
    %145 = arith.addi %0, %c3_i32_128 : i32
    %146 = arith.index_cast %145 : i32 to index
    %c0_129 = arith.constant 0 : index
    %147 = memref.load %arg1[%146, %c0_129] : memref<16x8xi32, #tpu.memory_space<smem>>
    %c3_i32_130 = arith.constant 3 : i32
    %c0_i32_131 = arith.constant 0 : i32
    %148 = tpu.memref_slice %arg3[%147, %c0_i32_131] : memref<32x128xf32, #tpu.memory_space<any>> -> memref<1x128xf32, #tpu.memory_space<any>>
    %c0_i32_132 = arith.constant 0 : i32
    %c0_i32_133 = arith.constant 0 : i32
    %149 = tpu.memref_slice %arg11[%c3_i32_130, %c0_i32_132, %c0_i32_133] : memref<8x8x128xf32, #tpu.memory_space<vmem>> -> memref<1x1x128xf32, #tpu.memory_space<vmem>>
    %150 = tpu.memref_squeeze %149 : memref<1x1x128xf32, #tpu.memory_space<vmem>> -> memref<1x128xf32, #tpu.memory_space<vmem>>
    tpu.enqueue_dma source(%148 : memref<1x128xf32, #tpu.memory_space<any>>) target(%150 : memref<1x128xf32, #tpu.memory_space<vmem>>) target_semaphore(%arg12 : memref<!tpu.dma_semaphore, #tpu.memory_space<semaphore_mem>>)
    %c3_i32_134 = arith.constant 3 : i32
    %151 = arith.addi %0, %c3_i32_134 : i32
    %152 = arith.index_cast %151 : i32 to index
    %c1_135 = arith.constant 1 : index
    %153 = memref.load %arg1[%152, %c1_135] : memref<16x8xi32, #tpu.memory_space<smem>>
    %c3_i32_136 = arith.constant 3 : i32
    %c0_i32_137 = arith.constant 0 : i32
    %154 = tpu.memref_slice %arg3[%153, %c0_i32_137] : memref<32x128xf32, #tpu.memory_space<any>> -> memref<1x128xf32, #tpu.memory_space<any>>
    %c1_i32_138 = arith.constant 1 : i32
    %c0_i32_139 = arith.constant 0 : i32
    %155 = tpu.memref_slice %arg11[%c3_i32_136, %c1_i32_138, %c0_i32_139] : memref<8x8x128xf32, #tpu.memory_space<vmem>> -> memref<1x1x128xf32, #tpu.memory_space<vmem>>
    %156 = tpu.memref_squeeze %155 : memref<1x1x128xf32, #tpu.memory_space<vmem>> -> memref<1x128xf32, #tpu.memory_space<vmem>>
    tpu.enqueue_dma source(%154 : memref<1x128xf32, #tpu.memory_space<any>>) target(%156 : memref<1x128xf32, #tpu.memory_space<vmem>>) target_semaphore(%arg12 : memref<!tpu.dma_semaphore, #tpu.memory_space<semaphore_mem>>)
    %c3_i32_140 = arith.constant 3 : i32
    %157 = arith.addi %0, %c3_i32_140 : i32
    %158 = arith.index_cast %157 : i32 to index
    %c2_141 = arith.constant 2 : index
    %159 = memref.load %arg1[%158, %c2_141] : memref<16x8xi32, #tpu.memory_space<smem>>
    %c3_i32_142 = arith.constant 3 : i32
    %c0_i32_143 = arith.constant 0 : i32
    %160 = tpu.memref_slice %arg3[%159, %c0_i32_143] : memref<32x128xf32, #tpu.memory_space<any>> -> memref<1x128xf32, #tpu.memory_space<any>>
    %c2_i32_144 = arith.constant 2 : i32
    %c0_i32_145 = arith.constant 0 : i32
    %161 = tpu.memref_slice %arg11[%c3_i32_142, %c2_i32_144, %c0_i32_145] : memref<8x8x128xf32, #tpu.memory_space<vmem>> -> memref<1x1x128xf32, #tpu.memory_space<vmem>>
    %162 = tpu.memref_squeeze %161 : memref<1x1x128xf32, #tpu.memory_space<vmem>> -> memref<1x128xf32, #tpu.memory_space<vmem>>
    tpu.enqueue_dma source(%160 : memref<1x128xf32, #tpu.memory_space<any>>) target(%162 : memref<1x128xf32, #tpu.memory_space<vmem>>) target_semaphore(%arg12 : memref<!tpu.dma_semaphore, #tpu.memory_space<semaphore_mem>>)
    %c3_i32_146 = arith.constant 3 : i32
    %163 = arith.addi %0, %c3_i32_146 : i32
    %164 = arith.index_cast %163 : i32 to index
    %c3_147 = arith.constant 3 : index
    %165 = memref.load %arg1[%164, %c3_147] : memref<16x8xi32, #tpu.memory_space<smem>>
    %c3_i32_148 = arith.constant 3 : i32
    %c0_i32_149 = arith.constant 0 : i32
    %166 = tpu.memref_slice %arg3[%165, %c0_i32_149] : memref<32x128xf32, #tpu.memory_space<any>> -> memref<1x128xf32, #tpu.memory_space<any>>
    %c3_i32_150 = arith.constant 3 : i32
    %c0_i32_151 = arith.constant 0 : i32
    %167 = tpu.memref_slice %arg11[%c3_i32_148, %c3_i32_150, %c0_i32_151] : memref<8x8x128xf32, #tpu.memory_space<vmem>> -> memref<1x1x128xf32, #tpu.memory_space<vmem>>
    %168 = tpu.memref_squeeze %167 : memref<1x1x128xf32, #tpu.memory_space<vmem>> -> memref<1x128xf32, #tpu.memory_space<vmem>>
    tpu.enqueue_dma source(%166 : memref<1x128xf32, #tpu.memory_space<any>>) target(%168 : memref<1x128xf32, #tpu.memory_space<vmem>>) target_semaphore(%arg12 : memref<!tpu.dma_semaphore, #tpu.memory_space<semaphore_mem>>)
    %c3_i32_152 = arith.constant 3 : i32
    %169 = arith.addi %0, %c3_i32_152 : i32
    %170 = arith.index_cast %169 : i32 to index
    %c4_153 = arith.constant 4 : index
    %171 = memref.load %arg1[%170, %c4_153] : memref<16x8xi32, #tpu.memory_space<smem>>
    %c3_i32_154 = arith.constant 3 : i32
    %c0_i32_155 = arith.constant 0 : i32
    %172 = tpu.memref_slice %arg3[%171, %c0_i32_155] : memref<32x128xf32, #tpu.memory_space<any>> -> memref<1x128xf32, #tpu.memory_space<any>>
    %c4_i32_156 = arith.constant 4 : i32
    %c0_i32_157 = arith.constant 0 : i32
    %173 = tpu.memref_slice %arg11[%c3_i32_154, %c4_i32_156, %c0_i32_157] : memref<8x8x128xf32, #tpu.memory_space<vmem>> -> memref<1x1x128xf32, #tpu.memory_space<vmem>>
    %174 = tpu.memref_squeeze %173 : memref<1x1x128xf32, #tpu.memory_space<vmem>> -> memref<1x128xf32, #tpu.memory_space<vmem>>
    tpu.enqueue_dma source(%172 : memref<1x128xf32, #tpu.memory_space<any>>) target(%174 : memref<1x128xf32, #tpu.memory_space<vmem>>) target_semaphore(%arg12 : memref<!tpu.dma_semaphore, #tpu.memory_space<semaphore_mem>>)
    %c3_i32_158 = arith.constant 3 : i32
    %175 = arith.addi %0, %c3_i32_158 : i32
    %176 = arith.index_cast %175 : i32 to index
    %c5_159 = arith.constant 5 : index
    %177 = memref.load %arg1[%176, %c5_159] : memref<16x8xi32, #tpu.memory_space<smem>>
    %c3_i32_160 = arith.constant 3 : i32
    %c0_i32_161 = arith.constant 0 : i32
    %178 = tpu.memref_slice %arg3[%177, %c0_i32_161] : memref<32x128xf32, #tpu.memory_space<any>> -> memref<1x128xf32, #tpu.memory_space<any>>
    %c5_i32_162 = arith.constant 5 : i32
    %c0_i32_163 = arith.constant 0 : i32
    %179 = tpu.memref_slice %arg11[%c3_i32_160, %c5_i32_162, %c0_i32_163] : memref<8x8x128xf32, #tpu.memory_space<vmem>> -> memref<1x1x128xf32, #tpu.memory_space<vmem>>
    %180 = tpu.memref_squeeze %179 : memref<1x1x128xf32, #tpu.memory_space<vmem>> -> memref<1x128xf32, #tpu.memory_space<vmem>>
    tpu.enqueue_dma source(%178 : memref<1x128xf32, #tpu.memory_space<any>>) target(%180 : memref<1x128xf32, #tpu.memory_space<vmem>>) target_semaphore(%arg12 : memref<!tpu.dma_semaphore, #tpu.memory_space<semaphore_mem>>)
    %c3_i32_164 = arith.constant 3 : i32
    %181 = arith.addi %0, %c3_i32_164 : i32
    %182 = arith.index_cast %181 : i32 to index
    %c6_165 = arith.constant 6 : index
    %183 = memref.load %arg1[%182, %c6_165] : memref<16x8xi32, #tpu.memory_space<smem>>
    %c3_i32_166 = arith.constant 3 : i32
    %c0_i32_167 = arith.constant 0 : i32
    %184 = tpu.memref_slice %arg3[%183, %c0_i32_167] : memref<32x128xf32, #tpu.memory_space<any>> -> memref<1x128xf32, #tpu.memory_space<any>>
    %c6_i32_168 = arith.constant 6 : i32
    %c0_i32_169 = arith.constant 0 : i32
    %185 = tpu.memref_slice %arg11[%c3_i32_166, %c6_i32_168, %c0_i32_169] : memref<8x8x128xf32, #tpu.memory_space<vmem>> -> memref<1x1x128xf32, #tpu.memory_space<vmem>>
    %186 = tpu.memref_squeeze %185 : memref<1x1x128xf32, #tpu.memory_space<vmem>> -> memref<1x128xf32, #tpu.memory_space<vmem>>
    tpu.enqueue_dma source(%184 : memref<1x128xf32, #tpu.memory_space<any>>) target(%186 : memref<1x128xf32, #tpu.memory_space<vmem>>) target_semaphore(%arg12 : memref<!tpu.dma_semaphore, #tpu.memory_space<semaphore_mem>>)
    %c3_i32_170 = arith.constant 3 : i32
    %187 = arith.addi %0, %c3_i32_170 : i32
    %188 = arith.index_cast %187 : i32 to index
    %c7_171 = arith.constant 7 : index
    %189 = memref.load %arg1[%188, %c7_171] : memref<16x8xi32, #tpu.memory_space<smem>>
    %c3_i32_172 = arith.constant 3 : i32
    %c0_i32_173 = arith.constant 0 : i32
    %190 = tpu.memref_slice %arg3[%189, %c0_i32_173] : memref<32x128xf32, #tpu.memory_space<any>> -> memref<1x128xf32, #tpu.memory_space<any>>
    %c7_i32_174 = arith.constant 7 : i32
    %c0_i32_175 = arith.constant 0 : i32
    %191 = tpu.memref_slice %arg11[%c3_i32_172, %c7_i32_174, %c0_i32_175] : memref<8x8x128xf32, #tpu.memory_space<vmem>> -> memref<1x1x128xf32, #tpu.memory_space<vmem>>
    %192 = tpu.memref_squeeze %191 : memref<1x1x128xf32, #tpu.memory_space<vmem>> -> memref<1x128xf32, #tpu.memory_space<vmem>>
    tpu.enqueue_dma source(%190 : memref<1x128xf32, #tpu.memory_space<any>>) target(%192 : memref<1x128xf32, #tpu.memory_space<vmem>>) target_semaphore(%arg12 : memref<!tpu.dma_semaphore, #tpu.memory_space<semaphore_mem>>)
    %c4_i32_176 = arith.constant 4 : i32
    %193 = arith.addi %0, %c4_i32_176 : i32
    %194 = arith.index_cast %193 : i32 to index
    %c0_177 = arith.constant 0 : index
    %195 = memref.load %arg1[%194, %c0_177] : memref<16x8xi32, #tpu.memory_space<smem>>
    %c4_i32_178 = arith.constant 4 : i32
    %c0_i32_179 = arith.constant 0 : i32
    %196 = tpu.memref_slice %arg3[%195, %c0_i32_179] : memref<32x128xf32, #tpu.memory_space<any>> -> memref<1x128xf32, #tpu.memory_space<any>>
    %c0_i32_180 = arith.constant 0 : i32
    %c0_i32_181 = arith.constant 0 : i32
    %197 = tpu.memref_slice %arg11[%c4_i32_178, %c0_i32_180, %c0_i32_181] : memref<8x8x128xf32, #tpu.memory_space<vmem>> -> memref<1x1x128xf32, #tpu.memory_space<vmem>>
    %198 = tpu.memref_squeeze %197 : memref<1x1x128xf32, #tpu.memory_space<vmem>> -> memref<1x128xf32, #tpu.memory_space<vmem>>
    tpu.enqueue_dma source(%196 : memref<1x128xf32, #tpu.memory_space<any>>) target(%198 : memref<1x128xf32, #tpu.memory_space<vmem>>) target_semaphore(%arg12 : memref<!tpu.dma_semaphore, #tpu.memory_space<semaphore_mem>>)
    %c4_i32_182 = arith.constant 4 : i32
    %199 = arith.addi %0, %c4_i32_182 : i32
    %200 = arith.index_cast %199 : i32 to index
    %c1_183 = arith.constant 1 : index
    %201 = memref.load %arg1[%200, %c1_183] : memref<16x8xi32, #tpu.memory_space<smem>>
    %c4_i32_184 = arith.constant 4 : i32
    %c0_i32_185 = arith.constant 0 : i32
    %202 = tpu.memref_slice %arg3[%201, %c0_i32_185] : memref<32x128xf32, #tpu.memory_space<any>> -> memref<1x128xf32, #tpu.memory_space<any>>
    %c1_i32_186 = arith.constant 1 : i32
    %c0_i32_187 = arith.constant 0 : i32
    %203 = tpu.memref_slice %arg11[%c4_i32_184, %c1_i32_186, %c0_i32_187] : memref<8x8x128xf32, #tpu.memory_space<vmem>> -> memref<1x1x128xf32, #tpu.memory_space<vmem>>
    %204 = tpu.memref_squeeze %203 : memref<1x1x128xf32, #tpu.memory_space<vmem>> -> memref<1x128xf32, #tpu.memory_space<vmem>>
    tpu.enqueue_dma source(%202 : memref<1x128xf32, #tpu.memory_space<any>>) target(%204 : memref<1x128xf32, #tpu.memory_space<vmem>>) target_semaphore(%arg12 : memref<!tpu.dma_semaphore, #tpu.memory_space<semaphore_mem>>)
    %c4_i32_188 = arith.constant 4 : i32
    %205 = arith.addi %0, %c4_i32_188 : i32
    %206 = arith.index_cast %205 : i32 to index
    %c2_189 = arith.constant 2 : index
    %207 = memref.load %arg1[%206, %c2_189] : memref<16x8xi32, #tpu.memory_space<smem>>
    %c4_i32_190 = arith.constant 4 : i32
    %c0_i32_191 = arith.constant 0 : i32
    %208 = tpu.memref_slice %arg3[%207, %c0_i32_191] : memref<32x128xf32, #tpu.memory_space<any>> -> memref<1x128xf32, #tpu.memory_space<any>>
    %c2_i32_192 = arith.constant 2 : i32
    %c0_i32_193 = arith.constant 0 : i32
    %209 = tpu.memref_slice %arg11[%c4_i32_190, %c2_i32_192, %c0_i32_193] : memref<8x8x128xf32, #tpu.memory_space<vmem>> -> memref<1x1x128xf32, #tpu.memory_space<vmem>>
    %210 = tpu.memref_squeeze %209 : memref<1x1x128xf32, #tpu.memory_space<vmem>> -> memref<1x128xf32, #tpu.memory_space<vmem>>
    tpu.enqueue_dma source(%208 : memref<1x128xf32, #tpu.memory_space<any>>) target(%210 : memref<1x128xf32, #tpu.memory_space<vmem>>) target_semaphore(%arg12 : memref<!tpu.dma_semaphore, #tpu.memory_space<semaphore_mem>>)
    %c4_i32_194 = arith.constant 4 : i32
    %211 = arith.addi %0, %c4_i32_194 : i32
    %212 = arith.index_cast %211 : i32 to index
    %c3_195 = arith.constant 3 : index
    %213 = memref.load %arg1[%212, %c3_195] : memref<16x8xi32, #tpu.memory_space<smem>>
    %c4_i32_196 = arith.constant 4 : i32
    %c0_i32_197 = arith.constant 0 : i32
    %214 = tpu.memref_slice %arg3[%213, %c0_i32_197] : memref<32x128xf32, #tpu.memory_space<any>> -> memref<1x128xf32, #tpu.memory_space<any>>
    %c3_i32_198 = arith.constant 3 : i32
    %c0_i32_199 = arith.constant 0 : i32
    %215 = tpu.memref_slice %arg11[%c4_i32_196, %c3_i32_198, %c0_i32_199] : memref<8x8x128xf32, #tpu.memory_space<vmem>> -> memref<1x1x128xf32, #tpu.memory_space<vmem>>
    %216 = tpu.memref_squeeze %215 : memref<1x1x128xf32, #tpu.memory_space<vmem>> -> memref<1x128xf32, #tpu.memory_space<vmem>>
    tpu.enqueue_dma source(%214 : memref<1x128xf32, #tpu.memory_space<any>>) target(%216 : memref<1x128xf32, #tpu.memory_space<vmem>>) target_semaphore(%arg12 : memref<!tpu.dma_semaphore, #tpu.memory_space<semaphore_mem>>)
    %c4_i32_200 = arith.constant 4 : i32
    %217 = arith.addi %0, %c4_i32_200 : i32
    %218 = arith.index_cast %217 : i32 to index
    %c4_201 = arith.constant 4 : index
    %219 = memref.load %arg1[%218, %c4_201] : memref<16x8xi32, #tpu.memory_space<smem>>
    %c4_i32_202 = arith.constant 4 : i32
    %c0_i32_203 = arith.constant 0 : i32
    %220 = tpu.memref_slice %arg3[%219, %c0_i32_203] : memref<32x128xf32, #tpu.memory_space<any>> -> memref<1x128xf32, #tpu.memory_space<any>>
    %c4_i32_204 = arith.constant 4 : i32
    %c0_i32_205 = arith.constant 0 : i32
    %221 = tpu.memref_slice %arg11[%c4_i32_202, %c4_i32_204, %c0_i32_205] : memref<8x8x128xf32, #tpu.memory_space<vmem>> -> memref<1x1x128xf32, #tpu.memory_space<vmem>>
    %222 = tpu.memref_squeeze %221 : memref<1x1x128xf32, #tpu.memory_space<vmem>> -> memref<1x128xf32, #tpu.memory_space<vmem>>
    tpu.enqueue_dma source(%220 : memref<1x128xf32, #tpu.memory_space<any>>) target(%222 : memref<1x128xf32, #tpu.memory_space<vmem>>) target_semaphore(%arg12 : memref<!tpu.dma_semaphore, #tpu.memory_space<semaphore_mem>>)
    %c4_i32_206 = arith.constant 4 : i32
    %223 = arith.addi %0, %c4_i32_206 : i32
    %224 = arith.index_cast %223 : i32 to index
    %c5_207 = arith.constant 5 : index
    %225 = memref.load %arg1[%224, %c5_207] : memref<16x8xi32, #tpu.memory_space<smem>>
    %c4_i32_208 = arith.constant 4 : i32
    %c0_i32_209 = arith.constant 0 : i32
    %226 = tpu.memref_slice %arg3[%225, %c0_i32_209] : memref<32x128xf32, #tpu.memory_space<any>> -> memref<1x128xf32, #tpu.memory_space<any>>
    %c5_i32_210 = arith.constant 5 : i32
    %c0_i32_211 = arith.constant 0 : i32
    %227 = tpu.memref_slice %arg11[%c4_i32_208, %c5_i32_210, %c0_i32_211] : memref<8x8x128xf32, #tpu.memory_space<vmem>> -> memref<1x1x128xf32, #tpu.memory_space<vmem>>
    %228 = tpu.memref_squeeze %227 : memref<1x1x128xf32, #tpu.memory_space<vmem>> -> memref<1x128xf32, #tpu.memory_space<vmem>>
    tpu.enqueue_dma source(%226 : memref<1x128xf32, #tpu.memory_space<any>>) target(%228 : memref<1x128xf32, #tpu.memory_space<vmem>>) target_semaphore(%arg12 : memref<!tpu.dma_semaphore, #tpu.memory_space<semaphore_mem>>)
    %c4_i32_212 = arith.constant 4 : i32
    %229 = arith.addi %0, %c4_i32_212 : i32
    %230 = arith.index_cast %229 : i32 to index
    %c6_213 = arith.constant 6 : index
    %231 = memref.load %arg1[%230, %c6_213] : memref<16x8xi32, #tpu.memory_space<smem>>
    %c4_i32_214 = arith.constant 4 : i32
    %c0_i32_215 = arith.constant 0 : i32
    %232 = tpu.memref_slice %arg3[%231, %c0_i32_215] : memref<32x128xf32, #tpu.memory_space<any>> -> memref<1x128xf32, #tpu.memory_space<any>>
    %c6_i32_216 = arith.constant 6 : i32
    %c0_i32_217 = arith.constant 0 : i32
    %233 = tpu.memref_slice %arg11[%c4_i32_214, %c6_i32_216, %c0_i32_217] : memref<8x8x128xf32, #tpu.memory_space<vmem>> -> memref<1x1x128xf32, #tpu.memory_space<vmem>>
    %234 = tpu.memref_squeeze %233 : memref<1x1x128xf32, #tpu.memory_space<vmem>> -> memref<1x128xf32, #tpu.memory_space<vmem>>
    tpu.enqueue_dma source(%232 : memref<1x128xf32, #tpu.memory_space<any>>) target(%234 : memref<1x128xf32, #tpu.memory_space<vmem>>) target_semaphore(%arg12 : memref<!tpu.dma_semaphore, #tpu.memory_space<semaphore_mem>>)
    %c4_i32_218 = arith.constant 4 : i32
    %235 = arith.addi %0, %c4_i32_218 : i32
    %236 = arith.index_cast %235 : i32 to index
    %c7_219 = arith.constant 7 : index
    %237 = memref.load %arg1[%236, %c7_219] : memref<16x8xi32, #tpu.memory_space<smem>>
    %c4_i32_220 = arith.constant 4 : i32
    %c0_i32_221 = arith.constant 0 : i32
    %238 = tpu.memref_slice %arg3[%237, %c0_i32_221] : memref<32x128xf32, #tpu.memory_space<any>> -> memref<1x128xf32, #tpu.memory_space<any>>
    %c7_i32_222 = arith.constant 7 : i32
    %c0_i32_223 = arith.constant 0 : i32
    %239 = tpu.memref_slice %arg11[%c4_i32_220, %c7_i32_222, %c0_i32_223] : memref<8x8x128xf32, #tpu.memory_space<vmem>> -> memref<1x1x128xf32, #tpu.memory_space<vmem>>
    %240 = tpu.memref_squeeze %239 : memref<1x1x128xf32, #tpu.memory_space<vmem>> -> memref<1x128xf32, #tpu.memory_space<vmem>>
    tpu.enqueue_dma source(%238 : memref<1x128xf32, #tpu.memory_space<any>>) target(%240 : memref<1x128xf32, #tpu.memory_space<vmem>>) target_semaphore(%arg12 : memref<!tpu.dma_semaphore, #tpu.memory_space<semaphore_mem>>)
    %c5_i32_224 = arith.constant 5 : i32
    %241 = arith.addi %0, %c5_i32_224 : i32
    %242 = arith.index_cast %241 : i32 to index
    %c0_225 = arith.constant 0 : index
    %243 = memref.load %arg1[%242, %c0_225] : memref<16x8xi32, #tpu.memory_space<smem>>
    %c5_i32_226 = arith.constant 5 : i32
    %c0_i32_227 = arith.constant 0 : i32
    %244 = tpu.memref_slice %arg3[%243, %c0_i32_227] : memref<32x128xf32, #tpu.memory_space<any>> -> memref<1x128xf32, #tpu.memory_space<any>>
    %c0_i32_228 = arith.constant 0 : i32
    %c0_i32_229 = arith.constant 0 : i32
    %245 = tpu.memref_slice %arg11[%c5_i32_226, %c0_i32_228, %c0_i32_229] : memref<8x8x128xf32, #tpu.memory_space<vmem>> -> memref<1x1x128xf32, #tpu.memory_space<vmem>>
    %246 = tpu.memref_squeeze %245 : memref<1x1x128xf32, #tpu.memory_space<vmem>> -> memref<1x128xf32, #tpu.memory_space<vmem>>
    tpu.enqueue_dma source(%244 : memref<1x128xf32, #tpu.memory_space<any>>) target(%246 : memref<1x128xf32, #tpu.memory_space<vmem>>) target_semaphore(%arg12 : memref<!tpu.dma_semaphore, #tpu.memory_space<semaphore_mem>>)
    %c5_i32_230 = arith.constant 5 : i32
    %247 = arith.addi %0, %c5_i32_230 : i32
    %248 = arith.index_cast %247 : i32 to index
    %c1_231 = arith.constant 1 : index
    %249 = memref.load %arg1[%248, %c1_231] : memref<16x8xi32, #tpu.memory_space<smem>>
    %c5_i32_232 = arith.constant 5 : i32
    %c0_i32_233 = arith.constant 0 : i32
    %250 = tpu.memref_slice %arg3[%249, %c0_i32_233] : memref<32x128xf32, #tpu.memory_space<any>> -> memref<1x128xf32, #tpu.memory_space<any>>
    %c1_i32_234 = arith.constant 1 : i32
    %c0_i32_235 = arith.constant 0 : i32
    %251 = tpu.memref_slice %arg11[%c5_i32_232, %c1_i32_234, %c0_i32_235] : memref<8x8x128xf32, #tpu.memory_space<vmem>> -> memref<1x1x128xf32, #tpu.memory_space<vmem>>
    %252 = tpu.memref_squeeze %251 : memref<1x1x128xf32, #tpu.memory_space<vmem>> -> memref<1x128xf32, #tpu.memory_space<vmem>>
    tpu.enqueue_dma source(%250 : memref<1x128xf32, #tpu.memory_space<any>>) target(%252 : memref<1x128xf32, #tpu.memory_space<vmem>>) target_semaphore(%arg12 : memref<!tpu.dma_semaphore, #tpu.memory_space<semaphore_mem>>)
    %c5_i32_236 = arith.constant 5 : i32
    %253 = arith.addi %0, %c5_i32_236 : i32
    %254 = arith.index_cast %253 : i32 to index
    %c2_237 = arith.constant 2 : index
    %255 = memref.load %arg1[%254, %c2_237] : memref<16x8xi32, #tpu.memory_space<smem>>
    %c5_i32_238 = arith.constant 5 : i32
    %c0_i32_239 = arith.constant 0 : i32
    %256 = tpu.memref_slice %arg3[%255, %c0_i32_239] : memref<32x128xf32, #tpu.memory_space<any>> -> memref<1x128xf32, #tpu.memory_space<any>>
    %c2_i32_240 = arith.constant 2 : i32
    %c0_i32_241 = arith.constant 0 : i32
    %257 = tpu.memref_slice %arg11[%c5_i32_238, %c2_i32_240, %c0_i32_241] : memref<8x8x128xf32, #tpu.memory_space<vmem>> -> memref<1x1x128xf32, #tpu.memory_space<vmem>>
    %258 = tpu.memref_squeeze %257 : memref<1x1x128xf32, #tpu.memory_space<vmem>> -> memref<1x128xf32, #tpu.memory_space<vmem>>
    tpu.enqueue_dma source(%256 : memref<1x128xf32, #tpu.memory_space<any>>) target(%258 : memref<1x128xf32, #tpu.memory_space<vmem>>) target_semaphore(%arg12 : memref<!tpu.dma_semaphore, #tpu.memory_space<semaphore_mem>>)
    %c5_i32_242 = arith.constant 5 : i32
    %259 = arith.addi %0, %c5_i32_242 : i32
    %260 = arith.index_cast %259 : i32 to index
    %c3_243 = arith.constant 3 : index
    %261 = memref.load %arg1[%260, %c3_243] : memref<16x8xi32, #tpu.memory_space<smem>>
    %c5_i32_244 = arith.constant 5 : i32
    %c0_i32_245 = arith.constant 0 : i32
    %262 = tpu.memref_slice %arg3[%261, %c0_i32_245] : memref<32x128xf32, #tpu.memory_space<any>> -> memref<1x128xf32, #tpu.memory_space<any>>
    %c3_i32_246 = arith.constant 3 : i32
    %c0_i32_247 = arith.constant 0 : i32
    %263 = tpu.memref_slice %arg11[%c5_i32_244, %c3_i32_246, %c0_i32_247] : memref<8x8x128xf32, #tpu.memory_space<vmem>> -> memref<1x1x128xf32, #tpu.memory_space<vmem>>
    %264 = tpu.memref_squeeze %263 : memref<1x1x128xf32, #tpu.memory_space<vmem>> -> memref<1x128xf32, #tpu.memory_space<vmem>>
    tpu.enqueue_dma source(%262 : memref<1x128xf32, #tpu.memory_space<any>>) target(%264 : memref<1x128xf32, #tpu.memory_space<vmem>>) target_semaphore(%arg12 : memref<!tpu.dma_semaphore, #tpu.memory_space<semaphore_mem>>)
    %c5_i32_248 = arith.constant 5 : i32
    %265 = arith.addi %0, %c5_i32_248 : i32
    %266 = arith.index_cast %265 : i32 to index
    %c4_249 = arith.constant 4 : index
    %267 = memref.load %arg1[%266, %c4_249] : memref<16x8xi32, #tpu.memory_space<smem>>
    %c5_i32_250 = arith.constant 5 : i32
    %c0_i32_251 = arith.constant 0 : i32
    %268 = tpu.memref_slice %arg3[%267, %c0_i32_251] : memref<32x128xf32, #tpu.memory_space<any>> -> memref<1x128xf32, #tpu.memory_space<any>>
    %c4_i32_252 = arith.constant 4 : i32
    %c0_i32_253 = arith.constant 0 : i32
    %269 = tpu.memref_slice %arg11[%c5_i32_250, %c4_i32_252, %c0_i32_253] : memref<8x8x128xf32, #tpu.memory_space<vmem>> -> memref<1x1x128xf32, #tpu.memory_space<vmem>>
    %270 = tpu.memref_squeeze %269 : memref<1x1x128xf32, #tpu.memory_space<vmem>> -> memref<1x128xf32, #tpu.memory_space<vmem>>
    tpu.enqueue_dma source(%268 : memref<1x128xf32, #tpu.memory_space<any>>) target(%270 : memref<1x128xf32, #tpu.memory_space<vmem>>) target_semaphore(%arg12 : memref<!tpu.dma_semaphore, #tpu.memory_space<semaphore_mem>>)
    %c5_i32_254 = arith.constant 5 : i32
    %271 = arith.addi %0, %c5_i32_254 : i32
    %272 = arith.index_cast %271 : i32 to index
    %c5_255 = arith.constant 5 : index
    %273 = memref.load %arg1[%272, %c5_255] : memref<16x8xi32, #tpu.memory_space<smem>>
    %c5_i32_256 = arith.constant 5 : i32
    %c0_i32_257 = arith.constant 0 : i32
    %274 = tpu.memref_slice %arg3[%273, %c0_i32_257] : memref<32x128xf32, #tpu.memory_space<any>> -> memref<1x128xf32, #tpu.memory_space<any>>
    %c5_i32_258 = arith.constant 5 : i32
    %c0_i32_259 = arith.constant 0 : i32
    %275 = tpu.memref_slice %arg11[%c5_i32_256, %c5_i32_258, %c0_i32_259] : memref<8x8x128xf32, #tpu.memory_space<vmem>> -> memref<1x1x128xf32, #tpu.memory_space<vmem>>
    %276 = tpu.memref_squeeze %275 : memref<1x1x128xf32, #tpu.memory_space<vmem>> -> memref<1x128xf32, #tpu.memory_space<vmem>>
    tpu.enqueue_dma source(%274 : memref<1x128xf32, #tpu.memory_space<any>>) target(%276 : memref<1x128xf32, #tpu.memory_space<vmem>>) target_semaphore(%arg12 : memref<!tpu.dma_semaphore, #tpu.memory_space<semaphore_mem>>)
    %c5_i32_260 = arith.constant 5 : i32
    %277 = arith.addi %0, %c5_i32_260 : i32
    %278 = arith.index_cast %277 : i32 to index
    %c6_261 = arith.constant 6 : index
    %279 = memref.load %arg1[%278, %c6_261] : memref<16x8xi32, #tpu.memory_space<smem>>
    %c5_i32_262 = arith.constant 5 : i32
    %c0_i32_263 = arith.constant 0 : i32
    %280 = tpu.memref_slice %arg3[%279, %c0_i32_263] : memref<32x128xf32, #tpu.memory_space<any>> -> memref<1x128xf32, #tpu.memory_space<any>>
    %c6_i32_264 = arith.constant 6 : i32
    %c0_i32_265 = arith.constant 0 : i32
    %281 = tpu.memref_slice %arg11[%c5_i32_262, %c6_i32_264, %c0_i32_265] : memref<8x8x128xf32, #tpu.memory_space<vmem>> -> memref<1x1x128xf32, #tpu.memory_space<vmem>>
    %282 = tpu.memref_squeeze %281 : memref<1x1x128xf32, #tpu.memory_space<vmem>> -> memref<1x128xf32, #tpu.memory_space<vmem>>
    tpu.enqueue_dma source(%280 : memref<1x128xf32, #tpu.memory_space<any>>) target(%282 : memref<1x128xf32, #tpu.memory_space<vmem>>) target_semaphore(%arg12 : memref<!tpu.dma_semaphore, #tpu.memory_space<semaphore_mem>>)
    %c5_i32_266 = arith.constant 5 : i32
    %283 = arith.addi %0, %c5_i32_266 : i32
    %284 = arith.index_cast %283 : i32 to index
    %c7_267 = arith.constant 7 : index
    %285 = memref.load %arg1[%284, %c7_267] : memref<16x8xi32, #tpu.memory_space<smem>>
    %c5_i32_268 = arith.constant 5 : i32
    %c0_i32_269 = arith.constant 0 : i32
    %286 = tpu.memref_slice %arg3[%285, %c0_i32_269] : memref<32x128xf32, #tpu.memory_space<any>> -> memref<1x128xf32, #tpu.memory_space<any>>
    %c7_i32_270 = arith.constant 7 : i32
    %c0_i32_271 = arith.constant 0 : i32
    %287 = tpu.memref_slice %arg11[%c5_i32_268, %c7_i32_270, %c0_i32_271] : memref<8x8x128xf32, #tpu.memory_space<vmem>> -> memref<1x1x128xf32, #tpu.memory_space<vmem>>
    %288 = tpu.memref_squeeze %287 : memref<1x1x128xf32, #tpu.memory_space<vmem>> -> memref<1x128xf32, #tpu.memory_space<vmem>>
    tpu.enqueue_dma source(%286 : memref<1x128xf32, #tpu.memory_space<any>>) target(%288 : memref<1x128xf32, #tpu.memory_space<vmem>>) target_semaphore(%arg12 : memref<!tpu.dma_semaphore, #tpu.memory_space<semaphore_mem>>)
    %c6_i32_272 = arith.constant 6 : i32
    %289 = arith.addi %0, %c6_i32_272 : i32
    %290 = arith.index_cast %289 : i32 to index
    %c0_273 = arith.constant 0 : index
    %291 = memref.load %arg1[%290, %c0_273] : memref<16x8xi32, #tpu.memory_space<smem>>
    %c6_i32_274 = arith.constant 6 : i32
    %c0_i32_275 = arith.constant 0 : i32
    %292 = tpu.memref_slice %arg3[%291, %c0_i32_275] : memref<32x128xf32, #tpu.memory_space<any>> -> memref<1x128xf32, #tpu.memory_space<any>>
    %c0_i32_276 = arith.constant 0 : i32
    %c0_i32_277 = arith.constant 0 : i32
    %293 = tpu.memref_slice %arg11[%c6_i32_274, %c0_i32_276, %c0_i32_277] : memref<8x8x128xf32, #tpu.memory_space<vmem>> -> memref<1x1x128xf32, #tpu.memory_space<vmem>>
    %294 = tpu.memref_squeeze %293 : memref<1x1x128xf32, #tpu.memory_space<vmem>> -> memref<1x128xf32, #tpu.memory_space<vmem>>
    tpu.enqueue_dma source(%292 : memref<1x128xf32, #tpu.memory_space<any>>) target(%294 : memref<1x128xf32, #tpu.memory_space<vmem>>) target_semaphore(%arg12 : memref<!tpu.dma_semaphore, #tpu.memory_space<semaphore_mem>>)
    %c6_i32_278 = arith.constant 6 : i32
    %295 = arith.addi %0, %c6_i32_278 : i32
    %296 = arith.index_cast %295 : i32 to index
    %c1_279 = arith.constant 1 : index
    %297 = memref.load %arg1[%296, %c1_279] : memref<16x8xi32, #tpu.memory_space<smem>>
    %c6_i32_280 = arith.constant 6 : i32
    %c0_i32_281 = arith.constant 0 : i32
    %298 = tpu.memref_slice %arg3[%297, %c0_i32_281] : memref<32x128xf32, #tpu.memory_space<any>> -> memref<1x128xf32, #tpu.memory_space<any>>
    %c1_i32_282 = arith.constant 1 : i32
    %c0_i32_283 = arith.constant 0 : i32
    %299 = tpu.memref_slice %arg11[%c6_i32_280, %c1_i32_282, %c0_i32_283] : memref<8x8x128xf32, #tpu.memory_space<vmem>> -> memref<1x1x128xf32, #tpu.memory_space<vmem>>
    %300 = tpu.memref_squeeze %299 : memref<1x1x128xf32, #tpu.memory_space<vmem>> -> memref<1x128xf32, #tpu.memory_space<vmem>>
    tpu.enqueue_dma source(%298 : memref<1x128xf32, #tpu.memory_space<any>>) target(%300 : memref<1x128xf32, #tpu.memory_space<vmem>>) target_semaphore(%arg12 : memref<!tpu.dma_semaphore, #tpu.memory_space<semaphore_mem>>)
    %c6_i32_284 = arith.constant 6 : i32
    %301 = arith.addi %0, %c6_i32_284 : i32
    %302 = arith.index_cast %301 : i32 to index
    %c2_285 = arith.constant 2 : index
    %303 = memref.load %arg1[%302, %c2_285] : memref<16x8xi32, #tpu.memory_space<smem>>
    %c6_i32_286 = arith.constant 6 : i32
    %c0_i32_287 = arith.constant 0 : i32
    %304 = tpu.memref_slice %arg3[%303, %c0_i32_287] : memref<32x128xf32, #tpu.memory_space<any>> -> memref<1x128xf32, #tpu.memory_space<any>>
    %c2_i32_288 = arith.constant 2 : i32
    %c0_i32_289 = arith.constant 0 : i32
    %305 = tpu.memref_slice %arg11[%c6_i32_286, %c2_i32_288, %c0_i32_289] : memref<8x8x128xf32, #tpu.memory_space<vmem>> -> memref<1x1x128xf32, #tpu.memory_space<vmem>>
    %306 = tpu.memref_squeeze %305 : memref<1x1x128xf32, #tpu.memory_space<vmem>> -> memref<1x128xf32, #tpu.memory_space<vmem>>
    tpu.enqueue_dma source(%304 : memref<1x128xf32, #tpu.memory_space<any>>) target(%306 : memref<1x128xf32, #tpu.memory_space<vmem>>) target_semaphore(%arg12 : memref<!tpu.dma_semaphore, #tpu.memory_space<semaphore_mem>>)
    %c6_i32_290 = arith.constant 6 : i32
    %307 = arith.addi %0, %c6_i32_290 : i32
    %308 = arith.index_cast %307 : i32 to index
    %c3_291 = arith.constant 3 : index
    %309 = memref.load %arg1[%308, %c3_291] : memref<16x8xi32, #tpu.memory_space<smem>>
    %c6_i32_292 = arith.constant 6 : i32
    %c0_i32_293 = arith.constant 0 : i32
    %310 = tpu.memref_slice %arg3[%309, %c0_i32_293] : memref<32x128xf32, #tpu.memory_space<any>> -> memref<1x128xf32, #tpu.memory_space<any>>
    %c3_i32_294 = arith.constant 3 : i32
    %c0_i32_295 = arith.constant 0 : i32
    %311 = tpu.memref_slice %arg11[%c6_i32_292, %c3_i32_294, %c0_i32_295] : memref<8x8x128xf32, #tpu.memory_space<vmem>> -> memref<1x1x128xf32, #tpu.memory_space<vmem>>
    %312 = tpu.memref_squeeze %311 : memref<1x1x128xf32, #tpu.memory_space<vmem>> -> memref<1x128xf32, #tpu.memory_space<vmem>>
    tpu.enqueue_dma source(%310 : memref<1x128xf32, #tpu.memory_space<any>>) target(%312 : memref<1x128xf32, #tpu.memory_space<vmem>>) target_semaphore(%arg12 : memref<!tpu.dma_semaphore, #tpu.memory_space<semaphore_mem>>)
    %c6_i32_296 = arith.constant 6 : i32
    %313 = arith.addi %0, %c6_i32_296 : i32
    %314 = arith.index_cast %313 : i32 to index
    %c4_297 = arith.constant 4 : index
    %315 = memref.load %arg1[%314, %c4_297] : memref<16x8xi32, #tpu.memory_space<smem>>
    %c6_i32_298 = arith.constant 6 : i32
    %c0_i32_299 = arith.constant 0 : i32
    %316 = tpu.memref_slice %arg3[%315, %c0_i32_299] : memref<32x128xf32, #tpu.memory_space<any>> -> memref<1x128xf32, #tpu.memory_space<any>>
    %c4_i32_300 = arith.constant 4 : i32
    %c0_i32_301 = arith.constant 0 : i32
    %317 = tpu.memref_slice %arg11[%c6_i32_298, %c4_i32_300, %c0_i32_301] : memref<8x8x128xf32, #tpu.memory_space<vmem>> -> memref<1x1x128xf32, #tpu.memory_space<vmem>>
    %318 = tpu.memref_squeeze %317 : memref<1x1x128xf32, #tpu.memory_space<vmem>> -> memref<1x128xf32, #tpu.memory_space<vmem>>
    tpu.enqueue_dma source(%316 : memref<1x128xf32, #tpu.memory_space<any>>) target(%318 : memref<1x128xf32, #tpu.memory_space<vmem>>) target_semaphore(%arg12 : memref<!tpu.dma_semaphore, #tpu.memory_space<semaphore_mem>>)
    %c6_i32_302 = arith.constant 6 : i32
    %319 = arith.addi %0, %c6_i32_302 : i32
    %320 = arith.index_cast %319 : i32 to index
    %c5_303 = arith.constant 5 : index
    %321 = memref.load %arg1[%320, %c5_303] : memref<16x8xi32, #tpu.memory_space<smem>>
    %c6_i32_304 = arith.constant 6 : i32
    %c0_i32_305 = arith.constant 0 : i32
    %322 = tpu.memref_slice %arg3[%321, %c0_i32_305] : memref<32x128xf32, #tpu.memory_space<any>> -> memref<1x128xf32, #tpu.memory_space<any>>
    %c5_i32_306 = arith.constant 5 : i32
    %c0_i32_307 = arith.constant 0 : i32
    %323 = tpu.memref_slice %arg11[%c6_i32_304, %c5_i32_306, %c0_i32_307] : memref<8x8x128xf32, #tpu.memory_space<vmem>> -> memref<1x1x128xf32, #tpu.memory_space<vmem>>
    %324 = tpu.memref_squeeze %323 : memref<1x1x128xf32, #tpu.memory_space<vmem>> -> memref<1x128xf32, #tpu.memory_space<vmem>>
    tpu.enqueue_dma source(%322 : memref<1x128xf32, #tpu.memory_space<any>>) target(%324 : memref<1x128xf32, #tpu.memory_space<vmem>>) target_semaphore(%arg12 : memref<!tpu.dma_semaphore, #tpu.memory_space<semaphore_mem>>)
    %c6_i32_308 = arith.constant 6 : i32
    %325 = arith.addi %0, %c6_i32_308 : i32
    %326 = arith.index_cast %325 : i32 to index
    %c6_309 = arith.constant 6 : index
    %327 = memref.load %arg1[%326, %c6_309] : memref<16x8xi32, #tpu.memory_space<smem>>
    %c6_i32_310 = arith.constant 6 : i32
    %c0_i32_311 = arith.constant 0 : i32
    %328 = tpu.memref_slice %arg3[%327, %c0_i32_311] : memref<32x128xf32, #tpu.memory_space<any>> -> memref<1x128xf32, #tpu.memory_space<any>>
    %c6_i32_312 = arith.constant 6 : i32
    %c0_i32_313 = arith.constant 0 : i32
    %329 = tpu.memref_slice %arg11[%c6_i32_310, %c6_i32_312, %c0_i32_313] : memref<8x8x128xf32, #tpu.memory_space<vmem>> -> memref<1x1x128xf32, #tpu.memory_space<vmem>>
    %330 = tpu.memref_squeeze %329 : memref<1x1x128xf32, #tpu.memory_space<vmem>> -> memref<1x128xf32, #tpu.memory_space<vmem>>
    tpu.enqueue_dma source(%328 : memref<1x128xf32, #tpu.memory_space<any>>) target(%330 : memref<1x128xf32, #tpu.memory_space<vmem>>) target_semaphore(%arg12 : memref<!tpu.dma_semaphore, #tpu.memory_space<semaphore_mem>>)
    %c6_i32_314 = arith.constant 6 : i32
    %331 = arith.addi %0, %c6_i32_314 : i32
    %332 = arith.index_cast %331 : i32 to index
    %c7_315 = arith.constant 7 : index
    %333 = memref.load %arg1[%332, %c7_315] : memref<16x8xi32, #tpu.memory_space<smem>>
    %c6_i32_316 = arith.constant 6 : i32
    %c0_i32_317 = arith.constant 0 : i32
    %334 = tpu.memref_slice %arg3[%333, %c0_i32_317] : memref<32x128xf32, #tpu.memory_space<any>> -> memref<1x128xf32, #tpu.memory_space<any>>
    %c7_i32_318 = arith.constant 7 : i32
    %c0_i32_319 = arith.constant 0 : i32
    %335 = tpu.memref_slice %arg11[%c6_i32_316, %c7_i32_318, %c0_i32_319] : memref<8x8x128xf32, #tpu.memory_space<vmem>> -> memref<1x1x128xf32, #tpu.memory_space<vmem>>
    %336 = tpu.memref_squeeze %335 : memref<1x1x128xf32, #tpu.memory_space<vmem>> -> memref<1x128xf32, #tpu.memory_space<vmem>>
    tpu.enqueue_dma source(%334 : memref<1x128xf32, #tpu.memory_space<any>>) target(%336 : memref<1x128xf32, #tpu.memory_space<vmem>>) target_semaphore(%arg12 : memref<!tpu.dma_semaphore, #tpu.memory_space<semaphore_mem>>)
    %c7_i32_320 = arith.constant 7 : i32
    %337 = arith.addi %0, %c7_i32_320 : i32
    %338 = arith.index_cast %337 : i32 to index
    %c0_321 = arith.constant 0 : index
    %339 = memref.load %arg1[%338, %c0_321] : memref<16x8xi32, #tpu.memory_space<smem>>
    %c7_i32_322 = arith.constant 7 : i32
    %c0_i32_323 = arith.constant 0 : i32
    %340 = tpu.memref_slice %arg3[%339, %c0_i32_323] : memref<32x128xf32, #tpu.memory_space<any>> -> memref<1x128xf32, #tpu.memory_space<any>>
    %c0_i32_324 = arith.constant 0 : i32
    %c0_i32_325 = arith.constant 0 : i32
    %341 = tpu.memref_slice %arg11[%c7_i32_322, %c0_i32_324, %c0_i32_325] : memref<8x8x128xf32, #tpu.memory_space<vmem>> -> memref<1x1x128xf32, #tpu.memory_space<vmem>>
    %342 = tpu.memref_squeeze %341 : memref<1x1x128xf32, #tpu.memory_space<vmem>> -> memref<1x128xf32, #tpu.memory_space<vmem>>
    tpu.enqueue_dma source(%340 : memref<1x128xf32, #tpu.memory_space<any>>) target(%342 : memref<1x128xf32, #tpu.memory_space<vmem>>) target_semaphore(%arg12 : memref<!tpu.dma_semaphore, #tpu.memory_space<semaphore_mem>>)
    %c7_i32_326 = arith.constant 7 : i32
    %343 = arith.addi %0, %c7_i32_326 : i32
    %344 = arith.index_cast %343 : i32 to index
    %c1_327 = arith.constant 1 : index
    %345 = memref.load %arg1[%344, %c1_327] : memref<16x8xi32, #tpu.memory_space<smem>>
    %c7_i32_328 = arith.constant 7 : i32
    %c0_i32_329 = arith.constant 0 : i32
    %346 = tpu.memref_slice %arg3[%345, %c0_i32_329] : memref<32x128xf32, #tpu.memory_space<any>> -> memref<1x128xf32, #tpu.memory_space<any>>
    %c1_i32_330 = arith.constant 1 : i32
    %c0_i32_331 = arith.constant 0 : i32
    %347 = tpu.memref_slice %arg11[%c7_i32_328, %c1_i32_330, %c0_i32_331] : memref<8x8x128xf32, #tpu.memory_space<vmem>> -> memref<1x1x128xf32, #tpu.memory_space<vmem>>
    %348 = tpu.memref_squeeze %347 : memref<1x1x128xf32, #tpu.memory_space<vmem>> -> memref<1x128xf32, #tpu.memory_space<vmem>>
    tpu.enqueue_dma source(%346 : memref<1x128xf32, #tpu.memory_space<any>>) target(%348 : memref<1x128xf32, #tpu.memory_space<vmem>>) target_semaphore(%arg12 : memref<!tpu.dma_semaphore, #tpu.memory_space<semaphore_mem>>)
    %c7_i32_332 = arith.constant 7 : i32
    %349 = arith.addi %0, %c7_i32_332 : i32
    %350 = arith.index_cast %349 : i32 to index
    %c2_333 = arith.constant 2 : index
    %351 = memref.load %arg1[%350, %c2_333] : memref<16x8xi32, #tpu.memory_space<smem>>
    %c7_i32_334 = arith.constant 7 : i32
    %c0_i32_335 = arith.constant 0 : i32
    %352 = tpu.memref_slice %arg3[%351, %c0_i32_335] : memref<32x128xf32, #tpu.memory_space<any>> -> memref<1x128xf32, #tpu.memory_space<any>>
    %c2_i32_336 = arith.constant 2 : i32
    %c0_i32_337 = arith.constant 0 : i32
    %353 = tpu.memref_slice %arg11[%c7_i32_334, %c2_i32_336, %c0_i32_337] : memref<8x8x128xf32, #tpu.memory_space<vmem>> -> memref<1x1x128xf32, #tpu.memory_space<vmem>>
    %354 = tpu.memref_squeeze %353 : memref<1x1x128xf32, #tpu.memory_space<vmem>> -> memref<1x128xf32, #tpu.memory_space<vmem>>
    tpu.enqueue_dma source(%352 : memref<1x128xf32, #tpu.memory_space<any>>) target(%354 : memref<1x128xf32, #tpu.memory_space<vmem>>) target_semaphore(%arg12 : memref<!tpu.dma_semaphore, #tpu.memory_space<semaphore_mem>>)
    %c7_i32_338 = arith.constant 7 : i32
    %355 = arith.addi %0, %c7_i32_338 : i32
    %356 = arith.index_cast %355 : i32 to index
    %c3_339 = arith.constant 3 : index
    %357 = memref.load %arg1[%356, %c3_339] : memref<16x8xi32, #tpu.memory_space<smem>>
    %c7_i32_340 = arith.constant 7 : i32
    %c0_i32_341 = arith.constant 0 : i32
    %358 = tpu.memref_slice %arg3[%357, %c0_i32_341] : memref<32x128xf32, #tpu.memory_space<any>> -> memref<1x128xf32, #tpu.memory_space<any>>
    %c3_i32_342 = arith.constant 3 : i32
    %c0_i32_343 = arith.constant 0 : i32
    %359 = tpu.memref_slice %arg11[%c7_i32_340, %c3_i32_342, %c0_i32_343] : memref<8x8x128xf32, #tpu.memory_space<vmem>> -> memref<1x1x128xf32, #tpu.memory_space<vmem>>
    %360 = tpu.memref_squeeze %359 : memref<1x1x128xf32, #tpu.memory_space<vmem>> -> memref<1x128xf32, #tpu.memory_space<vmem>>
    tpu.enqueue_dma source(%358 : memref<1x128xf32, #tpu.memory_space<any>>) target(%360 : memref<1x128xf32, #tpu.memory_space<vmem>>) target_semaphore(%arg12 : memref<!tpu.dma_semaphore, #tpu.memory_space<semaphore_mem>>)
    %c7_i32_344 = arith.constant 7 : i32
    %361 = arith.addi %0, %c7_i32_344 : i32
    %362 = arith.index_cast %361 : i32 to index
    %c4_345 = arith.constant 4 : index
    %363 = memref.load %arg1[%362, %c4_345] : memref<16x8xi32, #tpu.memory_space<smem>>
    %c7_i32_346 = arith.constant 7 : i32
    %c0_i32_347 = arith.constant 0 : i32
    %364 = tpu.memref_slice %arg3[%363, %c0_i32_347] : memref<32x128xf32, #tpu.memory_space<any>> -> memref<1x128xf32, #tpu.memory_space<any>>
    %c4_i32_348 = arith.constant 4 : i32
    %c0_i32_349 = arith.constant 0 : i32
    %365 = tpu.memref_slice %arg11[%c7_i32_346, %c4_i32_348, %c0_i32_349] : memref<8x8x128xf32, #tpu.memory_space<vmem>> -> memref<1x1x128xf32, #tpu.memory_space<vmem>>
    %366 = tpu.memref_squeeze %365 : memref<1x1x128xf32, #tpu.memory_space<vmem>> -> memref<1x128xf32, #tpu.memory_space<vmem>>
    tpu.enqueue_dma source(%364 : memref<1x128xf32, #tpu.memory_space<any>>) target(%366 : memref<1x128xf32, #tpu.memory_space<vmem>>) target_semaphore(%arg12 : memref<!tpu.dma_semaphore, #tpu.memory_space<semaphore_mem>>)
    %c7_i32_350 = arith.constant 7 : i32
    %367 = arith.addi %0, %c7_i32_350 : i32
    %368 = arith.index_cast %367 : i32 to index
    %c5_351 = arith.constant 5 : index
    %369 = memref.load %arg1[%368, %c5_351] : memref<16x8xi32, #tpu.memory_space<smem>>
    %c7_i32_352 = arith.constant 7 : i32
    %c0_i32_353 = arith.constant 0 : i32
    %370 = tpu.memref_slice %arg3[%369, %c0_i32_353] : memref<32x128xf32, #tpu.memory_space<any>> -> memref<1x128xf32, #tpu.memory_space<any>>
    %c5_i32_354 = arith.constant 5 : i32
    %c0_i32_355 = arith.constant 0 : i32
    %371 = tpu.memref_slice %arg11[%c7_i32_352, %c5_i32_354, %c0_i32_355] : memref<8x8x128xf32, #tpu.memory_space<vmem>> -> memref<1x1x128xf32, #tpu.memory_space<vmem>>
    %372 = tpu.memref_squeeze %371 : memref<1x1x128xf32, #tpu.memory_space<vmem>> -> memref<1x128xf32, #tpu.memory_space<vmem>>
    tpu.enqueue_dma source(%370 : memref<1x128xf32, #tpu.memory_space<any>>) target(%372 : memref<1x128xf32, #tpu.memory_space<vmem>>) target_semaphore(%arg12 : memref<!tpu.dma_semaphore, #tpu.memory_space<semaphore_mem>>)
    %c7_i32_356 = arith.constant 7 : i32
    %373 = arith.addi %0, %c7_i32_356 : i32
    %374 = arith.index_cast %373 : i32 to index
    %c6_357 = arith.constant 6 : index
    %375 = memref.load %arg1[%374, %c6_357] : memref<16x8xi32, #tpu.memory_space<smem>>
    %c7_i32_358 = arith.constant 7 : i32
    %c0_i32_359 = arith.constant 0 : i32
    %376 = tpu.memref_slice %arg3[%375, %c0_i32_359] : memref<32x128xf32, #tpu.memory_space<any>> -> memref<1x128xf32, #tpu.memory_space<any>>
    %c6_i32_360 = arith.constant 6 : i32
    %c0_i32_361 = arith.constant 0 : i32
    %377 = tpu.memref_slice %arg11[%c7_i32_358, %c6_i32_360, %c0_i32_361] : memref<8x8x128xf32, #tpu.memory_space<vmem>> -> memref<1x1x128xf32, #tpu.memory_space<vmem>>
    %378 = tpu.memref_squeeze %377 : memref<1x1x128xf32, #tpu.memory_space<vmem>> -> memref<1x128xf32, #tpu.memory_space<vmem>>
    tpu.enqueue_dma source(%376 : memref<1x128xf32, #tpu.memory_space<any>>) target(%378 : memref<1x128xf32, #tpu.memory_space<vmem>>) target_semaphore(%arg12 : memref<!tpu.dma_semaphore, #tpu.memory_space<semaphore_mem>>)
    %c7_i32_362 = arith.constant 7 : i32
    %379 = arith.addi %0, %c7_i32_362 : i32
    %380 = arith.index_cast %379 : i32 to index
    %c7_363 = arith.constant 7 : index
    %381 = memref.load %arg1[%380, %c7_363] : memref<16x8xi32, #tpu.memory_space<smem>>
    %c7_i32_364 = arith.constant 7 : i32
    %c0_i32_365 = arith.constant 0 : i32
    %382 = tpu.memref_slice %arg3[%381, %c0_i32_365] : memref<32x128xf32, #tpu.memory_space<any>> -> memref<1x128xf32, #tpu.memory_space<any>>
    %c7_i32_366 = arith.constant 7 : i32
    %c0_i32_367 = arith.constant 0 : i32
    %383 = tpu.memref_slice %arg11[%c7_i32_364, %c7_i32_366, %c0_i32_367] : memref<8x8x128xf32, #tpu.memory_space<vmem>> -> memref<1x1x128xf32, #tpu.memory_space<vmem>>
    %384 = tpu.memref_squeeze %383 : memref<1x1x128xf32, #tpu.memory_space<vmem>> -> memref<1x128xf32, #tpu.memory_space<vmem>>
    tpu.enqueue_dma source(%382 : memref<1x128xf32, #tpu.memory_space<any>>) target(%384 : memref<1x128xf32, #tpu.memory_space<vmem>>) target_semaphore(%arg12 : memref<!tpu.dma_semaphore, #tpu.memory_space<semaphore_mem>>)
    %c0_368 = arith.constant 0 : index
    %c0_369 = arith.constant 0 : index
    %385 = vector.load %arg2[%c0_368, %c0_369] : memref<8x8xi32, #tpu.memory_space<vmem>>, vector<8x8xi32>
    %c0_i32_370 = arith.constant 0 : i32
    %386 = vector.broadcast %c0_i32_370 : i32 to vector<8x8xi32>
    %387 = arith.cmpi ne, %385, %386 : vector<8x8xi32>
    %388 = arith.extui %387 : vector<8x8xi1> to vector<8x8xi32>
    %389 = arith.sitofp %388 : vector<8x8xi32> to vector<8x8xf32>
    %cst = arith.constant dense<0.000000e+00> : vector<8xf32>
    %390 = vector.multi_reduction <add>, %389, %cst [1] : vector<8x8xf32> to vector<8xf32>
    %391 = vector.shape_cast %390 : vector<8xf32> to vector<8x1xf32>
    %cst_371 = arith.constant 1.000000e+00 : f32
    %392 = vector.broadcast %cst_371 : f32 to vector<8x1xf32>
    %393 = arith.maximumf %391, %392 : vector<8x1xf32>
    %394 = tpu.reciprocal %393 {approx = true} : vector<8x1xf32> -> vector<8x1xf32>
    %c0_i32_372 = arith.constant 0 : i32
    %c0_i32_373 = arith.constant 0 : i32
    %395 = tpu.memref_slice %arg3[%3, %c0_i32_373] : memref<32x128xf32, #tpu.memory_space<any>> -> memref<1x128xf32, #tpu.memory_space<any>>
    %c0_i32_374 = arith.constant 0 : i32
    %c0_i32_375 = arith.constant 0 : i32
    %396 = tpu.memref_slice %arg11[%c0_i32_372, %c0_i32_374, %c0_i32_375] : memref<8x8x128xf32, #tpu.memory_space<vmem>> -> memref<1x1x128xf32, #tpu.memory_space<vmem>>
    %397 = tpu.memref_squeeze %396 : memref<1x1x128xf32, #tpu.memory_space<vmem>> -> memref<1x128xf32, #tpu.memory_space<vmem>>
    tpu.wait_dma2 semaphore(%arg12 : memref<!tpu.dma_semaphore, #tpu.memory_space<semaphore_mem>>) src(%395 : memref<1x128xf32, #tpu.memory_space<any>>) dst(%397 : memref<1x128xf32, #tpu.memory_space<vmem>>)
    %c0_i32_376 = arith.constant 0 : i32
    %c0_i32_377 = arith.constant 0 : i32
    %398 = tpu.memref_slice %arg3[%9, %c0_i32_377] : memref<32x128xf32, #tpu.memory_space<any>> -> memref<1x128xf32, #tpu.memory_space<any>>
    %c1_i32_378 = arith.constant 1 : i32
    %c0_i32_379 = arith.constant 0 : i32
    %399 = tpu.memref_slice %arg11[%c0_i32_376, %c1_i32_378, %c0_i32_379] : memref<8x8x128xf32, #tpu.memory_space<vmem>> -> memref<1x1x128xf32, #tpu.memory_space<vmem>>
    %400 = tpu.memref_squeeze %399 : memref<1x1x128xf32, #tpu.memory_space<vmem>> -> memref<1x128xf32, #tpu.memory_space<vmem>>
    tpu.wait_dma2 semaphore(%arg12 : memref<!tpu.dma_semaphore, #tpu.memory_space<semaphore_mem>>) src(%398 : memref<1x128xf32, #tpu.memory_space<any>>) dst(%400 : memref<1x128xf32, #tpu.memory_space<vmem>>)
    %c0_i32_380 = arith.constant 0 : i32
    %c0_i32_381 = arith.constant 0 : i32
    %401 = tpu.memref_slice %arg3[%15, %c0_i32_381] : memref<32x128xf32, #tpu.memory_space<any>> -> memref<1x128xf32, #tpu.memory_space<any>>
    %c2_i32_382 = arith.constant 2 : i32
    %c0_i32_383 = arith.constant 0 : i32
    %402 = tpu.memref_slice %arg11[%c0_i32_380, %c2_i32_382, %c0_i32_383] : memref<8x8x128xf32, #tpu.memory_space<vmem>> -> memref<1x1x128xf32, #tpu.memory_space<vmem>>
    %403 = tpu.memref_squeeze %402 : memref<1x1x128xf32, #tpu.memory_space<vmem>> -> memref<1x128xf32, #tpu.memory_space<vmem>>
    tpu.wait_dma2 semaphore(%arg12 : memref<!tpu.dma_semaphore, #tpu.memory_space<semaphore_mem>>) src(%401 : memref<1x128xf32, #tpu.memory_space<any>>) dst(%403 : memref<1x128xf32, #tpu.memory_space<vmem>>)
    %c0_i32_384 = arith.constant 0 : i32
    %c0_i32_385 = arith.constant 0 : i32
    %404 = tpu.memref_slice %arg3[%21, %c0_i32_385] : memref<32x128xf32, #tpu.memory_space<any>> -> memref<1x128xf32, #tpu.memory_space<any>>
    %c3_i32_386 = arith.constant 3 : i32
    %c0_i32_387 = arith.constant 0 : i32
    %405 = tpu.memref_slice %arg11[%c0_i32_384, %c3_i32_386, %c0_i32_387] : memref<8x8x128xf32, #tpu.memory_space<vmem>> -> memref<1x1x128xf32, #tpu.memory_space<vmem>>
    %406 = tpu.memref_squeeze %405 : memref<1x1x128xf32, #tpu.memory_space<vmem>> -> memref<1x128xf32, #tpu.memory_space<vmem>>
    tpu.wait_dma2 semaphore(%arg12 : memref<!tpu.dma_semaphore, #tpu.memory_space<semaphore_mem>>) src(%404 : memref<1x128xf32, #tpu.memory_space<any>>) dst(%406 : memref<1x128xf32, #tpu.memory_space<vmem>>)
    %c0_i32_388 = arith.constant 0 : i32
    %c0_i32_389 = arith.constant 0 : i32
    %407 = tpu.memref_slice %arg3[%27, %c0_i32_389] : memref<32x128xf32, #tpu.memory_space<any>> -> memref<1x128xf32, #tpu.memory_space<any>>
    %c4_i32_390 = arith.constant 4 : i32
    %c0_i32_391 = arith.constant 0 : i32
    %408 = tpu.memref_slice %arg11[%c0_i32_388, %c4_i32_390, %c0_i32_391] : memref<8x8x128xf32, #tpu.memory_space<vmem>> -> memref<1x1x128xf32, #tpu.memory_space<vmem>>
    %409 = tpu.memref_squeeze %408 : memref<1x1x128xf32, #tpu.memory_space<vmem>> -> memref<1x128xf32, #tpu.memory_space<vmem>>
    tpu.wait_dma2 semaphore(%arg12 : memref<!tpu.dma_semaphore, #tpu.memory_space<semaphore_mem>>) src(%407 : memref<1x128xf32, #tpu.memory_space<any>>) dst(%409 : memref<1x128xf32, #tpu.memory_space<vmem>>)
    %c0_i32_392 = arith.constant 0 : i32
    %c0_i32_393 = arith.constant 0 : i32
    %410 = tpu.memref_slice %arg3[%33, %c0_i32_393] : memref<32x128xf32, #tpu.memory_space<any>> -> memref<1x128xf32, #tpu.memory_space<any>>
    %c5_i32_394 = arith.constant 5 : i32
    %c0_i32_395 = arith.constant 0 : i32
    %411 = tpu.memref_slice %arg11[%c0_i32_392, %c5_i32_394, %c0_i32_395] : memref<8x8x128xf32, #tpu.memory_space<vmem>> -> memref<1x1x128xf32, #tpu.memory_space<vmem>>
    %412 = tpu.memref_squeeze %411 : memref<1x1x128xf32, #tpu.memory_space<vmem>> -> memref<1x128xf32, #tpu.memory_space<vmem>>
    tpu.wait_dma2 semaphore(%arg12 : memref<!tpu.dma_semaphore, #tpu.memory_space<semaphore_mem>>) src(%410 : memref<1x128xf32, #tpu.memory_space<any>>) dst(%412 : memref<1x128xf32, #tpu.memory_space<vmem>>)
    %c0_i32_396 = arith.constant 0 : i32
    %c0_i32_397 = arith.constant 0 : i32
    %413 = tpu.memref_slice %arg3[%39, %c0_i32_397] : memref<32x128xf32, #tpu.memory_space<any>> -> memref<1x128xf32, #tpu.memory_space<any>>
    %c6_i32_398 = arith.constant 6 : i32
    %c0_i32_399 = arith.constant 0 : i32
    %414 = tpu.memref_slice %arg11[%c0_i32_396, %c6_i32_398, %c0_i32_399] : memref<8x8x128xf32, #tpu.memory_space<vmem>> -> memref<1x1x128xf32, #tpu.memory_space<vmem>>
    %415 = tpu.memref_squeeze %414 : memref<1x1x128xf32, #tpu.memory_space<vmem>> -> memref<1x128xf32, #tpu.memory_space<vmem>>
    tpu.wait_dma2 semaphore(%arg12 : memref<!tpu.dma_semaphore, #tpu.memory_space<semaphore_mem>>) src(%413 : memref<1x128xf32, #tpu.memory_space<any>>) dst(%415 : memref<1x128xf32, #tpu.memory_space<vmem>>)
    %c0_i32_400 = arith.constant 0 : i32
    %c0_i32_401 = arith.constant 0 : i32
    %416 = tpu.memref_slice %arg3[%45, %c0_i32_401] : memref<32x128xf32, #tpu.memory_space<any>> -> memref<1x128xf32, #tpu.memory_space<any>>
    %c7_i32_402 = arith.constant 7 : i32
    %c0_i32_403 = arith.constant 0 : i32
    %417 = tpu.memref_slice %arg11[%c0_i32_400, %c7_i32_402, %c0_i32_403] : memref<8x8x128xf32, #tpu.memory_space<vmem>> -> memref<1x1x128xf32, #tpu.memory_space<vmem>>
    %418 = tpu.memref_squeeze %417 : memref<1x1x128xf32, #tpu.memory_space<vmem>> -> memref<1x128xf32, #tpu.memory_space<vmem>>
    tpu.wait_dma2 semaphore(%arg12 : memref<!tpu.dma_semaphore, #tpu.memory_space<semaphore_mem>>) src(%416 : memref<1x128xf32, #tpu.memory_space<any>>) dst(%418 : memref<1x128xf32, #tpu.memory_space<vmem>>)
    %c1_i32_404 = arith.constant 1 : i32
    %c0_i32_405 = arith.constant 0 : i32
    %419 = tpu.memref_slice %arg3[%51, %c0_i32_405] : memref<32x128xf32, #tpu.memory_space<any>> -> memref<1x128xf32, #tpu.memory_space<any>>
    %c0_i32_406 = arith.constant 0 : i32
    %c0_i32_407 = arith.constant 0 : i32
    %420 = tpu.memref_slice %arg11[%c1_i32_404, %c0_i32_406, %c0_i32_407] : memref<8x8x128xf32, #tpu.memory_space<vmem>> -> memref<1x1x128xf32, #tpu.memory_space<vmem>>
    %421 = tpu.memref_squeeze %420 : memref<1x1x128xf32, #tpu.memory_space<vmem>> -> memref<1x128xf32, #tpu.memory_space<vmem>>
    tpu.wait_dma2 semaphore(%arg12 : memref<!tpu.dma_semaphore, #tpu.memory_space<semaphore_mem>>) src(%419 : memref<1x128xf32, #tpu.memory_space<any>>) dst(%421 : memref<1x128xf32, #tpu.memory_space<vmem>>)
    %c1_i32_408 = arith.constant 1 : i32
    %c0_i32_409 = arith.constant 0 : i32
    %422 = tpu.memref_slice %arg3[%57, %c0_i32_409] : memref<32x128xf32, #tpu.memory_space<any>> -> memref<1x128xf32, #tpu.memory_space<any>>
    %c1_i32_410 = arith.constant 1 : i32
    %c0_i32_411 = arith.constant 0 : i32
    %423 = tpu.memref_slice %arg11[%c1_i32_408, %c1_i32_410, %c0_i32_411] : memref<8x8x128xf32, #tpu.memory_space<vmem>> -> memref<1x1x128xf32, #tpu.memory_space<vmem>>
    %424 = tpu.memref_squeeze %423 : memref<1x1x128xf32, #tpu.memory_space<vmem>> -> memref<1x128xf32, #tpu.memory_space<vmem>>
    tpu.wait_dma2 semaphore(%arg12 : memref<!tpu.dma_semaphore, #tpu.memory_space<semaphore_mem>>) src(%422 : memref<1x128xf32, #tpu.memory_space<any>>) dst(%424 : memref<1x128xf32, #tpu.memory_space<vmem>>)
    %c1_i32_412 = arith.constant 1 : i32
    %c0_i32_413 = arith.constant 0 : i32
    %425 = tpu.memref_slice %arg3[%63, %c0_i32_413] : memref<32x128xf32, #tpu.memory_space<any>> -> memref<1x128xf32, #tpu.memory_space<any>>
    %c2_i32_414 = arith.constant 2 : i32
    %c0_i32_415 = arith.constant 0 : i32
    %426 = tpu.memref_slice %arg11[%c1_i32_412, %c2_i32_414, %c0_i32_415] : memref<8x8x128xf32, #tpu.memory_space<vmem>> -> memref<1x1x128xf32, #tpu.memory_space<vmem>>
    %427 = tpu.memref_squeeze %426 : memref<1x1x128xf32, #tpu.memory_space<vmem>> -> memref<1x128xf32, #tpu.memory_space<vmem>>
    tpu.wait_dma2 semaphore(%arg12 : memref<!tpu.dma_semaphore, #tpu.memory_space<semaphore_mem>>) src(%425 : memref<1x128xf32, #tpu.memory_space<any>>) dst(%427 : memref<1x128xf32, #tpu.memory_space<vmem>>)
    %c1_i32_416 = arith.constant 1 : i32
    %c0_i32_417 = arith.constant 0 : i32
    %428 = tpu.memref_slice %arg3[%69, %c0_i32_417] : memref<32x128xf32, #tpu.memory_space<any>> -> memref<1x128xf32, #tpu.memory_space<any>>
    %c3_i32_418 = arith.constant 3 : i32
    %c0_i32_419 = arith.constant 0 : i32
    %429 = tpu.memref_slice %arg11[%c1_i32_416, %c3_i32_418, %c0_i32_419] : memref<8x8x128xf32, #tpu.memory_space<vmem>> -> memref<1x1x128xf32, #tpu.memory_space<vmem>>
    %430 = tpu.memref_squeeze %429 : memref<1x1x128xf32, #tpu.memory_space<vmem>> -> memref<1x128xf32, #tpu.memory_space<vmem>>
    tpu.wait_dma2 semaphore(%arg12 : memref<!tpu.dma_semaphore, #tpu.memory_space<semaphore_mem>>) src(%428 : memref<1x128xf32, #tpu.memory_space<any>>) dst(%430 : memref<1x128xf32, #tpu.memory_space<vmem>>)
    %c1_i32_420 = arith.constant 1 : i32
    %c0_i32_421 = arith.constant 0 : i32
    %431 = tpu.memref_slice %arg3[%75, %c0_i32_421] : memref<32x128xf32, #tpu.memory_space<any>> -> memref<1x128xf32, #tpu.memory_space<any>>
    %c4_i32_422 = arith.constant 4 : i32
    %c0_i32_423 = arith.constant 0 : i32
    %432 = tpu.memref_slice %arg11[%c1_i32_420, %c4_i32_422, %c0_i32_423] : memref<8x8x128xf32, #tpu.memory_space<vmem>> -> memref<1x1x128xf32, #tpu.memory_space<vmem>>
    %433 = tpu.memref_squeeze %432 : memref<1x1x128xf32, #tpu.memory_space<vmem>> -> memref<1x128xf32, #tpu.memory_space<vmem>>
    tpu.wait_dma2 semaphore(%arg12 : memref<!tpu.dma_semaphore, #tpu.memory_space<semaphore_mem>>) src(%431 : memref<1x128xf32, #tpu.memory_space<any>>) dst(%433 : memref<1x128xf32, #tpu.memory_space<vmem>>)
    %c1_i32_424 = arith.constant 1 : i32
    %c0_i32_425 = arith.constant 0 : i32
    %434 = tpu.memref_slice %arg3[%81, %c0_i32_425] : memref<32x128xf32, #tpu.memory_space<any>> -> memref<1x128xf32, #tpu.memory_space<any>>
    %c5_i32_426 = arith.constant 5 : i32
    %c0_i32_427 = arith.constant 0 : i32
    %435 = tpu.memref_slice %arg11[%c1_i32_424, %c5_i32_426, %c0_i32_427] : memref<8x8x128xf32, #tpu.memory_space<vmem>> -> memref<1x1x128xf32, #tpu.memory_space<vmem>>
    %436 = tpu.memref_squeeze %435 : memref<1x1x128xf32, #tpu.memory_space<vmem>> -> memref<1x128xf32, #tpu.memory_space<vmem>>
    tpu.wait_dma2 semaphore(%arg12 : memref<!tpu.dma_semaphore, #tpu.memory_space<semaphore_mem>>) src(%434 : memref<1x128xf32, #tpu.memory_space<any>>) dst(%436 : memref<1x128xf32, #tpu.memory_space<vmem>>)
    %c1_i32_428 = arith.constant 1 : i32
    %c0_i32_429 = arith.constant 0 : i32
    %437 = tpu.memref_slice %arg3[%87, %c0_i32_429] : memref<32x128xf32, #tpu.memory_space<any>> -> memref<1x128xf32, #tpu.memory_space<any>>
    %c6_i32_430 = arith.constant 6 : i32
    %c0_i32_431 = arith.constant 0 : i32
    %438 = tpu.memref_slice %arg11[%c1_i32_428, %c6_i32_430, %c0_i32_431] : memref<8x8x128xf32, #tpu.memory_space<vmem>> -> memref<1x1x128xf32, #tpu.memory_space<vmem>>
    %439 = tpu.memref_squeeze %438 : memref<1x1x128xf32, #tpu.memory_space<vmem>> -> memref<1x128xf32, #tpu.memory_space<vmem>>
    tpu.wait_dma2 semaphore(%arg12 : memref<!tpu.dma_semaphore, #tpu.memory_space<semaphore_mem>>) src(%437 : memref<1x128xf32, #tpu.memory_space<any>>) dst(%439 : memref<1x128xf32, #tpu.memory_space<vmem>>)
    %c1_i32_432 = arith.constant 1 : i32
    %c0_i32_433 = arith.constant 0 : i32
    %440 = tpu.memref_slice %arg3[%93, %c0_i32_433] : memref<32x128xf32, #tpu.memory_space<any>> -> memref<1x128xf32, #tpu.memory_space<any>>
    %c7_i32_434 = arith.constant 7 : i32
    %c0_i32_435 = arith.constant 0 : i32
    %441 = tpu.memref_slice %arg11[%c1_i32_432, %c7_i32_434, %c0_i32_435] : memref<8x8x128xf32, #tpu.memory_space<vmem>> -> memref<1x1x128xf32, #tpu.memory_space<vmem>>
    %442 = tpu.memref_squeeze %441 : memref<1x1x128xf32, #tpu.memory_space<vmem>> -> memref<1x128xf32, #tpu.memory_space<vmem>>
    tpu.wait_dma2 semaphore(%arg12 : memref<!tpu.dma_semaphore, #tpu.memory_space<semaphore_mem>>) src(%440 : memref<1x128xf32, #tpu.memory_space<any>>) dst(%442 : memref<1x128xf32, #tpu.memory_space<vmem>>)
    %c2_i32_436 = arith.constant 2 : i32
    %c0_i32_437 = arith.constant 0 : i32
    %443 = tpu.memref_slice %arg3[%99, %c0_i32_437] : memref<32x128xf32, #tpu.memory_space<any>> -> memref<1x128xf32, #tpu.memory_space<any>>
    %c0_i32_438 = arith.constant 0 : i32
    %c0_i32_439 = arith.constant 0 : i32
    %444 = tpu.memref_slice %arg11[%c2_i32_436, %c0_i32_438, %c0_i32_439] : memref<8x8x128xf32, #tpu.memory_space<vmem>> -> memref<1x1x128xf32, #tpu.memory_space<vmem>>
    %445 = tpu.memref_squeeze %444 : memref<1x1x128xf32, #tpu.memory_space<vmem>> -> memref<1x128xf32, #tpu.memory_space<vmem>>
    tpu.wait_dma2 semaphore(%arg12 : memref<!tpu.dma_semaphore, #tpu.memory_space<semaphore_mem>>) src(%443 : memref<1x128xf32, #tpu.memory_space<any>>) dst(%445 : memref<1x128xf32, #tpu.memory_space<vmem>>)
    %c2_i32_440 = arith.constant 2 : i32
    %c0_i32_441 = arith.constant 0 : i32
    %446 = tpu.memref_slice %arg3[%105, %c0_i32_441] : memref<32x128xf32, #tpu.memory_space<any>> -> memref<1x128xf32, #tpu.memory_space<any>>
    %c1_i32_442 = arith.constant 1 : i32
    %c0_i32_443 = arith.constant 0 : i32
    %447 = tpu.memref_slice %arg11[%c2_i32_440, %c1_i32_442, %c0_i32_443] : memref<8x8x128xf32, #tpu.memory_space<vmem>> -> memref<1x1x128xf32, #tpu.memory_space<vmem>>
    %448 = tpu.memref_squeeze %447 : memref<1x1x128xf32, #tpu.memory_space<vmem>> -> memref<1x128xf32, #tpu.memory_space<vmem>>
    tpu.wait_dma2 semaphore(%arg12 : memref<!tpu.dma_semaphore, #tpu.memory_space<semaphore_mem>>) src(%446 : memref<1x128xf32, #tpu.memory_space<any>>) dst(%448 : memref<1x128xf32, #tpu.memory_space<vmem>>)
    %c2_i32_444 = arith.constant 2 : i32
    %c0_i32_445 = arith.constant 0 : i32
    %449 = tpu.memref_slice %arg3[%111, %c0_i32_445] : memref<32x128xf32, #tpu.memory_space<any>> -> memref<1x128xf32, #tpu.memory_space<any>>
    %c2_i32_446 = arith.constant 2 : i32
    %c0_i32_447 = arith.constant 0 : i32
    %450 = tpu.memref_slice %arg11[%c2_i32_444, %c2_i32_446, %c0_i32_447] : memref<8x8x128xf32, #tpu.memory_space<vmem>> -> memref<1x1x128xf32, #tpu.memory_space<vmem>>
    %451 = tpu.memref_squeeze %450 : memref<1x1x128xf32, #tpu.memory_space<vmem>> -> memref<1x128xf32, #tpu.memory_space<vmem>>
    tpu.wait_dma2 semaphore(%arg12 : memref<!tpu.dma_semaphore, #tpu.memory_space<semaphore_mem>>) src(%449 : memref<1x128xf32, #tpu.memory_space<any>>) dst(%451 : memref<1x128xf32, #tpu.memory_space<vmem>>)
    %c2_i32_448 = arith.constant 2 : i32
    %c0_i32_449 = arith.constant 0 : i32
    %452 = tpu.memref_slice %arg3[%117, %c0_i32_449] : memref<32x128xf32, #tpu.memory_space<any>> -> memref<1x128xf32, #tpu.memory_space<any>>
    %c3_i32_450 = arith.constant 3 : i32
    %c0_i32_451 = arith.constant 0 : i32
    %453 = tpu.memref_slice %arg11[%c2_i32_448, %c3_i32_450, %c0_i32_451] : memref<8x8x128xf32, #tpu.memory_space<vmem>> -> memref<1x1x128xf32, #tpu.memory_space<vmem>>
    %454 = tpu.memref_squeeze %453 : memref<1x1x128xf32, #tpu.memory_space<vmem>> -> memref<1x128xf32, #tpu.memory_space<vmem>>
    tpu.wait_dma2 semaphore(%arg12 : memref<!tpu.dma_semaphore, #tpu.memory_space<semaphore_mem>>) src(%452 : memref<1x128xf32, #tpu.memory_space<any>>) dst(%454 : memref<1x128xf32, #tpu.memory_space<vmem>>)
    %c2_i32_452 = arith.constant 2 : i32
    %c0_i32_453 = arith.constant 0 : i32
    %455 = tpu.memref_slice %arg3[%123, %c0_i32_453] : memref<32x128xf32, #tpu.memory_space<any>> -> memref<1x128xf32, #tpu.memory_space<any>>
    %c4_i32_454 = arith.constant 4 : i32
    %c0_i32_455 = arith.constant 0 : i32
    %456 = tpu.memref_slice %arg11[%c2_i32_452, %c4_i32_454, %c0_i32_455] : memref<8x8x128xf32, #tpu.memory_space<vmem>> -> memref<1x1x128xf32, #tpu.memory_space<vmem>>
    %457 = tpu.memref_squeeze %456 : memref<1x1x128xf32, #tpu.memory_space<vmem>> -> memref<1x128xf32, #tpu.memory_space<vmem>>
    tpu.wait_dma2 semaphore(%arg12 : memref<!tpu.dma_semaphore, #tpu.memory_space<semaphore_mem>>) src(%455 : memref<1x128xf32, #tpu.memory_space<any>>) dst(%457 : memref<1x128xf32, #tpu.memory_space<vmem>>)
    %c2_i32_456 = arith.constant 2 : i32
    %c0_i32_457 = arith.constant 0 : i32
    %458 = tpu.memref_slice %arg3[%129, %c0_i32_457] : memref<32x128xf32, #tpu.memory_space<any>> -> memref<1x128xf32, #tpu.memory_space<any>>
    %c5_i32_458 = arith.constant 5 : i32
    %c0_i32_459 = arith.constant 0 : i32
    %459 = tpu.memref_slice %arg11[%c2_i32_456, %c5_i32_458, %c0_i32_459] : memref<8x8x128xf32, #tpu.memory_space<vmem>> -> memref<1x1x128xf32, #tpu.memory_space<vmem>>
    %460 = tpu.memref_squeeze %459 : memref<1x1x128xf32, #tpu.memory_space<vmem>> -> memref<1x128xf32, #tpu.memory_space<vmem>>
    tpu.wait_dma2 semaphore(%arg12 : memref<!tpu.dma_semaphore, #tpu.memory_space<semaphore_mem>>) src(%458 : memref<1x128xf32, #tpu.memory_space<any>>) dst(%460 : memref<1x128xf32, #tpu.memory_space<vmem>>)
    %c2_i32_460 = arith.constant 2 : i32
    %c0_i32_461 = arith.constant 0 : i32
    %461 = tpu.memref_slice %arg3[%135, %c0_i32_461] : memref<32x128xf32, #tpu.memory_space<any>> -> memref<1x128xf32, #tpu.memory_space<any>>
    %c6_i32_462 = arith.constant 6 : i32
    %c0_i32_463 = arith.constant 0 : i32
    %462 = tpu.memref_slice %arg11[%c2_i32_460, %c6_i32_462, %c0_i32_463] : memref<8x8x128xf32, #tpu.memory_space<vmem>> -> memref<1x1x128xf32, #tpu.memory_space<vmem>>
    %463 = tpu.memref_squeeze %462 : memref<1x1x128xf32, #tpu.memory_space<vmem>> -> memref<1x128xf32, #tpu.memory_space<vmem>>
    tpu.wait_dma2 semaphore(%arg12 : memref<!tpu.dma_semaphore, #tpu.memory_space<semaphore_mem>>) src(%461 : memref<1x128xf32, #tpu.memory_space<any>>) dst(%463 : memref<1x128xf32, #tpu.memory_space<vmem>>)
    %c2_i32_464 = arith.constant 2 : i32
    %c0_i32_465 = arith.constant 0 : i32
    %464 = tpu.memref_slice %arg3[%141, %c0_i32_465] : memref<32x128xf32, #tpu.memory_space<any>> -> memref<1x128xf32, #tpu.memory_space<any>>
    %c7_i32_466 = arith.constant 7 : i32
    %c0_i32_467 = arith.constant 0 : i32
    %465 = tpu.memref_slice %arg11[%c2_i32_464, %c7_i32_466, %c0_i32_467] : memref<8x8x128xf32, #tpu.memory_space<vmem>> -> memref<1x1x128xf32, #tpu.memory_space<vmem>>
    %466 = tpu.memref_squeeze %465 : memref<1x1x128xf32, #tpu.memory_space<vmem>> -> memref<1x128xf32, #tpu.memory_space<vmem>>
    tpu.wait_dma2 semaphore(%arg12 : memref<!tpu.dma_semaphore, #tpu.memory_space<semaphore_mem>>) src(%464 : memref<1x128xf32, #tpu.memory_space<any>>) dst(%466 : memref<1x128xf32, #tpu.memory_space<vmem>>)
    %c3_i32_468 = arith.constant 3 : i32
    %c0_i32_469 = arith.constant 0 : i32
    %467 = tpu.memref_slice %arg3[%147, %c0_i32_469] : memref<32x128xf32, #tpu.memory_space<any>> -> memref<1x128xf32, #tpu.memory_space<any>>
    %c0_i32_470 = arith.constant 0 : i32
    %c0_i32_471 = arith.constant 0 : i32
    %468 = tpu.memref_slice %arg11[%c3_i32_468, %c0_i32_470, %c0_i32_471] : memref<8x8x128xf32, #tpu.memory_space<vmem>> -> memref<1x1x128xf32, #tpu.memory_space<vmem>>
    %469 = tpu.memref_squeeze %468 : memref<1x1x128xf32, #tpu.memory_space<vmem>> -> memref<1x128xf32, #tpu.memory_space<vmem>>
    tpu.wait_dma2 semaphore(%arg12 : memref<!tpu.dma_semaphore, #tpu.memory_space<semaphore_mem>>) src(%467 : memref<1x128xf32, #tpu.memory_space<any>>) dst(%469 : memref<1x128xf32, #tpu.memory_space<vmem>>)
    %c3_i32_472 = arith.constant 3 : i32
    %c0_i32_473 = arith.constant 0 : i32
    %470 = tpu.memref_slice %arg3[%153, %c0_i32_473] : memref<32x128xf32, #tpu.memory_space<any>> -> memref<1x128xf32, #tpu.memory_space<any>>
    %c1_i32_474 = arith.constant 1 : i32
    %c0_i32_475 = arith.constant 0 : i32
    %471 = tpu.memref_slice %arg11[%c3_i32_472, %c1_i32_474, %c0_i32_475] : memref<8x8x128xf32, #tpu.memory_space<vmem>> -> memref<1x1x128xf32, #tpu.memory_space<vmem>>
    %472 = tpu.memref_squeeze %471 : memref<1x1x128xf32, #tpu.memory_space<vmem>> -> memref<1x128xf32, #tpu.memory_space<vmem>>
    tpu.wait_dma2 semaphore(%arg12 : memref<!tpu.dma_semaphore, #tpu.memory_space<semaphore_mem>>) src(%470 : memref<1x128xf32, #tpu.memory_space<any>>) dst(%472 : memref<1x128xf32, #tpu.memory_space<vmem>>)
    %c3_i32_476 = arith.constant 3 : i32
    %c0_i32_477 = arith.constant 0 : i32
    %473 = tpu.memref_slice %arg3[%159, %c0_i32_477] : memref<32x128xf32, #tpu.memory_space<any>> -> memref<1x128xf32, #tpu.memory_space<any>>
    %c2_i32_478 = arith.constant 2 : i32
    %c0_i32_479 = arith.constant 0 : i32
    %474 = tpu.memref_slice %arg11[%c3_i32_476, %c2_i32_478, %c0_i32_479] : memref<8x8x128xf32, #tpu.memory_space<vmem>> -> memref<1x1x128xf32, #tpu.memory_space<vmem>>
    %475 = tpu.memref_squeeze %474 : memref<1x1x128xf32, #tpu.memory_space<vmem>> -> memref<1x128xf32, #tpu.memory_space<vmem>>
    tpu.wait_dma2 semaphore(%arg12 : memref<!tpu.dma_semaphore, #tpu.memory_space<semaphore_mem>>) src(%473 : memref<1x128xf32, #tpu.memory_space<any>>) dst(%475 : memref<1x128xf32, #tpu.memory_space<vmem>>)
    %c3_i32_480 = arith.constant 3 : i32
    %c0_i32_481 = arith.constant 0 : i32
    %476 = tpu.memref_slice %arg3[%165, %c0_i32_481] : memref<32x128xf32, #tpu.memory_space<any>> -> memref<1x128xf32, #tpu.memory_space<any>>
    %c3_i32_482 = arith.constant 3 : i32
    %c0_i32_483 = arith.constant 0 : i32
    %477 = tpu.memref_slice %arg11[%c3_i32_480, %c3_i32_482, %c0_i32_483] : memref<8x8x128xf32, #tpu.memory_space<vmem>> -> memref<1x1x128xf32, #tpu.memory_space<vmem>>
    %478 = tpu.memref_squeeze %477 : memref<1x1x128xf32, #tpu.memory_space<vmem>> -> memref<1x128xf32, #tpu.memory_space<vmem>>
    tpu.wait_dma2 semaphore(%arg12 : memref<!tpu.dma_semaphore, #tpu.memory_space<semaphore_mem>>) src(%476 : memref<1x128xf32, #tpu.memory_space<any>>) dst(%478 : memref<1x128xf32, #tpu.memory_space<vmem>>)
    %c3_i32_484 = arith.constant 3 : i32
    %c0_i32_485 = arith.constant 0 : i32
    %479 = tpu.memref_slice %arg3[%171, %c0_i32_485] : memref<32x128xf32, #tpu.memory_space<any>> -> memref<1x128xf32, #tpu.memory_space<any>>
    %c4_i32_486 = arith.constant 4 : i32
    %c0_i32_487 = arith.constant 0 : i32
    %480 = tpu.memref_slice %arg11[%c3_i32_484, %c4_i32_486, %c0_i32_487] : memref<8x8x128xf32, #tpu.memory_space<vmem>> -> memref<1x1x128xf32, #tpu.memory_space<vmem>>
    %481 = tpu.memref_squeeze %480 : memref<1x1x128xf32, #tpu.memory_space<vmem>> -> memref<1x128xf32, #tpu.memory_space<vmem>>
    tpu.wait_dma2 semaphore(%arg12 : memref<!tpu.dma_semaphore, #tpu.memory_space<semaphore_mem>>) src(%479 : memref<1x128xf32, #tpu.memory_space<any>>) dst(%481 : memref<1x128xf32, #tpu.memory_space<vmem>>)
    %c3_i32_488 = arith.constant 3 : i32
    %c0_i32_489 = arith.constant 0 : i32
    %482 = tpu.memref_slice %arg3[%177, %c0_i32_489] : memref<32x128xf32, #tpu.memory_space<any>> -> memref<1x128xf32, #tpu.memory_space<any>>
    %c5_i32_490 = arith.constant 5 : i32
    %c0_i32_491 = arith.constant 0 : i32
    %483 = tpu.memref_slice %arg11[%c3_i32_488, %c5_i32_490, %c0_i32_491] : memref<8x8x128xf32, #tpu.memory_space<vmem>> -> memref<1x1x128xf32, #tpu.memory_space<vmem>>
    %484 = tpu.memref_squeeze %483 : memref<1x1x128xf32, #tpu.memory_space<vmem>> -> memref<1x128xf32, #tpu.memory_space<vmem>>
    tpu.wait_dma2 semaphore(%arg12 : memref<!tpu.dma_semaphore, #tpu.memory_space<semaphore_mem>>) src(%482 : memref<1x128xf32, #tpu.memory_space<any>>) dst(%484 : memref<1x128xf32, #tpu.memory_space<vmem>>)
    %c3_i32_492 = arith.constant 3 : i32
    %c0_i32_493 = arith.constant 0 : i32
    %485 = tpu.memref_slice %arg3[%183, %c0_i32_493] : memref<32x128xf32, #tpu.memory_space<any>> -> memref<1x128xf32, #tpu.memory_space<any>>
    %c6_i32_494 = arith.constant 6 : i32
    %c0_i32_495 = arith.constant 0 : i32
    %486 = tpu.memref_slice %arg11[%c3_i32_492, %c6_i32_494, %c0_i32_495] : memref<8x8x128xf32, #tpu.memory_space<vmem>> -> memref<1x1x128xf32, #tpu.memory_space<vmem>>
    %487 = tpu.memref_squeeze %486 : memref<1x1x128xf32, #tpu.memory_space<vmem>> -> memref<1x128xf32, #tpu.memory_space<vmem>>
    tpu.wait_dma2 semaphore(%arg12 : memref<!tpu.dma_semaphore, #tpu.memory_space<semaphore_mem>>) src(%485 : memref<1x128xf32, #tpu.memory_space<any>>) dst(%487 : memref<1x128xf32, #tpu.memory_space<vmem>>)
    %c3_i32_496 = arith.constant 3 : i32
    %c0_i32_497 = arith.constant 0 : i32
    %488 = tpu.memref_slice %arg3[%189, %c0_i32_497] : memref<32x128xf32, #tpu.memory_space<any>> -> memref<1x128xf32, #tpu.memory_space<any>>
    %c7_i32_498 = arith.constant 7 : i32
    %c0_i32_499 = arith.constant 0 : i32
    %489 = tpu.memref_slice %arg11[%c3_i32_496, %c7_i32_498, %c0_i32_499] : memref<8x8x128xf32, #tpu.memory_space<vmem>> -> memref<1x1x128xf32, #tpu.memory_space<vmem>>
    %490 = tpu.memref_squeeze %489 : memref<1x1x128xf32, #tpu.memory_space<vmem>> -> memref<1x128xf32, #tpu.memory_space<vmem>>
    tpu.wait_dma2 semaphore(%arg12 : memref<!tpu.dma_semaphore, #tpu.memory_space<semaphore_mem>>) src(%488 : memref<1x128xf32, #tpu.memory_space<any>>) dst(%490 : memref<1x128xf32, #tpu.memory_space<vmem>>)
    %c4_i32_500 = arith.constant 4 : i32
    %c0_i32_501 = arith.constant 0 : i32
    %491 = tpu.memref_slice %arg3[%195, %c0_i32_501] : memref<32x128xf32, #tpu.memory_space<any>> -> memref<1x128xf32, #tpu.memory_space<any>>
    %c0_i32_502 = arith.constant 0 : i32
    %c0_i32_503 = arith.constant 0 : i32
    %492 = tpu.memref_slice %arg11[%c4_i32_500, %c0_i32_502, %c0_i32_503] : memref<8x8x128xf32, #tpu.memory_space<vmem>> -> memref<1x1x128xf32, #tpu.memory_space<vmem>>
    %493 = tpu.memref_squeeze %492 : memref<1x1x128xf32, #tpu.memory_space<vmem>> -> memref<1x128xf32, #tpu.memory_space<vmem>>
    tpu.wait_dma2 semaphore(%arg12 : memref<!tpu.dma_semaphore, #tpu.memory_space<semaphore_mem>>) src(%491 : memref<1x128xf32, #tpu.memory_space<any>>) dst(%493 : memref<1x128xf32, #tpu.memory_space<vmem>>)
    %c4_i32_504 = arith.constant 4 : i32
    %c0_i32_505 = arith.constant 0 : i32
    %494 = tpu.memref_slice %arg3[%201, %c0_i32_505] : memref<32x128xf32, #tpu.memory_space<any>> -> memref<1x128xf32, #tpu.memory_space<any>>
    %c1_i32_506 = arith.constant 1 : i32
    %c0_i32_507 = arith.constant 0 : i32
    %495 = tpu.memref_slice %arg11[%c4_i32_504, %c1_i32_506, %c0_i32_507] : memref<8x8x128xf32, #tpu.memory_space<vmem>> -> memref<1x1x128xf32, #tpu.memory_space<vmem>>
    %496 = tpu.memref_squeeze %495 : memref<1x1x128xf32, #tpu.memory_space<vmem>> -> memref<1x128xf32, #tpu.memory_space<vmem>>
    tpu.wait_dma2 semaphore(%arg12 : memref<!tpu.dma_semaphore, #tpu.memory_space<semaphore_mem>>) src(%494 : memref<1x128xf32, #tpu.memory_space<any>>) dst(%496 : memref<1x128xf32, #tpu.memory_space<vmem>>)
    %c4_i32_508 = arith.constant 4 : i32
    %c0_i32_509 = arith.constant 0 : i32
    %497 = tpu.memref_slice %arg3[%207, %c0_i32_509] : memref<32x128xf32, #tpu.memory_space<any>> -> memref<1x128xf32, #tpu.memory_space<any>>
    %c2_i32_510 = arith.constant 2 : i32
    %c0_i32_511 = arith.constant 0 : i32
    %498 = tpu.memref_slice %arg11[%c4_i32_508, %c2_i32_510, %c0_i32_511] : memref<8x8x128xf32, #tpu.memory_space<vmem>> -> memref<1x1x128xf32, #tpu.memory_space<vmem>>
    %499 = tpu.memref_squeeze %498 : memref<1x1x128xf32, #tpu.memory_space<vmem>> -> memref<1x128xf32, #tpu.memory_space<vmem>>
    tpu.wait_dma2 semaphore(%arg12 : memref<!tpu.dma_semaphore, #tpu.memory_space<semaphore_mem>>) src(%497 : memref<1x128xf32, #tpu.memory_space<any>>) dst(%499 : memref<1x128xf32, #tpu.memory_space<vmem>>)
    %c4_i32_512 = arith.constant 4 : i32
    %c0_i32_513 = arith.constant 0 : i32
    %500 = tpu.memref_slice %arg3[%213, %c0_i32_513] : memref<32x128xf32, #tpu.memory_space<any>> -> memref<1x128xf32, #tpu.memory_space<any>>
    %c3_i32_514 = arith.constant 3 : i32
    %c0_i32_515 = arith.constant 0 : i32
    %501 = tpu.memref_slice %arg11[%c4_i32_512, %c3_i32_514, %c0_i32_515] : memref<8x8x128xf32, #tpu.memory_space<vmem>> -> memref<1x1x128xf32, #tpu.memory_space<vmem>>
    %502 = tpu.memref_squeeze %501 : memref<1x1x128xf32, #tpu.memory_space<vmem>> -> memref<1x128xf32, #tpu.memory_space<vmem>>
    tpu.wait_dma2 semaphore(%arg12 : memref<!tpu.dma_semaphore, #tpu.memory_space<semaphore_mem>>) src(%500 : memref<1x128xf32, #tpu.memory_space<any>>) dst(%502 : memref<1x128xf32, #tpu.memory_space<vmem>>)
    %c4_i32_516 = arith.constant 4 : i32
    %c0_i32_517 = arith.constant 0 : i32
    %503 = tpu.memref_slice %arg3[%219, %c0_i32_517] : memref<32x128xf32, #tpu.memory_space<any>> -> memref<1x128xf32, #tpu.memory_space<any>>
    %c4_i32_518 = arith.constant 4 : i32
    %c0_i32_519 = arith.constant 0 : i32
    %504 = tpu.memref_slice %arg11[%c4_i32_516, %c4_i32_518, %c0_i32_519] : memref<8x8x128xf32, #tpu.memory_space<vmem>> -> memref<1x1x128xf32, #tpu.memory_space<vmem>>
    %505 = tpu.memref_squeeze %504 : memref<1x1x128xf32, #tpu.memory_space<vmem>> -> memref<1x128xf32, #tpu.memory_space<vmem>>
    tpu.wait_dma2 semaphore(%arg12 : memref<!tpu.dma_semaphore, #tpu.memory_space<semaphore_mem>>) src(%503 : memref<1x128xf32, #tpu.memory_space<any>>) dst(%505 : memref<1x128xf32, #tpu.memory_space<vmem>>)
    %c4_i32_520 = arith.constant 4 : i32
    %c0_i32_521 = arith.constant 0 : i32
    %506 = tpu.memref_slice %arg3[%225, %c0_i32_521] : memref<32x128xf32, #tpu.memory_space<any>> -> memref<1x128xf32, #tpu.memory_space<any>>
    %c5_i32_522 = arith.constant 5 : i32
    %c0_i32_523 = arith.constant 0 : i32
    %507 = tpu.memref_slice %arg11[%c4_i32_520, %c5_i32_522, %c0_i32_523] : memref<8x8x128xf32, #tpu.memory_space<vmem>> -> memref<1x1x128xf32, #tpu.memory_space<vmem>>
    %508 = tpu.memref_squeeze %507 : memref<1x1x128xf32, #tpu.memory_space<vmem>> -> memref<1x128xf32, #tpu.memory_space<vmem>>
    tpu.wait_dma2 semaphore(%arg12 : memref<!tpu.dma_semaphore, #tpu.memory_space<semaphore_mem>>) src(%506 : memref<1x128xf32, #tpu.memory_space<any>>) dst(%508 : memref<1x128xf32, #tpu.memory_space<vmem>>)
    %c4_i32_524 = arith.constant 4 : i32
    %c0_i32_525 = arith.constant 0 : i32
    %509 = tpu.memref_slice %arg3[%231, %c0_i32_525] : memref<32x128xf32, #tpu.memory_space<any>> -> memref<1x128xf32, #tpu.memory_space<any>>
    %c6_i32_526 = arith.constant 6 : i32
    %c0_i32_527 = arith.constant 0 : i32
    %510 = tpu.memref_slice %arg11[%c4_i32_524, %c6_i32_526, %c0_i32_527] : memref<8x8x128xf32, #tpu.memory_space<vmem>> -> memref<1x1x128xf32, #tpu.memory_space<vmem>>
    %511 = tpu.memref_squeeze %510 : memref<1x1x128xf32, #tpu.memory_space<vmem>> -> memref<1x128xf32, #tpu.memory_space<vmem>>
    tpu.wait_dma2 semaphore(%arg12 : memref<!tpu.dma_semaphore, #tpu.memory_space<semaphore_mem>>) src(%509 : memref<1x128xf32, #tpu.memory_space<any>>) dst(%511 : memref<1x128xf32, #tpu.memory_space<vmem>>)
    %c4_i32_528 = arith.constant 4 : i32
    %c0_i32_529 = arith.constant 0 : i32
    %512 = tpu.memref_slice %arg3[%237, %c0_i32_529] : memref<32x128xf32, #tpu.memory_space<any>> -> memref<1x128xf32, #tpu.memory_space<any>>
    %c7_i32_530 = arith.constant 7 : i32
    %c0_i32_531 = arith.constant 0 : i32
    %513 = tpu.memref_slice %arg11[%c4_i32_528, %c7_i32_530, %c0_i32_531] : memref<8x8x128xf32, #tpu.memory_space<vmem>> -> memref<1x1x128xf32, #tpu.memory_space<vmem>>
    %514 = tpu.memref_squeeze %513 : memref<1x1x128xf32, #tpu.memory_space<vmem>> -> memref<1x128xf32, #tpu.memory_space<vmem>>
    tpu.wait_dma2 semaphore(%arg12 : memref<!tpu.dma_semaphore, #tpu.memory_space<semaphore_mem>>) src(%512 : memref<1x128xf32, #tpu.memory_space<any>>) dst(%514 : memref<1x128xf32, #tpu.memory_space<vmem>>)
    %c5_i32_532 = arith.constant 5 : i32
    %c0_i32_533 = arith.constant 0 : i32
    %515 = tpu.memref_slice %arg3[%243, %c0_i32_533] : memref<32x128xf32, #tpu.memory_space<any>> -> memref<1x128xf32, #tpu.memory_space<any>>
    %c0_i32_534 = arith.constant 0 : i32
    %c0_i32_535 = arith.constant 0 : i32
    %516 = tpu.memref_slice %arg11[%c5_i32_532, %c0_i32_534, %c0_i32_535] : memref<8x8x128xf32, #tpu.memory_space<vmem>> -> memref<1x1x128xf32, #tpu.memory_space<vmem>>
    %517 = tpu.memref_squeeze %516 : memref<1x1x128xf32, #tpu.memory_space<vmem>> -> memref<1x128xf32, #tpu.memory_space<vmem>>
    tpu.wait_dma2 semaphore(%arg12 : memref<!tpu.dma_semaphore, #tpu.memory_space<semaphore_mem>>) src(%515 : memref<1x128xf32, #tpu.memory_space<any>>) dst(%517 : memref<1x128xf32, #tpu.memory_space<vmem>>)
    %c5_i32_536 = arith.constant 5 : i32
    %c0_i32_537 = arith.constant 0 : i32
    %518 = tpu.memref_slice %arg3[%249, %c0_i32_537] : memref<32x128xf32, #tpu.memory_space<any>> -> memref<1x128xf32, #tpu.memory_space<any>>
    %c1_i32_538 = arith.constant 1 : i32
    %c0_i32_539 = arith.constant 0 : i32
    %519 = tpu.memref_slice %arg11[%c5_i32_536, %c1_i32_538, %c0_i32_539] : memref<8x8x128xf32, #tpu.memory_space<vmem>> -> memref<1x1x128xf32, #tpu.memory_space<vmem>>
    %520 = tpu.memref_squeeze %519 : memref<1x1x128xf32, #tpu.memory_space<vmem>> -> memref<1x128xf32, #tpu.memory_space<vmem>>
    tpu.wait_dma2 semaphore(%arg12 : memref<!tpu.dma_semaphore, #tpu.memory_space<semaphore_mem>>) src(%518 : memref<1x128xf32, #tpu.memory_space<any>>) dst(%520 : memref<1x128xf32, #tpu.memory_space<vmem>>)
    %c5_i32_540 = arith.constant 5 : i32
    %c0_i32_541 = arith.constant 0 : i32
    %521 = tpu.memref_slice %arg3[%255, %c0_i32_541] : memref<32x128xf32, #tpu.memory_space<any>> -> memref<1x128xf32, #tpu.memory_space<any>>
    %c2_i32_542 = arith.constant 2 : i32
    %c0_i32_543 = arith.constant 0 : i32
    %522 = tpu.memref_slice %arg11[%c5_i32_540, %c2_i32_542, %c0_i32_543] : memref<8x8x128xf32, #tpu.memory_space<vmem>> -> memref<1x1x128xf32, #tpu.memory_space<vmem>>
    %523 = tpu.memref_squeeze %522 : memref<1x1x128xf32, #tpu.memory_space<vmem>> -> memref<1x128xf32, #tpu.memory_space<vmem>>
    tpu.wait_dma2 semaphore(%arg12 : memref<!tpu.dma_semaphore, #tpu.memory_space<semaphore_mem>>) src(%521 : memref<1x128xf32, #tpu.memory_space<any>>) dst(%523 : memref<1x128xf32, #tpu.memory_space<vmem>>)
    %c5_i32_544 = arith.constant 5 : i32
    %c0_i32_545 = arith.constant 0 : i32
    %524 = tpu.memref_slice %arg3[%261, %c0_i32_545] : memref<32x128xf32, #tpu.memory_space<any>> -> memref<1x128xf32, #tpu.memory_space<any>>
    %c3_i32_546 = arith.constant 3 : i32
    %c0_i32_547 = arith.constant 0 : i32
    %525 = tpu.memref_slice %arg11[%c5_i32_544, %c3_i32_546, %c0_i32_547] : memref<8x8x128xf32, #tpu.memory_space<vmem>> -> memref<1x1x128xf32, #tpu.memory_space<vmem>>
    %526 = tpu.memref_squeeze %525 : memref<1x1x128xf32, #tpu.memory_space<vmem>> -> memref<1x128xf32, #tpu.memory_space<vmem>>
    tpu.wait_dma2 semaphore(%arg12 : memref<!tpu.dma_semaphore, #tpu.memory_space<semaphore_mem>>) src(%524 : memref<1x128xf32, #tpu.memory_space<any>>) dst(%526 : memref<1x128xf32, #tpu.memory_space<vmem>>)
    %c5_i32_548 = arith.constant 5 : i32
    %c0_i32_549 = arith.constant 0 : i32
    %527 = tpu.memref_slice %arg3[%267, %c0_i32_549] : memref<32x128xf32, #tpu.memory_space<any>> -> memref<1x128xf32, #tpu.memory_space<any>>
    %c4_i32_550 = arith.constant 4 : i32
    %c0_i32_551 = arith.constant 0 : i32
    %528 = tpu.memref_slice %arg11[%c5_i32_548, %c4_i32_550, %c0_i32_551] : memref<8x8x128xf32, #tpu.memory_space<vmem>> -> memref<1x1x128xf32, #tpu.memory_space<vmem>>
    %529 = tpu.memref_squeeze %528 : memref<1x1x128xf32, #tpu.memory_space<vmem>> -> memref<1x128xf32, #tpu.memory_space<vmem>>
    tpu.wait_dma2 semaphore(%arg12 : memref<!tpu.dma_semaphore, #tpu.memory_space<semaphore_mem>>) src(%527 : memref<1x128xf32, #tpu.memory_space<any>>) dst(%529 : memref<1x128xf32, #tpu.memory_space<vmem>>)
    %c5_i32_552 = arith.constant 5 : i32
    %c0_i32_553 = arith.constant 0 : i32
    %530 = tpu.memref_slice %arg3[%273, %c0_i32_553] : memref<32x128xf32, #tpu.memory_space<any>> -> memref<1x128xf32, #tpu.memory_space<any>>
    %c5_i32_554 = arith.constant 5 : i32
    %c0_i32_555 = arith.constant 0 : i32
    %531 = tpu.memref_slice %arg11[%c5_i32_552, %c5_i32_554, %c0_i32_555] : memref<8x8x128xf32, #tpu.memory_space<vmem>> -> memref<1x1x128xf32, #tpu.memory_space<vmem>>
    %532 = tpu.memref_squeeze %531 : memref<1x1x128xf32, #tpu.memory_space<vmem>> -> memref<1x128xf32, #tpu.memory_space<vmem>>
    tpu.wait_dma2 semaphore(%arg12 : memref<!tpu.dma_semaphore, #tpu.memory_space<semaphore_mem>>) src(%530 : memref<1x128xf32, #tpu.memory_space<any>>) dst(%532 : memref<1x128xf32, #tpu.memory_space<vmem>>)
    %c5_i32_556 = arith.constant 5 : i32
    %c0_i32_557 = arith.constant 0 : i32
    %533 = tpu.memref_slice %arg3[%279, %c0_i32_557] : memref<32x128xf32, #tpu.memory_space<any>> -> memref<1x128xf32, #tpu.memory_space<any>>
    %c6_i32_558 = arith.constant 6 : i32
    %c0_i32_559 = arith.constant 0 : i32
    %534 = tpu.memref_slice %arg11[%c5_i32_556, %c6_i32_558, %c0_i32_559] : memref<8x8x128xf32, #tpu.memory_space<vmem>> -> memref<1x1x128xf32, #tpu.memory_space<vmem>>
    %535 = tpu.memref_squeeze %534 : memref<1x1x128xf32, #tpu.memory_space<vmem>> -> memref<1x128xf32, #tpu.memory_space<vmem>>
    tpu.wait_dma2 semaphore(%arg12 : memref<!tpu.dma_semaphore, #tpu.memory_space<semaphore_mem>>) src(%533 : memref<1x128xf32, #tpu.memory_space<any>>) dst(%535 : memref<1x128xf32, #tpu.memory_space<vmem>>)
    %c5_i32_560 = arith.constant 5 : i32
    %c0_i32_561 = arith.constant 0 : i32
    %536 = tpu.memref_slice %arg3[%285, %c0_i32_561] : memref<32x128xf32, #tpu.memory_space<any>> -> memref<1x128xf32, #tpu.memory_space<any>>
    %c7_i32_562 = arith.constant 7 : i32
    %c0_i32_563 = arith.constant 0 : i32
    %537 = tpu.memref_slice %arg11[%c5_i32_560, %c7_i32_562, %c0_i32_563] : memref<8x8x128xf32, #tpu.memory_space<vmem>> -> memref<1x1x128xf32, #tpu.memory_space<vmem>>
    %538 = tpu.memref_squeeze %537 : memref<1x1x128xf32, #tpu.memory_space<vmem>> -> memref<1x128xf32, #tpu.memory_space<vmem>>
    tpu.wait_dma2 semaphore(%arg12 : memref<!tpu.dma_semaphore, #tpu.memory_space<semaphore_mem>>) src(%536 : memref<1x128xf32, #tpu.memory_space<any>>) dst(%538 : memref<1x128xf32, #tpu.memory_space<vmem>>)
    %c6_i32_564 = arith.constant 6 : i32
    %c0_i32_565 = arith.constant 0 : i32
    %539 = tpu.memref_slice %arg3[%291, %c0_i32_565] : memref<32x128xf32, #tpu.memory_space<any>> -> memref<1x128xf32, #tpu.memory_space<any>>
    %c0_i32_566 = arith.constant 0 : i32
    %c0_i32_567 = arith.constant 0 : i32
    %540 = tpu.memref_slice %arg11[%c6_i32_564, %c0_i32_566, %c0_i32_567] : memref<8x8x128xf32, #tpu.memory_space<vmem>> -> memref<1x1x128xf32, #tpu.memory_space<vmem>>
    %541 = tpu.memref_squeeze %540 : memref<1x1x128xf32, #tpu.memory_space<vmem>> -> memref<1x128xf32, #tpu.memory_space<vmem>>
    tpu.wait_dma2 semaphore(%arg12 : memref<!tpu.dma_semaphore, #tpu.memory_space<semaphore_mem>>) src(%539 : memref<1x128xf32, #tpu.memory_space<any>>) dst(%541 : memref<1x128xf32, #tpu.memory_space<vmem>>)
    %c6_i32_568 = arith.constant 6 : i32
    %c0_i32_569 = arith.constant 0 : i32
    %542 = tpu.memref_slice %arg3[%297, %c0_i32_569] : memref<32x128xf32, #tpu.memory_space<any>> -> memref<1x128xf32, #tpu.memory_space<any>>
    %c1_i32_570 = arith.constant 1 : i32
    %c0_i32_571 = arith.constant 0 : i32
    %543 = tpu.memref_slice %arg11[%c6_i32_568, %c1_i32_570, %c0_i32_571] : memref<8x8x128xf32, #tpu.memory_space<vmem>> -> memref<1x1x128xf32, #tpu.memory_space<vmem>>
    %544 = tpu.memref_squeeze %543 : memref<1x1x128xf32, #tpu.memory_space<vmem>> -> memref<1x128xf32, #tpu.memory_space<vmem>>
    tpu.wait_dma2 semaphore(%arg12 : memref<!tpu.dma_semaphore, #tpu.memory_space<semaphore_mem>>) src(%542 : memref<1x128xf32, #tpu.memory_space<any>>) dst(%544 : memref<1x128xf32, #tpu.memory_space<vmem>>)
    %c6_i32_572 = arith.constant 6 : i32
    %c0_i32_573 = arith.constant 0 : i32
    %545 = tpu.memref_slice %arg3[%303, %c0_i32_573] : memref<32x128xf32, #tpu.memory_space<any>> -> memref<1x128xf32, #tpu.memory_space<any>>
    %c2_i32_574 = arith.constant 2 : i32
    %c0_i32_575 = arith.constant 0 : i32
    %546 = tpu.memref_slice %arg11[%c6_i32_572, %c2_i32_574, %c0_i32_575] : memref<8x8x128xf32, #tpu.memory_space<vmem>> -> memref<1x1x128xf32, #tpu.memory_space<vmem>>
    %547 = tpu.memref_squeeze %546 : memref<1x1x128xf32, #tpu.memory_space<vmem>> -> memref<1x128xf32, #tpu.memory_space<vmem>>
    tpu.wait_dma2 semaphore(%arg12 : memref<!tpu.dma_semaphore, #tpu.memory_space<semaphore_mem>>) src(%545 : memref<1x128xf32, #tpu.memory_space<any>>) dst(%547 : memref<1x128xf32, #tpu.memory_space<vmem>>)
    %c6_i32_576 = arith.constant 6 : i32
    %c0_i32_577 = arith.constant 0 : i32
    %548 = tpu.memref_slice %arg3[%309, %c0_i32_577] : memref<32x128xf32, #tpu.memory_space<any>> -> memref<1x128xf32, #tpu.memory_space<any>>
    %c3_i32_578 = arith.constant 3 : i32
    %c0_i32_579 = arith.constant 0 : i32
    %549 = tpu.memref_slice %arg11[%c6_i32_576, %c3_i32_578, %c0_i32_579] : memref<8x8x128xf32, #tpu.memory_space<vmem>> -> memref<1x1x128xf32, #tpu.memory_space<vmem>>
    %550 = tpu.memref_squeeze %549 : memref<1x1x128xf32, #tpu.memory_space<vmem>> -> memref<1x128xf32, #tpu.memory_space<vmem>>
    tpu.wait_dma2 semaphore(%arg12 : memref<!tpu.dma_semaphore, #tpu.memory_space<semaphore_mem>>) src(%548 : memref<1x128xf32, #tpu.memory_space<any>>) dst(%550 : memref<1x128xf32, #tpu.memory_space<vmem>>)
    %c6_i32_580 = arith.constant 6 : i32
    %c0_i32_581 = arith.constant 0 : i32
    %551 = tpu.memref_slice %arg3[%315, %c0_i32_581] : memref<32x128xf32, #tpu.memory_space<any>> -> memref<1x128xf32, #tpu.memory_space<any>>
    %c4_i32_582 = arith.constant 4 : i32
    %c0_i32_583 = arith.constant 0 : i32
    %552 = tpu.memref_slice %arg11[%c6_i32_580, %c4_i32_582, %c0_i32_583] : memref<8x8x128xf32, #tpu.memory_space<vmem>> -> memref<1x1x128xf32, #tpu.memory_space<vmem>>
    %553 = tpu.memref_squeeze %552 : memref<1x1x128xf32, #tpu.memory_space<vmem>> -> memref<1x128xf32, #tpu.memory_space<vmem>>
    tpu.wait_dma2 semaphore(%arg12 : memref<!tpu.dma_semaphore, #tpu.memory_space<semaphore_mem>>) src(%551 : memref<1x128xf32, #tpu.memory_space<any>>) dst(%553 : memref<1x128xf32, #tpu.memory_space<vmem>>)
    %c6_i32_584 = arith.constant 6 : i32
    %c0_i32_585 = arith.constant 0 : i32
    %554 = tpu.memref_slice %arg3[%321, %c0_i32_585] : memref<32x128xf32, #tpu.memory_space<any>> -> memref<1x128xf32, #tpu.memory_space<any>>
    %c5_i32_586 = arith.constant 5 : i32
    %c0_i32_587 = arith.constant 0 : i32
    %555 = tpu.memref_slice %arg11[%c6_i32_584, %c5_i32_586, %c0_i32_587] : memref<8x8x128xf32, #tpu.memory_space<vmem>> -> memref<1x1x128xf32, #tpu.memory_space<vmem>>
    %556 = tpu.memref_squeeze %555 : memref<1x1x128xf32, #tpu.memory_space<vmem>> -> memref<1x128xf32, #tpu.memory_space<vmem>>
    tpu.wait_dma2 semaphore(%arg12 : memref<!tpu.dma_semaphore, #tpu.memory_space<semaphore_mem>>) src(%554 : memref<1x128xf32, #tpu.memory_space<any>>) dst(%556 : memref<1x128xf32, #tpu.memory_space<vmem>>)
    %c6_i32_588 = arith.constant 6 : i32
    %c0_i32_589 = arith.constant 0 : i32
    %557 = tpu.memref_slice %arg3[%327, %c0_i32_589] : memref<32x128xf32, #tpu.memory_space<any>> -> memref<1x128xf32, #tpu.memory_space<any>>
    %c6_i32_590 = arith.constant 6 : i32
    %c0_i32_591 = arith.constant 0 : i32
    %558 = tpu.memref_slice %arg11[%c6_i32_588, %c6_i32_590, %c0_i32_591] : memref<8x8x128xf32, #tpu.memory_space<vmem>> -> memref<1x1x128xf32, #tpu.memory_space<vmem>>
    %559 = tpu.memref_squeeze %558 : memref<1x1x128xf32, #tpu.memory_space<vmem>> -> memref<1x128xf32, #tpu.memory_space<vmem>>
    tpu.wait_dma2 semaphore(%arg12 : memref<!tpu.dma_semaphore, #tpu.memory_space<semaphore_mem>>) src(%557 : memref<1x128xf32, #tpu.memory_space<any>>) dst(%559 : memref<1x128xf32, #tpu.memory_space<vmem>>)
    %c6_i32_592 = arith.constant 6 : i32
    %c0_i32_593 = arith.constant 0 : i32
    %560 = tpu.memref_slice %arg3[%333, %c0_i32_593] : memref<32x128xf32, #tpu.memory_space<any>> -> memref<1x128xf32, #tpu.memory_space<any>>
    %c7_i32_594 = arith.constant 7 : i32
    %c0_i32_595 = arith.constant 0 : i32
    %561 = tpu.memref_slice %arg11[%c6_i32_592, %c7_i32_594, %c0_i32_595] : memref<8x8x128xf32, #tpu.memory_space<vmem>> -> memref<1x1x128xf32, #tpu.memory_space<vmem>>
    %562 = tpu.memref_squeeze %561 : memref<1x1x128xf32, #tpu.memory_space<vmem>> -> memref<1x128xf32, #tpu.memory_space<vmem>>
    tpu.wait_dma2 semaphore(%arg12 : memref<!tpu.dma_semaphore, #tpu.memory_space<semaphore_mem>>) src(%560 : memref<1x128xf32, #tpu.memory_space<any>>) dst(%562 : memref<1x128xf32, #tpu.memory_space<vmem>>)
    %c7_i32_596 = arith.constant 7 : i32
    %c0_i32_597 = arith.constant 0 : i32
    %563 = tpu.memref_slice %arg3[%339, %c0_i32_597] : memref<32x128xf32, #tpu.memory_space<any>> -> memref<1x128xf32, #tpu.memory_space<any>>
    %c0_i32_598 = arith.constant 0 : i32
    %c0_i32_599 = arith.constant 0 : i32
    %564 = tpu.memref_slice %arg11[%c7_i32_596, %c0_i32_598, %c0_i32_599] : memref<8x8x128xf32, #tpu.memory_space<vmem>> -> memref<1x1x128xf32, #tpu.memory_space<vmem>>
    %565 = tpu.memref_squeeze %564 : memref<1x1x128xf32, #tpu.memory_space<vmem>> -> memref<1x128xf32, #tpu.memory_space<vmem>>
    tpu.wait_dma2 semaphore(%arg12 : memref<!tpu.dma_semaphore, #tpu.memory_space<semaphore_mem>>) src(%563 : memref<1x128xf32, #tpu.memory_space<any>>) dst(%565 : memref<1x128xf32, #tpu.memory_space<vmem>>)
    %c7_i32_600 = arith.constant 7 : i32
    %c0_i32_601 = arith.constant 0 : i32
    %566 = tpu.memref_slice %arg3[%345, %c0_i32_601] : memref<32x128xf32, #tpu.memory_space<any>> -> memref<1x128xf32, #tpu.memory_space<any>>
    %c1_i32_602 = arith.constant 1 : i32
    %c0_i32_603 = arith.constant 0 : i32
    %567 = tpu.memref_slice %arg11[%c7_i32_600, %c1_i32_602, %c0_i32_603] : memref<8x8x128xf32, #tpu.memory_space<vmem>> -> memref<1x1x128xf32, #tpu.memory_space<vmem>>
    %568 = tpu.memref_squeeze %567 : memref<1x1x128xf32, #tpu.memory_space<vmem>> -> memref<1x128xf32, #tpu.memory_space<vmem>>
    tpu.wait_dma2 semaphore(%arg12 : memref<!tpu.dma_semaphore, #tpu.memory_space<semaphore_mem>>) src(%566 : memref<1x128xf32, #tpu.memory_space<any>>) dst(%568 : memref<1x128xf32, #tpu.memory_space<vmem>>)
    %c7_i32_604 = arith.constant 7 : i32
    %c0_i32_605 = arith.constant 0 : i32
    %569 = tpu.memref_slice %arg3[%351, %c0_i32_605] : memref<32x128xf32, #tpu.memory_space<any>> -> memref<1x128xf32, #tpu.memory_space<any>>
    %c2_i32_606 = arith.constant 2 : i32
    %c0_i32_607 = arith.constant 0 : i32
    %570 = tpu.memref_slice %arg11[%c7_i32_604, %c2_i32_606, %c0_i32_607] : memref<8x8x128xf32, #tpu.memory_space<vmem>> -> memref<1x1x128xf32, #tpu.memory_space<vmem>>
    %571 = tpu.memref_squeeze %570 : memref<1x1x128xf32, #tpu.memory_space<vmem>> -> memref<1x128xf32, #tpu.memory_space<vmem>>
    tpu.wait_dma2 semaphore(%arg12 : memref<!tpu.dma_semaphore, #tpu.memory_space<semaphore_mem>>) src(%569 : memref<1x128xf32, #tpu.memory_space<any>>) dst(%571 : memref<1x128xf32, #tpu.memory_space<vmem>>)
    %c7_i32_608 = arith.constant 7 : i32
    %c0_i32_609 = arith.constant 0 : i32
    %572 = tpu.memref_slice %arg3[%357, %c0_i32_609] : memref<32x128xf32, #tpu.memory_space<any>> -> memref<1x128xf32, #tpu.memory_space<any>>
    %c3_i32_610 = arith.constant 3 : i32
    %c0_i32_611 = arith.constant 0 : i32
    %573 = tpu.memref_slice %arg11[%c7_i32_608, %c3_i32_610, %c0_i32_611] : memref<8x8x128xf32, #tpu.memory_space<vmem>> -> memref<1x1x128xf32, #tpu.memory_space<vmem>>
    %574 = tpu.memref_squeeze %573 : memref<1x1x128xf32, #tpu.memory_space<vmem>> -> memref<1x128xf32, #tpu.memory_space<vmem>>
    tpu.wait_dma2 semaphore(%arg12 : memref<!tpu.dma_semaphore, #tpu.memory_space<semaphore_mem>>) src(%572 : memref<1x128xf32, #tpu.memory_space<any>>) dst(%574 : memref<1x128xf32, #tpu.memory_space<vmem>>)
    %c7_i32_612 = arith.constant 7 : i32
    %c0_i32_613 = arith.constant 0 : i32
    %575 = tpu.memref_slice %arg3[%363, %c0_i32_613] : memref<32x128xf32, #tpu.memory_space<any>> -> memref<1x128xf32, #tpu.memory_space<any>>
    %c4_i32_614 = arith.constant 4 : i32
    %c0_i32_615 = arith.constant 0 : i32
    %576 = tpu.memref_slice %arg11[%c7_i32_612, %c4_i32_614, %c0_i32_615] : memref<8x8x128xf32, #tpu.memory_space<vmem>> -> memref<1x1x128xf32, #tpu.memory_space<vmem>>
    %577 = tpu.memref_squeeze %576 : memref<1x1x128xf32, #tpu.memory_space<vmem>> -> memref<1x128xf32, #tpu.memory_space<vmem>>
    tpu.wait_dma2 semaphore(%arg12 : memref<!tpu.dma_semaphore, #tpu.memory_space<semaphore_mem>>) src(%575 : memref<1x128xf32, #tpu.memory_space<any>>) dst(%577 : memref<1x128xf32, #tpu.memory_space<vmem>>)
    %c7_i32_616 = arith.constant 7 : i32
    %c0_i32_617 = arith.constant 0 : i32
    %578 = tpu.memref_slice %arg3[%369, %c0_i32_617] : memref<32x128xf32, #tpu.memory_space<any>> -> memref<1x128xf32, #tpu.memory_space<any>>
    %c5_i32_618 = arith.constant 5 : i32
    %c0_i32_619 = arith.constant 0 : i32
    %579 = tpu.memref_slice %arg11[%c7_i32_616, %c5_i32_618, %c0_i32_619] : memref<8x8x128xf32, #tpu.memory_space<vmem>> -> memref<1x1x128xf32, #tpu.memory_space<vmem>>
    %580 = tpu.memref_squeeze %579 : memref<1x1x128xf32, #tpu.memory_space<vmem>> -> memref<1x128xf32, #tpu.memory_space<vmem>>
    tpu.wait_dma2 semaphore(%arg12 : memref<!tpu.dma_semaphore, #tpu.memory_space<semaphore_mem>>) src(%578 : memref<1x128xf32, #tpu.memory_space<any>>) dst(%580 : memref<1x128xf32, #tpu.memory_space<vmem>>)
    %c7_i32_620 = arith.constant 7 : i32
    %c0_i32_621 = arith.constant 0 : i32
    %581 = tpu.memref_slice %arg3[%375, %c0_i32_621] : memref<32x128xf32, #tpu.memory_space<any>> -> memref<1x128xf32, #tpu.memory_space<any>>
    %c6_i32_622 = arith.constant 6 : i32
    %c0_i32_623 = arith.constant 0 : i32
    %582 = tpu.memref_slice %arg11[%c7_i32_620, %c6_i32_622, %c0_i32_623] : memref<8x8x128xf32, #tpu.memory_space<vmem>> -> memref<1x1x128xf32, #tpu.memory_space<vmem>>
    %583 = tpu.memref_squeeze %582 : memref<1x1x128xf32, #tpu.memory_space<vmem>> -> memref<1x128xf32, #tpu.memory_space<vmem>>
    tpu.wait_dma2 semaphore(%arg12 : memref<!tpu.dma_semaphore, #tpu.memory_space<semaphore_mem>>) src(%581 : memref<1x128xf32, #tpu.memory_space<any>>) dst(%583 : memref<1x128xf32, #tpu.memory_space<vmem>>)
    %c7_i32_624 = arith.constant 7 : i32
    %c0_i32_625 = arith.constant 0 : i32
    %584 = tpu.memref_slice %arg3[%381, %c0_i32_625] : memref<32x128xf32, #tpu.memory_space<any>> -> memref<1x128xf32, #tpu.memory_space<any>>
    %c7_i32_626 = arith.constant 7 : i32
    %c0_i32_627 = arith.constant 0 : i32
    %585 = tpu.memref_slice %arg11[%c7_i32_624, %c7_i32_626, %c0_i32_627] : memref<8x8x128xf32, #tpu.memory_space<vmem>> -> memref<1x1x128xf32, #tpu.memory_space<vmem>>
    %586 = tpu.memref_squeeze %585 : memref<1x1x128xf32, #tpu.memory_space<vmem>> -> memref<1x128xf32, #tpu.memory_space<vmem>>
    tpu.wait_dma2 semaphore(%arg12 : memref<!tpu.dma_semaphore, #tpu.memory_space<semaphore_mem>>) src(%584 : memref<1x128xf32, #tpu.memory_space<any>>) dst(%586 : memref<1x128xf32, #tpu.memory_space<vmem>>)
    %c0_628 = arith.constant 0 : index
    %c0_629 = arith.constant 0 : index
    %c0_630 = arith.constant 0 : index
    %587 = vector.load %arg11[%c0_628, %c0_629, %c0_630] : memref<8x8x128xf32, #tpu.memory_space<vmem>>, vector<8x8x128xf32>
    %588 = vector.shape_cast %389 : vector<8x8xf32> to vector<8x8x1xf32>
    %589 = vector.broadcast %588 : vector<8x8x1xf32> to vector<8x8x128xf32>
    %590 = arith.mulf %587, %589 : vector<8x8x128xf32>
    %cst_631 = arith.constant dense<0.000000e+00> : vector<8x128xf32>
    %591 = vector.multi_reduction <add>, %590, %cst_631 [1] : vector<8x8x128xf32> to vector<8x128xf32>
    %592 = vector.broadcast %394 : vector<8x1xf32> to vector<8x128xf32>
    %593 = arith.mulf %591, %592 : vector<8x128xf32>
    %c0_632 = arith.constant 0 : index
    %c0_633 = arith.constant 0 : index
    %594 = vector.load %arg4[%c0_632, %c0_633] : memref<128x128xbf16, #tpu.memory_space<vmem>>, vector<128x128xbf16>
    %c0_634 = arith.constant 0 : index
    %c0_635 = arith.constant 0 : index
    %595 = vector.load %arg5[%c0_634, %c0_635] : memref<1x128xf32, #tpu.memory_space<vmem>>, vector<1x128xf32>
    %596 = arith.truncf %593 : vector<8x128xf32> to vector<8x128xbf16>
    %cst_636 = arith.constant dense<0.000000e+00> : vector<8x128xf32>
    %597 = tpu.matmul %596, %594, %cst_636 {dimension_numbers = #tpu.dot_dimension_numbers<[1], [0], [0], [1], [0, 0, 1, 1], [], []>} : vector<8x128xbf16>, vector<128x128xbf16>, vector<8x128xf32> -> vector<8x128xf32>
    %598 = vector.broadcast %595 : vector<1x128xf32> to vector<8x128xf32>
    %599 = arith.addf %597, %598 : vector<8x128xf32>
    %cst_637 = arith.constant 0.000000e+00 : f32
    %600 = vector.broadcast %cst_637 : f32 to vector<8x128xf32>
    %601 = arith.maximumf %599, %600 : vector<8x128xf32>
    %c0_638 = arith.constant 0 : index
    %c0_639 = arith.constant 0 : index
    %602 = vector.load %arg6[%c0_638, %c0_639] : memref<128x128xbf16, #tpu.memory_space<vmem>>, vector<128x128xbf16>
    %c0_640 = arith.constant 0 : index
    %c0_641 = arith.constant 0 : index
    %603 = vector.load %arg7[%c0_640, %c0_641] : memref<1x128xf32, #tpu.memory_space<vmem>>, vector<1x128xf32>
    %604 = arith.truncf %601 : vector<8x128xf32> to vector<8x128xbf16>
    %cst_642 = arith.constant dense<0.000000e+00> : vector<8x128xf32>
    %605 = tpu.matmul %604, %602, %cst_642 {dimension_numbers = #tpu.dot_dimension_numbers<[1], [0], [0], [1], [0, 0, 1, 1], [], []>} : vector<8x128xbf16>, vector<128x128xbf16>, vector<8x128xf32> -> vector<8x128xf32>
    %606 = vector.broadcast %603 : vector<1x128xf32> to vector<8x128xf32>
    %607 = arith.addf %605, %606 : vector<8x128xf32>
    %cst_643 = arith.constant 0.000000e+00 : f32
    %608 = vector.broadcast %cst_643 : f32 to vector<8x128xf32>
    %609 = arith.maximumf %607, %608 : vector<8x128xf32>
    %c0_644 = arith.constant 0 : index
    %c0_645 = arith.constant 0 : index
    %610 = vector.load %arg8[%c0_644, %c0_645] : memref<128x128xbf16, #tpu.memory_space<vmem>>, vector<128x128xbf16>
    %c0_646 = arith.constant 0 : index
    %c0_647 = arith.constant 0 : index
    %611 = vector.load %arg9[%c0_646, %c0_647] : memref<1x128xf32, #tpu.memory_space<vmem>>, vector<1x128xf32>
    %612 = arith.truncf %609 : vector<8x128xf32> to vector<8x128xbf16>
    %cst_648 = arith.constant dense<0.000000e+00> : vector<8x128xf32>
    %613 = tpu.matmul %612, %610, %cst_648 {dimension_numbers = #tpu.dot_dimension_numbers<[1], [0], [0], [1], [0, 0, 1, 1], [], []>} : vector<8x128xbf16>, vector<128x128xbf16>, vector<8x128xf32> -> vector<8x128xf32>
    %614 = vector.broadcast %611 : vector<1x128xf32> to vector<8x128xf32>
    %615 = arith.addf %613, %614 : vector<8x128xf32>
    %c0_649 = arith.constant 0 : index
    %c0_650 = arith.constant 0 : index
    %616 = vector.load %arg10[%c0_649, %c0_650] : memref<8x128xf32, #tpu.memory_space<vmem>>, vector<8x128xf32>
    tpu.vector_store %arg10[%c0_649, %c0_650], %615 {strides = array<i32>} : memref<8x128xf32, #tpu.memory_space<vmem>>, vector<8x128xf32>,
    return
  }
  func.func @transform_0(%arg0: i32, %arg1: memref<16x8xi32, #tpu.memory_space<smem>>) -> (i32, i32) {
    %c0_i32 = arith.constant 0 : i32
    %c0_i32_0 = arith.constant 0 : i32
    return %arg0, %c0_i32 : i32, i32
  }
  func.func @transform_2(%arg0: i32, %arg1: memref<16x8xi32, #tpu.memory_space<smem>>) -> (i32, i32) {
    %c0_i32 = arith.constant 0 : i32
    %c0_i32_0 = arith.constant 0 : i32
    %c0_i32_1 = arith.constant 0 : i32
    return %c0_i32, %c0_i32_0 : i32, i32
  }
  func.func @transform_3(%arg0: i32, %arg1: memref<16x8xi32, #tpu.memory_space<smem>>) -> (i32, i32) {
    %c0_i32 = arith.constant 0 : i32
    %c0_i32_0 = arith.constant 0 : i32
    %c0_i32_1 = arith.constant 0 : i32
    return %c0_i32, %c0_i32_0 : i32, i32
  }
  func.func @transform_4(%arg0: i32, %arg1: memref<16x8xi32, #tpu.memory_space<smem>>) -> (i32, i32) {
    %c0_i32 = arith.constant 0 : i32
    %c0_i32_0 = arith.constant 0 : i32
    %c0_i32_1 = arith.constant 0 : i32
    return %c0_i32, %c0_i32_0 : i32, i32
  }
  func.func @transform_5(%arg0: i32, %arg1: memref<16x8xi32, #tpu.memory_space<smem>>) -> (i32, i32) {
    %c0_i32 = arith.constant 0 : i32
    %c0_i32_0 = arith.constant 0 : i32
    %c0_i32_1 = arith.constant 0 : i32
    return %c0_i32, %c0_i32_0 : i32, i32
  }
  func.func @transform_6(%arg0: i32, %arg1: memref<16x8xi32, #tpu.memory_space<smem>>) -> (i32, i32) {
    %c0_i32 = arith.constant 0 : i32
    %c0_i32_0 = arith.constant 0 : i32
    %c0_i32_1 = arith.constant 0 : i32
    return %c0_i32, %c0_i32_0 : i32, i32
  }
  func.func @transform_7(%arg0: i32, %arg1: memref<16x8xi32, #tpu.memory_space<smem>>) -> (i32, i32) {
    %c0_i32 = arith.constant 0 : i32
    %c0_i32_0 = arith.constant 0 : i32
    %c0_i32_1 = arith.constant 0 : i32
    return %c0_i32, %c0_i32_0 : i32, i32
  }
  func.func @transform_8(%arg0: i32, %arg1: memref<16x8xi32, #tpu.memory_space<smem>>) -> (i32, i32) {
    %c0_i32 = arith.constant 0 : i32
    %c0_i32_0 = arith.constant 0 : i32
    return %arg0, %c0_i32 : i32, i32
  }
}

</mosaic_0001>

<llo_original>
// kernel: tpu_custom_call.1
$region0: #{tpu_custom_call.1}
  #allocation0 [shape = 'u32[]', space=smem, size = 0x4, offset = 0x4, fixed_abs, tag = 'smem constant byte address 0x4 - core index']
  #allocation1 [shape = 'u32[72,128]{1,0:T(1,128)}', space=vmem, size = 0x9000, scoped, tag = 'internal scratch']
  #allocation2 [shape = 'f32[8,8,128]{2,1,0:T(8,128)}', space=vmem, size = 0x8000, scoped, tag = 'scratch operand']
  #allocation3 [shape = 's32[1]{0}', space=sflag, size = 0x4, scoped, tag = 'scratch operand']
  #allocation4 [shape = 's32[1]{0}', space=sflag, size = 0x4, scoped, tag = 'scoped memory for tpu_custom_call.1']
  #allocation5 [shape = 'u8[8192]{0}', space=smem, size = 0x2000, scoped, tag = 'prefetched SMEM operand 0']
  #allocation13 [shape = 's32[]', space=sflag, size = 0x4, offset = 0, fixed_abs, tag = 'sflag constant byte address 0x0 - dummy sync flag']
  #allocation14 [shape = 's32[]', space=sflag, size = 0x4, offset = 0, fixed_abs, tag = 'sflag constant byte address 0x0 - dummy sync flag']
  #allocation15 [shape = 's32[]', space=sflag, size = 0x4, offset = 0, fixed_abs, tag = 'sflag constant byte address 0x0 - dummy sync flag']
  #allocation16 [shape = 's32[]', space=sflag, size = 0x4, offset = 0, fixed_abs, tag = 'sflag constant byte address 0x0 - dummy sync flag']
  #allocation17 [shape = 's32[]', space=sflag, size = 0x4, offset = 0, fixed_abs, tag = 'sflag constant byte address 0x0 - dummy sync flag']
  #allocation18 [shape = 's32[]', space=sflag, size = 0x4, offset = 0, fixed_abs, tag = 'sflag constant byte address 0x0 - dummy sync flag']
  #allocation19 [shape = 's32[]', space=sflag, size = 0x4, offset = 0, fixed_abs, tag = 'sflag constant byte address 0x0 - dummy sync flag']
  #allocation20 [shape = 's32[]', space=sflag, size = 0x4, offset = 0, fixed_abs, tag = 'sflag constant byte address 0x0 - dummy sync flag']
  #allocation21 [shape = 's32[]', space=sflag, size = 0x4, offset = 0, fixed_abs, tag = 'sflag constant byte address 0x0 - dummy sync flag']
  #allocation22 [shape = 's32[]', space=sflag, size = 0x4, offset = 0, fixed_abs, tag = 'sflag constant byte address 0x0 - dummy sync flag']
  #allocation23 [shape = 's32[]', space=sflag, size = 0x4, offset = 0, fixed_abs, tag = 'sflag constant byte address 0x0 - dummy sync flag']
  #allocation24 [shape = 's32[]', space=sflag, size = 0x4, offset = 0, fixed_abs, tag = 'sflag constant byte address 0x0 - dummy sync flag']
  #allocation25 [shape = 's32[]', space=sflag, size = 0x4, offset = 0, fixed_abs, tag = 'sflag constant byte address 0x0 - dummy sync flag']
  #allocation26 [shape = 's32[]', space=sflag, size = 0x4, offset = 0, fixed_abs, tag = 'sflag constant byte address 0x0 - dummy sync flag']
  #allocation27 [shape = 's32[]', space=sflag, size = 0x4, offset = 0, fixed_abs, tag = 'sflag constant byte address 0x0 - dummy sync flag']
  #allocation28 [shape = 's32[]', space=sflag, size = 0x4, offset = 0, fixed_abs, tag = 'sflag constant byte address 0x0 - dummy sync flag']
  #allocation29 [shape = 's32[]', space=sflag, size = 0x4, offset = 0, fixed_abs, tag = 'sflag constant byte address 0x0 - dummy sync flag']
  #allocation30 [shape = 's32[]', space=sflag, size = 0x4, offset = 0, fixed_abs, tag = 'sflag constant byte address 0x0 - dummy sync flag']
  #allocation31 [shape = 's32[]', space=sflag, size = 0x4, offset = 0, fixed_abs, tag = 'sflag constant byte address 0x0 - dummy sync flag']
  #allocation32 [shape = 's32[]', space=sflag, size = 0x4, offset = 0, fixed_abs, tag = 'sflag constant byte address 0x0 - dummy sync flag']
  #allocation33 [shape = 's32[]', space=sflag, size = 0x4, offset = 0, fixed_abs, tag = 'sflag constant byte address 0x0 - dummy sync flag']
  #allocation34 [shape = 's32[]', space=sflag, size = 0x4, offset = 0, fixed_abs, tag = 'sflag constant byte address 0x0 - dummy sync flag']
  #allocation35 [shape = 's32[]', space=sflag, size = 0x4, offset = 0, fixed_abs, tag = 'sflag constant byte address 0x0 - dummy sync flag']
  #allocation36 [shape = 's32[]', space=sflag, size = 0x4, offset = 0, fixed_abs, tag = 'sflag constant byte address 0x0 - dummy sync flag']
  #allocation37 [shape = 's32[]', space=sflag, size = 0x4, offset = 0, fixed_abs, tag = 'sflag constant byte address 0x0 - dummy sync flag']
  #allocation38 [shape = 's32[]', space=sflag, size = 0x4, offset = 0, fixed_abs, tag = 'sflag constant byte address 0x0 - dummy sync flag']
  #allocation39 [shape = 's32[]', space=sflag, size = 0x4, offset = 0, fixed_abs, tag = 'sflag constant byte address 0x0 - dummy sync flag']
  #allocation40 [shape = 's32[]', space=sflag, size = 0x4, offset = 0, fixed_abs, tag = 'sflag constant byte address 0x0 - dummy sync flag']
  #allocation41 [shape = 's32[]', space=sflag, size = 0x4, offset = 0, fixed_abs, tag = 'sflag constant byte address 0x0 - dummy sync flag']
  #allocation42 [shape = 's32[]', space=sflag, size = 0x4, offset = 0, fixed_abs, tag = 'sflag constant byte address 0x0 - dummy sync flag']
  #allocation43 [shape = 's32[]', space=sflag, size = 0x4, offset = 0, fixed_abs, tag = 'sflag constant byte address 0x0 - dummy sync flag']
  #allocation44 [shape = 's32[]', space=sflag, size = 0x4, offset = 0, fixed_abs, tag = 'sflag constant byte address 0x0 - dummy sync flag']
  #allocation45 [shape = 's32[]', space=sflag, size = 0x4, offset = 0, fixed_abs, tag = 'sflag constant byte address 0x0 - dummy sync flag']
  #allocation46 [shape = 's32[]', space=sflag, size = 0x4, offset = 0, fixed_abs, tag = 'sflag constant byte address 0x0 - dummy sync flag']
  #allocation47 [shape = 's32[]', space=sflag, size = 0x4, offset = 0, fixed_abs, tag = 'sflag constant byte address 0x0 - dummy sync flag']
  #allocation48 [shape = 's32[]', space=sflag, size = 0x4, offset = 0, fixed_abs, tag = 'sflag constant byte address 0x0 - dummy sync flag']
  #allocation49 [shape = 's32[]', space=sflag, size = 0x4, offset = 0, fixed_abs, tag = 'sflag constant byte address 0x0 - dummy sync flag']
  #allocation50 [shape = 's32[]', space=sflag, size = 0x4, offset = 0, fixed_abs, tag = 'sflag constant byte address 0x0 - dummy sync flag']
  #allocation51 [shape = 's32[]', space=sflag, size = 0x4, offset = 0, fixed_abs, tag = 'sflag constant byte address 0x0 - dummy sync flag']
  #allocation52 [shape = 's32[]', space=sflag, size = 0x4, offset = 0, fixed_abs, tag = 'sflag constant byte address 0x0 - dummy sync flag']
  #allocation53 [shape = 's32[]', space=sflag, size = 0x4, offset = 0, fixed_abs, tag = 'sflag constant byte address 0x0 - dummy sync flag']
  #allocation54 [shape = 's32[]', space=sflag, size = 0x4, offset = 0, fixed_abs, tag = 'sflag constant byte address 0x0 - dummy sync flag']
  #allocation55 [shape = 's32[]', space=sflag, size = 0x4, offset = 0, fixed_abs, tag = 'sflag constant byte address 0x0 - dummy sync flag']
  #allocation56 [shape = 's32[]', space=sflag, size = 0x4, offset = 0, fixed_abs, tag = 'sflag constant byte address 0x0 - dummy sync flag']
  #allocation57 [shape = 's32[]', space=sflag, size = 0x4, offset = 0, fixed_abs, tag = 'sflag constant byte address 0x0 - dummy sync flag']
  #allocation58 [shape = 's32[]', space=sflag, size = 0x4, offset = 0, fixed_abs, tag = 'sflag constant byte address 0x0 - dummy sync flag']
  #allocation59 [shape = 's32[]', space=sflag, size = 0x4, offset = 0, fixed_abs, tag = 'sflag constant byte address 0x0 - dummy sync flag']
  #allocation60 [shape = 's32[]', space=sflag, size = 0x4, offset = 0, fixed_abs, tag = 'sflag constant byte address 0x0 - dummy sync flag']
  #allocation61 [shape = 's32[]', space=sflag, size = 0x4, offset = 0, fixed_abs, tag = 'sflag constant byte address 0x0 - dummy sync flag']
  #allocation62 [shape = 's32[]', space=sflag, size = 0x4, offset = 0, fixed_abs, tag = 'sflag constant byte address 0x0 - dummy sync flag']
  #allocation63 [shape = 's32[]', space=sflag, size = 0x4, offset = 0, fixed_abs, tag = 'sflag constant byte address 0x0 - dummy sync flag']
  #allocation64 [shape = 's32[]', space=sflag, size = 0x4, offset = 0, fixed_abs, tag = 'sflag constant byte address 0x0 - dummy sync flag']
  #allocation65 [shape = 's32[]', space=sflag, size = 0x4, offset = 0, fixed_abs, tag = 'sflag constant byte address 0x0 - dummy sync flag']
  #allocation66 [shape = 's32[]', space=sflag, size = 0x4, offset = 0, fixed_abs, tag = 'sflag constant byte address 0x0 - dummy sync flag']
  #allocation67 [shape = 's32[]', space=sflag, size = 0x4, offset = 0, fixed_abs, tag = 'sflag constant byte address 0x0 - dummy sync flag']
  #allocation68 [shape = 's32[]', space=sflag, size = 0x4, offset = 0, fixed_abs, tag = 'sflag constant byte address 0x0 - dummy sync flag']
  #allocation69 [shape = 's32[]', space=sflag, size = 0x4, offset = 0, fixed_abs, tag = 'sflag constant byte address 0x0 - dummy sync flag']
  #allocation70 [shape = 's32[]', space=sflag, size = 0x4, offset = 0, fixed_abs, tag = 'sflag constant byte address 0x0 - dummy sync flag']
  #allocation71 [shape = 's32[]', space=sflag, size = 0x4, offset = 0, fixed_abs, tag = 'sflag constant byte address 0x0 - dummy sync flag']
  #allocation72 [shape = 's32[]', space=sflag, size = 0x4, offset = 0, fixed_abs, tag = 'sflag constant byte address 0x0 - dummy sync flag']
  #allocation73 [shape = 's32[]', space=sflag, size = 0x4, offset = 0, fixed_abs, tag = 'sflag constant byte address 0x0 - dummy sync flag']
  #allocation74 [shape = 's32[]', space=sflag, size = 0x4, offset = 0, fixed_abs, tag = 'sflag constant byte address 0x0 - dummy sync flag']
  #allocation75 [shape = 's32[]', space=sflag, size = 0x4, offset = 0, fixed_abs, tag = 'sflag constant byte address 0x0 - dummy sync flag']
  #allocation76 [shape = 's32[]', space=sflag, size = 0x4, offset = 0, fixed_abs, tag = 'sflag constant byte address 0x0 - dummy sync flag']
  %s0 = inlined_call_operand.vmem [shape: s32[16,8], index: 0, kind: input, shape index: {}]
  %s1 = inlined_call_operand.vmem [shape: s32[16,8], index: 1, kind: input, shape index: {}]
  %s2 = inlined_call_operand.vmem [shape: f32[32,128], index: 2, kind: input, shape index: {}]
  %s3 = inlined_call_operand.hbm [shape: bf16[128,128], index: 3, kind: input, shape index: {}]
  %s4 = inlined_call_operand.vmem [shape: f32[1,128], index: 4, kind: input, shape index: {}]
  %s5 = inlined_call_operand.hbm [shape: bf16[128,128], index: 5, kind: input, shape index: {}]
  %s6 = inlined_call_operand.vmem [shape: f32[1,128], index: 6, kind: input, shape index: {}]
  %s7 = inlined_call_operand.hbm [shape: bf16[128,128], index: 7, kind: input, shape index: {}]
  %s8 = inlined_call_operand.vmem [shape: f32[1,128], index: 8, kind: input, shape index: {}]
  %s9 = inlined_call_operand.hbm [shape: f32[16,128], index: 9, kind: output, shape index: {}]
  %s10 = sld [smem:[#allocation0]]
  $region1993: #{tpu_custom_call.1} parent=0
    _
  %s12 = ssub.s32 1, %s10
  %s13 = scalar_select 0, %s12, %s10
  %s15 = sshll.u32 %s0, 4
  %s16 = int_to_ptr.vmem [resolvable:$true] %s15
  %18 = dma.vmem_to_smem %s16, 256, [#allocation5], [#allocation4]
  %20 = dma.done [#allocation4], 256
  %21 = sfence
  $region1: #{tpu_custom_call.1} parent=0
    #allocation6 [shape = 'u8[32768]{0}', space=vmem, size = 0x8000, scoped, tag = 'input window, operand 3, single buffered']
    #allocation7 [shape = 's32[2]{0}', space=sflag, size = 0x8, scoped, tag = 'scoped memory for tpu_custom_call.1']
    #allocation8 [shape = 's32[2]{0}', space=sflag, size = 0x8, scoped, tag = 'scoped memory for tpu_custom_call.1']
    #allocation9 [shape = 'u8[32768]{0}', space=vmem, size = 0x8000, scoped, tag = 'input window, operand 5, single buffered']
    #allocation10 [shape = 's32[1]{0}', space=sflag, size = 0x4, scoped, tag = 'scoped memory for tpu_custom_call.1']
    #allocation11 [shape = 'u8[32768]{0}', space=vmem, size = 0x8000, scoped, tag = 'input window, operand 7, single buffered']
    #allocation12 [shape = 'u8[8192]{0}', space=vmem, size = 0x2000, scoped, tag = 'output window, operand 0']
    %22 = vsyncpa [#allocation7], 0
    %23 = vsyncpa [#allocation10], 0
    %24 = vsyncpa [#allocation8], 0
    %s25 = scalar_lea.sflag [#allocation8], 1
    %26 = vsyncpa %s25, 0
    loop: start=0, step=1, limit=4
    $region2: #{tpu_custom_call.1} parent=1 // loop_pre_header
      _
    $region3: #{tpu_custom_call.1} parent=1 // loop_header
      %s28 = sphi 0, %s32
      %p29 = scmp.ge.s32.totalorder %s28, 4
      %s38 = sphi 0, %s40
      %s41 = sphi 0, %s38
      %s42 = sphi 0, %s41
      %s58 = sphi 0, %s42
      %s62 = sphi 0, %s62
      %s64 = sphi 0, %s62
      %s65 = sphi 0, %s64
      %s79 = sphi 0, %s65
      %s83 = sphi 0, %s83
      %s85 = sphi 0, %s83
      %s86 = sphi 0, %s85
      %s100 = sphi 0, %s86
      %s104 = sphi 0, %s104
      %s106 = sphi 0, %s104
      %s107 = sphi 0, %s106
      %s121 = sphi 0, %s107
      %s125 = sphi 0, %s125
      %s127 = sphi 0, %s125
      %s128 = sphi 0, %s127
      %s142 = sphi 0, %s128
      %s146 = sphi 0, %s146
      %s148 = sphi 0, %s146
      %s149 = sphi 0, %s148
      %s163 = sphi 0, %s149
      %s167 = sphi 0, %s167
      %s169 = sphi 0, %s167
      %s170 = sphi 0, %s169
      %s184 = sphi 0, %s170
      %s190 = sphi 0, %s192
      %s193 = sphi 0, %s190
      %s194 = sphi 0, %s193
      %s210 = sphi 0, %s194
    $region4: #{tpu_custom_call.1} parent=1 // loop_header_branch
      %31 = sbr.rel (%p29) target = $region8
    $region5: #{tpu_custom_call.1} parent=1 // loop_body
      %s33 = ssub.s32 %s28, 1
      %s34 = ssub.s32 %s28, 2
      %s35 = sadd.s32 %s28, 1
      %s36 = ssub.s32 %s28, %s35
      %p37 = scmp.eq.s32.totalorder %s36, 0
      %s39 = sadd.s32 %s38, 1
      %s40 = scalar_select %p37, %s38, %s39
      %p43 = pneg %p37
      %p44 = scmp.eq.s32.totalorder %s28, 1
      %p45 = por %p43, %p44
      %p46 = scmp.ne.s32.totalorder %s38, %s41
      %p47 = scmp.eq.s32.totalorder %s28, 0
      %p48 = por %p46, %p47
      %p49 = scmp.ne.s32.totalorder %s38, %s41
      %p50 = scmp.eq.s32.totalorder %s33, 1
      %p51 = por %p49, %p50
      %p52 = scmp.ne.s32.totalorder %s41, %s42
      %p53 = scmp.eq.s32.totalorder %s33, 0
      %p54 = por %p52, %p53
      %p55 = scmp.ne.s32.totalorder %s41, %s42
      %p56 = scmp.eq.s32.totalorder %s34, 1
      %p57 = por %p55, %p56
      %p59 = scmp.ne.s32.totalorder %s42, %s58
      %p60 = scmp.eq.s32.totalorder %s34, 0
      %p61 = por %p59, %p60
      %s63 = sadd.s32 %s62, 1
      %p66 = scmp.eq.s32.totalorder %s28, 1
      %p67 = scmp.ne.s32.totalorder %s62, %s64
      %p68 = scmp.eq.s32.totalorder %s28, 0
      %p69 = por %p67, %p68
      %p70 = scmp.ne.s32.totalorder %s62, %s64
      %p71 = scmp.eq.s32.totalorder %s33, 1
      %p72 = por %p70, %p71
      %p73 = scmp.ne.s32.totalorder %s64, %s65
      %p74 = scmp.eq.s32.totalorder %s33, 0
      %p75 = por %p73, %p74
      %p76 = scmp.ne.s32.totalorder %s64, %s65
      %p77 = scmp.eq.s32.totalorder %s34, 1
      %p78 = por %p76, %p77
      %p80 = scmp.ne.s32.totalorder %s65, %s79
      %p81 = scmp.eq.s32.totalorder %s34, 0
      %p82 = por %p80, %p81
      %s84 = sadd.s32 %s83, 1
      %p87 = scmp.eq.s32.totalorder %s28, 1
      %p88 = scmp.ne.s32.totalorder %s83, %s85
      %p89 = scmp.eq.s32.totalorder %s28, 0
      %p90 = por %p88, %p89
      %p91 = scmp.ne.s32.totalorder %s83, %s85
      %p92 = scmp.eq.s32.totalorder %s33, 1
      %p93 = por %p91, %p92
      %p94 = scmp.ne.s32.totalorder %s85, %s86
      %p95 = scmp.eq.s32.totalorder %s33, 0
      %p96 = por %p94, %p95
      %p97 = scmp.ne.s32.totalorder %s85, %s86
      %p98 = scmp.eq.s32.totalorder %s34, 1
      %p99 = por %p97, %p98
      %p101 = scmp.ne.s32.totalorder %s86, %s100
      %p102 = scmp.eq.s32.totalorder %s34, 0
      %p103 = por %p101, %p102
      %s105 = sadd.s32 %s104, 1
      %p108 = scmp.eq.s32.totalorder %s28, 1
      %p109 = scmp.ne.s32.totalorder %s104, %s106
      %p110 = scmp.eq.s32.totalorder %s28, 0
      %p111 = por %p109, %p110
      %p112 = scmp.ne.s32.totalorder %s104, %s106
      %p113 = scmp.eq.s32.totalorder %s33, 1
      %p114 = por %p112, %p113
      %p115 = scmp.ne.s32.totalorder %s106, %s107
      %p116 = scmp.eq.s32.totalorder %s33, 0
      %p117 = por %p115, %p116
      %p118 = scmp.ne.s32.totalorder %s106, %s107
      %p119 = scmp.eq.s32.totalorder %s34, 1
      %p120 = por %p118, %p119
      %p122 = scmp.ne.s32.totalorder %s107, %s121
      %p123 = scmp.eq.s32.totalorder %s34, 0
      %p124 = por %p122, %p123
      %s126 = sadd.s32 %s125, 1
      %p129 = scmp.eq.s32.totalorder %s28, 1
      %p130 = scmp.ne.s32.totalorder %s125, %s127
      %p131 = scmp.eq.s32.totalorder %s28, 0
      %p132 = por %p130, %p131
      %p133 = scmp.ne.s32.totalorder %s125, %s127
      %p134 = scmp.eq.s32.totalorder %s33, 1
      %p135 = por %p133, %p134
      %p136 = scmp.ne.s32.totalorder %s127, %s128
      %p137 = scmp.eq.s32.totalorder %s33, 0
      %p138 = por %p136, %p137
      %p139 = scmp.ne.s32.totalorder %s127, %s128
      %p140 = scmp.eq.s32.totalorder %s34, 1
      %p141 = por %p139, %p140
      %p143 = scmp.ne.s32.totalorder %s128, %s142
      %p144 = scmp.eq.s32.totalorder %s34, 0
      %p145 = por %p143, %p144
      %s147 = sadd.s32 %s146, 1
      %p150 = scmp.eq.s32.totalorder %s28, 1
      %p151 = scmp.ne.s32.totalorder %s146, %s148
      %p152 = scmp.eq.s32.totalorder %s28, 0
      %p153 = por %p151, %p152
      %p154 = scmp.ne.s32.totalorder %s146, %s148
      %p155 = scmp.eq.s32.totalorder %s33, 1
      %p156 = por %p154, %p155
      %p157 = scmp.ne.s32.totalorder %s148, %s149
      %p158 = scmp.eq.s32.totalorder %s33, 0
      %p159 = por %p157, %p158
      %p160 = scmp.ne.s32.totalorder %s148, %s149
      %p161 = scmp.eq.s32.totalorder %s34, 1
      %p162 = por %p160, %p161
      %p164 = scmp.ne.s32.totalorder %s149, %s163
      %p165 = scmp.eq.s32.totalorder %s34, 0
      %p166 = por %p164, %p165
      %s168 = sadd.s32 %s167, 1
      %p171 = scmp.eq.s32.totalorder %s28, 1
      %p172 = scmp.ne.s32.totalorder %s167, %s169
      %p173 = scmp.eq.s32.totalorder %s28, 0
      %p174 = por %p172, %p173
      %p175 = scmp.ne.s32.totalorder %s167, %s169
      %p176 = scmp.eq.s32.totalorder %s33, 1
      %p177 = por %p175, %p176
      %p178 = scmp.ne.s32.totalorder %s169, %s170
      %p179 = scmp.eq.s32.totalorder %s33, 0
      %p180 = por %p178, %p179
      %p181 = scmp.ne.s32.totalorder %s169, %s170
      %p182 = scmp.eq.s32.totalorder %s34, 1
      %p183 = por %p181, %p182
      %p185 = scmp.ne.s32.totalorder %s170, %s184
      %p186 = scmp.eq.s32.totalorder %s34, 0
      %p187 = por %p185, %p186
      %s188 = ssub.s32 %s28, %s35
      %p189 = scmp.eq.s32.totalorder %s188, 0
      %s191 = sadd.s32 %s190, 1
      %s192 = scalar_select %p189, %s190, %s191
      %p195 = pneg %p189
      %p196 = scmp.eq.s32.totalorder %s28, 1
      %p197 = por %p195, %p196
      %p198 = scmp.ne.s32.totalorder %s190, %s193
      %p199 = scmp.eq.s32.totalorder %s28, 0
      %p200 = por %p198, %p199
      %p201 = scmp.ne.s32.totalorder %s190, %s193
      %p202 = scmp.eq.s32.totalorder %s33, 1
      %p203 = por %p201, %p202
      %p204 = scmp.ne.s32.totalorder %s193, %s194
      %p205 = scmp.eq.s32.totalorder %s33, 0
      %p206 = por %p204, %p205
      %p207 = scmp.ne.s32.totalorder %s193, %s194
      %p208 = scmp.eq.s32.totalorder %s34, 1
      %p209 = por %p207, %p208
      %p211 = scmp.ne.s32.totalorder %s194, %s210
      %p212 = scmp.eq.s32.totalorder %s34, 0
      %p213 = por %p211, %p212
      %p214 = scmp.le.s32.totalorder 1, %s28
      %p215 = scmp.lt.s32.totalorder %s28, 3
      %p216 = pnand %p214, %p215
      %p217 = pneg %p216
      // Predicated region
      $region9: #{tpu_custom_call.1} parent=5 // pred_check
        _
      $region10: #{tpu_custom_call.1} parent=5 // pred_check_branch
        %219 = sbr.rel (%p216) target = $region12
      $region11: #{tpu_custom_call.1} parent=5 // pred_region
        %s220 = ssub.s32 %s28, 1
        // Predicated region
        $region13: #{tpu_custom_call.1} parent=11 // pred_check
          %p221 = pneg %p75
        $region14: #{tpu_custom_call.1} parent=11 // pred_check_branch
          %223 = sbr.rel (%p221) target = $region16
        $region15: #{tpu_custom_call.1} parent=11 // pred_region
          %225 = vsyncadd [#allocation7], 0
          %s226 = sshll.u32 %s3, 4
          %s227 = int_to_ptr.hbm [resolvable:$true] %s226
          %s228 = sshll.u32 [#allocation6], 4
          %s229 = int_to_ptr.vmem [resolvable:$true] %s228
          %234 = dma.hbm_to_vmem [thread:$0]  %s227, 1024, %s229, [#allocation7], 64, 64, 4
        $region16: #{tpu_custom_call.1} parent=11 // pred_fallthru
          _
        // Predicated region
        $region17: #{tpu_custom_call.1} parent=11 // pred_check
          %p235 = pneg %p96
        $region18: #{tpu_custom_call.1} parent=11 // pred_check_branch
          %237 = sbr.rel (%p235) target = $region20
        $region19: #{tpu_custom_call.1} parent=11 // pred_region
          _
        $region20: #{tpu_custom_call.1} parent=11 // pred_fallthru
          _
        // Predicated region
        $region21: #{tpu_custom_call.1} parent=11 // pred_check
          %p238 = pneg %p117
        $region22: #{tpu_custom_call.1} parent=11 // pred_check_branch
          %240 = sbr.rel (%p238) target = $region24
        $region23: #{tpu_custom_call.1} parent=11 // pred_region
          %242 = vsyncadd [#allocation10], 0
          %s243 = sshll.u32 %s5, 4
          %s244 = int_to_ptr.hbm [resolvable:$true] %s243
          %s245 = sshll.u32 [#allocation9], 4
          %s246 = int_to_ptr.vmem [resolvable:$true] %s245
          %251 = dma.hbm_to_vmem [thread:$0]  %s244, 1024, %s246, [#allocation10], 64, 64, 4
        $region24: #{tpu_custom_call.1} parent=11 // pred_fallthru
          _
        // Predicated region
        $region25: #{tpu_custom_call.1} parent=11 // pred_check
          %p252 = pneg %p138
        $region26: #{tpu_custom_call.1} parent=11 // pred_check_branch
          %254 = sbr.rel (%p252) target = $region28
        $region27: #{tpu_custom_call.1} parent=11 // pred_region
          _
        $region28: #{tpu_custom_call.1} parent=11 // pred_fallthru
          _
        // Predicated region
        $region29: #{tpu_custom_call.1} parent=11 // pred_check
          %p255 = pneg %p159
        $region30: #{tpu_custom_call.1} parent=11 // pred_check_branch
          %257 = sbr.rel (%p255) target = $region32
        $region31: #{tpu_custom_call.1} parent=11 // pred_region
          %259 = vsyncadd [#allocation10], 0
          %s260 = sshll.u32 %s7, 4
          %s261 = int_to_ptr.hbm [resolvable:$true] %s260
          %s262 = sshll.u32 [#allocation11], 4
          %s263 = int_to_ptr.vmem [resolvable:$true] %s262
          %268 = dma.hbm_to_vmem [thread:$0]  %s261, 1024, %s263, [#allocation10], 64, 64, 4
        $region32: #{tpu_custom_call.1} parent=11 // pred_fallthru
          _
        // Predicated region
        $region33: #{tpu_custom_call.1} parent=11 // pred_check
          %p269 = pneg %p180
        $region34: #{tpu_custom_call.1} parent=11 // pred_check_branch
          %271 = sbr.rel (%p269) target = $region36
        $region35: #{tpu_custom_call.1} parent=11 // pred_region
          _
        $region36: #{tpu_custom_call.1} parent=11 // pred_fallthru
          _
      $region12: #{tpu_custom_call.1} parent=5 // pred_fallthru
        _
      %p272 = scmp.lt.s32.totalorder %s28, 2
      // Predicated region
      $region37: #{tpu_custom_call.1} parent=5 // pred_check
        %p273 = pneg %p272
      $region38: #{tpu_custom_call.1} parent=5 // pred_check_branch
        %275 = sbr.rel (%p273) target = $region40
      $region39: #{tpu_custom_call.1} parent=5 // pred_region
        // Predicated region
        $region41: #{tpu_custom_call.1} parent=39 // pred_check
          %p276 = pneg %p48
        $region42: #{tpu_custom_call.1} parent=39 // pred_check_branch
          %278 = sbr.rel (%p276) target = $region44
        $region43: #{tpu_custom_call.1} parent=39 // pred_region
          %p279 = scmp.lt.s32.totalorder %s28, 1
          %s280 = scalar_select %p279, %s28, 1
          %s281 = smul.addr %s280, 8
          %s282 = scalar_lea.vmem %s1, %s281
        $region44: #{tpu_custom_call.1} parent=39 // pred_fallthru
          _
      $region40: #{tpu_custom_call.1} parent=5 // pred_fallthru
        _
      %p283 = scmp.le.s32.totalorder 1, %s28
      %p284 = scmp.lt.s32.totalorder %s28, 3
      %p285 = pnand %p283, %p284
      %p286 = pneg %p285
      // Predicated region
      $region45: #{tpu_custom_call.1} parent=5 // pred_check
        _
      $region46: #{tpu_custom_call.1} parent=5 // pred_check_branch
        %288 = sbr.rel (%p285) target = $region48
      $region47: #{tpu_custom_call.1} parent=5 // pred_region
        %s289 = ssub.s32 %s28, 1
        // Predicated region
        $region49: #{tpu_custom_call.1} parent=47 // pred_check
          %p290 = pneg %p75
        $region50: #{tpu_custom_call.1} parent=47 // pred_check_branch
          %292 = sbr.rel (%p290) target = $region52
        $region51: #{tpu_custom_call.1} parent=47 // pred_region
          %294 = dma.done [#allocation7], 1024
        $region52: #{tpu_custom_call.1} parent=47 // pred_fallthru
          _
        // Predicated region
        $region53: #{tpu_custom_call.1} parent=47 // pred_check
          %p295 = pneg %p117
        $region54: #{tpu_custom_call.1} parent=47 // pred_check_branch
          %297 = sbr.rel (%p295) target = $region56
        $region55: #{tpu_custom_call.1} parent=47 // pred_region
          %299 = dma.done [#allocation10], 1024
        $region56: #{tpu_custom_call.1} parent=47 // pred_fallthru
          _
        // Predicated region
        $region57: #{tpu_custom_call.1} parent=47 // pred_check
          %p300 = pneg %p159
        $region58: #{tpu_custom_call.1} parent=47 // pred_check_branch
          %302 = sbr.rel (%p300) target = $region60
        $region59: #{tpu_custom_call.1} parent=47 // pred_region
          %304 = dma.done [#allocation10], 1024
        $region60: #{tpu_custom_call.1} parent=47 // pred_fallthru
          _
        %p305 = scmp.lt.s32.totalorder %s33, 1
        %s306 = scalar_select %p305, %s33, 1
        %s307 = smul.addr %s306, 8
        %s308 = scalar_lea.vmem %s1, %s307
        %p309 = pneg %p54
        %p310 = pneg %p51
        %p311 = pneg %p75
        %p312 = pneg %p72
        %p313 = pneg %p96
        %p314 = pneg %p93
        %p315 = pneg %p117
        %p316 = pneg %p114
        %p317 = pneg %p138
        %p318 = pneg %p135
        %p319 = pneg %p159
        %p320 = pneg %p156
        %p321 = pneg %p180
        %p322 = pneg %p177
        %p323 = pneg %p206
        %p324 = pneg %p203
        %s325 = sand.u32 %s193, 1
        %s326 = scalar_lea.sflag [#allocation8], %s325
        %s327 = sand.u32 %s193, 1
        %s328 = smul.addr %s327, 8
        %s329 = scalar_lea.vmem [#allocation12], %s328
        %p330 = scmp.lt.s32.totalorder %s33, 1
        %s331 = scalar_select %p330, %s33, 1
        %s332 = smul.addr %s331, 8
        %s333 = scalar_lea.vmem %s1, %s332
        %s334 = smul.u32 %s33, 8
        %s335 = smul.u32 %s334, 128
        %s336 = sld [smem:[#allocation5 + %s335]]
        %s337 = scalar_lea.vmem %s2, %s336
        // Predicated region
        $region61: #{tpu_custom_call.1} parent=47 // pred_check
          _
        $region62: #{tpu_custom_call.1} parent=47 // pred_check_branch
          %339 = sbr.rel target = $region64
        $region63: #{tpu_custom_call.1} parent=47 // pred_region
          // Predicated region
          $region76: #{tpu_custom_call.1} parent=63 // pred_check
            _
          $region77: #{tpu_custom_call.1} parent=63 // pred_check_branch
            %355 = sbr.rel (0) target = $region79
          $region78: #{tpu_custom_call.1} parent=63 // pred_region
            %s357 = ssub.s32 2, 1
            loop: start=0, step=1, limit=1
            $region80: #{tpu_custom_call.1} parent=78 // loop_pre_header
              _
            $region81: #{tpu_custom_call.1} parent=78 // loop_header
              %s359 = sphi 0, %s363
              %p360 = scmp.ge.s32.totalorder %s359, 1
              %s364 = sphi %s337, %s337
              %s365 = sphi [#allocation2], [#allocation2]
            $region82: #{tpu_custom_call.1} parent=78 // loop_header_branch
              %362 = sbr.rel (%p360) target = $region86
            $region83: #{tpu_custom_call.1} parent=78 // loop_body
              %v366 = vld [vmem:[%s364] sm:%s357]
              %367 = vst [vmem:[%s365] sm:%s357] %v366
            $region84: #{tpu_custom_call.1} parent=78 // loop_footer
              %s363 = sadd.s32 1, %s359
            $region85: #{tpu_custom_call.1} parent=78 // loop_footer_branch
              %358 = sbr.rel target = $region81
            $region86: #{tpu_custom_call.1} parent=78 // loop_exit
              _
          $region79: #{tpu_custom_call.1} parent=63 // pred_fallthru
            _
        $region64: #{tpu_custom_call.1} parent=47 // pred_fallthru
          _
        // Predicated region
        $region65: #{tpu_custom_call.1} parent=47 // pred_check
          _
        $region66: #{tpu_custom_call.1} parent=47 // pred_check_branch
          %341 = sbr.rel (0) target = $region68
        $region67: #{tpu_custom_call.1} parent=47 // pred_region
          %s343 = ssub.s32 2, 1
          loop: start=0, step=1, limit=1
          $region69: #{tpu_custom_call.1} parent=67 // loop_pre_header
            _
          $region70: #{tpu_custom_call.1} parent=67 // loop_header
            %s345 = sphi 0, %s349
            %p346 = scmp.ge.s32.totalorder %s345, 1
            %s350 = sphi %s337, %s337
            %s351 = sphi [#allocation2], [#allocation2]
          $region71: #{tpu_custom_call.1} parent=67 // loop_header_branch
            %348 = sbr.rel (%p346) target = $region75
          $region72: #{tpu_custom_call.1} parent=67 // loop_body
            %v352 = vld [vmem:[%s350] sm:%s343]
            %353 = vst [vmem:[%s351] sm:%s343] %v352
          $region73: #{tpu_custom_call.1} parent=67 // loop_footer
            %s349 = sadd.s32 1, %s345
          $region74: #{tpu_custom_call.1} parent=67 // loop_footer_branch
            %344 = sbr.rel target = $region70
          $region75: #{tpu_custom_call.1} parent=67 // loop_exit
            _
        $region68: #{tpu_custom_call.1} parent=47 // pred_fallthru
          _
        // Predicated region
        $region87: #{tpu_custom_call.1} parent=47 // pred_check
          _
        $region88: #{tpu_custom_call.1} parent=47 // pred_check_branch
          %370 = sbr.rel (0) target = $region90
        $region89: #{tpu_custom_call.1} parent=47 // pred_region
          %371 = vsyncadd [#allocation3], 16
        $region90: #{tpu_custom_call.1} parent=47 // pred_fallthru
          _
        %s372 = sadd.s32 %s335, 1
        %s373 = sld [smem:[#allocation5 + %s372]]
        %s374 = scalar_lea.vmem %s2, %s373
        %s375 = scalar_lea.vmem [#allocation2], 1
        // Predicated region
        $region91: #{tpu_custom_call.1} parent=47 // pred_check
          _
        $region92: #{tpu_custom_call.1} parent=47 // pred_check_branch
          %377 = sbr.rel target = $region94
        $region93: #{tpu_custom_call.1} parent=47 // pred_region
          // Predicated region
          $region106: #{tpu_custom_call.1} parent=93 // pred_check
            _
          $region107: #{tpu_custom_call.1} parent=93 // pred_check_branch
            %393 = sbr.rel (0) target = $region109
          $region108: #{tpu_custom_call.1} parent=93 // pred_region
            %s395 = ssub.s32 2, 1
            loop: start=0, step=1, limit=1
            $region110: #{tpu_custom_call.1} parent=108 // loop_pre_header
              _
            $region111: #{tpu_custom_call.1} parent=108 // loop_header
              %s397 = sphi 0, %s401
              %p398 = scmp.ge.s32.totalorder %s397, 1
              %s402 = sphi %s374, %s374
              %s403 = sphi %s375, %s375
            $region112: #{tpu_custom_call.1} parent=108 // loop_header_branch
              %400 = sbr.rel (%p398) target = $region116
            $region113: #{tpu_custom_call.1} parent=108 // loop_body
              %v404 = vld [vmem:[%s402] sm:%s395]
              %405 = vst [vmem:[%s403] sm:%s395] %v404
            $region114: #{tpu_custom_call.1} parent=108 // loop_footer
              %s401 = sadd.s32 1, %s397
            $region115: #{tpu_custom_call.1} parent=108 // loop_footer_branch
              %396 = sbr.rel target = $region111
            $region116: #{tpu_custom_call.1} parent=108 // loop_exit
              _
          $region109: #{tpu_custom_call.1} parent=93 // pred_fallthru
            _
        $region94: #{tpu_custom_call.1} parent=47 // pred_fallthru
          _
        // Predicated region
        $region95: #{tpu_custom_call.1} parent=47 // pred_check
          _
        $region96: #{tpu_custom_call.1} parent=47 // pred_check_branch
          %379 = sbr.rel (0) target = $region98
        $region97: #{tpu_custom_call.1} parent=47 // pred_region
          %s381 = ssub.s32 2, 1
          loop: start=0, step=1, limit=1
          $region99: #{tpu_custom_call.1} parent=97 // loop_pre_header
            _
          $region100: #{tpu_custom_call.1} parent=97 // loop_header
            %s383 = sphi 0, %s387
            %p384 = scmp.ge.s32.totalorder %s383, 1
            %s388 = sphi %s374, %s374
            %s389 = sphi %s375, %s375
          $region101: #{tpu_custom_call.1} parent=97 // loop_header_branch
            %386 = sbr.rel (%p384) target = $region105
          $region102: #{tpu_custom_call.1} parent=97 // loop_body
            %v390 = vld [vmem:[%s388] sm:%s381]
            %391 = vst [vmem:[%s389] sm:%s381] %v390
          $region103: #{tpu_custom_call.1} parent=97 // loop_footer
            %s387 = sadd.s32 1, %s383
          $region104: #{tpu_custom_call.1} parent=97 // loop_footer_branch
            %382 = sbr.rel target = $region100
          $region105: #{tpu_custom_call.1} parent=97 // loop_exit
            _
        $region98: #{tpu_custom_call.1} parent=47 // pred_fallthru
          _
        // Predicated region
        $region117: #{tpu_custom_call.1} parent=47 // pred_check
          _
        $region118: #{tpu_custom_call.1} parent=47 // pred_check_branch
          %408 = sbr.rel (0) target = $region120
        $region119: #{tpu_custom_call.1} parent=47 // pred_region
          %409 = vsyncadd [#allocation3], 16
        $region120: #{tpu_custom_call.1} parent=47 // pred_fallthru
          _
        %s410 = sadd.s32 %s335, 2
        %s411 = sld [smem:[#allocation5 + %s410]]
        %s412 = scalar_lea.vmem %s2, %s411
        %s413 = scalar_lea.vmem [#allocation2], 2
        // Predicated region
        $region121: #{tpu_custom_call.1} parent=47 // pred_check
          _
        $region122: #{tpu_custom_call.1} parent=47 // pred_check_branch
          %415 = sbr.rel target = $region124
        $region123: #{tpu_custom_call.1} parent=47 // pred_region
          // Predicated region
          $region136: #{tpu_custom_call.1} parent=123 // pred_check
            _
          $region137: #{tpu_custom_call.1} parent=123 // pred_check_branch
            %431 = sbr.rel (0) target = $region139
          $region138: #{tpu_custom_call.1} parent=123 // pred_region
            %s433 = ssub.s32 2, 1
            loop: start=0, step=1, limit=1
            $region140: #{tpu_custom_call.1} parent=138 // loop_pre_header
              _
            $region141: #{tpu_custom_call.1} parent=138 // loop_header
              %s435 = sphi 0, %s439
              %p436 = scmp.ge.s32.totalorder %s435, 1
              %s440 = sphi %s412, %s412
              %s441 = sphi %s413, %s413
            $region142: #{tpu_custom_call.1} parent=138 // loop_header_branch
              %438 = sbr.rel (%p436) target = $region146
            $region143: #{tpu_custom_call.1} parent=138 // loop_body
              %v442 = vld [vmem:[%s440] sm:%s433]
              %443 = vst [vmem:[%s441] sm:%s433] %v442
            $region144: #{tpu_custom_call.1} parent=138 // loop_footer
              %s439 = sadd.s32 1, %s435
            $region145: #{tpu_custom_call.1} parent=138 // loop_footer_branch
              %434 = sbr.rel target = $region141
            $region146: #{tpu_custom_call.1} parent=138 // loop_exit
              _
          $region139: #{tpu_custom_call.1} parent=123 // pred_fallthru
            _
        $region124: #{tpu_custom_call.1} parent=47 // pred_fallthru
          _
        // Predicated region
        $region125: #{tpu_custom_call.1} parent=47 // pred_check
          _
        $region126: #{tpu_custom_call.1} parent=47 // pred_check_branch
          %417 = sbr.rel (0) target = $region128
        $region127: #{tpu_custom_call.1} parent=47 // pred_region
          %s419 = ssub.s32 2, 1
          loop: start=0, step=1, limit=1
          $region129: #{tpu_custom_call.1} parent=127 // loop_pre_header
            _
          $region130: #{tpu_custom_call.1} parent=127 // loop_header
            %s421 = sphi 0, %s425
            %p422 = scmp.ge.s32.totalorder %s421, 1
            %s426 = sphi %s412, %s412
            %s427 = sphi %s413, %s413
          $region131: #{tpu_custom_call.1} parent=127 // loop_header_branch
            %424 = sbr.rel (%p422) target = $region135
          $region132: #{tpu_custom_call.1} parent=127 // loop_body
            %v428 = vld [vmem:[%s426] sm:%s419]
            %429 = vst [vmem:[%s427] sm:%s419] %v428
          $region133: #{tpu_custom_call.1} parent=127 // loop_footer
            %s425 = sadd.s32 1, %s421
          $region134: #{tpu_custom_call.1} parent=127 // loop_footer_branch
            %420 = sbr.rel target = $region130
          $region135: #{tpu_custom_call.1} parent=127 // loop_exit
            _
        $region128: #{tpu_custom_call.1} parent=47 // pred_fallthru
          _
        // Predicated region
        $region147: #{tpu_custom_call.1} parent=47 // pred_check
          _
        $region148: #{tpu_custom_call.1} parent=47 // pred_check_branch
          %446 = sbr.rel (0) target = $region150
        $region149: #{tpu_custom_call.1} parent=47 // pred_region
          %447 = vsyncadd [#allocation3], 16
        $region150: #{tpu_custom_call.1} parent=47 // pred_fallthru
          _
        %s448 = sadd.s32 %s335, 3
        %s449 = sld [smem:[#allocation5 + %s448]]
        %s450 = scalar_lea.vmem %s2, %s449
        %s451 = scalar_lea.vmem [#allocation2], 3
        // Predicated region
        $region151: #{tpu_custom_call.1} parent=47 // pred_check
          _
        $region152: #{tpu_custom_call.1} parent=47 // pred_check_branch
          %453 = sbr.rel target = $region154
        $region153: #{tpu_custom_call.1} parent=47 // pred_region
          // Predicated region
          $region166: #{tpu_custom_call.1} parent=153 // pred_check
            _
          $region167: #{tpu_custom_call.1} parent=153 // pred_check_branch
            %469 = sbr.rel (0) target = $region169
          $region168: #{tpu_custom_call.1} parent=153 // pred_region
            %s471 = ssub.s32 2, 1
            loop: start=0, step=1, limit=1
            $region170: #{tpu_custom_call.1} parent=168 // loop_pre_header
              _
            $region171: #{tpu_custom_call.1} parent=168 // loop_header
              %s473 = sphi 0, %s477
              %p474 = scmp.ge.s32.totalorder %s473, 1
              %s478 = sphi %s450, %s450
              %s479 = sphi %s451, %s451
            $region172: #{tpu_custom_call.1} parent=168 // loop_header_branch
              %476 = sbr.rel (%p474) target = $region176
            $region173: #{tpu_custom_call.1} parent=168 // loop_body
              %v480 = vld [vmem:[%s478] sm:%s471]
              %481 = vst [vmem:[%s479] sm:%s471] %v480
            $region174: #{tpu_custom_call.1} parent=168 // loop_footer
              %s477 = sadd.s32 1, %s473
            $region175: #{tpu_custom_call.1} parent=168 // loop_footer_branch
              %472 = sbr.rel target = $region171
            $region176: #{tpu_custom_call.1} parent=168 // loop_exit
              _
          $region169: #{tpu_custom_call.1} parent=153 // pred_fallthru
            _
        $region154: #{tpu_custom_call.1} parent=47 // pred_fallthru
          _
        // Predicated region
        $region155: #{tpu_custom_call.1} parent=47 // pred_check
          _
        $region156: #{tpu_custom_call.1} parent=47 // pred_check_branch
          %455 = sbr.rel (0) target = $region158
        $region157: #{tpu_custom_call.1} parent=47 // pred_region
          %s457 = ssub.s32 2, 1
          loop: start=0, step=1, limit=1
          $region159: #{tpu_custom_call.1} parent=157 // loop_pre_header
            _
          $region160: #{tpu_custom_call.1} parent=157 // loop_header
            %s459 = sphi 0, %s463
            %p460 = scmp.ge.s32.totalorder %s459, 1
            %s464 = sphi %s450, %s450
            %s465 = sphi %s451, %s451
          $region161: #{tpu_custom_call.1} parent=157 // loop_header_branch
            %462 = sbr.rel (%p460) target = $region165
          $region162: #{tpu_custom_call.1} parent=157 // loop_body
            %v466 = vld [vmem:[%s464] sm:%s457]
            %467 = vst [vmem:[%s465] sm:%s457] %v466
          $region163: #{tpu_custom_call.1} parent=157 // loop_footer
            %s463 = sadd.s32 1, %s459
          $region164: #{tpu_custom_call.1} parent=157 // loop_footer_branch
            %458 = sbr.rel target = $region160
          $region165: #{tpu_custom_call.1} parent=157 // loop_exit
            _
        $region158: #{tpu_custom_call.1} parent=47 // pred_fallthru
          _
        // Predicated region
        $region177: #{tpu_custom_call.1} parent=47 // pred_check
          _
        $region178: #{tpu_custom_call.1} parent=47 // pred_check_branch
          %484 = sbr.rel (0) target = $region180
        $region179: #{tpu_custom_call.1} parent=47 // pred_region
          %485 = vsyncadd [#allocation3], 16
        $region180: #{tpu_custom_call.1} parent=47 // pred_fallthru
          _
        %s486 = sadd.s32 %s335, 4
        %s487 = sld [smem:[#allocation5 + %s486]]
        %s488 = scalar_lea.vmem %s2, %s487
        %s489 = scalar_lea.vmem [#allocation2], 4
        // Predicated region
        $region181: #{tpu_custom_call.1} parent=47 // pred_check
          _
        $region182: #{tpu_custom_call.1} parent=47 // pred_check_branch
          %491 = sbr.rel target = $region184
        $region183: #{tpu_custom_call.1} parent=47 // pred_region
          // Predicated region
          $region196: #{tpu_custom_call.1} parent=183 // pred_check
            _
          $region197: #{tpu_custom_call.1} parent=183 // pred_check_branch
            %507 = sbr.rel (0) target = $region199
          $region198: #{tpu_custom_call.1} parent=183 // pred_region
            %s509 = ssub.s32 2, 1
            loop: start=0, step=1, limit=1
            $region200: #{tpu_custom_call.1} parent=198 // loop_pre_header
              _
            $region201: #{tpu_custom_call.1} parent=198 // loop_header
              %s511 = sphi 0, %s515
              %p512 = scmp.ge.s32.totalorder %s511, 1
              %s516 = sphi %s488, %s488
              %s517 = sphi %s489, %s489
            $region202: #{tpu_custom_call.1} parent=198 // loop_header_branch
              %514 = sbr.rel (%p512) target = $region206
            $region203: #{tpu_custom_call.1} parent=198 // loop_body
              %v518 = vld [vmem:[%s516] sm:%s509]
              %519 = vst [vmem:[%s517] sm:%s509] %v518
            $region204: #{tpu_custom_call.1} parent=198 // loop_footer
              %s515 = sadd.s32 1, %s511
            $region205: #{tpu_custom_call.1} parent=198 // loop_footer_branch
              %510 = sbr.rel target = $region201
            $region206: #{tpu_custom_call.1} parent=198 // loop_exit
              _
          $region199: #{tpu_custom_call.1} parent=183 // pred_fallthru
            _
        $region184: #{tpu_custom_call.1} parent=47 // pred_fallthru
          _
        // Predicated region
        $region185: #{tpu_custom_call.1} parent=47 // pred_check
          _
        $region186: #{tpu_custom_call.1} parent=47 // pred_check_branch
          %493 = sbr.rel (0) target = $region188
        $region187: #{tpu_custom_call.1} parent=47 // pred_region
          %s495 = ssub.s32 2, 1
          loop: start=0, step=1, limit=1
          $region189: #{tpu_custom_call.1} parent=187 // loop_pre_header
            _
          $region190: #{tpu_custom_call.1} parent=187 // loop_header
            %s497 = sphi 0, %s501
            %p498 = scmp.ge.s32.totalorder %s497, 1
            %s502 = sphi %s488, %s488
            %s503 = sphi %s489, %s489
          $region191: #{tpu_custom_call.1} parent=187 // loop_header_branch
            %500 = sbr.rel (%p498) target = $region195
          $region192: #{tpu_custom_call.1} parent=187 // loop_body
            %v504 = vld [vmem:[%s502] sm:%s495]
            %505 = vst [vmem:[%s503] sm:%s495] %v504
          $region193: #{tpu_custom_call.1} parent=187 // loop_footer
            %s501 = sadd.s32 1, %s497
          $region194: #{tpu_custom_call.1} parent=187 // loop_footer_branch
            %496 = sbr.rel target = $region190
          $region195: #{tpu_custom_call.1} parent=187 // loop_exit
            _
        $region188: #{tpu_custom_call.1} parent=47 // pred_fallthru
          _
        // Predicated region
        $region207: #{tpu_custom_call.1} parent=47 // pred_check
          _
        $region208: #{tpu_custom_call.1} parent=47 // pred_check_branch
          %522 = sbr.rel (0) target = $region210
        $region209: #{tpu_custom_call.1} parent=47 // pred_region
          %523 = vsyncadd [#allocation3], 16
        $region210: #{tpu_custom_call.1} parent=47 // pred_fallthru
          _
        %s524 = sadd.s32 %s335, 5
        %s525 = sld [smem:[#allocation5 + %s524]]
        %s526 = scalar_lea.vmem %s2, %s525
        %s527 = scalar_lea.vmem [#allocation2], 5
        // Predicated region
        $region211: #{tpu_custom_call.1} parent=47 // pred_check
          _
        $region212: #{tpu_custom_call.1} parent=47 // pred_check_branch
          %529 = sbr.rel target = $region214
        $region213: #{tpu_custom_call.1} parent=47 // pred_region
          // Predicated region
          $region226: #{tpu_custom_call.1} parent=213 // pred_check
            _
          $region227: #{tpu_custom_call.1} parent=213 // pred_check_branch
            %545 = sbr.rel (0) target = $region229
          $region228: #{tpu_custom_call.1} parent=213 // pred_region
            %s547 = ssub.s32 2, 1
            loop: start=0, step=1, limit=1
            $region230: #{tpu_custom_call.1} parent=228 // loop_pre_header
              _
            $region231: #{tpu_custom_call.1} parent=228 // loop_header
              %s549 = sphi 0, %s553
              %p550 = scmp.ge.s32.totalorder %s549, 1
              %s554 = sphi %s526, %s526
              %s555 = sphi %s527, %s527
            $region232: #{tpu_custom_call.1} parent=228 // loop_header_branch
              %552 = sbr.rel (%p550) target = $region236
            $region233: #{tpu_custom_call.1} parent=228 // loop_body
              %v556 = vld [vmem:[%s554] sm:%s547]
              %557 = vst [vmem:[%s555] sm:%s547] %v556
            $region234: #{tpu_custom_call.1} parent=228 // loop_footer
              %s553 = sadd.s32 1, %s549
            $region235: #{tpu_custom_call.1} parent=228 // loop_footer_branch
              %548 = sbr.rel target = $region231
            $region236: #{tpu_custom_call.1} parent=228 // loop_exit
              _
          $region229: #{tpu_custom_call.1} parent=213 // pred_fallthru
            _
        $region214: #{tpu_custom_call.1} parent=47 // pred_fallthru
          _
        // Predicated region
        $region215: #{tpu_custom_call.1} parent=47 // pred_check
          _
        $region216: #{tpu_custom_call.1} parent=47 // pred_check_branch
          %531 = sbr.rel (0) target = $region218
        $region217: #{tpu_custom_call.1} parent=47 // pred_region
          %s533 = ssub.s32 2, 1
          loop: start=0, step=1, limit=1
          $region219: #{tpu_custom_call.1} parent=217 // loop_pre_header
            _
          $region220: #{tpu_custom_call.1} parent=217 // loop_header
            %s535 = sphi 0, %s539
            %p536 = scmp.ge.s32.totalorder %s535, 1
            %s540 = sphi %s526, %s526
            %s541 = sphi %s527, %s527
          $region221: #{tpu_custom_call.1} parent=217 // loop_header_branch
            %538 = sbr.rel (%p536) target = $region225
          $region222: #{tpu_custom_call.1} parent=217 // loop_body
            %v542 = vld [vmem:[%s540] sm:%s533]
            %543 = vst [vmem:[%s541] sm:%s533] %v542
          $region223: #{tpu_custom_call.1} parent=217 // loop_footer
            %s539 = sadd.s32 1, %s535
          $region224: #{tpu_custom_call.1} parent=217 // loop_footer_branch
            %534 = sbr.rel target = $region220
          $region225: #{tpu_custom_call.1} parent=217 // loop_exit
            _
        $region218: #{tpu_custom_call.1} parent=47 // pred_fallthru
          _
        // Predicated region
        $region237: #{tpu_custom_call.1} parent=47 // pred_check
          _
        $region238: #{tpu_custom_call.1} parent=47 // pred_check_branch
          %560 = sbr.rel (0) target = $region240
        $region239: #{tpu_custom_call.1} parent=47 // pred_region
          %561 = vsyncadd [#allocation3], 16
        $region240: #{tpu_custom_call.1} parent=47 // pred_fallthru
          _
        %s562 = sadd.s32 %s335, 6
        %s563 = sld [smem:[#allocation5 + %s562]]
        %s564 = scalar_lea.vmem %s2, %s563
        %s565 = scalar_lea.vmem [#allocation2], 6
        // Predicated region
        $region241: #{tpu_custom_call.1} parent=47 // pred_check
          _
        $region242: #{tpu_custom_call.1} parent=47 // pred_check_branch
          %567 = sbr.rel target = $region244
        $region243: #{tpu_custom_call.1} parent=47 // pred_region
          // Predicated region
          $region256: #{tpu_custom_call.1} parent=243 // pred_check
            _
          $region257: #{tpu_custom_call.1} parent=243 // pred_check_branch
            %583 = sbr.rel (0) target = $region259
          $region258: #{tpu_custom_call.1} parent=243 // pred_region
            %s585 = ssub.s32 2, 1
            loop: start=0, step=1, limit=1
            $region260: #{tpu_custom_call.1} parent=258 // loop_pre_header
              _
            $region261: #{tpu_custom_call.1} parent=258 // loop_header
              %s587 = sphi 0, %s591
              %p588 = scmp.ge.s32.totalorder %s587, 1
              %s592 = sphi %s564, %s564
              %s593 = sphi %s565, %s565
            $region262: #{tpu_custom_call.1} parent=258 // loop_header_branch
              %590 = sbr.rel (%p588) target = $region266
            $region263: #{tpu_custom_call.1} parent=258 // loop_body
              %v594 = vld [vmem:[%s592] sm:%s585]
              %595 = vst [vmem:[%s593] sm:%s585] %v594
            $region264: #{tpu_custom_call.1} parent=258 // loop_footer
              %s591 = sadd.s32 1, %s587
            $region265: #{tpu_custom_call.1} parent=258 // loop_footer_branch
              %586 = sbr.rel target = $region261
            $region266: #{tpu_custom_call.1} parent=258 // loop_exit
              _
          $region259: #{tpu_custom_call.1} parent=243 // pred_fallthru
            _
        $region244: #{tpu_custom_call.1} parent=47 // pred_fallthru
          _
        // Predicated region
        $region245: #{tpu_custom_call.1} parent=47 // pred_check
          _
        $region246: #{tpu_custom_call.1} parent=47 // pred_check_branch
          %569 = sbr.rel (0) target = $region248
        $region247: #{tpu_custom_call.1} parent=47 // pred_region
          %s571 = ssub.s32 2, 1
          loop: start=0, step=1, limit=1
          $region249: #{tpu_custom_call.1} parent=247 // loop_pre_header
            _
          $region250: #{tpu_custom_call.1} parent=247 // loop_header
            %s573 = sphi 0, %s577
            %p574 = scmp.ge.s32.totalorder %s573, 1
            %s578 = sphi %s564, %s564
            %s579 = sphi %s565, %s565
          $region251: #{tpu_custom_call.1} parent=247 // loop_header_branch
            %576 = sbr.rel (%p574) target = $region255
          $region252: #{tpu_custom_call.1} parent=247 // loop_body
            %v580 = vld [vmem:[%s578] sm:%s571]
            %581 = vst [vmem:[%s579] sm:%s571] %v580
          $region253: #{tpu_custom_call.1} parent=247 // loop_footer
            %s577 = sadd.s32 1, %s573
          $region254: #{tpu_custom_call.1} parent=247 // loop_footer_branch
            %572 = sbr.rel target = $region250
          $region255: #{tpu_custom_call.1} parent=247 // loop_exit
            _
        $region248: #{tpu_custom_call.1} parent=47 // pred_fallthru
          _
        // Predicated region
        $region267: #{tpu_custom_call.1} parent=47 // pred_check
          _
        $region268: #{tpu_custom_call.1} parent=47 // pred_check_branch
          %598 = sbr.rel (0) target = $region270
        $region269: #{tpu_custom_call.1} parent=47 // pred_region
          %599 = vsyncadd [#allocation3], 16
        $region270: #{tpu_custom_call.1} parent=47 // pred_fallthru
          _
        %s600 = sadd.s32 %s335, 7
        %s601 = sld [smem:[#allocation5 + %s600]]
        %s602 = scalar_lea.vmem %s2, %s601
        %s603 = scalar_lea.vmem [#allocation2], 7
        // Predicated region
        $region271: #{tpu_custom_call.1} parent=47 // pred_check
          _
        $region272: #{tpu_custom_call.1} parent=47 // pred_check_branch
          %605 = sbr.rel target = $region274
        $region273: #{tpu_custom_call.1} parent=47 // pred_region
          // Predicated region
          $region286: #{tpu_custom_call.1} parent=273 // pred_check
            _
          $region287: #{tpu_custom_call.1} parent=273 // pred_check_branch
            %621 = sbr.rel (0) target = $region289
          $region288: #{tpu_custom_call.1} parent=273 // pred_region
            %s623 = ssub.s32 2, 1
            loop: start=0, step=1, limit=1
            $region290: #{tpu_custom_call.1} parent=288 // loop_pre_header
              _
            $region291: #{tpu_custom_call.1} parent=288 // loop_header
              %s625 = sphi 0, %s629
              %p626 = scmp.ge.s32.totalorder %s625, 1
              %s630 = sphi %s602, %s602
              %s631 = sphi %s603, %s603
            $region292: #{tpu_custom_call.1} parent=288 // loop_header_branch
              %628 = sbr.rel (%p626) target = $region296
            $region293: #{tpu_custom_call.1} parent=288 // loop_body
              %v632 = vld [vmem:[%s630] sm:%s623]
              %633 = vst [vmem:[%s631] sm:%s623] %v632
            $region294: #{tpu_custom_call.1} parent=288 // loop_footer
              %s629 = sadd.s32 1, %s625
            $region295: #{tpu_custom_call.1} parent=288 // loop_footer_branch
              %624 = sbr.rel target = $region291
            $region296: #{tpu_custom_call.1} parent=288 // loop_exit
              _
          $region289: #{tpu_custom_call.1} parent=273 // pred_fallthru
            _
        $region274: #{tpu_custom_call.1} parent=47 // pred_fallthru
          _
        // Predicated region
        $region275: #{tpu_custom_call.1} parent=47 // pred_check
          _
        $region276: #{tpu_custom_call.1} parent=47 // pred_check_branch
          %607 = sbr.rel (0) target = $region278
        $region277: #{tpu_custom_call.1} parent=47 // pred_region
          %s609 = ssub.s32 2, 1
          loop: start=0, step=1, limit=1
          $region279: #{tpu_custom_call.1} parent=277 // loop_pre_header
            _
          $region280: #{tpu_custom_call.1} parent=277 // loop_header
            %s611 = sphi 0, %s615
            %p612 = scmp.ge.s32.totalorder %s611, 1
            %s616 = sphi %s602, %s602
            %s617 = sphi %s603, %s603
          $region281: #{tpu_custom_call.1} parent=277 // loop_header_branch
            %614 = sbr.rel (%p612) target = $region285
          $region282: #{tpu_custom_call.1} parent=277 // loop_body
            %v618 = vld [vmem:[%s616] sm:%s609]
            %619 = vst [vmem:[%s617] sm:%s609] %v618
          $region283: #{tpu_custom_call.1} parent=277 // loop_footer
            %s615 = sadd.s32 1, %s611
          $region284: #{tpu_custom_call.1} parent=277 // loop_footer_branch
            %610 = sbr.rel target = $region280
          $region285: #{tpu_custom_call.1} parent=277 // loop_exit
            _
        $region278: #{tpu_custom_call.1} parent=47 // pred_fallthru
          _
        // Predicated region
        $region297: #{tpu_custom_call.1} parent=47 // pred_check
          _
        $region298: #{tpu_custom_call.1} parent=47 // pred_check_branch
          %636 = sbr.rel (0) target = $region300
        $region299: #{tpu_custom_call.1} parent=47 // pred_region
          %637 = vsyncadd [#allocation3], 16
        $region300: #{tpu_custom_call.1} parent=47 // pred_fallthru
          _
        %s638 = sadd.s32 %s334, 1
        %s639 = smul.u32 %s638, 128
        %s640 = sld [smem:[#allocation5 + %s639]]
        %s641 = scalar_lea.vmem %s2, %s640
        %s642 = scalar_lea.vmem [#allocation2], 8
        // Predicated region
        $region301: #{tpu_custom_call.1} parent=47 // pred_check
          _
        $region302: #{tpu_custom_call.1} parent=47 // pred_check_branch
          %644 = sbr.rel target = $region304
        $region303: #{tpu_custom_call.1} parent=47 // pred_region
          // Predicated region
          $region316: #{tpu_custom_call.1} parent=303 // pred_check
            _
          $region317: #{tpu_custom_call.1} parent=303 // pred_check_branch
            %660 = sbr.rel (0) target = $region319
          $region318: #{tpu_custom_call.1} parent=303 // pred_region
            %s662 = ssub.s32 2, 1
            loop: start=0, step=1, limit=1
            $region320: #{tpu_custom_call.1} parent=318 // loop_pre_header
              _
            $region321: #{tpu_custom_call.1} parent=318 // loop_header
              %s664 = sphi 0, %s668
              %p665 = scmp.ge.s32.totalorder %s664, 1
              %s669 = sphi %s641, %s641
              %s670 = sphi %s642, %s642
            $region322: #{tpu_custom_call.1} parent=318 // loop_header_branch
              %667 = sbr.rel (%p665) target = $region326
            $region323: #{tpu_custom_call.1} parent=318 // loop_body
              %v671 = vld [vmem:[%s669] sm:%s662]
              %672 = vst [vmem:[%s670] sm:%s662] %v671
            $region324: #{tpu_custom_call.1} parent=318 // loop_footer
              %s668 = sadd.s32 1, %s664
            $region325: #{tpu_custom_call.1} parent=318 // loop_footer_branch
              %663 = sbr.rel target = $region321
            $region326: #{tpu_custom_call.1} parent=318 // loop_exit
              _
          $region319: #{tpu_custom_call.1} parent=303 // pred_fallthru
            _
        $region304: #{tpu_custom_call.1} parent=47 // pred_fallthru
          _
        // Predicated region
        $region305: #{tpu_custom_call.1} parent=47 // pred_check
          _
        $region306: #{tpu_custom_call.1} parent=47 // pred_check_branch
          %646 = sbr.rel (0) target = $region308
        $region307: #{tpu_custom_call.1} parent=47 // pred_region
          %s648 = ssub.s32 2, 1
          loop: start=0, step=1, limit=1
          $region309: #{tpu_custom_call.1} parent=307 // loop_pre_header
            _
          $region310: #{tpu_custom_call.1} parent=307 // loop_header
            %s650 = sphi 0, %s654
            %p651 = scmp.ge.s32.totalorder %s650, 1
            %s655 = sphi %s641, %s641
            %s656 = sphi %s642, %s642
          $region311: #{tpu_custom_call.1} parent=307 // loop_header_branch
            %653 = sbr.rel (%p651) target = $region315
          $region312: #{tpu_custom_call.1} parent=307 // loop_body
            %v657 = vld [vmem:[%s655] sm:%s648]
            %658 = vst [vmem:[%s656] sm:%s648] %v657
          $region313: #{tpu_custom_call.1} parent=307 // loop_footer
            %s654 = sadd.s32 1, %s650
          $region314: #{tpu_custom_call.1} parent=307 // loop_footer_branch
            %649 = sbr.rel target = $region310
          $region315: #{tpu_custom_call.1} parent=307 // loop_exit
            _
        $region308: #{tpu_custom_call.1} parent=47 // pred_fallthru
          _
        // Predicated region
        $region327: #{tpu_custom_call.1} parent=47 // pred_check
          _
        $region328: #{tpu_custom_call.1} parent=47 // pred_check_branch
          %675 = sbr.rel (0) target = $region330
        $region329: #{tpu_custom_call.1} parent=47 // pred_region
          %676 = vsyncadd [#allocation3], 16
        $region330: #{tpu_custom_call.1} parent=47 // pred_fallthru
          _
        %s677 = sadd.s32 %s639, 1
        %s678 = sld [smem:[#allocation5 + %s677]]
        %s679 = scalar_lea.vmem %s2, %s678
        %s680 = scalar_lea.vmem [#allocation2], 9
        // Predicated region
        $region331: #{tpu_custom_call.1} parent=47 // pred_check
          _
        $region332: #{tpu_custom_call.1} parent=47 // pred_check_branch
          %682 = sbr.rel target = $region334
        $region333: #{tpu_custom_call.1} parent=47 // pred_region
          // Predicated region
          $region346: #{tpu_custom_call.1} parent=333 // pred_check
            _
          $region347: #{tpu_custom_call.1} parent=333 // pred_check_branch
            %698 = sbr.rel (0) target = $region349
          $region348: #{tpu_custom_call.1} parent=333 // pred_region
            %s700 = ssub.s32 2, 1
            loop: start=0, step=1, limit=1
            $region350: #{tpu_custom_call.1} parent=348 // loop_pre_header
              _
            $region351: #{tpu_custom_call.1} parent=348 // loop_header
              %s702 = sphi 0, %s706
              %p703 = scmp.ge.s32.totalorder %s702, 1
              %s707 = sphi %s679, %s679
              %s708 = sphi %s680, %s680
            $region352: #{tpu_custom_call.1} parent=348 // loop_header_branch
              %705 = sbr.rel (%p703) target = $region356
            $region353: #{tpu_custom_call.1} parent=348 // loop_body
              %v709 = vld [vmem:[%s707] sm:%s700]
              %710 = vst [vmem:[%s708] sm:%s700] %v709
            $region354: #{tpu_custom_call.1} parent=348 // loop_footer
              %s706 = sadd.s32 1, %s702
            $region355: #{tpu_custom_call.1} parent=348 // loop_footer_branch
              %701 = sbr.rel target = $region351
            $region356: #{tpu_custom_call.1} parent=348 // loop_exit
              _
          $region349: #{tpu_custom_call.1} parent=333 // pred_fallthru
            _
        $region334: #{tpu_custom_call.1} parent=47 // pred_fallthru
          _
        // Predicated region
        $region335: #{tpu_custom_call.1} parent=47 // pred_check
          _
        $region336: #{tpu_custom_call.1} parent=47 // pred_check_branch
          %684 = sbr.rel (0) target = $region338
        $region337: #{tpu_custom_call.1} parent=47 // pred_region
          %s686 = ssub.s32 2, 1
          loop: start=0, step=1, limit=1
          $region339: #{tpu_custom_call.1} parent=337 // loop_pre_header
            _
          $region340: #{tpu_custom_call.1} parent=337 // loop_header
            %s688 = sphi 0, %s692
            %p689 = scmp.ge.s32.totalorder %s688, 1
            %s693 = sphi %s679, %s679
            %s694 = sphi %s680, %s680
          $region341: #{tpu_custom_call.1} parent=337 // loop_header_branch
            %691 = sbr.rel (%p689) target = $region345
          $region342: #{tpu_custom_call.1} parent=337 // loop_body
            %v695 = vld [vmem:[%s693] sm:%s686]
            %696 = vst [vmem:[%s694] sm:%s686] %v695
          $region343: #{tpu_custom_call.1} parent=337 // loop_footer
            %s692 = sadd.s32 1, %s688
          $region344: #{tpu_custom_call.1} parent=337 // loop_footer_branch
            %687 = sbr.rel target = $region340
          $region345: #{tpu_custom_call.1} parent=337 // loop_exit
            _
        $region338: #{tpu_custom_call.1} parent=47 // pred_fallthru
          _
        // Predicated region
        $region357: #{tpu_custom_call.1} parent=47 // pred_check
          _
        $region358: #{tpu_custom_call.1} parent=47 // pred_check_branch
          %713 = sbr.rel (0) target = $region360
        $region359: #{tpu_custom_call.1} parent=47 // pred_region
          %714 = vsyncadd [#allocation3], 16
        $region360: #{tpu_custom_call.1} parent=47 // pred_fallthru
          _
        %s715 = sadd.s32 %s639, 2
        %s716 = sld [smem:[#allocation5 + %s715]]
        %s717 = scalar_lea.vmem %s2, %s716
        %s718 = scalar_lea.vmem [#allocation2], 10
        // Predicated region
        $region361: #{tpu_custom_call.1} parent=47 // pred_check
          _
        $region362: #{tpu_custom_call.1} parent=47 // pred_check_branch
          %720 = sbr.rel target = $region364
        $region363: #{tpu_custom_call.1} parent=47 // pred_region
          // Predicated region
          $region376: #{tpu_custom_call.1} parent=363 // pred_check
            _
          $region377: #{tpu_custom_call.1} parent=363 // pred_check_branch
            %736 = sbr.rel (0) target = $region379
          $region378: #{tpu_custom_call.1} parent=363 // pred_region
            %s738 = ssub.s32 2, 1
            loop: start=0, step=1, limit=1
            $region380: #{tpu_custom_call.1} parent=378 // loop_pre_header
              _
            $region381: #{tpu_custom_call.1} parent=378 // loop_header
              %s740 = sphi 0, %s744
              %p741 = scmp.ge.s32.totalorder %s740, 1
              %s745 = sphi %s717, %s717
              %s746 = sphi %s718, %s718
            $region382: #{tpu_custom_call.1} parent=378 // loop_header_branch
              %743 = sbr.rel (%p741) target = $region386
            $region383: #{tpu_custom_call.1} parent=378 // loop_body
              %v747 = vld [vmem:[%s745] sm:%s738]
              %748 = vst [vmem:[%s746] sm:%s738] %v747
            $region384: #{tpu_custom_call.1} parent=378 // loop_footer
              %s744 = sadd.s32 1, %s740
            $region385: #{tpu_custom_call.1} parent=378 // loop_footer_branch
              %739 = sbr.rel target = $region381
            $region386: #{tpu_custom_call.1} parent=378 // loop_exit
              _
          $region379: #{tpu_custom_call.1} parent=363 // pred_fallthru
            _
        $region364: #{tpu_custom_call.1} parent=47 // pred_fallthru
          _
        // Predicated region
        $region365: #{tpu_custom_call.1} parent=47 // pred_check
          _
        $region366: #{tpu_custom_call.1} parent=47 // pred_check_branch
          %722 = sbr.rel (0) target = $region368
        $region367: #{tpu_custom_call.1} parent=47 // pred_region
          %s724 = ssub.s32 2, 1
          loop: start=0, step=1, limit=1
          $region369: #{tpu_custom_call.1} parent=367 // loop_pre_header
            _
          $region370: #{tpu_custom_call.1} parent=367 // loop_header
            %s726 = sphi 0, %s730
            %p727 = scmp.ge.s32.totalorder %s726, 1
            %s731 = sphi %s717, %s717
            %s732 = sphi %s718, %s718
          $region371: #{tpu_custom_call.1} parent=367 // loop_header_branch
            %729 = sbr.rel (%p727) target = $region375
          $region372: #{tpu_custom_call.1} parent=367 // loop_body
            %v733 = vld [vmem:[%s731] sm:%s724]
            %734 = vst [vmem:[%s732] sm:%s724] %v733
          $region373: #{tpu_custom_call.1} parent=367 // loop_footer
            %s730 = sadd.s32 1, %s726
          $region374: #{tpu_custom_call.1} parent=367 // loop_footer_branch
            %725 = sbr.rel target = $region370
          $region375: #{tpu_custom_call.1} parent=367 // loop_exit
            _
        $region368: #{tpu_custom_call.1} parent=47 // pred_fallthru
          _
        // Predicated region
        $region387: #{tpu_custom_call.1} parent=47 // pred_check
          _
        $region388: #{tpu_custom_call.1} parent=47 // pred_check_branch
          %751 = sbr.rel (0) target = $region390
        $region389: #{tpu_custom_call.1} parent=47 // pred_region
          %752 = vsyncadd [#allocation3], 16
        $region390: #{tpu_custom_call.1} parent=47 // pred_fallthru
          _
        %s753 = sadd.s32 %s639, 3
        %s754 = sld [smem:[#allocation5 + %s753]]
        %s755 = scalar_lea.vmem %s2, %s754
        %s756 = scalar_lea.vmem [#allocation2], 11
        // Predicated region
        $region391: #{tpu_custom_call.1} parent=47 // pred_check
          _
        $region392: #{tpu_custom_call.1} parent=47 // pred_check_branch
          %758 = sbr.rel target = $region394
        $region393: #{tpu_custom_call.1} parent=47 // pred_region
          // Predicated region
          $region406: #{tpu_custom_call.1} parent=393 // pred_check
            _
          $region407: #{tpu_custom_call.1} parent=393 // pred_check_branch
            %774 = sbr.rel (0) target = $region409
          $region408: #{tpu_custom_call.1} parent=393 // pred_region
            %s776 = ssub.s32 2, 1
            loop: start=0, step=1, limit=1
            $region410: #{tpu_custom_call.1} parent=408 // loop_pre_header
              _
            $region411: #{tpu_custom_call.1} parent=408 // loop_header
              %s778 = sphi 0, %s782
              %p779 = scmp.ge.s32.totalorder %s778, 1
              %s783 = sphi %s755, %s755
              %s784 = sphi %s756, %s756
            $region412: #{tpu_custom_call.1} parent=408 // loop_header_branch
              %781 = sbr.rel (%p779) target = $region416
            $region413: #{tpu_custom_call.1} parent=408 // loop_body
              %v785 = vld [vmem:[%s783] sm:%s776]
              %786 = vst [vmem:[%s784] sm:%s776] %v785
            $region414: #{tpu_custom_call.1} parent=408 // loop_footer
              %s782 = sadd.s32 1, %s778
            $region415: #{tpu_custom_call.1} parent=408 // loop_footer_branch
              %777 = sbr.rel target = $region411
            $region416: #{tpu_custom_call.1} parent=408 // loop_exit
              _
          $region409: #{tpu_custom_call.1} parent=393 // pred_fallthru
            _
        $region394: #{tpu_custom_call.1} parent=47 // pred_fallthru
          _
        // Predicated region
        $region395: #{tpu_custom_call.1} parent=47 // pred_check
          _
        $region396: #{tpu_custom_call.1} parent=47 // pred_check_branch
          %760 = sbr.rel (0) target = $region398
        $region397: #{tpu_custom_call.1} parent=47 // pred_region
          %s762 = ssub.s32 2, 1
          loop: start=0, step=1, limit=1
          $region399: #{tpu_custom_call.1} parent=397 // loop_pre_header
            _
          $region400: #{tpu_custom_call.1} parent=397 // loop_header
            %s764 = sphi 0, %s768
            %p765 = scmp.ge.s32.totalorder %s764, 1
            %s769 = sphi %s755, %s755
            %s770 = sphi %s756, %s756
          $region401: #{tpu_custom_call.1} parent=397 // loop_header_branch
            %767 = sbr.rel (%p765) target = $region405
          $region402: #{tpu_custom_call.1} parent=397 // loop_body
            %v771 = vld [vmem:[%s769] sm:%s762]
            %772 = vst [vmem:[%s770] sm:%s762] %v771
          $region403: #{tpu_custom_call.1} parent=397 // loop_footer
            %s768 = sadd.s32 1, %s764
          $region404: #{tpu_custom_call.1} parent=397 // loop_footer_branch
            %763 = sbr.rel target = $region400
          $region405: #{tpu_custom_call.1} parent=397 // loop_exit
            _
        $region398: #{tpu_custom_call.1} parent=47 // pred_fallthru
          _
        // Predicated region
        $region417: #{tpu_custom_call.1} parent=47 // pred_check
          _
        $region418: #{tpu_custom_call.1} parent=47 // pred_check_branch
          %789 = sbr.rel (0) target = $region420
        $region419: #{tpu_custom_call.1} parent=47 // pred_region
          %790 = vsyncadd [#allocation3], 16
        $region420: #{tpu_custom_call.1} parent=47 // pred_fallthru
          _
        %s791 = sadd.s32 %s639, 4
        %s792 = sld [smem:[#allocation5 + %s791]]
        %s793 = scalar_lea.vmem %s2, %s792
        %s794 = scalar_lea.vmem [#allocation2], 12
        // Predicated region
        $region421: #{tpu_custom_call.1} parent=47 // pred_check
          _
        $region422: #{tpu_custom_call.1} parent=47 // pred_check_branch
          %796 = sbr.rel target = $region424
        $region423: #{tpu_custom_call.1} parent=47 // pred_region
          // Predicated region
          $region436: #{tpu_custom_call.1} parent=423 // pred_check
            _
          $region437: #{tpu_custom_call.1} parent=423 // pred_check_branch
            %812 = sbr.rel (0) target = $region439
          $region438: #{tpu_custom_call.1} parent=423 // pred_region
            %s814 = ssub.s32 2, 1
            loop: start=0, step=1, limit=1
            $region440: #{tpu_custom_call.1} parent=438 // loop_pre_header
              _
            $region441: #{tpu_custom_call.1} parent=438 // loop_header
              %s816 = sphi 0, %s820
              %p817 = scmp.ge.s32.totalorder %s816, 1
              %s821 = sphi %s793, %s793
              %s822 = sphi %s794, %s794
            $region442: #{tpu_custom_call.1} parent=438 // loop_header_branch
              %819 = sbr.rel (%p817) target = $region446
            $region443: #{tpu_custom_call.1} parent=438 // loop_body
              %v823 = vld [vmem:[%s821] sm:%s814]
              %824 = vst [vmem:[%s822] sm:%s814] %v823
            $region444: #{tpu_custom_call.1} parent=438 // loop_footer
              %s820 = sadd.s32 1, %s816
            $region445: #{tpu_custom_call.1} parent=438 // loop_footer_branch
              %815 = sbr.rel target = $region441
            $region446: #{tpu_custom_call.1} parent=438 // loop_exit
              _
          $region439: #{tpu_custom_call.1} parent=423 // pred_fallthru
            _
        $region424: #{tpu_custom_call.1} parent=47 // pred_fallthru
          _
        // Predicated region
        $region425: #{tpu_custom_call.1} parent=47 // pred_check
          _
        $region426: #{tpu_custom_call.1} parent=47 // pred_check_branch
          %798 = sbr.rel (0) target = $region428
        $region427: #{tpu_custom_call.1} parent=47 // pred_region
          %s800 = ssub.s32 2, 1
          loop: start=0, step=1, limit=1
          $region429: #{tpu_custom_call.1} parent=427 // loop_pre_header
            _
          $region430: #{tpu_custom_call.1} parent=427 // loop_header
            %s802 = sphi 0, %s806
            %p803 = scmp.ge.s32.totalorder %s802, 1
            %s807 = sphi %s793, %s793
            %s808 = sphi %s794, %s794
          $region431: #{tpu_custom_call.1} parent=427 // loop_header_branch
            %805 = sbr.rel (%p803) target = $region435
          $region432: #{tpu_custom_call.1} parent=427 // loop_body
            %v809 = vld [vmem:[%s807] sm:%s800]
            %810 = vst [vmem:[%s808] sm:%s800] %v809
          $region433: #{tpu_custom_call.1} parent=427 // loop_footer
            %s806 = sadd.s32 1, %s802
          $region434: #{tpu_custom_call.1} parent=427 // loop_footer_branch
            %801 = sbr.rel target = $region430
          $region435: #{tpu_custom_call.1} parent=427 // loop_exit
            _
        $region428: #{tpu_custom_call.1} parent=47 // pred_fallthru
          _
        // Predicated region
        $region447: #{tpu_custom_call.1} parent=47 // pred_check
          _
        $region448: #{tpu_custom_call.1} parent=47 // pred_check_branch
          %827 = sbr.rel (0) target = $region450
        $region449: #{tpu_custom_call.1} parent=47 // pred_region
          %828 = vsyncadd [#allocation3], 16
        $region450: #{tpu_custom_call.1} parent=47 // pred_fallthru
          _
        %s829 = sadd.s32 %s639, 5
        %s830 = sld [smem:[#allocation5 + %s829]]
        %s831 = scalar_lea.vmem %s2, %s830
        %s832 = scalar_lea.vmem [#allocation2], 13
        // Predicated region
        $region451: #{tpu_custom_call.1} parent=47 // pred_check
          _
        $region452: #{tpu_custom_call.1} parent=47 // pred_check_branch
          %834 = sbr.rel target = $region454
        $region453: #{tpu_custom_call.1} parent=47 // pred_region
          // Predicated region
          $region466: #{tpu_custom_call.1} parent=453 // pred_check
            _
          $region467: #{tpu_custom_call.1} parent=453 // pred_check_branch
            %850 = sbr.rel (0) target = $region469
          $region468: #{tpu_custom_call.1} parent=453 // pred_region
            %s852 = ssub.s32 2, 1
            loop: start=0, step=1, limit=1
            $region470: #{tpu_custom_call.1} parent=468 // loop_pre_header
              _
            $region471: #{tpu_custom_call.1} parent=468 // loop_header
              %s854 = sphi 0, %s858
              %p855 = scmp.ge.s32.totalorder %s854, 1
              %s859 = sphi %s831, %s831
              %s860 = sphi %s832, %s832
            $region472: #{tpu_custom_call.1} parent=468 // loop_header_branch
              %857 = sbr.rel (%p855) target = $region476
            $region473: #{tpu_custom_call.1} parent=468 // loop_body
              %v861 = vld [vmem:[%s859] sm:%s852]
              %862 = vst [vmem:[%s860] sm:%s852] %v861
            $region474: #{tpu_custom_call.1} parent=468 // loop_footer
              %s858 = sadd.s32 1, %s854
            $region475: #{tpu_custom_call.1} parent=468 // loop_footer_branch
              %853 = sbr.rel target = $region471
            $region476: #{tpu_custom_call.1} parent=468 // loop_exit
              _
          $region469: #{tpu_custom_call.1} parent=453 // pred_fallthru
            _
        $region454: #{tpu_custom_call.1} parent=47 // pred_fallthru
          _
        // Predicated region
        $region455: #{tpu_custom_call.1} parent=47 // pred_check
          _
        $region456: #{tpu_custom_call.1} parent=47 // pred_check_branch
          %836 = sbr.rel (0) target = $region458
        $region457: #{tpu_custom_call.1} parent=47 // pred_region
          %s838 = ssub.s32 2, 1
          loop: start=0, step=1, limit=1
          $region459: #{tpu_custom_call.1} parent=457 // loop_pre_header
            _
          $region460: #{tpu_custom_call.1} parent=457 // loop_header
            %s840 = sphi 0, %s844
            %p841 = scmp.ge.s32.totalorder %s840, 1
            %s845 = sphi %s831, %s831
            %s846 = sphi %s832, %s832
          $region461: #{tpu_custom_call.1} parent=457 // loop_header_branch
            %843 = sbr.rel (%p841) target = $region465
          $region462: #{tpu_custom_call.1} parent=457 // loop_body
            %v847 = vld [vmem:[%s845] sm:%s838]
            %848 = vst [vmem:[%s846] sm:%s838] %v847
          $region463: #{tpu_custom_call.1} parent=457 // loop_footer
            %s844 = sadd.s32 1, %s840
          $region464: #{tpu_custom_call.1} parent=457 // loop_footer_branch
            %839 = sbr.rel target = $region460
          $region465: #{tpu_custom_call.1} parent=457 // loop_exit
            _
        $region458: #{tpu_custom_call.1} parent=47 // pred_fallthru
          _
        // Predicated region
        $region477: #{tpu_custom_call.1} parent=47 // pred_check
          _
        $region478: #{tpu_custom_call.1} parent=47 // pred_check_branch
          %865 = sbr.rel (0) target = $region480
        $region479: #{tpu_custom_call.1} parent=47 // pred_region
          %866 = vsyncadd [#allocation3], 16
        $region480: #{tpu_custom_call.1} parent=47 // pred_fallthru
          _
        %s867 = sadd.s32 %s639, 6
        %s868 = sld [smem:[#allocation5 + %s867]]
        %s869 = scalar_lea.vmem %s2, %s868
        %s870 = scalar_lea.vmem [#allocation2], 14
        // Predicated region
        $region481: #{tpu_custom_call.1} parent=47 // pred_check
          _
        $region482: #{tpu_custom_call.1} parent=47 // pred_check_branch
          %872 = sbr.rel target = $region484
        $region483: #{tpu_custom_call.1} parent=47 // pred_region
          // Predicated region
          $region496: #{tpu_custom_call.1} parent=483 // pred_check
            _
          $region497: #{tpu_custom_call.1} parent=483 // pred_check_branch
            %888 = sbr.rel (0) target = $region499
          $region498: #{tpu_custom_call.1} parent=483 // pred_region
            %s890 = ssub.s32 2, 1
            loop: start=0, step=1, limit=1
            $region500: #{tpu_custom_call.1} parent=498 // loop_pre_header
              _
            $region501: #{tpu_custom_call.1} parent=498 // loop_header
              %s892 = sphi 0, %s896
              %p893 = scmp.ge.s32.totalorder %s892, 1
              %s897 = sphi %s869, %s869
              %s898 = sphi %s870, %s870
            $region502: #{tpu_custom_call.1} parent=498 // loop_header_branch
              %895 = sbr.rel (%p893) target = $region506
            $region503: #{tpu_custom_call.1} parent=498 // loop_body
              %v899 = vld [vmem:[%s897] sm:%s890]
              %900 = vst [vmem:[%s898] sm:%s890] %v899
            $region504: #{tpu_custom_call.1} parent=498 // loop_footer
              %s896 = sadd.s32 1, %s892
            $region505: #{tpu_custom_call.1} parent=498 // loop_footer_branch
              %891 = sbr.rel target = $region501
            $region506: #{tpu_custom_call.1} parent=498 // loop_exit
              _
          $region499: #{tpu_custom_call.1} parent=483 // pred_fallthru
            _
        $region484: #{tpu_custom_call.1} parent=47 // pred_fallthru
          _
        // Predicated region
        $region485: #{tpu_custom_call.1} parent=47 // pred_check
          _
        $region486: #{tpu_custom_call.1} parent=47 // pred_check_branch
          %874 = sbr.rel (0) target = $region488
        $region487: #{tpu_custom_call.1} parent=47 // pred_region
          %s876 = ssub.s32 2, 1
          loop: start=0, step=1, limit=1
          $region489: #{tpu_custom_call.1} parent=487 // loop_pre_header
            _
          $region490: #{tpu_custom_call.1} parent=487 // loop_header
            %s878 = sphi 0, %s882
            %p879 = scmp.ge.s32.totalorder %s878, 1
            %s883 = sphi %s869, %s869
            %s884 = sphi %s870, %s870
          $region491: #{tpu_custom_call.1} parent=487 // loop_header_branch
            %881 = sbr.rel (%p879) target = $region495
          $region492: #{tpu_custom_call.1} parent=487 // loop_body
            %v885 = vld [vmem:[%s883] sm:%s876]
            %886 = vst [vmem:[%s884] sm:%s876] %v885
          $region493: #{tpu_custom_call.1} parent=487 // loop_footer
            %s882 = sadd.s32 1, %s878
          $region494: #{tpu_custom_call.1} parent=487 // loop_footer_branch
            %877 = sbr.rel target = $region490
          $region495: #{tpu_custom_call.1} parent=487 // loop_exit
            _
        $region488: #{tpu_custom_call.1} parent=47 // pred_fallthru
          _
        // Predicated region
        $region507: #{tpu_custom_call.1} parent=47 // pred_check
          _
        $region508: #{tpu_custom_call.1} parent=47 // pred_check_branch
          %903 = sbr.rel (0) target = $region510
        $region509: #{tpu_custom_call.1} parent=47 // pred_region
          %904 = vsyncadd [#allocation3], 16
        $region510: #{tpu_custom_call.1} parent=47 // pred_fallthru
          _
        %s905 = sadd.s32 %s639, 7
        %s906 = sld [smem:[#allocation5 + %s905]]
        %s907 = scalar_lea.vmem %s2, %s906
        %s908 = scalar_lea.vmem [#allocation2], 15
        // Predicated region
        $region511: #{tpu_custom_call.1} parent=47 // pred_check
          _
        $region512: #{tpu_custom_call.1} parent=47 // pred_check_branch
          %910 = sbr.rel target = $region514
        $region513: #{tpu_custom_call.1} parent=47 // pred_region
          // Predicated region
          $region526: #{tpu_custom_call.1} parent=513 // pred_check
            _
          $region527: #{tpu_custom_call.1} parent=513 // pred_check_branch
            %926 = sbr.rel (0) target = $region529
          $region528: #{tpu_custom_call.1} parent=513 // pred_region
            %s928 = ssub.s32 2, 1
            loop: start=0, step=1, limit=1
            $region530: #{tpu_custom_call.1} parent=528 // loop_pre_header
              _
            $region531: #{tpu_custom_call.1} parent=528 // loop_header
              %s930 = sphi 0, %s934
              %p931 = scmp.ge.s32.totalorder %s930, 1
              %s935 = sphi %s907, %s907
              %s936 = sphi %s908, %s908
            $region532: #{tpu_custom_call.1} parent=528 // loop_header_branch
              %933 = sbr.rel (%p931) target = $region536
            $region533: #{tpu_custom_call.1} parent=528 // loop_body
              %v937 = vld [vmem:[%s935] sm:%s928]
              %938 = vst [vmem:[%s936] sm:%s928] %v937
            $region534: #{tpu_custom_call.1} parent=528 // loop_footer
              %s934 = sadd.s32 1, %s930
            $region535: #{tpu_custom_call.1} parent=528 // loop_footer_branch
              %929 = sbr.rel target = $region531
            $region536: #{tpu_custom_call.1} parent=528 // loop_exit
              _
          $region529: #{tpu_custom_call.1} parent=513 // pred_fallthru
            _
        $region514: #{tpu_custom_call.1} parent=47 // pred_fallthru
          _
        // Predicated region
        $region515: #{tpu_custom_call.1} parent=47 // pred_check
          _
        $region516: #{tpu_custom_call.1} parent=47 // pred_check_branch
          %912 = sbr.rel (0) target = $region518
        $region517: #{tpu_custom_call.1} parent=47 // pred_region
          %s914 = ssub.s32 2, 1
          loop: start=0, step=1, limit=1
          $region519: #{tpu_custom_call.1} parent=517 // loop_pre_header
            _
          $region520: #{tpu_custom_call.1} parent=517 // loop_header
            %s916 = sphi 0, %s920
            %p917 = scmp.ge.s32.totalorder %s916, 1
            %s921 = sphi %s907, %s907
            %s922 = sphi %s908, %s908
          $region521: #{tpu_custom_call.1} parent=517 // loop_header_branch
            %919 = sbr.rel (%p917) target = $region525
          $region522: #{tpu_custom_call.1} parent=517 // loop_body
            %v923 = vld [vmem:[%s921] sm:%s914]
            %924 = vst [vmem:[%s922] sm:%s914] %v923
          $region523: #{tpu_custom_call.1} parent=517 // loop_footer
            %s920 = sadd.s32 1, %s916
          $region524: #{tpu_custom_call.1} parent=517 // loop_footer_branch
            %915 = sbr.rel target = $region520
          $region525: #{tpu_custom_call.1} parent=517 // loop_exit
            _
        $region518: #{tpu_custom_call.1} parent=47 // pred_fallthru
          _
        // Predicated region
        $region537: #{tpu_custom_call.1} parent=47 // pred_check
          _
        $region538: #{tpu_custom_call.1} parent=47 // pred_check_branch
          %941 = sbr.rel (0) target = $region540
        $region539: #{tpu_custom_call.1} parent=47 // pred_region
          %942 = vsyncadd [#allocation3], 16
        $region540: #{tpu_custom_call.1} parent=47 // pred_fallthru
          _
        %s943 = sadd.s32 %s334, 2
        %s944 = smul.u32 %s943, 128
        %s945 = sld [smem:[#allocation5 + %s944]]
        %s946 = scalar_lea.vmem %s2, %s945
        %s947 = scalar_lea.vmem [#allocation2], 16
        // Predicated region
        $region541: #{tpu_custom_call.1} parent=47 // pred_check
          _
        $region542: #{tpu_custom_call.1} parent=47 // pred_check_branch
          %949 = sbr.rel target = $region544
        $region543: #{tpu_custom_call.1} parent=47 // pred_region
          // Predicated region
          $region556: #{tpu_custom_call.1} parent=543 // pred_check
            _
          $region557: #{tpu_custom_call.1} parent=543 // pred_check_branch
            %965 = sbr.rel (0) target = $region559
          $region558: #{tpu_custom_call.1} parent=543 // pred_region
            %s967 = ssub.s32 2, 1
            loop: start=0, step=1, limit=1
            $region560: #{tpu_custom_call.1} parent=558 // loop_pre_header
              _
            $region561: #{tpu_custom_call.1} parent=558 // loop_header
              %s969 = sphi 0, %s973
              %p970 = scmp.ge.s32.totalorder %s969, 1
              %s974 = sphi %s946, %s946
              %s975 = sphi %s947, %s947
            $region562: #{tpu_custom_call.1} parent=558 // loop_header_branch
              %972 = sbr.rel (%p970) target = $region566
            $region563: #{tpu_custom_call.1} parent=558 // loop_body
              %v976 = vld [vmem:[%s974] sm:%s967]
              %977 = vst [vmem:[%s975] sm:%s967] %v976
            $region564: #{tpu_custom_call.1} parent=558 // loop_footer
              %s973 = sadd.s32 1, %s969
            $region565: #{tpu_custom_call.1} parent=558 // loop_footer_branch
              %968 = sbr.rel target = $region561
            $region566: #{tpu_custom_call.1} parent=558 // loop_exit
              _
          $region559: #{tpu_custom_call.1} parent=543 // pred_fallthru
            _
        $region544: #{tpu_custom_call.1} parent=47 // pred_fallthru
          _
        // Predicated region
        $region545: #{tpu_custom_call.1} parent=47 // pred_check
          _
        $region546: #{tpu_custom_call.1} parent=47 // pred_check_branch
          %951 = sbr.rel (0) target = $region548
        $region547: #{tpu_custom_call.1} parent=47 // pred_region
          %s953 = ssub.s32 2, 1
          loop: start=0, step=1, limit=1
          $region549: #{tpu_custom_call.1} parent=547 // loop_pre_header
            _
          $region550: #{tpu_custom_call.1} parent=547 // loop_header
            %s955 = sphi 0, %s959
            %p956 = scmp.ge.s32.totalorder %s955, 1
            %s960 = sphi %s946, %s946
            %s961 = sphi %s947, %s947
          $region551: #{tpu_custom_call.1} parent=547 // loop_header_branch
            %958 = sbr.rel (%p956) target = $region555
          $region552: #{tpu_custom_call.1} parent=547 // loop_body
            %v962 = vld [vmem:[%s960] sm:%s953]
            %963 = vst [vmem:[%s961] sm:%s953] %v962
          $region553: #{tpu_custom_call.1} parent=547 // loop_footer
            %s959 = sadd.s32 1, %s955
          $region554: #{tpu_custom_call.1} parent=547 // loop_footer_branch
            %954 = sbr.rel target = $region550
          $region555: #{tpu_custom_call.1} parent=547 // loop_exit
            _
        $region548: #{tpu_custom_call.1} parent=47 // pred_fallthru
          _
        // Predicated region
        $region567: #{tpu_custom_call.1} parent=47 // pred_check
          _
        $region568: #{tpu_custom_call.1} parent=47 // pred_check_branch
          %980 = sbr.rel (0) target = $region570
        $region569: #{tpu_custom_call.1} parent=47 // pred_region
          %981 = vsyncadd [#allocation3], 16
        $region570: #{tpu_custom_call.1} parent=47 // pred_fallthru
          _
        %s982 = sadd.s32 %s944, 1
        %s983 = sld [smem:[#allocation5 + %s982]]
        %s984 = scalar_lea.vmem %s2, %s983
        %s985 = scalar_lea.vmem [#allocation2], 17
        // Predicated region
        $region571: #{tpu_custom_call.1} parent=47 // pred_check
          _
        $region572: #{tpu_custom_call.1} parent=47 // pred_check_branch
          %987 = sbr.rel target = $region574
        $region573: #{tpu_custom_call.1} parent=47 // pred_region
          // Predicated region
          $region586: #{tpu_custom_call.1} parent=573 // pred_check
            _
          $region587: #{tpu_custom_call.1} parent=573 // pred_check_branch
            %1003 = sbr.rel (0) target = $region589
          $region588: #{tpu_custom_call.1} parent=573 // pred_region
            %s1005 = ssub.s32 2, 1
            loop: start=0, step=1, limit=1
            $region590: #{tpu_custom_call.1} parent=588 // loop_pre_header
              _
            $region591: #{tpu_custom_call.1} parent=588 // loop_header
              %s1007 = sphi 0, %s1011
              %p1008 = scmp.ge.s32.totalorder %s1007, 1
              %s1012 = sphi %s984, %s984
              %s1013 = sphi %s985, %s985
            $region592: #{tpu_custom_call.1} parent=588 // loop_header_branch
              %1010 = sbr.rel (%p1008) target = $region596
            $region593: #{tpu_custom_call.1} parent=588 // loop_body
              %v1014 = vld [vmem:[%s1012] sm:%s1005]
              %1015 = vst [vmem:[%s1013] sm:%s1005] %v1014
            $region594: #{tpu_custom_call.1} parent=588 // loop_footer
              %s1011 = sadd.s32 1, %s1007
            $region595: #{tpu_custom_call.1} parent=588 // loop_footer_branch
              %1006 = sbr.rel target = $region591
            $region596: #{tpu_custom_call.1} parent=588 // loop_exit
              _
          $region589: #{tpu_custom_call.1} parent=573 // pred_fallthru
            _
        $region574: #{tpu_custom_call.1} parent=47 // pred_fallthru
          _
        // Predicated region
        $region575: #{tpu_custom_call.1} parent=47 // pred_check
          _
        $region576: #{tpu_custom_call.1} parent=47 // pred_check_branch
          %989 = sbr.rel (0) target = $region578
        $region577: #{tpu_custom_call.1} parent=47 // pred_region
          %s991 = ssub.s32 2, 1
          loop: start=0, step=1, limit=1
          $region579: #{tpu_custom_call.1} parent=577 // loop_pre_header
            _
          $region580: #{tpu_custom_call.1} parent=577 // loop_header
            %s993 = sphi 0, %s997
            %p994 = scmp.ge.s32.totalorder %s993, 1
            %s998 = sphi %s984, %s984
            %s999 = sphi %s985, %s985
          $region581: #{tpu_custom_call.1} parent=577 // loop_header_branch
            %996 = sbr.rel (%p994) target = $region585
          $region582: #{tpu_custom_call.1} parent=577 // loop_body
            %v1000 = vld [vmem:[%s998] sm:%s991]
            %1001 = vst [vmem:[%s999] sm:%s991] %v1000
          $region583: #{tpu_custom_call.1} parent=577 // loop_footer
            %s997 = sadd.s32 1, %s993
          $region584: #{tpu_custom_call.1} parent=577 // loop_footer_branch
            %992 = sbr.rel target = $region580
          $region585: #{tpu_custom_call.1} parent=577 // loop_exit
            _
        $region578: #{tpu_custom_call.1} parent=47 // pred_fallthru
          _
        // Predicated region
        $region597: #{tpu_custom_call.1} parent=47 // pred_check
          _
        $region598: #{tpu_custom_call.1} parent=47 // pred_check_branch
          %1018 = sbr.rel (0) target = $region600
        $region599: #{tpu_custom_call.1} parent=47 // pred_region
          %1019 = vsyncadd [#allocation3], 16
        $region600: #{tpu_custom_call.1} parent=47 // pred_fallthru
          _
        %s1020 = sadd.s32 %s944, 2
        %s1021 = sld [smem:[#allocation5 + %s1020]]
        %s1022 = scalar_lea.vmem %s2, %s1021
        %s1023 = scalar_lea.vmem [#allocation2], 18
        // Predicated region
        $region601: #{tpu_custom_call.1} parent=47 // pred_check
          _
        $region602: #{tpu_custom_call.1} parent=47 // pred_check_branch
          %1025 = sbr.rel target = $region604
        $region603: #{tpu_custom_call.1} parent=47 // pred_region
          // Predicated region
          $region616: #{tpu_custom_call.1} parent=603 // pred_check
            _
          $region617: #{tpu_custom_call.1} parent=603 // pred_check_branch
            %1041 = sbr.rel (0) target = $region619
          $region618: #{tpu_custom_call.1} parent=603 // pred_region
            %s1043 = ssub.s32 2, 1
            loop: start=0, step=1, limit=1
            $region620: #{tpu_custom_call.1} parent=618 // loop_pre_header
              _
            $region621: #{tpu_custom_call.1} parent=618 // loop_header
              %s1045 = sphi 0, %s1049
              %p1046 = scmp.ge.s32.totalorder %s1045, 1
              %s1050 = sphi %s1022, %s1022
              %s1051 = sphi %s1023, %s1023
            $region622: #{tpu_custom_call.1} parent=618 // loop_header_branch
              %1048 = sbr.rel (%p1046) target = $region626
            $region623: #{tpu_custom_call.1} parent=618 // loop_body
              %v1052 = vld [vmem:[%s1050] sm:%s1043]
              %1053 = vst [vmem:[%s1051] sm:%s1043] %v1052
            $region624: #{tpu_custom_call.1} parent=618 // loop_footer
              %s1049 = sadd.s32 1, %s1045
            $region625: #{tpu_custom_call.1} parent=618 // loop_footer_branch
              %1044 = sbr.rel target = $region621
            $region626: #{tpu_custom_call.1} parent=618 // loop_exit
              _
          $region619: #{tpu_custom_call.1} parent=603 // pred_fallthru
            _
        $region604: #{tpu_custom_call.1} parent=47 // pred_fallthru
          _
        // Predicated region
        $region605: #{tpu_custom_call.1} parent=47 // pred_check
          _
        $region606: #{tpu_custom_call.1} parent=47 // pred_check_branch
          %1027 = sbr.rel (0) target = $region608
        $region607: #{tpu_custom_call.1} parent=47 // pred_region
          %s1029 = ssub.s32 2, 1
          loop: start=0, step=1, limit=1
          $region609: #{tpu_custom_call.1} parent=607 // loop_pre_header
            _
          $region610: #{tpu_custom_call.1} parent=607 // loop_header
            %s1031 = sphi 0, %s1035
            %p1032 = scmp.ge.s32.totalorder %s1031, 1
            %s1036 = sphi %s1022, %s1022
            %s1037 = sphi %s1023, %s1023
          $region611: #{tpu_custom_call.1} parent=607 // loop_header_branch
            %1034 = sbr.rel (%p1032) target = $region615
          $region612: #{tpu_custom_call.1} parent=607 // loop_body
            %v1038 = vld [vmem:[%s1036] sm:%s1029]
            %1039 = vst [vmem:[%s1037] sm:%s1029] %v1038
          $region613: #{tpu_custom_call.1} parent=607 // loop_footer
            %s1035 = sadd.s32 1, %s1031
          $region614: #{tpu_custom_call.1} parent=607 // loop_footer_branch
            %1030 = sbr.rel target = $region610
          $region615: #{tpu_custom_call.1} parent=607 // loop_exit
            _
        $region608: #{tpu_custom_call.1} parent=47 // pred_fallthru
          _
        // Predicated region
        $region627: #{tpu_custom_call.1} parent=47 // pred_check
          _
        $region628: #{tpu_custom_call.1} parent=47 // pred_check_branch
          %1056 = sbr.rel (0) target = $region630
        $region629: #{tpu_custom_call.1} parent=47 // pred_region
          %1057 = vsyncadd [#allocation3], 16
        $region630: #{tpu_custom_call.1} parent=47 // pred_fallthru
          _
        %s1058 = sadd.s32 %s944, 3
        %s1059 = sld [smem:[#allocation5 + %s1058]]
        %s1060 = scalar_lea.vmem %s2, %s1059
        %s1061 = scalar_lea.vmem [#allocation2], 19
        // Predicated region
        $region631: #{tpu_custom_call.1} parent=47 // pred_check
          _
        $region632: #{tpu_custom_call.1} parent=47 // pred_check_branch
          %1063 = sbr.rel target = $region634
        $region633: #{tpu_custom_call.1} parent=47 // pred_region
          // Predicated region
          $region646: #{tpu_custom_call.1} parent=633 // pred_check
            _
          $region647: #{tpu_custom_call.1} parent=633 // pred_check_branch
            %1079 = sbr.rel (0) target = $region649
          $region648: #{tpu_custom_call.1} parent=633 // pred_region
            %s1081 = ssub.s32 2, 1
            loop: start=0, step=1, limit=1
            $region650: #{tpu_custom_call.1} parent=648 // loop_pre_header
              _
            $region651: #{tpu_custom_call.1} parent=648 // loop_header
              %s1083 = sphi 0, %s1087
              %p1084 = scmp.ge.s32.totalorder %s1083, 1
              %s1088 = sphi %s1060, %s1060
              %s1089 = sphi %s1061, %s1061
            $region652: #{tpu_custom_call.1} parent=648 // loop_header_branch
              %1086 = sbr.rel (%p1084) target = $region656
            $region653: #{tpu_custom_call.1} parent=648 // loop_body
              %v1090 = vld [vmem:[%s1088] sm:%s1081]
              %1091 = vst [vmem:[%s1089] sm:%s1081] %v1090
            $region654: #{tpu_custom_call.1} parent=648 // loop_footer
              %s1087 = sadd.s32 1, %s1083
            $region655: #{tpu_custom_call.1} parent=648 // loop_footer_branch
              %1082 = sbr.rel target = $region651
            $region656: #{tpu_custom_call.1} parent=648 // loop_exit
              _
          $region649: #{tpu_custom_call.1} parent=633 // pred_fallthru
            _
        $region634: #{tpu_custom_call.1} parent=47 // pred_fallthru
          _
        // Predicated region
        $region635: #{tpu_custom_call.1} parent=47 // pred_check
          _
        $region636: #{tpu_custom_call.1} parent=47 // pred_check_branch
          %1065 = sbr.rel (0) target = $region638
        $region637: #{tpu_custom_call.1} parent=47 // pred_region
          %s1067 = ssub.s32 2, 1
          loop: start=0, step=1, limit=1
          $region639: #{tpu_custom_call.1} parent=637 // loop_pre_header
            _
          $region640: #{tpu_custom_call.1} parent=637 // loop_header
            %s1069 = sphi 0, %s1073
            %p1070 = scmp.ge.s32.totalorder %s1069, 1
            %s1074 = sphi %s1060, %s1060
            %s1075 = sphi %s1061, %s1061
          $region641: #{tpu_custom_call.1} parent=637 // loop_header_branch
            %1072 = sbr.rel (%p1070) target = $region645
          $region642: #{tpu_custom_call.1} parent=637 // loop_body
            %v1076 = vld [vmem:[%s1074] sm:%s1067]
            %1077 = vst [vmem:[%s1075] sm:%s1067] %v1076
          $region643: #{tpu_custom_call.1} parent=637 // loop_footer
            %s1073 = sadd.s32 1, %s1069
          $region644: #{tpu_custom_call.1} parent=637 // loop_footer_branch
            %1068 = sbr.rel target = $region640
          $region645: #{tpu_custom_call.1} parent=637 // loop_exit
            _
        $region638: #{tpu_custom_call.1} parent=47 // pred_fallthru
          _
        // Predicated region
        $region657: #{tpu_custom_call.1} parent=47 // pred_check
          _
        $region658: #{tpu_custom_call.1} parent=47 // pred_check_branch
          %1094 = sbr.rel (0) target = $region660
        $region659: #{tpu_custom_call.1} parent=47 // pred_region
          %1095 = vsyncadd [#allocation3], 16
        $region660: #{tpu_custom_call.1} parent=47 // pred_fallthru
          _
        %s1096 = sadd.s32 %s944, 4
        %s1097 = sld [smem:[#allocation5 + %s1096]]
        %s1098 = scalar_lea.vmem %s2, %s1097
        %s1099 = scalar_lea.vmem [#allocation2], 20
        // Predicated region
        $region661: #{tpu_custom_call.1} parent=47 // pred_check
          _
        $region662: #{tpu_custom_call.1} parent=47 // pred_check_branch
          %1101 = sbr.rel target = $region664
        $region663: #{tpu_custom_call.1} parent=47 // pred_region
          // Predicated region
          $region676: #{tpu_custom_call.1} parent=663 // pred_check
            _
          $region677: #{tpu_custom_call.1} parent=663 // pred_check_branch
            %1117 = sbr.rel (0) target = $region679
          $region678: #{tpu_custom_call.1} parent=663 // pred_region
            %s1119 = ssub.s32 2, 1
            loop: start=0, step=1, limit=1
            $region680: #{tpu_custom_call.1} parent=678 // loop_pre_header
              _
            $region681: #{tpu_custom_call.1} parent=678 // loop_header
              %s1121 = sphi 0, %s1125
              %p1122 = scmp.ge.s32.totalorder %s1121, 1
              %s1126 = sphi %s1098, %s1098
              %s1127 = sphi %s1099, %s1099
            $region682: #{tpu_custom_call.1} parent=678 // loop_header_branch
              %1124 = sbr.rel (%p1122) target = $region686
            $region683: #{tpu_custom_call.1} parent=678 // loop_body
              %v1128 = vld [vmem:[%s1126] sm:%s1119]
              %1129 = vst [vmem:[%s1127] sm:%s1119] %v1128
            $region684: #{tpu_custom_call.1} parent=678 // loop_footer
              %s1125 = sadd.s32 1, %s1121
            $region685: #{tpu_custom_call.1} parent=678 // loop_footer_branch
              %1120 = sbr.rel target = $region681
            $region686: #{tpu_custom_call.1} parent=678 // loop_exit
              _
          $region679: #{tpu_custom_call.1} parent=663 // pred_fallthru
            _
        $region664: #{tpu_custom_call.1} parent=47 // pred_fallthru
          _
        // Predicated region
        $region665: #{tpu_custom_call.1} parent=47 // pred_check
          _
        $region666: #{tpu_custom_call.1} parent=47 // pred_check_branch
          %1103 = sbr.rel (0) target = $region668
        $region667: #{tpu_custom_call.1} parent=47 // pred_region
          %s1105 = ssub.s32 2, 1
          loop: start=0, step=1, limit=1
          $region669: #{tpu_custom_call.1} parent=667 // loop_pre_header
            _
          $region670: #{tpu_custom_call.1} parent=667 // loop_header
            %s1107 = sphi 0, %s1111
            %p1108 = scmp.ge.s32.totalorder %s1107, 1
            %s1112 = sphi %s1098, %s1098
            %s1113 = sphi %s1099, %s1099
          $region671: #{tpu_custom_call.1} parent=667 // loop_header_branch
            %1110 = sbr.rel (%p1108) target = $region675
          $region672: #{tpu_custom_call.1} parent=667 // loop_body
            %v1114 = vld [vmem:[%s1112] sm:%s1105]
            %1115 = vst [vmem:[%s1113] sm:%s1105] %v1114
          $region673: #{tpu_custom_call.1} parent=667 // loop_footer
            %s1111 = sadd.s32 1, %s1107
          $region674: #{tpu_custom_call.1} parent=667 // loop_footer_branch
            %1106 = sbr.rel target = $region670
          $region675: #{tpu_custom_call.1} parent=667 // loop_exit
            _
        $region668: #{tpu_custom_call.1} parent=47 // pred_fallthru
          _
        // Predicated region
        $region687: #{tpu_custom_call.1} parent=47 // pred_check
          _
        $region688: #{tpu_custom_call.1} parent=47 // pred_check_branch
          %1132 = sbr.rel (0) target = $region690
        $region689: #{tpu_custom_call.1} parent=47 // pred_region
          %1133 = vsyncadd [#allocation3], 16
        $region690: #{tpu_custom_call.1} parent=47 // pred_fallthru
          _
        %s1134 = sadd.s32 %s944, 5
        %s1135 = sld [smem:[#allocation5 + %s1134]]
        %s1136 = scalar_lea.vmem %s2, %s1135
        %s1137 = scalar_lea.vmem [#allocation2], 21
        // Predicated region
        $region691: #{tpu_custom_call.1} parent=47 // pred_check
          _
        $region692: #{tpu_custom_call.1} parent=47 // pred_check_branch
          %1139 = sbr.rel target = $region694
        $region693: #{tpu_custom_call.1} parent=47 // pred_region
          // Predicated region
          $region706: #{tpu_custom_call.1} parent=693 // pred_check
            _
          $region707: #{tpu_custom_call.1} parent=693 // pred_check_branch
            %1155 = sbr.rel (0) target = $region709
          $region708: #{tpu_custom_call.1} parent=693 // pred_region
            %s1157 = ssub.s32 2, 1
            loop: start=0, step=1, limit=1
            $region710: #{tpu_custom_call.1} parent=708 // loop_pre_header
              _
            $region711: #{tpu_custom_call.1} parent=708 // loop_header
              %s1159 = sphi 0, %s1163
              %p1160 = scmp.ge.s32.totalorder %s1159, 1
              %s1164 = sphi %s1136, %s1136
              %s1165 = sphi %s1137, %s1137
            $region712: #{tpu_custom_call.1} parent=708 // loop_header_branch
              %1162 = sbr.rel (%p1160) target = $region716
            $region713: #{tpu_custom_call.1} parent=708 // loop_body
              %v1166 = vld [vmem:[%s1164] sm:%s1157]
              %1167 = vst [vmem:[%s1165] sm:%s1157] %v1166
            $region714: #{tpu_custom_call.1} parent=708 // loop_footer
              %s1163 = sadd.s32 1, %s1159
            $region715: #{tpu_custom_call.1} parent=708 // loop_footer_branch
              %1158 = sbr.rel target = $region711
            $region716: #{tpu_custom_call.1} parent=708 // loop_exit
              _
          $region709: #{tpu_custom_call.1} parent=693 // pred_fallthru
            _
        $region694: #{tpu_custom_call.1} parent=47 // pred_fallthru
          _
        // Predicated region
        $region695: #{tpu_custom_call.1} parent=47 // pred_check
          _
        $region696: #{tpu_custom_call.1} parent=47 // pred_check_branch
          %1141 = sbr.rel (0) target = $region698
        $region697: #{tpu_custom_call.1} parent=47 // pred_region
          %s1143 = ssub.s32 2, 1
          loop: start=0, step=1, limit=1
          $region699: #{tpu_custom_call.1} parent=697 // loop_pre_header
            _
          $region700: #{tpu_custom_call.1} parent=697 // loop_header
            %s1145 = sphi 0, %s1149
            %p1146 = scmp.ge.s32.totalorder %s1145, 1
            %s1150 = sphi %s1136, %s1136
            %s1151 = sphi %s1137, %s1137
          $region701: #{tpu_custom_call.1} parent=697 // loop_header_branch
            %1148 = sbr.rel (%p1146) target = $region705
          $region702: #{tpu_custom_call.1} parent=697 // loop_body
            %v1152 = vld [vmem:[%s1150] sm:%s1143]
            %1153 = vst [vmem:[%s1151] sm:%s1143] %v1152
          $region703: #{tpu_custom_call.1} parent=697 // loop_footer
            %s1149 = sadd.s32 1, %s1145
          $region704: #{tpu_custom_call.1} parent=697 // loop_footer_branch
            %1144 = sbr.rel target = $region700
          $region705: #{tpu_custom_call.1} parent=697 // loop_exit
            _
        $region698: #{tpu_custom_call.1} parent=47 // pred_fallthru
          _
        // Predicated region
        $region717: #{tpu_custom_call.1} parent=47 // pred_check
          _
        $region718: #{tpu_custom_call.1} parent=47 // pred_check_branch
          %1170 = sbr.rel (0) target = $region720
        $region719: #{tpu_custom_call.1} parent=47 // pred_region
          %1171 = vsyncadd [#allocation3], 16
        $region720: #{tpu_custom_call.1} parent=47 // pred_fallthru
          _
        %s1172 = sadd.s32 %s944, 6
        %s1173 = sld [smem:[#allocation5 + %s1172]]
        %s1174 = scalar_lea.vmem %s2, %s1173
        %s1175 = scalar_lea.vmem [#allocation2], 22
        // Predicated region
        $region721: #{tpu_custom_call.1} parent=47 // pred_check
          _
        $region722: #{tpu_custom_call.1} parent=47 // pred_check_branch
          %1177 = sbr.rel target = $region724
        $region723: #{tpu_custom_call.1} parent=47 // pred_region
          // Predicated region
          $region736: #{tpu_custom_call.1} parent=723 // pred_check
            _
          $region737: #{tpu_custom_call.1} parent=723 // pred_check_branch
            %1193 = sbr.rel (0) target = $region739
          $region738: #{tpu_custom_call.1} parent=723 // pred_region
            %s1195 = ssub.s32 2, 1
            loop: start=0, step=1, limit=1
            $region740: #{tpu_custom_call.1} parent=738 // loop_pre_header
              _
            $region741: #{tpu_custom_call.1} parent=738 // loop_header
              %s1197 = sphi 0, %s1201
              %p1198 = scmp.ge.s32.totalorder %s1197, 1
              %s1202 = sphi %s1174, %s1174
              %s1203 = sphi %s1175, %s1175
            $region742: #{tpu_custom_call.1} parent=738 // loop_header_branch
              %1200 = sbr.rel (%p1198) target = $region746
            $region743: #{tpu_custom_call.1} parent=738 // loop_body
              %v1204 = vld [vmem:[%s1202] sm:%s1195]
              %1205 = vst [vmem:[%s1203] sm:%s1195] %v1204
            $region744: #{tpu_custom_call.1} parent=738 // loop_footer
              %s1201 = sadd.s32 1, %s1197
            $region745: #{tpu_custom_call.1} parent=738 // loop_footer_branch
              %1196 = sbr.rel target = $region741
            $region746: #{tpu_custom_call.1} parent=738 // loop_exit
              _
          $region739: #{tpu_custom_call.1} parent=723 // pred_fallthru
            _
        $region724: #{tpu_custom_call.1} parent=47 // pred_fallthru
          _
        // Predicated region
        $region725: #{tpu_custom_call.1} parent=47 // pred_check
          _
        $region726: #{tpu_custom_call.1} parent=47 // pred_check_branch
          %1179 = sbr.rel (0) target = $region728
        $region727: #{tpu_custom_call.1} parent=47 // pred_region
          %s1181 = ssub.s32 2, 1
          loop: start=0, step=1, limit=1
          $region729: #{tpu_custom_call.1} parent=727 // loop_pre_header
            _
          $region730: #{tpu_custom_call.1} parent=727 // loop_header
            %s1183 = sphi 0, %s1187
            %p1184 = scmp.ge.s32.totalorder %s1183, 1
            %s1188 = sphi %s1174, %s1174
            %s1189 = sphi %s1175, %s1175
          $region731: #{tpu_custom_call.1} parent=727 // loop_header_branch
            %1186 = sbr.rel (%p1184) target = $region735
          $region732: #{tpu_custom_call.1} parent=727 // loop_body
            %v1190 = vld [vmem:[%s1188] sm:%s1181]
            %1191 = vst [vmem:[%s1189] sm:%s1181] %v1190
          $region733: #{tpu_custom_call.1} parent=727 // loop_footer
            %s1187 = sadd.s32 1, %s1183
          $region734: #{tpu_custom_call.1} parent=727 // loop_footer_branch
            %1182 = sbr.rel target = $region730
          $region735: #{tpu_custom_call.1} parent=727 // loop_exit
            _
        $region728: #{tpu_custom_call.1} parent=47 // pred_fallthru
          _
        // Predicated region
        $region747: #{tpu_custom_call.1} parent=47 // pred_check
          _
        $region748: #{tpu_custom_call.1} parent=47 // pred_check_branch
          %1208 = sbr.rel (0) target = $region750
        $region749: #{tpu_custom_call.1} parent=47 // pred_region
          %1209 = vsyncadd [#allocation3], 16
        $region750: #{tpu_custom_call.1} parent=47 // pred_fallthru
          _
        %s1210 = sadd.s32 %s944, 7
        %s1211 = sld [smem:[#allocation5 + %s1210]]
        %s1212 = scalar_lea.vmem %s2, %s1211
        %s1213 = scalar_lea.vmem [#allocation2], 23
        // Predicated region
        $region751: #{tpu_custom_call.1} parent=47 // pred_check
          _
        $region752: #{tpu_custom_call.1} parent=47 // pred_check_branch
          %1215 = sbr.rel target = $region754
        $region753: #{tpu_custom_call.1} parent=47 // pred_region
          // Predicated region
          $region766: #{tpu_custom_call.1} parent=753 // pred_check
            _
          $region767: #{tpu_custom_call.1} parent=753 // pred_check_branch
            %1231 = sbr.rel (0) target = $region769
          $region768: #{tpu_custom_call.1} parent=753 // pred_region
            %s1233 = ssub.s32 2, 1
            loop: start=0, step=1, limit=1
            $region770: #{tpu_custom_call.1} parent=768 // loop_pre_header
              _
            $region771: #{tpu_custom_call.1} parent=768 // loop_header
              %s1235 = sphi 0, %s1239
              %p1236 = scmp.ge.s32.totalorder %s1235, 1
              %s1240 = sphi %s1212, %s1212
              %s1241 = sphi %s1213, %s1213
            $region772: #{tpu_custom_call.1} parent=768 // loop_header_branch
              %1238 = sbr.rel (%p1236) target = $region776
            $region773: #{tpu_custom_call.1} parent=768 // loop_body
              %v1242 = vld [vmem:[%s1240] sm:%s1233]
              %1243 = vst [vmem:[%s1241] sm:%s1233] %v1242
            $region774: #{tpu_custom_call.1} parent=768 // loop_footer
              %s1239 = sadd.s32 1, %s1235
            $region775: #{tpu_custom_call.1} parent=768 // loop_footer_branch
              %1234 = sbr.rel target = $region771
            $region776: #{tpu_custom_call.1} parent=768 // loop_exit
              _
          $region769: #{tpu_custom_call.1} parent=753 // pred_fallthru
            _
        $region754: #{tpu_custom_call.1} parent=47 // pred_fallthru
          _
        // Predicated region
        $region755: #{tpu_custom_call.1} parent=47 // pred_check
          _
        $region756: #{tpu_custom_call.1} parent=47 // pred_check_branch
          %1217 = sbr.rel (0) target = $region758
        $region757: #{tpu_custom_call.1} parent=47 // pred_region
          %s1219 = ssub.s32 2, 1
          loop: start=0, step=1, limit=1
          $region759: #{tpu_custom_call.1} parent=757 // loop_pre_header
            _
          $region760: #{tpu_custom_call.1} parent=757 // loop_header
            %s1221 = sphi 0, %s1225
            %p1222 = scmp.ge.s32.totalorder %s1221, 1
            %s1226 = sphi %s1212, %s1212
            %s1227 = sphi %s1213, %s1213
          $region761: #{tpu_custom_call.1} parent=757 // loop_header_branch
            %1224 = sbr.rel (%p1222) target = $region765
          $region762: #{tpu_custom_call.1} parent=757 // loop_body
            %v1228 = vld [vmem:[%s1226] sm:%s1219]
            %1229 = vst [vmem:[%s1227] sm:%s1219] %v1228
          $region763: #{tpu_custom_call.1} parent=757 // loop_footer
            %s1225 = sadd.s32 1, %s1221
          $region764: #{tpu_custom_call.1} parent=757 // loop_footer_branch
            %1220 = sbr.rel target = $region760
          $region765: #{tpu_custom_call.1} parent=757 // loop_exit
            _
        $region758: #{tpu_custom_call.1} parent=47 // pred_fallthru
          _
        // Predicated region
        $region777: #{tpu_custom_call.1} parent=47 // pred_check
          _
        $region778: #{tpu_custom_call.1} parent=47 // pred_check_branch
          %1246 = sbr.rel (0) target = $region780
        $region779: #{tpu_custom_call.1} parent=47 // pred_region
          %1247 = vsyncadd [#allocation3], 16
        $region780: #{tpu_custom_call.1} parent=47 // pred_fallthru
          _
        %s1248 = sadd.s32 %s334, 3
        %s1249 = smul.u32 %s1248, 128
        %s1250 = sld [smem:[#allocation5 + %s1249]]
        %s1251 = scalar_lea.vmem %s2, %s1250
        %s1252 = scalar_lea.vmem [#allocation2], 24
        // Predicated region
        $region781: #{tpu_custom_call.1} parent=47 // pred_check
          _
        $region782: #{tpu_custom_call.1} parent=47 // pred_check_branch
          %1254 = sbr.rel target = $region784
        $region783: #{tpu_custom_call.1} parent=47 // pred_region
          // Predicated region
          $region796: #{tpu_custom_call.1} parent=783 // pred_check
            _
          $region797: #{tpu_custom_call.1} parent=783 // pred_check_branch
            %1270 = sbr.rel (0) target = $region799
          $region798: #{tpu_custom_call.1} parent=783 // pred_region
            %s1272 = ssub.s32 2, 1
            loop: start=0, step=1, limit=1
            $region800: #{tpu_custom_call.1} parent=798 // loop_pre_header
              _
            $region801: #{tpu_custom_call.1} parent=798 // loop_header
              %s1274 = sphi 0, %s1278
              %p1275 = scmp.ge.s32.totalorder %s1274, 1
              %s1279 = sphi %s1251, %s1251
              %s1280 = sphi %s1252, %s1252
            $region802: #{tpu_custom_call.1} parent=798 // loop_header_branch
              %1277 = sbr.rel (%p1275) target = $region806
            $region803: #{tpu_custom_call.1} parent=798 // loop_body
              %v1281 = vld [vmem:[%s1279] sm:%s1272]
              %1282 = vst [vmem:[%s1280] sm:%s1272] %v1281
            $region804: #{tpu_custom_call.1} parent=798 // loop_footer
              %s1278 = sadd.s32 1, %s1274
            $region805: #{tpu_custom_call.1} parent=798 // loop_footer_branch
              %1273 = sbr.rel target = $region801
            $region806: #{tpu_custom_call.1} parent=798 // loop_exit
              _
          $region799: #{tpu_custom_call.1} parent=783 // pred_fallthru
            _
        $region784: #{tpu_custom_call.1} parent=47 // pred_fallthru
          _
        // Predicated region
        $region785: #{tpu_custom_call.1} parent=47 // pred_check
          _
        $region786: #{tpu_custom_call.1} parent=47 // pred_check_branch
          %1256 = sbr.rel (0) target = $region788
        $region787: #{tpu_custom_call.1} parent=47 // pred_region
          %s1258 = ssub.s32 2, 1
          loop: start=0, step=1, limit=1
          $region789: #{tpu_custom_call.1} parent=787 // loop_pre_header
            _
          $region790: #{tpu_custom_call.1} parent=787 // loop_header
            %s1260 = sphi 0, %s1264
            %p1261 = scmp.ge.s32.totalorder %s1260, 1
            %s1265 = sphi %s1251, %s1251
            %s1266 = sphi %s1252, %s1252
          $region791: #{tpu_custom_call.1} parent=787 // loop_header_branch
            %1263 = sbr.rel (%p1261) target = $region795
          $region792: #{tpu_custom_call.1} parent=787 // loop_body
            %v1267 = vld [vmem:[%s1265] sm:%s1258]
            %1268 = vst [vmem:[%s1266] sm:%s1258] %v1267
          $region793: #{tpu_custom_call.1} parent=787 // loop_footer
            %s1264 = sadd.s32 1, %s1260
          $region794: #{tpu_custom_call.1} parent=787 // loop_footer_branch
            %1259 = sbr.rel target = $region790
          $region795: #{tpu_custom_call.1} parent=787 // loop_exit
            _
        $region788: #{tpu_custom_call.1} parent=47 // pred_fallthru
          _
        // Predicated region
        $region807: #{tpu_custom_call.1} parent=47 // pred_check
          _
        $region808: #{tpu_custom_call.1} parent=47 // pred_check_branch
          %1285 = sbr.rel (0) target = $region810
        $region809: #{tpu_custom_call.1} parent=47 // pred_region
          %1286 = vsyncadd [#allocation3], 16
        $region810: #{tpu_custom_call.1} parent=47 // pred_fallthru
          _
        %s1287 = sadd.s32 %s1249, 1
        %s1288 = sld [smem:[#allocation5 + %s1287]]
        %s1289 = scalar_lea.vmem %s2, %s1288
        %s1290 = scalar_lea.vmem [#allocation2], 25
        // Predicated region
        $region811: #{tpu_custom_call.1} parent=47 // pred_check
          _
        $region812: #{tpu_custom_call.1} parent=47 // pred_check_branch
          %1292 = sbr.rel target = $region814
        $region813: #{tpu_custom_call.1} parent=47 // pred_region
          // Predicated region
          $region826: #{tpu_custom_call.1} parent=813 // pred_check
            _
          $region827: #{tpu_custom_call.1} parent=813 // pred_check_branch
            %1308 = sbr.rel (0) target = $region829
          $region828: #{tpu_custom_call.1} parent=813 // pred_region
            %s1310 = ssub.s32 2, 1
            loop: start=0, step=1, limit=1
            $region830: #{tpu_custom_call.1} parent=828 // loop_pre_header
              _
            $region831: #{tpu_custom_call.1} parent=828 // loop_header
              %s1312 = sphi 0, %s1316
              %p1313 = scmp.ge.s32.totalorder %s1312, 1
              %s1317 = sphi %s1289, %s1289
              %s1318 = sphi %s1290, %s1290
            $region832: #{tpu_custom_call.1} parent=828 // loop_header_branch
              %1315 = sbr.rel (%p1313) target = $region836
            $region833: #{tpu_custom_call.1} parent=828 // loop_body
              %v1319 = vld [vmem:[%s1317] sm:%s1310]
              %1320 = vst [vmem:[%s1318] sm:%s1310] %v1319
            $region834: #{tpu_custom_call.1} parent=828 // loop_footer
              %s1316 = sadd.s32 1, %s1312
            $region835: #{tpu_custom_call.1} parent=828 // loop_footer_branch
              %1311 = sbr.rel target = $region831
            $region836: #{tpu_custom_call.1} parent=828 // loop_exit
              _
          $region829: #{tpu_custom_call.1} parent=813 // pred_fallthru
            _
        $region814: #{tpu_custom_call.1} parent=47 // pred_fallthru
          _
        // Predicated region
        $region815: #{tpu_custom_call.1} parent=47 // pred_check
          _
        $region816: #{tpu_custom_call.1} parent=47 // pred_check_branch
          %1294 = sbr.rel (0) target = $region818
        $region817: #{tpu_custom_call.1} parent=47 // pred_region
          %s1296 = ssub.s32 2, 1
          loop: start=0, step=1, limit=1
          $region819: #{tpu_custom_call.1} parent=817 // loop_pre_header
            _
          $region820: #{tpu_custom_call.1} parent=817 // loop_header
            %s1298 = sphi 0, %s1302
            %p1299 = scmp.ge.s32.totalorder %s1298, 1
            %s1303 = sphi %s1289, %s1289
            %s1304 = sphi %s1290, %s1290
          $region821: #{tpu_custom_call.1} parent=817 // loop_header_branch
            %1301 = sbr.rel (%p1299) target = $region825
          $region822: #{tpu_custom_call.1} parent=817 // loop_body
            %v1305 = vld [vmem:[%s1303] sm:%s1296]
            %1306 = vst [vmem:[%s1304] sm:%s1296] %v1305
          $region823: #{tpu_custom_call.1} parent=817 // loop_footer
            %s1302 = sadd.s32 1, %s1298
          $region824: #{tpu_custom_call.1} parent=817 // loop_footer_branch
            %1297 = sbr.rel target = $region820
          $region825: #{tpu_custom_call.1} parent=817 // loop_exit
            _
        $region818: #{tpu_custom_call.1} parent=47 // pred_fallthru
          _
        // Predicated region
        $region837: #{tpu_custom_call.1} parent=47 // pred_check
          _
        $region838: #{tpu_custom_call.1} parent=47 // pred_check_branch
          %1323 = sbr.rel (0) target = $region840
        $region839: #{tpu_custom_call.1} parent=47 // pred_region
          %1324 = vsyncadd [#allocation3], 16
        $region840: #{tpu_custom_call.1} parent=47 // pred_fallthru
          _
        %s1325 = sadd.s32 %s1249, 2
        %s1326 = sld [smem:[#allocation5 + %s1325]]
        %s1327 = scalar_lea.vmem %s2, %s1326
        %s1328 = scalar_lea.vmem [#allocation2], 26
        // Predicated region
        $region841: #{tpu_custom_call.1} parent=47 // pred_check
          _
        $region842: #{tpu_custom_call.1} parent=47 // pred_check_branch
          %1330 = sbr.rel target = $region844
        $region843: #{tpu_custom_call.1} parent=47 // pred_region
          // Predicated region
          $region856: #{tpu_custom_call.1} parent=843 // pred_check
            _
          $region857: #{tpu_custom_call.1} parent=843 // pred_check_branch
            %1346 = sbr.rel (0) target = $region859
          $region858: #{tpu_custom_call.1} parent=843 // pred_region
            %s1348 = ssub.s32 2, 1
            loop: start=0, step=1, limit=1
            $region860: #{tpu_custom_call.1} parent=858 // loop_pre_header
              _
            $region861: #{tpu_custom_call.1} parent=858 // loop_header
              %s1350 = sphi 0, %s1354
              %p1351 = scmp.ge.s32.totalorder %s1350, 1
              %s1355 = sphi %s1327, %s1327
              %s1356 = sphi %s1328, %s1328
            $region862: #{tpu_custom_call.1} parent=858 // loop_header_branch
              %1353 = sbr.rel (%p1351) target = $region866
            $region863: #{tpu_custom_call.1} parent=858 // loop_body
              %v1357 = vld [vmem:[%s1355] sm:%s1348]
              %1358 = vst [vmem:[%s1356] sm:%s1348] %v1357
            $region864: #{tpu_custom_call.1} parent=858 // loop_footer
              %s1354 = sadd.s32 1, %s1350
            $region865: #{tpu_custom_call.1} parent=858 // loop_footer_branch
              %1349 = sbr.rel target = $region861
            $region866: #{tpu_custom_call.1} parent=858 // loop_exit
              _
          $region859: #{tpu_custom_call.1} parent=843 // pred_fallthru
            _
        $region844: #{tpu_custom_call.1} parent=47 // pred_fallthru
          _
        // Predicated region
        $region845: #{tpu_custom_call.1} parent=47 // pred_check
          _
        $region846: #{tpu_custom_call.1} parent=47 // pred_check_branch
          %1332 = sbr.rel (0) target = $region848
        $region847: #{tpu_custom_call.1} parent=47 // pred_region
          %s1334 = ssub.s32 2, 1
          loop: start=0, step=1, limit=1
          $region849: #{tpu_custom_call.1} parent=847 // loop_pre_header
            _
          $region850: #{tpu_custom_call.1} parent=847 // loop_header
            %s1336 = sphi 0, %s1340
            %p1337 = scmp.ge.s32.totalorder %s1336, 1
            %s1341 = sphi %s1327, %s1327
            %s1342 = sphi %s1328, %s1328
          $region851: #{tpu_custom_call.1} parent=847 // loop_header_branch
            %1339 = sbr.rel (%p1337) target = $region855
          $region852: #{tpu_custom_call.1} parent=847 // loop_body
            %v1343 = vld [vmem:[%s1341] sm:%s1334]
            %1344 = vst [vmem:[%s1342] sm:%s1334] %v1343
          $region853: #{tpu_custom_call.1} parent=847 // loop_footer
            %s1340 = sadd.s32 1, %s1336
          $region854: #{tpu_custom_call.1} parent=847 // loop_footer_branch
            %1335 = sbr.rel target = $region850
          $region855: #{tpu_custom_call.1} parent=847 // loop_exit
            _
        $region848: #{tpu_custom_call.1} parent=47 // pred_fallthru
          _
        // Predicated region
        $region867: #{tpu_custom_call.1} parent=47 // pred_check
          _
        $region868: #{tpu_custom_call.1} parent=47 // pred_check_branch
          %1361 = sbr.rel (0) target = $region870
        $region869: #{tpu_custom_call.1} parent=47 // pred_region
          %1362 = vsyncadd [#allocation3], 16
        $region870: #{tpu_custom_call.1} parent=47 // pred_fallthru
          _
        %s1363 = sadd.s32 %s1249, 3
        %s1364 = sld [smem:[#allocation5 + %s1363]]
        %s1365 = scalar_lea.vmem %s2, %s1364
        %s1366 = scalar_lea.vmem [#allocation2], 27
        // Predicated region
        $region871: #{tpu_custom_call.1} parent=47 // pred_check
          _
        $region872: #{tpu_custom_call.1} parent=47 // pred_check_branch
          %1368 = sbr.rel target = $region874
        $region873: #{tpu_custom_call.1} parent=47 // pred_region
          // Predicated region
          $region886: #{tpu_custom_call.1} parent=873 // pred_check
            _
          $region887: #{tpu_custom_call.1} parent=873 // pred_check_branch
            %1384 = sbr.rel (0) target = $region889
          $region888: #{tpu_custom_call.1} parent=873 // pred_region
            %s1386 = ssub.s32 2, 1
            loop: start=0, step=1, limit=1
            $region890: #{tpu_custom_call.1} parent=888 // loop_pre_header
              _
            $region891: #{tpu_custom_call.1} parent=888 // loop_header
              %s1388 = sphi 0, %s1392
              %p1389 = scmp.ge.s32.totalorder %s1388, 1
              %s1393 = sphi %s1365, %s1365
              %s1394 = sphi %s1366, %s1366
            $region892: #{tpu_custom_call.1} parent=888 // loop_header_branch
              %1391 = sbr.rel (%p1389) target = $region896
            $region893: #{tpu_custom_call.1} parent=888 // loop_body
              %v1395 = vld [vmem:[%s1393] sm:%s1386]
              %1396 = vst [vmem:[%s1394] sm:%s1386] %v1395
            $region894: #{tpu_custom_call.1} parent=888 // loop_footer
              %s1392 = sadd.s32 1, %s1388
            $region895: #{tpu_custom_call.1} parent=888 // loop_footer_branch
              %1387 = sbr.rel target = $region891
            $region896: #{tpu_custom_call.1} parent=888 // loop_exit
              _
          $region889: #{tpu_custom_call.1} parent=873 // pred_fallthru
            _
        $region874: #{tpu_custom_call.1} parent=47 // pred_fallthru
          _
        // Predicated region
        $region875: #{tpu_custom_call.1} parent=47 // pred_check
          _
        $region876: #{tpu_custom_call.1} parent=47 // pred_check_branch
          %1370 = sbr.rel (0) target = $region878
        $region877: #{tpu_custom_call.1} parent=47 // pred_region
          %s1372 = ssub.s32 2, 1
          loop: start=0, step=1, limit=1
          $region879: #{tpu_custom_call.1} parent=877 // loop_pre_header
            _
          $region880: #{tpu_custom_call.1} parent=877 // loop_header
            %s1374 = sphi 0, %s1378
            %p1375 = scmp.ge.s32.totalorder %s1374, 1
            %s1379 = sphi %s1365, %s1365
            %s1380 = sphi %s1366, %s1366
          $region881: #{tpu_custom_call.1} parent=877 // loop_header_branch
            %1377 = sbr.rel (%p1375) target = $region885
          $region882: #{tpu_custom_call.1} parent=877 // loop_body
            %v1381 = vld [vmem:[%s1379] sm:%s1372]
            %1382 = vst [vmem:[%s1380] sm:%s1372] %v1381
          $region883: #{tpu_custom_call.1} parent=877 // loop_footer
            %s1378 = sadd.s32 1, %s1374
          $region884: #{tpu_custom_call.1} parent=877 // loop_footer_branch
            %1373 = sbr.rel target = $region880
          $region885: #{tpu_custom_call.1} parent=877 // loop_exit
            _
        $region878: #{tpu_custom_call.1} parent=47 // pred_fallthru
          _
        // Predicated region
        $region897: #{tpu_custom_call.1} parent=47 // pred_check
          _
        $region898: #{tpu_custom_call.1} parent=47 // pred_check_branch
          %1399 = sbr.rel (0) target = $region900
        $region899: #{tpu_custom_call.1} parent=47 // pred_region
          %1400 = vsyncadd [#allocation3], 16
        $region900: #{tpu_custom_call.1} parent=47 // pred_fallthru
          _
        %s1401 = sadd.s32 %s1249, 4
        %s1402 = sld [smem:[#allocation5 + %s1401]]
        %s1403 = scalar_lea.vmem %s2, %s1402
        %s1404 = scalar_lea.vmem [#allocation2], 28
        // Predicated region
        $region901: #{tpu_custom_call.1} parent=47 // pred_check
          _
        $region902: #{tpu_custom_call.1} parent=47 // pred_check_branch
          %1406 = sbr.rel target = $region904
        $region903: #{tpu_custom_call.1} parent=47 // pred_region
          // Predicated region
          $region916: #{tpu_custom_call.1} parent=903 // pred_check
            _
          $region917: #{tpu_custom_call.1} parent=903 // pred_check_branch
            %1422 = sbr.rel (0) target = $region919
          $region918: #{tpu_custom_call.1} parent=903 // pred_region
            %s1424 = ssub.s32 2, 1
            loop: start=0, step=1, limit=1
            $region920: #{tpu_custom_call.1} parent=918 // loop_pre_header
              _
            $region921: #{tpu_custom_call.1} parent=918 // loop_header
              %s1426 = sphi 0, %s1430
              %p1427 = scmp.ge.s32.totalorder %s1426, 1
              %s1431 = sphi %s1403, %s1403
              %s1432 = sphi %s1404, %s1404
            $region922: #{tpu_custom_call.1} parent=918 // loop_header_branch
              %1429 = sbr.rel (%p1427) target = $region926
            $region923: #{tpu_custom_call.1} parent=918 // loop_body
              %v1433 = vld [vmem:[%s1431] sm:%s1424]
              %1434 = vst [vmem:[%s1432] sm:%s1424] %v1433
            $region924: #{tpu_custom_call.1} parent=918 // loop_footer
              %s1430 = sadd.s32 1, %s1426
            $region925: #{tpu_custom_call.1} parent=918 // loop_footer_branch
              %1425 = sbr.rel target = $region921
            $region926: #{tpu_custom_call.1} parent=918 // loop_exit
              _
          $region919: #{tpu_custom_call.1} parent=903 // pred_fallthru
            _
        $region904: #{tpu_custom_call.1} parent=47 // pred_fallthru
          _
        // Predicated region
        $region905: #{tpu_custom_call.1} parent=47 // pred_check
          _
        $region906: #{tpu_custom_call.1} parent=47 // pred_check_branch
          %1408 = sbr.rel (0) target = $region908
        $region907: #{tpu_custom_call.1} parent=47 // pred_region
          %s1410 = ssub.s32 2, 1
          loop: start=0, step=1, limit=1
          $region909: #{tpu_custom_call.1} parent=907 // loop_pre_header
            _
          $region910: #{tpu_custom_call.1} parent=907 // loop_header
            %s1412 = sphi 0, %s1416
            %p1413 = scmp.ge.s32.totalorder %s1412, 1
            %s1417 = sphi %s1403, %s1403
            %s1418 = sphi %s1404, %s1404
          $region911: #{tpu_custom_call.1} parent=907 // loop_header_branch
            %1415 = sbr.rel (%p1413) target = $region915
          $region912: #{tpu_custom_call.1} parent=907 // loop_body
            %v1419 = vld [vmem:[%s1417] sm:%s1410]
            %1420 = vst [vmem:[%s1418] sm:%s1410] %v1419
          $region913: #{tpu_custom_call.1} parent=907 // loop_footer
            %s1416 = sadd.s32 1, %s1412
          $region914: #{tpu_custom_call.1} parent=907 // loop_footer_branch
            %1411 = sbr.rel target = $region910
          $region915: #{tpu_custom_call.1} parent=907 // loop_exit
            _
        $region908: #{tpu_custom_call.1} parent=47 // pred_fallthru
          _
        // Predicated region
        $region927: #{tpu_custom_call.1} parent=47 // pred_check
          _
        $region928: #{tpu_custom_call.1} parent=47 // pred_check_branch
          %1437 = sbr.rel (0) target = $region930
        $region929: #{tpu_custom_call.1} parent=47 // pred_region
          %1438 = vsyncadd [#allocation3], 16
        $region930: #{tpu_custom_call.1} parent=47 // pred_fallthru
          _
        %s1439 = sadd.s32 %s1249, 5
        %s1440 = sld [smem:[#allocation5 + %s1439]]
        %s1441 = scalar_lea.vmem %s2, %s1440
        %s1442 = scalar_lea.vmem [#allocation2], 29
        // Predicated region
        $region931: #{tpu_custom_call.1} parent=47 // pred_check
          _
        $region932: #{tpu_custom_call.1} parent=47 // pred_check_branch
          %1444 = sbr.rel target = $region934
        $region933: #{tpu_custom_call.1} parent=47 // pred_region
          // Predicated region
          $region946: #{tpu_custom_call.1} parent=933 // pred_check
            _
          $region947: #{tpu_custom_call.1} parent=933 // pred_check_branch
            %1460 = sbr.rel (0) target = $region949
          $region948: #{tpu_custom_call.1} parent=933 // pred_region
            %s1462 = ssub.s32 2, 1
            loop: start=0, step=1, limit=1
            $region950: #{tpu_custom_call.1} parent=948 // loop_pre_header
              _
            $region951: #{tpu_custom_call.1} parent=948 // loop_header
              %s1464 = sphi 0, %s1468
              %p1465 = scmp.ge.s32.totalorder %s1464, 1
              %s1469 = sphi %s1441, %s1441
              %s1470 = sphi %s1442, %s1442
            $region952: #{tpu_custom_call.1} parent=948 // loop_header_branch
              %1467 = sbr.rel (%p1465) target = $region956
            $region953: #{tpu_custom_call.1} parent=948 // loop_body
              %v1471 = vld [vmem:[%s1469] sm:%s1462]
              %1472 = vst [vmem:[%s1470] sm:%s1462] %v1471
            $region954: #{tpu_custom_call.1} parent=948 // loop_footer
              %s1468 = sadd.s32 1, %s1464
            $region955: #{tpu_custom_call.1} parent=948 // loop_footer_branch
              %1463 = sbr.rel target = $region951
            $region956: #{tpu_custom_call.1} parent=948 // loop_exit
              _
          $region949: #{tpu_custom_call.1} parent=933 // pred_fallthru
            _
        $region934: #{tpu_custom_call.1} parent=47 // pred_fallthru
          _
        // Predicated region
        $region935: #{tpu_custom_call.1} parent=47 // pred_check
          _
        $region936: #{tpu_custom_call.1} parent=47 // pred_check_branch
          %1446 = sbr.rel (0) target = $region938
        $region937: #{tpu_custom_call.1} parent=47 // pred_region
          %s1448 = ssub.s32 2, 1
          loop: start=0, step=1, limit=1
          $region939: #{tpu_custom_call.1} parent=937 // loop_pre_header
            _
          $region940: #{tpu_custom_call.1} parent=937 // loop_header
            %s1450 = sphi 0, %s1454
            %p1451 = scmp.ge.s32.totalorder %s1450, 1
            %s1455 = sphi %s1441, %s1441
            %s1456 = sphi %s1442, %s1442
          $region941: #{tpu_custom_call.1} parent=937 // loop_header_branch
            %1453 = sbr.rel (%p1451) target = $region945
          $region942: #{tpu_custom_call.1} parent=937 // loop_body
            %v1457 = vld [vmem:[%s1455] sm:%s1448]
            %1458 = vst [vmem:[%s1456] sm:%s1448] %v1457
          $region943: #{tpu_custom_call.1} parent=937 // loop_footer
            %s1454 = sadd.s32 1, %s1450
          $region944: #{tpu_custom_call.1} parent=937 // loop_footer_branch
            %1449 = sbr.rel target = $region940
          $region945: #{tpu_custom_call.1} parent=937 // loop_exit
            _
        $region938: #{tpu_custom_call.1} parent=47 // pred_fallthru
          _
        // Predicated region
        $region957: #{tpu_custom_call.1} parent=47 // pred_check
          _
        $region958: #{tpu_custom_call.1} parent=47 // pred_check_branch
          %1475 = sbr.rel (0) target = $region960
        $region959: #{tpu_custom_call.1} parent=47 // pred_region
          %1476 = vsyncadd [#allocation3], 16
        $region960: #{tpu_custom_call.1} parent=47 // pred_fallthru
          _
        %s1477 = sadd.s32 %s1249, 6
        %s1478 = sld [smem:[#allocation5 + %s1477]]
        %s1479 = scalar_lea.vmem %s2, %s1478
        %s1480 = scalar_lea.vmem [#allocation2], 30
        // Predicated region
        $region961: #{tpu_custom_call.1} parent=47 // pred_check
          _
        $region962: #{tpu_custom_call.1} parent=47 // pred_check_branch
          %1482 = sbr.rel target = $region964
        $region963: #{tpu_custom_call.1} parent=47 // pred_region
          // Predicated region
          $region976: #{tpu_custom_call.1} parent=963 // pred_check
            _
          $region977: #{tpu_custom_call.1} parent=963 // pred_check_branch
            %1498 = sbr.rel (0) target = $region979
          $region978: #{tpu_custom_call.1} parent=963 // pred_region
            %s1500 = ssub.s32 2, 1
            loop: start=0, step=1, limit=1
            $region980: #{tpu_custom_call.1} parent=978 // loop_pre_header
              _
            $region981: #{tpu_custom_call.1} parent=978 // loop_header
              %s1502 = sphi 0, %s1506
              %p1503 = scmp.ge.s32.totalorder %s1502, 1
              %s1507 = sphi %s1479, %s1479
              %s1508 = sphi %s1480, %s1480
            $region982: #{tpu_custom_call.1} parent=978 // loop_header_branch
              %1505 = sbr.rel (%p1503) target = $region986
            $region983: #{tpu_custom_call.1} parent=978 // loop_body
              %v1509 = vld [vmem:[%s1507] sm:%s1500]
              %1510 = vst [vmem:[%s1508] sm:%s1500] %v1509
            $region984: #{tpu_custom_call.1} parent=978 // loop_footer
              %s1506 = sadd.s32 1, %s1502
            $region985: #{tpu_custom_call.1} parent=978 // loop_footer_branch
              %1501 = sbr.rel target = $region981
            $region986: #{tpu_custom_call.1} parent=978 // loop_exit
              _
          $region979: #{tpu_custom_call.1} parent=963 // pred_fallthru
            _
        $region964: #{tpu_custom_call.1} parent=47 // pred_fallthru
          _
        // Predicated region
        $region965: #{tpu_custom_call.1} parent=47 // pred_check
          _
        $region966: #{tpu_custom_call.1} parent=47 // pred_check_branch
          %1484 = sbr.rel (0) target = $region968
        $region967: #{tpu_custom_call.1} parent=47 // pred_region
          %s1486 = ssub.s32 2, 1
          loop: start=0, step=1, limit=1
          $region969: #{tpu_custom_call.1} parent=967 // loop_pre_header
            _
          $region970: #{tpu_custom_call.1} parent=967 // loop_header
            %s1488 = sphi 0, %s1492
            %p1489 = scmp.ge.s32.totalorder %s1488, 1
            %s1493 = sphi %s1479, %s1479
            %s1494 = sphi %s1480, %s1480
          $region971: #{tpu_custom_call.1} parent=967 // loop_header_branch
            %1491 = sbr.rel (%p1489) target = $region975
          $region972: #{tpu_custom_call.1} parent=967 // loop_body
            %v1495 = vld [vmem:[%s1493] sm:%s1486]
            %1496 = vst [vmem:[%s1494] sm:%s1486] %v1495
          $region973: #{tpu_custom_call.1} parent=967 // loop_footer
            %s1492 = sadd.s32 1, %s1488
          $region974: #{tpu_custom_call.1} parent=967 // loop_footer_branch
            %1487 = sbr.rel target = $region970
          $region975: #{tpu_custom_call.1} parent=967 // loop_exit
            _
        $region968: #{tpu_custom_call.1} parent=47 // pred_fallthru
          _
        // Predicated region
        $region987: #{tpu_custom_call.1} parent=47 // pred_check
          _
        $region988: #{tpu_custom_call.1} parent=47 // pred_check_branch
          %1513 = sbr.rel (0) target = $region990
        $region989: #{tpu_custom_call.1} parent=47 // pred_region
          %1514 = vsyncadd [#allocation3], 16
        $region990: #{tpu_custom_call.1} parent=47 // pred_fallthru
          _
        %s1515 = sadd.s32 %s1249, 7
        %s1516 = sld [smem:[#allocation5 + %s1515]]
        %s1517 = scalar_lea.vmem %s2, %s1516
        %s1518 = scalar_lea.vmem [#allocation2], 31
        // Predicated region
        $region991: #{tpu_custom_call.1} parent=47 // pred_check
          _
        $region992: #{tpu_custom_call.1} parent=47 // pred_check_branch
          %1520 = sbr.rel target = $region994
        $region993: #{tpu_custom_call.1} parent=47 // pred_region
          // Predicated region
          $region1006: #{tpu_custom_call.1} parent=993 // pred_check
            _
          $region1007: #{tpu_custom_call.1} parent=993 // pred_check_branch
            %1536 = sbr.rel (0) target = $region1009
          $region1008: #{tpu_custom_call.1} parent=993 // pred_region
            %s1538 = ssub.s32 2, 1
            loop: start=0, step=1, limit=1
            $region1010: #{tpu_custom_call.1} parent=1008 // loop_pre_header
              _
            $region1011: #{tpu_custom_call.1} parent=1008 // loop_header
              %s1540 = sphi 0, %s1544
              %p1541 = scmp.ge.s32.totalorder %s1540, 1
              %s1545 = sphi %s1517, %s1517
              %s1546 = sphi %s1518, %s1518
            $region1012: #{tpu_custom_call.1} parent=1008 // loop_header_branch
              %1543 = sbr.rel (%p1541) target = $region1016
            $region1013: #{tpu_custom_call.1} parent=1008 // loop_body
              %v1547 = vld [vmem:[%s1545] sm:%s1538]
              %1548 = vst [vmem:[%s1546] sm:%s1538] %v1547
            $region1014: #{tpu_custom_call.1} parent=1008 // loop_footer
              %s1544 = sadd.s32 1, %s1540
            $region1015: #{tpu_custom_call.1} parent=1008 // loop_footer_branch
              %1539 = sbr.rel target = $region1011
            $region1016: #{tpu_custom_call.1} parent=1008 // loop_exit
              _
          $region1009: #{tpu_custom_call.1} parent=993 // pred_fallthru
            _
        $region994: #{tpu_custom_call.1} parent=47 // pred_fallthru
          _
        // Predicated region
        $region995: #{tpu_custom_call.1} parent=47 // pred_check
          _
        $region996: #{tpu_custom_call.1} parent=47 // pred_check_branch
          %1522 = sbr.rel (0) target = $region998
        $region997: #{tpu_custom_call.1} parent=47 // pred_region
          %s1524 = ssub.s32 2, 1
          loop: start=0, step=1, limit=1
          $region999: #{tpu_custom_call.1} parent=997 // loop_pre_header
            _
          $region1000: #{tpu_custom_call.1} parent=997 // loop_header
            %s1526 = sphi 0, %s1530
            %p1527 = scmp.ge.s32.totalorder %s1526, 1
            %s1531 = sphi %s1517, %s1517
            %s1532 = sphi %s1518, %s1518
          $region1001: #{tpu_custom_call.1} parent=997 // loop_header_branch
            %1529 = sbr.rel (%p1527) target = $region1005
          $region1002: #{tpu_custom_call.1} parent=997 // loop_body
            %v1533 = vld [vmem:[%s1531] sm:%s1524]
            %1534 = vst [vmem:[%s1532] sm:%s1524] %v1533
          $region1003: #{tpu_custom_call.1} parent=997 // loop_footer
            %s1530 = sadd.s32 1, %s1526
          $region1004: #{tpu_custom_call.1} parent=997 // loop_footer_branch
            %1525 = sbr.rel target = $region1000
          $region1005: #{tpu_custom_call.1} parent=997 // loop_exit
            _
        $region998: #{tpu_custom_call.1} parent=47 // pred_fallthru
          _
        // Predicated region
        $region1017: #{tpu_custom_call.1} parent=47 // pred_check
          _
        $region1018: #{tpu_custom_call.1} parent=47 // pred_check_branch
          %1551 = sbr.rel (0) target = $region1020
        $region1019: #{tpu_custom_call.1} parent=47 // pred_region
          %1552 = vsyncadd [#allocation3], 16
        $region1020: #{tpu_custom_call.1} parent=47 // pred_fallthru
          _
        %s1553 = sadd.s32 %s334, 4
        %s1554 = smul.u32 %s1553, 128
        %s1555 = sld [smem:[#allocation5 + %s1554]]
        %s1556 = scalar_lea.vmem %s2, %s1555
        %s1557 = scalar_lea.vmem [#allocation2], 32
        // Predicated region
        $region1021: #{tpu_custom_call.1} parent=47 // pred_check
          _
        $region1022: #{tpu_custom_call.1} parent=47 // pred_check_branch
          %1559 = sbr.rel target = $region1024
        $region1023: #{tpu_custom_call.1} parent=47 // pred_region
          // Predicated region
          $region1036: #{tpu_custom_call.1} parent=1023 // pred_check
            _
          $region1037: #{tpu_custom_call.1} parent=1023 // pred_check_branch
            %1575 = sbr.rel (0) target = $region1039
          $region1038: #{tpu_custom_call.1} parent=1023 // pred_region
            %s1577 = ssub.s32 2, 1
            loop: start=0, step=1, limit=1
            $region1040: #{tpu_custom_call.1} parent=1038 // loop_pre_header
              _
            $region1041: #{tpu_custom_call.1} parent=1038 // loop_header
              %s1579 = sphi 0, %s1583
              %p1580 = scmp.ge.s32.totalorder %s1579, 1
              %s1584 = sphi %s1556, %s1556
              %s1585 = sphi %s1557, %s1557
            $region1042: #{tpu_custom_call.1} parent=1038 // loop_header_branch
              %1582 = sbr.rel (%p1580) target = $region1046
            $region1043: #{tpu_custom_call.1} parent=1038 // loop_body
              %v1586 = vld [vmem:[%s1584] sm:%s1577]
              %1587 = vst [vmem:[%s1585] sm:%s1577] %v1586
            $region1044: #{tpu_custom_call.1} parent=1038 // loop_footer
              %s1583 = sadd.s32 1, %s1579
            $region1045: #{tpu_custom_call.1} parent=1038 // loop_footer_branch
              %1578 = sbr.rel target = $region1041
            $region1046: #{tpu_custom_call.1} parent=1038 // loop_exit
              _
          $region1039: #{tpu_custom_call.1} parent=1023 // pred_fallthru
            _
        $region1024: #{tpu_custom_call.1} parent=47 // pred_fallthru
          _
        // Predicated region
        $region1025: #{tpu_custom_call.1} parent=47 // pred_check
          _
        $region1026: #{tpu_custom_call.1} parent=47 // pred_check_branch
          %1561 = sbr.rel (0) target = $region1028
        $region1027: #{tpu_custom_call.1} parent=47 // pred_region
          %s1563 = ssub.s32 2, 1
          loop: start=0, step=1, limit=1
          $region1029: #{tpu_custom_call.1} parent=1027 // loop_pre_header
            _
          $region1030: #{tpu_custom_call.1} parent=1027 // loop_header
            %s1565 = sphi 0, %s1569
            %p1566 = scmp.ge.s32.totalorder %s1565, 1
            %s1570 = sphi %s1556, %s1556
            %s1571 = sphi %s1557, %s1557
          $region1031: #{tpu_custom_call.1} parent=1027 // loop_header_branch
            %1568 = sbr.rel (%p1566) target = $region1035
          $region1032: #{tpu_custom_call.1} parent=1027 // loop_body
            %v1572 = vld [vmem:[%s1570] sm:%s1563]
            %1573 = vst [vmem:[%s1571] sm:%s1563] %v1572
          $region1033: #{tpu_custom_call.1} parent=1027 // loop_footer
            %s1569 = sadd.s32 1, %s1565
          $region1034: #{tpu_custom_call.1} parent=1027 // loop_footer_branch
            %1564 = sbr.rel target = $region1030
          $region1035: #{tpu_custom_call.1} parent=1027 // loop_exit
            _
        $region1028: #{tpu_custom_call.1} parent=47 // pred_fallthru
          _
        // Predicated region
        $region1047: #{tpu_custom_call.1} parent=47 // pred_check
          _
        $region1048: #{tpu_custom_call.1} parent=47 // pred_check_branch
          %1590 = sbr.rel (0) target = $region1050
        $region1049: #{tpu_custom_call.1} parent=47 // pred_region
          %1591 = vsyncadd [#allocation3], 16
        $region1050: #{tpu_custom_call.1} parent=47 // pred_fallthru
          _
        %s1592 = sadd.s32 %s1554, 1
        %s1593 = sld [smem:[#allocation5 + %s1592]]
        %s1594 = scalar_lea.vmem %s2, %s1593
        %s1595 = scalar_lea.vmem [#allocation2], 33
        // Predicated region
        $region1051: #{tpu_custom_call.1} parent=47 // pred_check
          _
        $region1052: #{tpu_custom_call.1} parent=47 // pred_check_branch
          %1597 = sbr.rel target = $region1054
        $region1053: #{tpu_custom_call.1} parent=47 // pred_region
          // Predicated region
          $region1066: #{tpu_custom_call.1} parent=1053 // pred_check
            _
          $region1067: #{tpu_custom_call.1} parent=1053 // pred_check_branch
            %1613 = sbr.rel (0) target = $region1069
          $region1068: #{tpu_custom_call.1} parent=1053 // pred_region
            %s1615 = ssub.s32 2, 1
            loop: start=0, step=1, limit=1
            $region1070: #{tpu_custom_call.1} parent=1068 // loop_pre_header
              _
            $region1071: #{tpu_custom_call.1} parent=1068 // loop_header
              %s1617 = sphi 0, %s1621
              %p1618 = scmp.ge.s32.totalorder %s1617, 1
              %s1622 = sphi %s1594, %s1594
              %s1623 = sphi %s1595, %s1595
            $region1072: #{tpu_custom_call.1} parent=1068 // loop_header_branch
              %1620 = sbr.rel (%p1618) target = $region1076
            $region1073: #{tpu_custom_call.1} parent=1068 // loop_body
              %v1624 = vld [vmem:[%s1622] sm:%s1615]
              %1625 = vst [vmem:[%s1623] sm:%s1615] %v1624
            $region1074: #{tpu_custom_call.1} parent=1068 // loop_footer
              %s1621 = sadd.s32 1, %s1617
            $region1075: #{tpu_custom_call.1} parent=1068 // loop_footer_branch
              %1616 = sbr.rel target = $region1071
            $region1076: #{tpu_custom_call.1} parent=1068 // loop_exit
              _
          $region1069: #{tpu_custom_call.1} parent=1053 // pred_fallthru
            _
        $region1054: #{tpu_custom_call.1} parent=47 // pred_fallthru
          _
        // Predicated region
        $region1055: #{tpu_custom_call.1} parent=47 // pred_check
          _
        $region1056: #{tpu_custom_call.1} parent=47 // pred_check_branch
          %1599 = sbr.rel (0) target = $region1058
        $region1057: #{tpu_custom_call.1} parent=47 // pred_region
          %s1601 = ssub.s32 2, 1
          loop: start=0, step=1, limit=1
          $region1059: #{tpu_custom_call.1} parent=1057 // loop_pre_header
            _
          $region1060: #{tpu_custom_call.1} parent=1057 // loop_header
            %s1603 = sphi 0, %s1607
            %p1604 = scmp.ge.s32.totalorder %s1603, 1
            %s1608 = sphi %s1594, %s1594
            %s1609 = sphi %s1595, %s1595
          $region1061: #{tpu_custom_call.1} parent=1057 // loop_header_branch
            %1606 = sbr.rel (%p1604) target = $region1065
          $region1062: #{tpu_custom_call.1} parent=1057 // loop_body
            %v1610 = vld [vmem:[%s1608] sm:%s1601]
            %1611 = vst [vmem:[%s1609] sm:%s1601] %v1610
          $region1063: #{tpu_custom_call.1} parent=1057 // loop_footer
            %s1607 = sadd.s32 1, %s1603
          $region1064: #{tpu_custom_call.1} parent=1057 // loop_footer_branch
            %1602 = sbr.rel target = $region1060
          $region1065: #{tpu_custom_call.1} parent=1057 // loop_exit
            _
        $region1058: #{tpu_custom_call.1} parent=47 // pred_fallthru
          _
        // Predicated region
        $region1077: #{tpu_custom_call.1} parent=47 // pred_check
          _
        $region1078: #{tpu_custom_call.1} parent=47 // pred_check_branch
          %1628 = sbr.rel (0) target = $region1080
        $region1079: #{tpu_custom_call.1} parent=47 // pred_region
          %1629 = vsyncadd [#allocation3], 16
        $region1080: #{tpu_custom_call.1} parent=47 // pred_fallthru
          _
        %s1630 = sadd.s32 %s1554, 2
        %s1631 = sld [smem:[#allocation5 + %s1630]]
        %s1632 = scalar_lea.vmem %s2, %s1631
        %s1633 = scalar_lea.vmem [#allocation2], 34
        // Predicated region
        $region1081: #{tpu_custom_call.1} parent=47 // pred_check
          _
        $region1082: #{tpu_custom_call.1} parent=47 // pred_check_branch
          %1635 = sbr.rel target = $region1084
        $region1083: #{tpu_custom_call.1} parent=47 // pred_region
          // Predicated region
          $region1096: #{tpu_custom_call.1} parent=1083 // pred_check
            _
          $region1097: #{tpu_custom_call.1} parent=1083 // pred_check_branch
            %1651 = sbr.rel (0) target = $region1099
          $region1098: #{tpu_custom_call.1} parent=1083 // pred_region
            %s1653 = ssub.s32 2, 1
            loop: start=0, step=1, limit=1
            $region1100: #{tpu_custom_call.1} parent=1098 // loop_pre_header
              _
            $region1101: #{tpu_custom_call.1} parent=1098 // loop_header
              %s1655 = sphi 0, %s1659
              %p1656 = scmp.ge.s32.totalorder %s1655, 1
              %s1660 = sphi %s1632, %s1632
              %s1661 = sphi %s1633, %s1633
            $region1102: #{tpu_custom_call.1} parent=1098 // loop_header_branch
              %1658 = sbr.rel (%p1656) target = $region1106
            $region1103: #{tpu_custom_call.1} parent=1098 // loop_body
              %v1662 = vld [vmem:[%s1660] sm:%s1653]
              %1663 = vst [vmem:[%s1661] sm:%s1653] %v1662
            $region1104: #{tpu_custom_call.1} parent=1098 // loop_footer
              %s1659 = sadd.s32 1, %s1655
            $region1105: #{tpu_custom_call.1} parent=1098 // loop_footer_branch
              %1654 = sbr.rel target = $region1101
            $region1106: #{tpu_custom_call.1} parent=1098 // loop_exit
              _
          $region1099: #{tpu_custom_call.1} parent=1083 // pred_fallthru
            _
        $region1084: #{tpu_custom_call.1} parent=47 // pred_fallthru
          _
        // Predicated region
        $region1085: #{tpu_custom_call.1} parent=47 // pred_check
          _
        $region1086: #{tpu_custom_call.1} parent=47 // pred_check_branch
          %1637 = sbr.rel (0) target = $region1088
        $region1087: #{tpu_custom_call.1} parent=47 // pred_region
          %s1639 = ssub.s32 2, 1
          loop: start=0, step=1, limit=1
          $region1089: #{tpu_custom_call.1} parent=1087 // loop_pre_header
            _
          $region1090: #{tpu_custom_call.1} parent=1087 // loop_header
            %s1641 = sphi 0, %s1645
            %p1642 = scmp.ge.s32.totalorder %s1641, 1
            %s1646 = sphi %s1632, %s1632
            %s1647 = sphi %s1633, %s1633
          $region1091: #{tpu_custom_call.1} parent=1087 // loop_header_branch
            %1644 = sbr.rel (%p1642) target = $region1095
          $region1092: #{tpu_custom_call.1} parent=1087 // loop_body
            %v1648 = vld [vmem:[%s1646] sm:%s1639]
            %1649 = vst [vmem:[%s1647] sm:%s1639] %v1648
          $region1093: #{tpu_custom_call.1} parent=1087 // loop_footer
            %s1645 = sadd.s32 1, %s1641
          $region1094: #{tpu_custom_call.1} parent=1087 // loop_footer_branch
            %1640 = sbr.rel target = $region1090
          $region1095: #{tpu_custom_call.1} parent=1087 // loop_exit
            _
        $region1088: #{tpu_custom_call.1} parent=47 // pred_fallthru
          _
        // Predicated region
        $region1107: #{tpu_custom_call.1} parent=47 // pred_check
          _
        $region1108: #{tpu_custom_call.1} parent=47 // pred_check_branch
          %1666 = sbr.rel (0) target = $region1110
        $region1109: #{tpu_custom_call.1} parent=47 // pred_region
          %1667 = vsyncadd [#allocation3], 16
        $region1110: #{tpu_custom_call.1} parent=47 // pred_fallthru
          _
        %s1668 = sadd.s32 %s1554, 3
        %s1669 = sld [smem:[#allocation5 + %s1668]]
        %s1670 = scalar_lea.vmem %s2, %s1669
        %s1671 = scalar_lea.vmem [#allocation2], 35
        // Predicated region
        $region1111: #{tpu_custom_call.1} parent=47 // pred_check
          _
        $region1112: #{tpu_custom_call.1} parent=47 // pred_check_branch
          %1673 = sbr.rel target = $region1114
        $region1113: #{tpu_custom_call.1} parent=47 // pred_region
          // Predicated region
          $region1126: #{tpu_custom_call.1} parent=1113 // pred_check
            _
          $region1127: #{tpu_custom_call.1} parent=1113 // pred_check_branch
            %1689 = sbr.rel (0) target = $region1129
          $region1128: #{tpu_custom_call.1} parent=1113 // pred_region
            %s1691 = ssub.s32 2, 1
            loop: start=0, step=1, limit=1
            $region1130: #{tpu_custom_call.1} parent=1128 // loop_pre_header
              _
            $region1131: #{tpu_custom_call.1} parent=1128 // loop_header
              %s1693 = sphi 0, %s1697
              %p1694 = scmp.ge.s32.totalorder %s1693, 1
              %s1698 = sphi %s1670, %s1670
              %s1699 = sphi %s1671, %s1671
            $region1132: #{tpu_custom_call.1} parent=1128 // loop_header_branch
              %1696 = sbr.rel (%p1694) target = $region1136
            $region1133: #{tpu_custom_call.1} parent=1128 // loop_body
              %v1700 = vld [vmem:[%s1698] sm:%s1691]
              %1701 = vst [vmem:[%s1699] sm:%s1691] %v1700
            $region1134: #{tpu_custom_call.1} parent=1128 // loop_footer
              %s1697 = sadd.s32 1, %s1693
            $region1135: #{tpu_custom_call.1} parent=1128 // loop_footer_branch
              %1692 = sbr.rel target = $region1131
            $region1136: #{tpu_custom_call.1} parent=1128 // loop_exit
              _
          $region1129: #{tpu_custom_call.1} parent=1113 // pred_fallthru
            _
        $region1114: #{tpu_custom_call.1} parent=47 // pred_fallthru
          _
        // Predicated region
        $region1115: #{tpu_custom_call.1} parent=47 // pred_check
          _
        $region1116: #{tpu_custom_call.1} parent=47 // pred_check_branch
          %1675 = sbr.rel (0) target = $region1118
        $region1117: #{tpu_custom_call.1} parent=47 // pred_region
          %s1677 = ssub.s32 2, 1
          loop: start=0, step=1, limit=1
          $region1119: #{tpu_custom_call.1} parent=1117 // loop_pre_header
            _
          $region1120: #{tpu_custom_call.1} parent=1117 // loop_header
            %s1679 = sphi 0, %s1683
            %p1680 = scmp.ge.s32.totalorder %s1679, 1
            %s1684 = sphi %s1670, %s1670
            %s1685 = sphi %s1671, %s1671
          $region1121: #{tpu_custom_call.1} parent=1117 // loop_header_branch
            %1682 = sbr.rel (%p1680) target = $region1125
          $region1122: #{tpu_custom_call.1} parent=1117 // loop_body
            %v1686 = vld [vmem:[%s1684] sm:%s1677]
            %1687 = vst [vmem:[%s1685] sm:%s1677] %v1686
          $region1123: #{tpu_custom_call.1} parent=1117 // loop_footer
            %s1683 = sadd.s32 1, %s1679
          $region1124: #{tpu_custom_call.1} parent=1117 // loop_footer_branch
            %1678 = sbr.rel target = $region1120
          $region1125: #{tpu_custom_call.1} parent=1117 // loop_exit
            _
        $region1118: #{tpu_custom_call.1} parent=47 // pred_fallthru
          _
        // Predicated region
        $region1137: #{tpu_custom_call.1} parent=47 // pred_check
          _
        $region1138: #{tpu_custom_call.1} parent=47 // pred_check_branch
          %1704 = sbr.rel (0) target = $region1140
        $region1139: #{tpu_custom_call.1} parent=47 // pred_region
          %1705 = vsyncadd [#allocation3], 16
        $region1140: #{tpu_custom_call.1} parent=47 // pred_fallthru
          _
        %s1706 = sadd.s32 %s1554, 4
        %s1707 = sld [smem:[#allocation5 + %s1706]]
        %s1708 = scalar_lea.vmem %s2, %s1707
        %s1709 = scalar_lea.vmem [#allocation2], 36
        // Predicated region
        $region1141: #{tpu_custom_call.1} parent=47 // pred_check
          _
        $region1142: #{tpu_custom_call.1} parent=47 // pred_check_branch
          %1711 = sbr.rel target = $region1144
        $region1143: #{tpu_custom_call.1} parent=47 // pred_region
          // Predicated region
          $region1156: #{tpu_custom_call.1} parent=1143 // pred_check
            _
          $region1157: #{tpu_custom_call.1} parent=1143 // pred_check_branch
            %1727 = sbr.rel (0) target = $region1159
          $region1158: #{tpu_custom_call.1} parent=1143 // pred_region
            %s1729 = ssub.s32 2, 1
            loop: start=0, step=1, limit=1
            $region1160: #{tpu_custom_call.1} parent=1158 // loop_pre_header
              _
            $region1161: #{tpu_custom_call.1} parent=1158 // loop_header
              %s1731 = sphi 0, %s1735
              %p1732 = scmp.ge.s32.totalorder %s1731, 1
              %s1736 = sphi %s1708, %s1708
              %s1737 = sphi %s1709, %s1709
            $region1162: #{tpu_custom_call.1} parent=1158 // loop_header_branch
              %1734 = sbr.rel (%p1732) target = $region1166
            $region1163: #{tpu_custom_call.1} parent=1158 // loop_body
              %v1738 = vld [vmem:[%s1736] sm:%s1729]
              %1739 = vst [vmem:[%s1737] sm:%s1729] %v1738
            $region1164: #{tpu_custom_call.1} parent=1158 // loop_footer
              %s1735 = sadd.s32 1, %s1731
            $region1165: #{tpu_custom_call.1} parent=1158 // loop_footer_branch
              %1730 = sbr.rel target = $region1161
            $region1166: #{tpu_custom_call.1} parent=1158 // loop_exit
              _
          $region1159: #{tpu_custom_call.1} parent=1143 // pred_fallthru
            _
        $region1144: #{tpu_custom_call.1} parent=47 // pred_fallthru
          _
        // Predicated region
        $region1145: #{tpu_custom_call.1} parent=47 // pred_check
          _
        $region1146: #{tpu_custom_call.1} parent=47 // pred_check_branch
          %1713 = sbr.rel (0) target = $region1148
        $region1147: #{tpu_custom_call.1} parent=47 // pred_region
          %s1715 = ssub.s32 2, 1
          loop: start=0, step=1, limit=1
          $region1149: #{tpu_custom_call.1} parent=1147 // loop_pre_header
            _
          $region1150: #{tpu_custom_call.1} parent=1147 // loop_header
            %s1717 = sphi 0, %s1721
            %p1718 = scmp.ge.s32.totalorder %s1717, 1
            %s1722 = sphi %s1708, %s1708
            %s1723 = sphi %s1709, %s1709
          $region1151: #{tpu_custom_call.1} parent=1147 // loop_header_branch
            %1720 = sbr.rel (%p1718) target = $region1155
          $region1152: #{tpu_custom_call.1} parent=1147 // loop_body
            %v1724 = vld [vmem:[%s1722] sm:%s1715]
            %1725 = vst [vmem:[%s1723] sm:%s1715] %v1724
          $region1153: #{tpu_custom_call.1} parent=1147 // loop_footer
            %s1721 = sadd.s32 1, %s1717
          $region1154: #{tpu_custom_call.1} parent=1147 // loop_footer_branch
            %1716 = sbr.rel target = $region1150
          $region1155: #{tpu_custom_call.1} parent=1147 // loop_exit
            _
        $region1148: #{tpu_custom_call.1} parent=47 // pred_fallthru
          _
        // Predicated region
        $region1167: #{tpu_custom_call.1} parent=47 // pred_check
          _
        $region1168: #{tpu_custom_call.1} parent=47 // pred_check_branch
          %1742 = sbr.rel (0) target = $region1170
        $region1169: #{tpu_custom_call.1} parent=47 // pred_region
          %1743 = vsyncadd [#allocation3], 16
        $region1170: #{tpu_custom_call.1} parent=47 // pred_fallthru
          _
        %s1744 = sadd.s32 %s1554, 5
        %s1745 = sld [smem:[#allocation5 + %s1744]]
        %s1746 = scalar_lea.vmem %s2, %s1745
        %s1747 = scalar_lea.vmem [#allocation2], 37
        // Predicated region
        $region1171: #{tpu_custom_call.1} parent=47 // pred_check
          _
        $region1172: #{tpu_custom_call.1} parent=47 // pred_check_branch
          %1749 = sbr.rel target = $region1174
        $region1173: #{tpu_custom_call.1} parent=47 // pred_region
          // Predicated region
          $region1186: #{tpu_custom_call.1} parent=1173 // pred_check
            _
          $region1187: #{tpu_custom_call.1} parent=1173 // pred_check_branch
            %1765 = sbr.rel (0) target = $region1189
          $region1188: #{tpu_custom_call.1} parent=1173 // pred_region
            %s1767 = ssub.s32 2, 1
            loop: start=0, step=1, limit=1
            $region1190: #{tpu_custom_call.1} parent=1188 // loop_pre_header
              _
            $region1191: #{tpu_custom_call.1} parent=1188 // loop_header
              %s1769 = sphi 0, %s1773
              %p1770 = scmp.ge.s32.totalorder %s1769, 1
              %s1774 = sphi %s1746, %s1746
              %s1775 = sphi %s1747, %s1747
            $region1192: #{tpu_custom_call.1} parent=1188 // loop_header_branch
              %1772 = sbr.rel (%p1770) target = $region1196
            $region1193: #{tpu_custom_call.1} parent=1188 // loop_body
              %v1776 = vld [vmem:[%s1774] sm:%s1767]
              %1777 = vst [vmem:[%s1775] sm:%s1767] %v1776
            $region1194: #{tpu_custom_call.1} parent=1188 // loop_footer
              %s1773 = sadd.s32 1, %s1769
            $region1195: #{tpu_custom_call.1} parent=1188 // loop_footer_branch
              %1768 = sbr.rel target = $region1191
            $region1196: #{tpu_custom_call.1} parent=1188 // loop_exit
              _
          $region1189: #{tpu_custom_call.1} parent=1173 // pred_fallthru
            _
        $region1174: #{tpu_custom_call.1} parent=47 // pred_fallthru
          _
        // Predicated region
        $region1175: #{tpu_custom_call.1} parent=47 // pred_check
          _
        $region1176: #{tpu_custom_call.1} parent=47 // pred_check_branch
          %1751 = sbr.rel (0) target = $region1178
        $region1177: #{tpu_custom_call.1} parent=47 // pred_region
          %s1753 = ssub.s32 2, 1
          loop: start=0, step=1, limit=1
          $region1179: #{tpu_custom_call.1} parent=1177 // loop_pre_header
            _
          $region1180: #{tpu_custom_call.1} parent=1177 // loop_header
            %s1755 = sphi 0, %s1759
            %p1756 = scmp.ge.s32.totalorder %s1755, 1
            %s1760 = sphi %s1746, %s1746
            %s1761 = sphi %s1747, %s1747
          $region1181: #{tpu_custom_call.1} parent=1177 // loop_header_branch
            %1758 = sbr.rel (%p1756) target = $region1185
          $region1182: #{tpu_custom_call.1} parent=1177 // loop_body
            %v1762 = vld [vmem:[%s1760] sm:%s1753]
            %1763 = vst [vmem:[%s1761] sm:%s1753] %v1762
          $region1183: #{tpu_custom_call.1} parent=1177 // loop_footer
            %s1759 = sadd.s32 1, %s1755
          $region1184: #{tpu_custom_call.1} parent=1177 // loop_footer_branch
            %1754 = sbr.rel target = $region1180
          $region1185: #{tpu_custom_call.1} parent=1177 // loop_exit
            _
        $region1178: #{tpu_custom_call.1} parent=47 // pred_fallthru
          _
        // Predicated region
        $region1197: #{tpu_custom_call.1} parent=47 // pred_check
          _
        $region1198: #{tpu_custom_call.1} parent=47 // pred_check_branch
          %1780 = sbr.rel (0) target = $region1200
        $region1199: #{tpu_custom_call.1} parent=47 // pred_region
          %1781 = vsyncadd [#allocation3], 16
        $region1200: #{tpu_custom_call.1} parent=47 // pred_fallthru
          _
        %s1782 = sadd.s32 %s1554, 6
        %s1783 = sld [smem:[#allocation5 + %s1782]]
        %s1784 = scalar_lea.vmem %s2, %s1783
        %s1785 = scalar_lea.vmem [#allocation2], 38
        // Predicated region
        $region1201: #{tpu_custom_call.1} parent=47 // pred_check
          _
        $region1202: #{tpu_custom_call.1} parent=47 // pred_check_branch
          %1787 = sbr.rel target = $region1204
        $region1203: #{tpu_custom_call.1} parent=47 // pred_region
          // Predicated region
          $region1216: #{tpu_custom_call.1} parent=1203 // pred_check
            _
          $region1217: #{tpu_custom_call.1} parent=1203 // pred_check_branch
            %1803 = sbr.rel (0) target = $region1219
          $region1218: #{tpu_custom_call.1} parent=1203 // pred_region
            %s1805 = ssub.s32 2, 1
            loop: start=0, step=1, limit=1
            $region1220: #{tpu_custom_call.1} parent=1218 // loop_pre_header
              _
            $region1221: #{tpu_custom_call.1} parent=1218 // loop_header
              %s1807 = sphi 0, %s1811
              %p1808 = scmp.ge.s32.totalorder %s1807, 1
              %s1812 = sphi %s1784, %s1784
              %s1813 = sphi %s1785, %s1785
            $region1222: #{tpu_custom_call.1} parent=1218 // loop_header_branch
              %1810 = sbr.rel (%p1808) target = $region1226
            $region1223: #{tpu_custom_call.1} parent=1218 // loop_body
              %v1814 = vld [vmem:[%s1812] sm:%s1805]
              %1815 = vst [vmem:[%s1813] sm:%s1805] %v1814
            $region1224: #{tpu_custom_call.1} parent=1218 // loop_footer
              %s1811 = sadd.s32 1, %s1807
            $region1225: #{tpu_custom_call.1} parent=1218 // loop_footer_branch
              %1806 = sbr.rel target = $region1221
            $region1226: #{tpu_custom_call.1} parent=1218 // loop_exit
              _
          $region1219: #{tpu_custom_call.1} parent=1203 // pred_fallthru
            _
        $region1204: #{tpu_custom_call.1} parent=47 // pred_fallthru
          _
        // Predicated region
        $region1205: #{tpu_custom_call.1} parent=47 // pred_check
          _
        $region1206: #{tpu_custom_call.1} parent=47 // pred_check_branch
          %1789 = sbr.rel (0) target = $region1208
        $region1207: #{tpu_custom_call.1} parent=47 // pred_region
          %s1791 = ssub.s32 2, 1
          loop: start=0, step=1, limit=1
          $region1209: #{tpu_custom_call.1} parent=1207 // loop_pre_header
            _
          $region1210: #{tpu_custom_call.1} parent=1207 // loop_header
            %s1793 = sphi 0, %s1797
            %p1794 = scmp.ge.s32.totalorder %s1793, 1
            %s1798 = sphi %s1784, %s1784
            %s1799 = sphi %s1785, %s1785
          $region1211: #{tpu_custom_call.1} parent=1207 // loop_header_branch
            %1796 = sbr.rel (%p1794) target = $region1215
          $region1212: #{tpu_custom_call.1} parent=1207 // loop_body
            %v1800 = vld [vmem:[%s1798] sm:%s1791]
            %1801 = vst [vmem:[%s1799] sm:%s1791] %v1800
          $region1213: #{tpu_custom_call.1} parent=1207 // loop_footer
            %s1797 = sadd.s32 1, %s1793
          $region1214: #{tpu_custom_call.1} parent=1207 // loop_footer_branch
            %1792 = sbr.rel target = $region1210
          $region1215: #{tpu_custom_call.1} parent=1207 // loop_exit
            _
        $region1208: #{tpu_custom_call.1} parent=47 // pred_fallthru
          _
        // Predicated region
        $region1227: #{tpu_custom_call.1} parent=47 // pred_check
          _
        $region1228: #{tpu_custom_call.1} parent=47 // pred_check_branch
          %1818 = sbr.rel (0) target = $region1230
        $region1229: #{tpu_custom_call.1} parent=47 // pred_region
          %1819 = vsyncadd [#allocation3], 16
        $region1230: #{tpu_custom_call.1} parent=47 // pred_fallthru
          _
        %s1820 = sadd.s32 %s1554, 7
        %s1821 = sld [smem:[#allocation5 + %s1820]]
        %s1822 = scalar_lea.vmem %s2, %s1821
        %s1823 = scalar_lea.vmem [#allocation2], 39
        // Predicated region
        $region1231: #{tpu_custom_call.1} parent=47 // pred_check
          _
        $region1232: #{tpu_custom_call.1} parent=47 // pred_check_branch
          %1825 = sbr.rel target = $region1234
        $region1233: #{tpu_custom_call.1} parent=47 // pred_region
          // Predicated region
          $region1246: #{tpu_custom_call.1} parent=1233 // pred_check
            _
          $region1247: #{tpu_custom_call.1} parent=1233 // pred_check_branch
            %1841 = sbr.rel (0) target = $region1249
          $region1248: #{tpu_custom_call.1} parent=1233 // pred_region
            %s1843 = ssub.s32 2, 1
            loop: start=0, step=1, limit=1
            $region1250: #{tpu_custom_call.1} parent=1248 // loop_pre_header
              _
            $region1251: #{tpu_custom_call.1} parent=1248 // loop_header
              %s1845 = sphi 0, %s1849
              %p1846 = scmp.ge.s32.totalorder %s1845, 1
              %s1850 = sphi %s1822, %s1822
              %s1851 = sphi %s1823, %s1823
            $region1252: #{tpu_custom_call.1} parent=1248 // loop_header_branch
              %1848 = sbr.rel (%p1846) target = $region1256
            $region1253: #{tpu_custom_call.1} parent=1248 // loop_body
              %v1852 = vld [vmem:[%s1850] sm:%s1843]
              %1853 = vst [vmem:[%s1851] sm:%s1843] %v1852
            $region1254: #{tpu_custom_call.1} parent=1248 // loop_footer
              %s1849 = sadd.s32 1, %s1845
            $region1255: #{tpu_custom_call.1} parent=1248 // loop_footer_branch
              %1844 = sbr.rel target = $region1251
            $region1256: #{tpu_custom_call.1} parent=1248 // loop_exit
              _
          $region1249: #{tpu_custom_call.1} parent=1233 // pred_fallthru
            _
        $region1234: #{tpu_custom_call.1} parent=47 // pred_fallthru
          _
        // Predicated region
        $region1235: #{tpu_custom_call.1} parent=47 // pred_check
          _
        $region1236: #{tpu_custom_call.1} parent=47 // pred_check_branch
          %1827 = sbr.rel (0) target = $region1238
        $region1237: #{tpu_custom_call.1} parent=47 // pred_region
          %s1829 = ssub.s32 2, 1
          loop: start=0, step=1, limit=1
          $region1239: #{tpu_custom_call.1} parent=1237 // loop_pre_header
            _
          $region1240: #{tpu_custom_call.1} parent=1237 // loop_header
            %s1831 = sphi 0, %s1835
            %p1832 = scmp.ge.s32.totalorder %s1831, 1
            %s1836 = sphi %s1822, %s1822
            %s1837 = sphi %s1823, %s1823
          $region1241: #{tpu_custom_call.1} parent=1237 // loop_header_branch
            %1834 = sbr.rel (%p1832) target = $region1245
          $region1242: #{tpu_custom_call.1} parent=1237 // loop_body
            %v1838 = vld [vmem:[%s1836] sm:%s1829]
            %1839 = vst [vmem:[%s1837] sm:%s1829] %v1838
          $region1243: #{tpu_custom_call.1} parent=1237 // loop_footer
            %s1835 = sadd.s32 1, %s1831
          $region1244: #{tpu_custom_call.1} parent=1237 // loop_footer_branch
            %1830 = sbr.rel target = $region1240
          $region1245: #{tpu_custom_call.1} parent=1237 // loop_exit
            _
        $region1238: #{tpu_custom_call.1} parent=47 // pred_fallthru
          _
        // Predicated region
        $region1257: #{tpu_custom_call.1} parent=47 // pred_check
          _
        $region1258: #{tpu_custom_call.1} parent=47 // pred_check_branch
          %1856 = sbr.rel (0) target = $region1260
        $region1259: #{tpu_custom_call.1} parent=47 // pred_region
          %1857 = vsyncadd [#allocation3], 16
        $region1260: #{tpu_custom_call.1} parent=47 // pred_fallthru
          _
        %s1858 = sadd.s32 %s334, 5
        %s1859 = smul.u32 %s1858, 128
        %s1860 = sld [smem:[#allocation5 + %s1859]]
        %s1861 = scalar_lea.vmem %s2, %s1860
        %s1862 = scalar_lea.vmem [#allocation2], 40
        // Predicated region
        $region1261: #{tpu_custom_call.1} parent=47 // pred_check
          _
        $region1262: #{tpu_custom_call.1} parent=47 // pred_check_branch
          %1864 = sbr.rel target = $region1264
        $region1263: #{tpu_custom_call.1} parent=47 // pred_region
          // Predicated region
          $region1276: #{tpu_custom_call.1} parent=1263 // pred_check
            _
          $region1277: #{tpu_custom_call.1} parent=1263 // pred_check_branch
            %1880 = sbr.rel (0) target = $region1279
          $region1278: #{tpu_custom_call.1} parent=1263 // pred_region
            %s1882 = ssub.s32 2, 1
            loop: start=0, step=1, limit=1
            $region1280: #{tpu_custom_call.1} parent=1278 // loop_pre_header
              _
            $region1281: #{tpu_custom_call.1} parent=1278 // loop_header
              %s1884 = sphi 0, %s1888
              %p1885 = scmp.ge.s32.totalorder %s1884, 1
              %s1889 = sphi %s1861, %s1861
              %s1890 = sphi %s1862, %s1862
            $region1282: #{tpu_custom_call.1} parent=1278 // loop_header_branch
              %1887 = sbr.rel (%p1885) target = $region1286
            $region1283: #{tpu_custom_call.1} parent=1278 // loop_body
              %v1891 = vld [vmem:[%s1889] sm:%s1882]
              %1892 = vst [vmem:[%s1890] sm:%s1882] %v1891
            $region1284: #{tpu_custom_call.1} parent=1278 // loop_footer
              %s1888 = sadd.s32 1, %s1884
            $region1285: #{tpu_custom_call.1} parent=1278 // loop_footer_branch
              %1883 = sbr.rel target = $region1281
            $region1286: #{tpu_custom_call.1} parent=1278 // loop_exit
              _
          $region1279: #{tpu_custom_call.1} parent=1263 // pred_fallthru
            _
        $region1264: #{tpu_custom_call.1} parent=47 // pred_fallthru
          _
        // Predicated region
        $region1265: #{tpu_custom_call.1} parent=47 // pred_check
          _
        $region1266: #{tpu_custom_call.1} parent=47 // pred_check_branch
          %1866 = sbr.rel (0) target = $region1268
        $region1267: #{tpu_custom_call.1} parent=47 // pred_region
          %s1868 = ssub.s32 2, 1
          loop: start=0, step=1, limit=1
          $region1269: #{tpu_custom_call.1} parent=1267 // loop_pre_header
            _
          $region1270: #{tpu_custom_call.1} parent=1267 // loop_header
            %s1870 = sphi 0, %s1874
            %p1871 = scmp.ge.s32.totalorder %s1870, 1
            %s1875 = sphi %s1861, %s1861
            %s1876 = sphi %s1862, %s1862
          $region1271: #{tpu_custom_call.1} parent=1267 // loop_header_branch
            %1873 = sbr.rel (%p1871) target = $region1275
          $region1272: #{tpu_custom_call.1} parent=1267 // loop_body
            %v1877 = vld [vmem:[%s1875] sm:%s1868]
            %1878 = vst [vmem:[%s1876] sm:%s1868] %v1877
          $region1273: #{tpu_custom_call.1} parent=1267 // loop_footer
            %s1874 = sadd.s32 1, %s1870
          $region1274: #{tpu_custom_call.1} parent=1267 // loop_footer_branch
            %1869 = sbr.rel target = $region1270
          $region1275: #{tpu_custom_call.1} parent=1267 // loop_exit
            _
        $region1268: #{tpu_custom_call.1} parent=47 // pred_fallthru
          _
        // Predicated region
        $region1287: #{tpu_custom_call.1} parent=47 // pred_check
          _
        $region1288: #{tpu_custom_call.1} parent=47 // pred_check_branch
          %1895 = sbr.rel (0) target = $region1290
        $region1289: #{tpu_custom_call.1} parent=47 // pred_region
          %1896 = vsyncadd [#allocation3], 16
        $region1290: #{tpu_custom_call.1} parent=47 // pred_fallthru
          _
        %s1897 = sadd.s32 %s1859, 1
        %s1898 = sld [smem:[#allocation5 + %s1897]]
        %s1899 = scalar_lea.vmem %s2, %s1898
        %s1900 = scalar_lea.vmem [#allocation2], 41
        // Predicated region
        $region1291: #{tpu_custom_call.1} parent=47 // pred_check
          _
        $region1292: #{tpu_custom_call.1} parent=47 // pred_check_branch
          %1902 = sbr.rel target = $region1294
        $region1293: #{tpu_custom_call.1} parent=47 // pred_region
          // Predicated region
          $region1306: #{tpu_custom_call.1} parent=1293 // pred_check
            _
          $region1307: #{tpu_custom_call.1} parent=1293 // pred_check_branch
            %1918 = sbr.rel (0) target = $region1309
          $region1308: #{tpu_custom_call.1} parent=1293 // pred_region
            %s1920 = ssub.s32 2, 1
            loop: start=0, step=1, limit=1
            $region1310: #{tpu_custom_call.1} parent=1308 // loop_pre_header
              _
            $region1311: #{tpu_custom_call.1} parent=1308 // loop_header
              %s1922 = sphi 0, %s1926
              %p1923 = scmp.ge.s32.totalorder %s1922, 1
              %s1927 = sphi %s1899, %s1899
              %s1928 = sphi %s1900, %s1900
            $region1312: #{tpu_custom_call.1} parent=1308 // loop_header_branch
              %1925 = sbr.rel (%p1923) target = $region1316
            $region1313: #{tpu_custom_call.1} parent=1308 // loop_body
              %v1929 = vld [vmem:[%s1927] sm:%s1920]
              %1930 = vst [vmem:[%s1928] sm:%s1920] %v1929
            $region1314: #{tpu_custom_call.1} parent=1308 // loop_footer
              %s1926 = sadd.s32 1, %s1922
            $region1315: #{tpu_custom_call.1} parent=1308 // loop_footer_branch
              %1921 = sbr.rel target = $region1311
            $region1316: #{tpu_custom_call.1} parent=1308 // loop_exit
              _
          $region1309: #{tpu_custom_call.1} parent=1293 // pred_fallthru
            _
        $region1294: #{tpu_custom_call.1} parent=47 // pred_fallthru
          _
        // Predicated region
        $region1295: #{tpu_custom_call.1} parent=47 // pred_check
          _
        $region1296: #{tpu_custom_call.1} parent=47 // pred_check_branch
          %1904 = sbr.rel (0) target = $region1298
        $region1297: #{tpu_custom_call.1} parent=47 // pred_region
          %s1906 = ssub.s32 2, 1
          loop: start=0, step=1, limit=1
          $region1299: #{tpu_custom_call.1} parent=1297 // loop_pre_header
            _
          $region1300: #{tpu_custom_call.1} parent=1297 // loop_header
            %s1908 = sphi 0, %s1912
            %p1909 = scmp.ge.s32.totalorder %s1908, 1
            %s1913 = sphi %s1899, %s1899
            %s1914 = sphi %s1900, %s1900
          $region1301: #{tpu_custom_call.1} parent=1297 // loop_header_branch
            %1911 = sbr.rel (%p1909) target = $region1305
          $region1302: #{tpu_custom_call.1} parent=1297 // loop_body
            %v1915 = vld [vmem:[%s1913] sm:%s1906]
            %1916 = vst [vmem:[%s1914] sm:%s1906] %v1915
          $region1303: #{tpu_custom_call.1} parent=1297 // loop_footer
            %s1912 = sadd.s32 1, %s1908
          $region1304: #{tpu_custom_call.1} parent=1297 // loop_footer_branch
            %1907 = sbr.rel target = $region1300
          $region1305: #{tpu_custom_call.1} parent=1297 // loop_exit
            _
        $region1298: #{tpu_custom_call.1} parent=47 // pred_fallthru
          _
        // Predicated region
        $region1317: #{tpu_custom_call.1} parent=47 // pred_check
          _
        $region1318: #{tpu_custom_call.1} parent=47 // pred_check_branch
          %1933 = sbr.rel (0) target = $region1320
        $region1319: #{tpu_custom_call.1} parent=47 // pred_region
          %1934 = vsyncadd [#allocation3], 16
        $region1320: #{tpu_custom_call.1} parent=47 // pred_fallthru
          _
        %s1935 = sadd.s32 %s1859, 2
        %s1936 = sld [smem:[#allocation5 + %s1935]]
        %s1937 = scalar_lea.vmem %s2, %s1936
        %s1938 = scalar_lea.vmem [#allocation2], 42
        // Predicated region
        $region1321: #{tpu_custom_call.1} parent=47 // pred_check
          _
        $region1322: #{tpu_custom_call.1} parent=47 // pred_check_branch
          %1940 = sbr.rel target = $region1324
        $region1323: #{tpu_custom_call.1} parent=47 // pred_region
          // Predicated region
          $region1336: #{tpu_custom_call.1} parent=1323 // pred_check
            _
          $region1337: #{tpu_custom_call.1} parent=1323 // pred_check_branch
            %1956 = sbr.rel (0) target = $region1339
          $region1338: #{tpu_custom_call.1} parent=1323 // pred_region
            %s1958 = ssub.s32 2, 1
            loop: start=0, step=1, limit=1
            $region1340: #{tpu_custom_call.1} parent=1338 // loop_pre_header
              _
            $region1341: #{tpu_custom_call.1} parent=1338 // loop_header
              %s1960 = sphi 0, %s1964
              %p1961 = scmp.ge.s32.totalorder %s1960, 1
              %s1965 = sphi %s1937, %s1937
              %s1966 = sphi %s1938, %s1938
            $region1342: #{tpu_custom_call.1} parent=1338 // loop_header_branch
              %1963 = sbr.rel (%p1961) target = $region1346
            $region1343: #{tpu_custom_call.1} parent=1338 // loop_body
              %v1967 = vld [vmem:[%s1965] sm:%s1958]
              %1968 = vst [vmem:[%s1966] sm:%s1958] %v1967
            $region1344: #{tpu_custom_call.1} parent=1338 // loop_footer
              %s1964 = sadd.s32 1, %s1960
            $region1345: #{tpu_custom_call.1} parent=1338 // loop_footer_branch
              %1959 = sbr.rel target = $region1341
            $region1346: #{tpu_custom_call.1} parent=1338 // loop_exit
              _
          $region1339: #{tpu_custom_call.1} parent=1323 // pred_fallthru
            _
        $region1324: #{tpu_custom_call.1} parent=47 // pred_fallthru
          _
        // Predicated region
        $region1325: #{tpu_custom_call.1} parent=47 // pred_check
          _
        $region1326: #{tpu_custom_call.1} parent=47 // pred_check_branch
          %1942 = sbr.rel (0) target = $region1328
        $region1327: #{tpu_custom_call.1} parent=47 // pred_region
          %s1944 = ssub.s32 2, 1
          loop: start=0, step=1, limit=1
          $region1329: #{tpu_custom_call.1} parent=1327 // loop_pre_header
            _
          $region1330: #{tpu_custom_call.1} parent=1327 // loop_header
            %s1946 = sphi 0, %s1950
            %p1947 = scmp.ge.s32.totalorder %s1946, 1
            %s1951 = sphi %s1937, %s1937
            %s1952 = sphi %s1938, %s1938
          $region1331: #{tpu_custom_call.1} parent=1327 // loop_header_branch
            %1949 = sbr.rel (%p1947) target = $region1335
          $region1332: #{tpu_custom_call.1} parent=1327 // loop_body
            %v1953 = vld [vmem:[%s1951] sm:%s1944]
            %1954 = vst [vmem:[%s1952] sm:%s1944] %v1953
          $region1333: #{tpu_custom_call.1} parent=1327 // loop_footer
            %s1950 = sadd.s32 1, %s1946
          $region1334: #{tpu_custom_call.1} parent=1327 // loop_footer_branch
            %1945 = sbr.rel target = $region1330
          $region1335: #{tpu_custom_call.1} parent=1327 // loop_exit
            _
        $region1328: #{tpu_custom_call.1} parent=47 // pred_fallthru
          _
        // Predicated region
        $region1347: #{tpu_custom_call.1} parent=47 // pred_check
          _
        $region1348: #{tpu_custom_call.1} parent=47 // pred_check_branch
          %1971 = sbr.rel (0) target = $region1350
        $region1349: #{tpu_custom_call.1} parent=47 // pred_region
          %1972 = vsyncadd [#allocation3], 16
        $region1350: #{tpu_custom_call.1} parent=47 // pred_fallthru
          _
        %s1973 = sadd.s32 %s1859, 3
        %s1974 = sld [smem:[#allocation5 + %s1973]]
        %s1975 = scalar_lea.vmem %s2, %s1974
        %s1976 = scalar_lea.vmem [#allocation2], 43
        // Predicated region
        $region1351: #{tpu_custom_call.1} parent=47 // pred_check
          _
        $region1352: #{tpu_custom_call.1} parent=47 // pred_check_branch
          %1978 = sbr.rel target = $region1354
        $region1353: #{tpu_custom_call.1} parent=47 // pred_region
          // Predicated region
          $region1366: #{tpu_custom_call.1} parent=1353 // pred_check
            _
          $region1367: #{tpu_custom_call.1} parent=1353 // pred_check_branch
            %1994 = sbr.rel (0) target = $region1369
          $region1368: #{tpu_custom_call.1} parent=1353 // pred_region
            %s1996 = ssub.s32 2, 1
            loop: start=0, step=1, limit=1
            $region1370: #{tpu_custom_call.1} parent=1368 // loop_pre_header
              _
            $region1371: #{tpu_custom_call.1} parent=1368 // loop_header
              %s1998 = sphi 0, %s2002
              %p1999 = scmp.ge.s32.totalorder %s1998, 1
              %s2003 = sphi %s1975, %s1975
              %s2004 = sphi %s1976, %s1976
            $region1372: #{tpu_custom_call.1} parent=1368 // loop_header_branch
              %2001 = sbr.rel (%p1999) target = $region1376
            $region1373: #{tpu_custom_call.1} parent=1368 // loop_body
              %v2005 = vld [vmem:[%s2003] sm:%s1996]
              %2006 = vst [vmem:[%s2004] sm:%s1996] %v2005
            $region1374: #{tpu_custom_call.1} parent=1368 // loop_footer
              %s2002 = sadd.s32 1, %s1998
            $region1375: #{tpu_custom_call.1} parent=1368 // loop_footer_branch
              %1997 = sbr.rel target = $region1371
            $region1376: #{tpu_custom_call.1} parent=1368 // loop_exit
              _
          $region1369: #{tpu_custom_call.1} parent=1353 // pred_fallthru
            _
        $region1354: #{tpu_custom_call.1} parent=47 // pred_fallthru
          _
        // Predicated region
        $region1355: #{tpu_custom_call.1} parent=47 // pred_check
          _
        $region1356: #{tpu_custom_call.1} parent=47 // pred_check_branch
          %1980 = sbr.rel (0) target = $region1358
        $region1357: #{tpu_custom_call.1} parent=47 // pred_region
          %s1982 = ssub.s32 2, 1
          loop: start=0, step=1, limit=1
          $region1359: #{tpu_custom_call.1} parent=1357 // loop_pre_header
            _
          $region1360: #{tpu_custom_call.1} parent=1357 // loop_header
            %s1984 = sphi 0, %s1988
            %p1985 = scmp.ge.s32.totalorder %s1984, 1
            %s1989 = sphi %s1975, %s1975
            %s1990 = sphi %s1976, %s1976
          $region1361: #{tpu_custom_call.1} parent=1357 // loop_header_branch
            %1987 = sbr.rel (%p1985) target = $region1365
          $region1362: #{tpu_custom_call.1} parent=1357 // loop_body
            %v1991 = vld [vmem:[%s1989] sm:%s1982]
            %1992 = vst [vmem:[%s1990] sm:%s1982] %v1991
          $region1363: #{tpu_custom_call.1} parent=1357 // loop_footer
            %s1988 = sadd.s32 1, %s1984
          $region1364: #{tpu_custom_call.1} parent=1357 // loop_footer_branch
            %1983 = sbr.rel target = $region1360
          $region1365: #{tpu_custom_call.1} parent=1357 // loop_exit
            _
        $region1358: #{tpu_custom_call.1} parent=47 // pred_fallthru
          _
        // Predicated region
        $region1377: #{tpu_custom_call.1} parent=47 // pred_check
          _
        $region1378: #{tpu_custom_call.1} parent=47 // pred_check_branch
          %2009 = sbr.rel (0) target = $region1380
        $region1379: #{tpu_custom_call.1} parent=47 // pred_region
          %2010 = vsyncadd [#allocation3], 16
        $region1380: #{tpu_custom_call.1} parent=47 // pred_fallthru
          _
        %s2011 = sadd.s32 %s1859, 4
        %s2012 = sld [smem:[#allocation5 + %s2011]]
        %s2013 = scalar_lea.vmem %s2, %s2012
        %s2014 = scalar_lea.vmem [#allocation2], 44
        // Predicated region
        $region1381: #{tpu_custom_call.1} parent=47 // pred_check
          _
        $region1382: #{tpu_custom_call.1} parent=47 // pred_check_branch
          %2016 = sbr.rel target = $region1384
        $region1383: #{tpu_custom_call.1} parent=47 // pred_region
          // Predicated region
          $region1396: #{tpu_custom_call.1} parent=1383 // pred_check
            _
          $region1397: #{tpu_custom_call.1} parent=1383 // pred_check_branch
            %2032 = sbr.rel (0) target = $region1399
          $region1398: #{tpu_custom_call.1} parent=1383 // pred_region
            %s2034 = ssub.s32 2, 1
            loop: start=0, step=1, limit=1
            $region1400: #{tpu_custom_call.1} parent=1398 // loop_pre_header
              _
            $region1401: #{tpu_custom_call.1} parent=1398 // loop_header
              %s2036 = sphi 0, %s2040
              %p2037 = scmp.ge.s32.totalorder %s2036, 1
              %s2041 = sphi %s2013, %s2013
              %s2042 = sphi %s2014, %s2014
            $region1402: #{tpu_custom_call.1} parent=1398 // loop_header_branch
              %2039 = sbr.rel (%p2037) target = $region1406
            $region1403: #{tpu_custom_call.1} parent=1398 // loop_body
              %v2043 = vld [vmem:[%s2041] sm:%s2034]
              %2044 = vst [vmem:[%s2042] sm:%s2034] %v2043
            $region1404: #{tpu_custom_call.1} parent=1398 // loop_footer
              %s2040 = sadd.s32 1, %s2036
            $region1405: #{tpu_custom_call.1} parent=1398 // loop_footer_branch
              %2035 = sbr.rel target = $region1401
            $region1406: #{tpu_custom_call.1} parent=1398 // loop_exit
              _
          $region1399: #{tpu_custom_call.1} parent=1383 // pred_fallthru
            _
        $region1384: #{tpu_custom_call.1} parent=47 // pred_fallthru
          _
        // Predicated region
        $region1385: #{tpu_custom_call.1} parent=47 // pred_check
          _
        $region1386: #{tpu_custom_call.1} parent=47 // pred_check_branch
          %2018 = sbr.rel (0) target = $region1388
        $region1387: #{tpu_custom_call.1} parent=47 // pred_region
          %s2020 = ssub.s32 2, 1
          loop: start=0, step=1, limit=1
          $region1389: #{tpu_custom_call.1} parent=1387 // loop_pre_header
            _
          $region1390: #{tpu_custom_call.1} parent=1387 // loop_header
            %s2022 = sphi 0, %s2026
            %p2023 = scmp.ge.s32.totalorder %s2022, 1
            %s2027 = sphi %s2013, %s2013
            %s2028 = sphi %s2014, %s2014
          $region1391: #{tpu_custom_call.1} parent=1387 // loop_header_branch
            %2025 = sbr.rel (%p2023) target = $region1395
          $region1392: #{tpu_custom_call.1} parent=1387 // loop_body
            %v2029 = vld [vmem:[%s2027] sm:%s2020]
            %2030 = vst [vmem:[%s2028] sm:%s2020] %v2029
          $region1393: #{tpu_custom_call.1} parent=1387 // loop_footer
            %s2026 = sadd.s32 1, %s2022
          $region1394: #{tpu_custom_call.1} parent=1387 // loop_footer_branch
            %2021 = sbr.rel target = $region1390
          $region1395: #{tpu_custom_call.1} parent=1387 // loop_exit
            _
        $region1388: #{tpu_custom_call.1} parent=47 // pred_fallthru
          _
        // Predicated region
        $region1407: #{tpu_custom_call.1} parent=47 // pred_check
          _
        $region1408: #{tpu_custom_call.1} parent=47 // pred_check_branch
          %2047 = sbr.rel (0) target = $region1410
        $region1409: #{tpu_custom_call.1} parent=47 // pred_region
          %2048 = vsyncadd [#allocation3], 16
        $region1410: #{tpu_custom_call.1} parent=47 // pred_fallthru
          _
        %s2049 = sadd.s32 %s1859, 5
        %s2050 = sld [smem:[#allocation5 + %s2049]]
        %s2051 = scalar_lea.vmem %s2, %s2050
        %s2052 = scalar_lea.vmem [#allocation2], 45
        // Predicated region
        $region1411: #{tpu_custom_call.1} parent=47 // pred_check
          _
        $region1412: #{tpu_custom_call.1} parent=47 // pred_check_branch
          %2054 = sbr.rel target = $region1414
        $region1413: #{tpu_custom_call.1} parent=47 // pred_region
          // Predicated region
          $region1426: #{tpu_custom_call.1} parent=1413 // pred_check
            _
          $region1427: #{tpu_custom_call.1} parent=1413 // pred_check_branch
            %2070 = sbr.rel (0) target = $region1429
          $region1428: #{tpu_custom_call.1} parent=1413 // pred_region
            %s2072 = ssub.s32 2, 1
            loop: start=0, step=1, limit=1
            $region1430: #{tpu_custom_call.1} parent=1428 // loop_pre_header
              _
            $region1431: #{tpu_custom_call.1} parent=1428 // loop_header
              %s2074 = sphi 0, %s2078
              %p2075 = scmp.ge.s32.totalorder %s2074, 1
              %s2079 = sphi %s2051, %s2051
              %s2080 = sphi %s2052, %s2052
            $region1432: #{tpu_custom_call.1} parent=1428 // loop_header_branch
              %2077 = sbr.rel (%p2075) target = $region1436
            $region1433: #{tpu_custom_call.1} parent=1428 // loop_body
              %v2081 = vld [vmem:[%s2079] sm:%s2072]
              %2082 = vst [vmem:[%s2080] sm:%s2072] %v2081
            $region1434: #{tpu_custom_call.1} parent=1428 // loop_footer
              %s2078 = sadd.s32 1, %s2074
            $region1435: #{tpu_custom_call.1} parent=1428 // loop_footer_branch
              %2073 = sbr.rel target = $region1431
            $region1436: #{tpu_custom_call.1} parent=1428 // loop_exit
              _
          $region1429: #{tpu_custom_call.1} parent=1413 // pred_fallthru
            _
        $region1414: #{tpu_custom_call.1} parent=47 // pred_fallthru
          _
        // Predicated region
        $region1415: #{tpu_custom_call.1} parent=47 // pred_check
          _
        $region1416: #{tpu_custom_call.1} parent=47 // pred_check_branch
          %2056 = sbr.rel (0) target = $region1418
        $region1417: #{tpu_custom_call.1} parent=47 // pred_region
          %s2058 = ssub.s32 2, 1
          loop: start=0, step=1, limit=1
          $region1419: #{tpu_custom_call.1} parent=1417 // loop_pre_header
            _
          $region1420: #{tpu_custom_call.1} parent=1417 // loop_header
            %s2060 = sphi 0, %s2064
            %p2061 = scmp.ge.s32.totalorder %s2060, 1
            %s2065 = sphi %s2051, %s2051
            %s2066 = sphi %s2052, %s2052
          $region1421: #{tpu_custom_call.1} parent=1417 // loop_header_branch
            %2063 = sbr.rel (%p2061) target = $region1425
          $region1422: #{tpu_custom_call.1} parent=1417 // loop_body
            %v2067 = vld [vmem:[%s2065] sm:%s2058]
            %2068 = vst [vmem:[%s2066] sm:%s2058] %v2067
          $region1423: #{tpu_custom_call.1} parent=1417 // loop_footer
            %s2064 = sadd.s32 1, %s2060
          $region1424: #{tpu_custom_call.1} parent=1417 // loop_footer_branch
            %2059 = sbr.rel target = $region1420
          $region1425: #{tpu_custom_call.1} parent=1417 // loop_exit
            _
        $region1418: #{tpu_custom_call.1} parent=47 // pred_fallthru
          _
        // Predicated region
        $region1437: #{tpu_custom_call.1} parent=47 // pred_check
          _
        $region1438: #{tpu_custom_call.1} parent=47 // pred_check_branch
          %2085 = sbr.rel (0) target = $region1440
        $region1439: #{tpu_custom_call.1} parent=47 // pred_region
          %2086 = vsyncadd [#allocation3], 16
        $region1440: #{tpu_custom_call.1} parent=47 // pred_fallthru
          _
        %s2087 = sadd.s32 %s1859, 6
        %s2088 = sld [smem:[#allocation5 + %s2087]]
        %s2089 = scalar_lea.vmem %s2, %s2088
        %s2090 = scalar_lea.vmem [#allocation2], 46
        // Predicated region
        $region1441: #{tpu_custom_call.1} parent=47 // pred_check
          _
        $region1442: #{tpu_custom_call.1} parent=47 // pred_check_branch
          %2092 = sbr.rel target = $region1444
        $region1443: #{tpu_custom_call.1} parent=47 // pred_region
          // Predicated region
          $region1456: #{tpu_custom_call.1} parent=1443 // pred_check
            _
          $region1457: #{tpu_custom_call.1} parent=1443 // pred_check_branch
            %2108 = sbr.rel (0) target = $region1459
          $region1458: #{tpu_custom_call.1} parent=1443 // pred_region
            %s2110 = ssub.s32 2, 1
            loop: start=0, step=1, limit=1
            $region1460: #{tpu_custom_call.1} parent=1458 // loop_pre_header
              _
            $region1461: #{tpu_custom_call.1} parent=1458 // loop_header
              %s2112 = sphi 0, %s2116
              %p2113 = scmp.ge.s32.totalorder %s2112, 1
              %s2117 = sphi %s2089, %s2089
              %s2118 = sphi %s2090, %s2090
            $region1462: #{tpu_custom_call.1} parent=1458 // loop_header_branch
              %2115 = sbr.rel (%p2113) target = $region1466
            $region1463: #{tpu_custom_call.1} parent=1458 // loop_body
              %v2119 = vld [vmem:[%s2117] sm:%s2110]
              %2120 = vst [vmem:[%s2118] sm:%s2110] %v2119
            $region1464: #{tpu_custom_call.1} parent=1458 // loop_footer
              %s2116 = sadd.s32 1, %s2112
            $region1465: #{tpu_custom_call.1} parent=1458 // loop_footer_branch
              %2111 = sbr.rel target = $region1461
            $region1466: #{tpu_custom_call.1} parent=1458 // loop_exit
              _
          $region1459: #{tpu_custom_call.1} parent=1443 // pred_fallthru
            _
        $region1444: #{tpu_custom_call.1} parent=47 // pred_fallthru
          _
        // Predicated region
        $region1445: #{tpu_custom_call.1} parent=47 // pred_check
          _
        $region1446: #{tpu_custom_call.1} parent=47 // pred_check_branch
          %2094 = sbr.rel (0) target = $region1448
        $region1447: #{tpu_custom_call.1} parent=47 // pred_region
          %s2096 = ssub.s32 2, 1
          loop: start=0, step=1, limit=1
          $region1449: #{tpu_custom_call.1} parent=1447 // loop_pre_header
            _
          $region1450: #{tpu_custom_call.1} parent=1447 // loop_header
            %s2098 = sphi 0, %s2102
            %p2099 = scmp.ge.s32.totalorder %s2098, 1
            %s2103 = sphi %s2089, %s2089
            %s2104 = sphi %s2090, %s2090
          $region1451: #{tpu_custom_call.1} parent=1447 // loop_header_branch
            %2101 = sbr.rel (%p2099) target = $region1455
          $region1452: #{tpu_custom_call.1} parent=1447 // loop_body
            %v2105 = vld [vmem:[%s2103] sm:%s2096]
            %2106 = vst [vmem:[%s2104] sm:%s2096] %v2105
          $region1453: #{tpu_custom_call.1} parent=1447 // loop_footer
            %s2102 = sadd.s32 1, %s2098
          $region1454: #{tpu_custom_call.1} parent=1447 // loop_footer_branch
            %2097 = sbr.rel target = $region1450
          $region1455: #{tpu_custom_call.1} parent=1447 // loop_exit
            _
        $region1448: #{tpu_custom_call.1} parent=47 // pred_fallthru
          _
        // Predicated region
        $region1467: #{tpu_custom_call.1} parent=47 // pred_check
          _
        $region1468: #{tpu_custom_call.1} parent=47 // pred_check_branch
          %2123 = sbr.rel (0) target = $region1470
        $region1469: #{tpu_custom_call.1} parent=47 // pred_region
          %2124 = vsyncadd [#allocation3], 16
        $region1470: #{tpu_custom_call.1} parent=47 // pred_fallthru
          _
        %s2125 = sadd.s32 %s1859, 7
        %s2126 = sld [smem:[#allocation5 + %s2125]]
        %s2127 = scalar_lea.vmem %s2, %s2126
        %s2128 = scalar_lea.vmem [#allocation2], 47
        // Predicated region
        $region1471: #{tpu_custom_call.1} parent=47 // pred_check
          _
        $region1472: #{tpu_custom_call.1} parent=47 // pred_check_branch
          %2130 = sbr.rel target = $region1474
        $region1473: #{tpu_custom_call.1} parent=47 // pred_region
          // Predicated region
          $region1486: #{tpu_custom_call.1} parent=1473 // pred_check
            _
          $region1487: #{tpu_custom_call.1} parent=1473 // pred_check_branch
            %2146 = sbr.rel (0) target = $region1489
          $region1488: #{tpu_custom_call.1} parent=1473 // pred_region
            %s2148 = ssub.s32 2, 1
            loop: start=0, step=1, limit=1
            $region1490: #{tpu_custom_call.1} parent=1488 // loop_pre_header
              _
            $region1491: #{tpu_custom_call.1} parent=1488 // loop_header
              %s2150 = sphi 0, %s2154
              %p2151 = scmp.ge.s32.totalorder %s2150, 1
              %s2155 = sphi %s2127, %s2127
              %s2156 = sphi %s2128, %s2128
            $region1492: #{tpu_custom_call.1} parent=1488 // loop_header_branch
              %2153 = sbr.rel (%p2151) target = $region1496
            $region1493: #{tpu_custom_call.1} parent=1488 // loop_body
              %v2157 = vld [vmem:[%s2155] sm:%s2148]
              %2158 = vst [vmem:[%s2156] sm:%s2148] %v2157
            $region1494: #{tpu_custom_call.1} parent=1488 // loop_footer
              %s2154 = sadd.s32 1, %s2150
            $region1495: #{tpu_custom_call.1} parent=1488 // loop_footer_branch
              %2149 = sbr.rel target = $region1491
            $region1496: #{tpu_custom_call.1} parent=1488 // loop_exit
              _
          $region1489: #{tpu_custom_call.1} parent=1473 // pred_fallthru
            _
        $region1474: #{tpu_custom_call.1} parent=47 // pred_fallthru
          _
        // Predicated region
        $region1475: #{tpu_custom_call.1} parent=47 // pred_check
          _
        $region1476: #{tpu_custom_call.1} parent=47 // pred_check_branch
          %2132 = sbr.rel (0) target = $region1478
        $region1477: #{tpu_custom_call.1} parent=47 // pred_region
          %s2134 = ssub.s32 2, 1
          loop: start=0, step=1, limit=1
          $region1479: #{tpu_custom_call.1} parent=1477 // loop_pre_header
            _
          $region1480: #{tpu_custom_call.1} parent=1477 // loop_header
            %s2136 = sphi 0, %s2140
            %p2137 = scmp.ge.s32.totalorder %s2136, 1
            %s2141 = sphi %s2127, %s2127
            %s2142 = sphi %s2128, %s2128
          $region1481: #{tpu_custom_call.1} parent=1477 // loop_header_branch
            %2139 = sbr.rel (%p2137) target = $region1485
          $region1482: #{tpu_custom_call.1} parent=1477 // loop_body
            %v2143 = vld [vmem:[%s2141] sm:%s2134]
            %2144 = vst [vmem:[%s2142] sm:%s2134] %v2143
          $region1483: #{tpu_custom_call.1} parent=1477 // loop_footer
            %s2140 = sadd.s32 1, %s2136
          $region1484: #{tpu_custom_call.1} parent=1477 // loop_footer_branch
            %2135 = sbr.rel target = $region1480
          $region1485: #{tpu_custom_call.1} parent=1477 // loop_exit
            _
        $region1478: #{tpu_custom_call.1} parent=47 // pred_fallthru
          _
        // Predicated region
        $region1497: #{tpu_custom_call.1} parent=47 // pred_check
          _
        $region1498: #{tpu_custom_call.1} parent=47 // pred_check_branch
          %2161 = sbr.rel (0) target = $region1500
        $region1499: #{tpu_custom_call.1} parent=47 // pred_region
          %2162 = vsyncadd [#allocation3], 16
        $region1500: #{tpu_custom_call.1} parent=47 // pred_fallthru
          _
        %s2163 = sadd.s32 %s334, 6
        %s2164 = smul.u32 %s2163, 128
        %s2165 = sld [smem:[#allocation5 + %s2164]]
        %s2166 = scalar_lea.vmem %s2, %s2165
        %s2167 = scalar_lea.vmem [#allocation2], 48
        // Predicated region
        $region1501: #{tpu_custom_call.1} parent=47 // pred_check
          _
        $region1502: #{tpu_custom_call.1} parent=47 // pred_check_branch
          %2169 = sbr.rel target = $region1504
        $region1503: #{tpu_custom_call.1} parent=47 // pred_region
          // Predicated region
          $region1516: #{tpu_custom_call.1} parent=1503 // pred_check
            _
          $region1517: #{tpu_custom_call.1} parent=1503 // pred_check_branch
            %2185 = sbr.rel (0) target = $region1519
          $region1518: #{tpu_custom_call.1} parent=1503 // pred_region
            %s2187 = ssub.s32 2, 1
            loop: start=0, step=1, limit=1
            $region1520: #{tpu_custom_call.1} parent=1518 // loop_pre_header
              _
            $region1521: #{tpu_custom_call.1} parent=1518 // loop_header
              %s2189 = sphi 0, %s2193
              %p2190 = scmp.ge.s32.totalorder %s2189, 1
              %s2194 = sphi %s2166, %s2166
              %s2195 = sphi %s2167, %s2167
            $region1522: #{tpu_custom_call.1} parent=1518 // loop_header_branch
              %2192 = sbr.rel (%p2190) target = $region1526
            $region1523: #{tpu_custom_call.1} parent=1518 // loop_body
              %v2196 = vld [vmem:[%s2194] sm:%s2187]
              %2197 = vst [vmem:[%s2195] sm:%s2187] %v2196
            $region1524: #{tpu_custom_call.1} parent=1518 // loop_footer
              %s2193 = sadd.s32 1, %s2189
            $region1525: #{tpu_custom_call.1} parent=1518 // loop_footer_branch
              %2188 = sbr.rel target = $region1521
            $region1526: #{tpu_custom_call.1} parent=1518 // loop_exit
              _
          $region1519: #{tpu_custom_call.1} parent=1503 // pred_fallthru
            _
        $region1504: #{tpu_custom_call.1} parent=47 // pred_fallthru
          _
        // Predicated region
        $region1505: #{tpu_custom_call.1} parent=47 // pred_check
          _
        $region1506: #{tpu_custom_call.1} parent=47 // pred_check_branch
          %2171 = sbr.rel (0) target = $region1508
        $region1507: #{tpu_custom_call.1} parent=47 // pred_region
          %s2173 = ssub.s32 2, 1
          loop: start=0, step=1, limit=1
          $region1509: #{tpu_custom_call.1} parent=1507 // loop_pre_header
            _
          $region1510: #{tpu_custom_call.1} parent=1507 // loop_header
            %s2175 = sphi 0, %s2179
            %p2176 = scmp.ge.s32.totalorder %s2175, 1
            %s2180 = sphi %s2166, %s2166
            %s2181 = sphi %s2167, %s2167
          $region1511: #{tpu_custom_call.1} parent=1507 // loop_header_branch
            %2178 = sbr.rel (%p2176) target = $region1515
          $region1512: #{tpu_custom_call.1} parent=1507 // loop_body
            %v2182 = vld [vmem:[%s2180] sm:%s2173]
            %2183 = vst [vmem:[%s2181] sm:%s2173] %v2182
          $region1513: #{tpu_custom_call.1} parent=1507 // loop_footer
            %s2179 = sadd.s32 1, %s2175
          $region1514: #{tpu_custom_call.1} parent=1507 // loop_footer_branch
            %2174 = sbr.rel target = $region1510
          $region1515: #{tpu_custom_call.1} parent=1507 // loop_exit
            _
        $region1508: #{tpu_custom_call.1} parent=47 // pred_fallthru
          _
        // Predicated region
        $region1527: #{tpu_custom_call.1} parent=47 // pred_check
          _
        $region1528: #{tpu_custom_call.1} parent=47 // pred_check_branch
          %2200 = sbr.rel (0) target = $region1530
        $region1529: #{tpu_custom_call.1} parent=47 // pred_region
          %2201 = vsyncadd [#allocation3], 16
        $region1530: #{tpu_custom_call.1} parent=47 // pred_fallthru
          _
        %s2202 = sadd.s32 %s2164, 1
        %s2203 = sld [smem:[#allocation5 + %s2202]]
        %s2204 = scalar_lea.vmem %s2, %s2203
        %s2205 = scalar_lea.vmem [#allocation2], 49
        // Predicated region
        $region1531: #{tpu_custom_call.1} parent=47 // pred_check
          _
        $region1532: #{tpu_custom_call.1} parent=47 // pred_check_branch
          %2207 = sbr.rel target = $region1534
        $region1533: #{tpu_custom_call.1} parent=47 // pred_region
          // Predicated region
          $region1546: #{tpu_custom_call.1} parent=1533 // pred_check
            _
          $region1547: #{tpu_custom_call.1} parent=1533 // pred_check_branch
            %2223 = sbr.rel (0) target = $region1549
          $region1548: #{tpu_custom_call.1} parent=1533 // pred_region
            %s2225 = ssub.s32 2, 1
            loop: start=0, step=1, limit=1
            $region1550: #{tpu_custom_call.1} parent=1548 // loop_pre_header
              _
            $region1551: #{tpu_custom_call.1} parent=1548 // loop_header
              %s2227 = sphi 0, %s2231
              %p2228 = scmp.ge.s32.totalorder %s2227, 1
              %s2232 = sphi %s2204, %s2204
              %s2233 = sphi %s2205, %s2205
            $region1552: #{tpu_custom_call.1} parent=1548 // loop_header_branch
              %2230 = sbr.rel (%p2228) target = $region1556
            $region1553: #{tpu_custom_call.1} parent=1548 // loop_body
              %v2234 = vld [vmem:[%s2232] sm:%s2225]
              %2235 = vst [vmem:[%s2233] sm:%s2225] %v2234
            $region1554: #{tpu_custom_call.1} parent=1548 // loop_footer
              %s2231 = sadd.s32 1, %s2227
            $region1555: #{tpu_custom_call.1} parent=1548 // loop_footer_branch
              %2226 = sbr.rel target = $region1551
            $region1556: #{tpu_custom_call.1} parent=1548 // loop_exit
              _
          $region1549: #{tpu_custom_call.1} parent=1533 // pred_fallthru
            _
        $region1534: #{tpu_custom_call.1} parent=47 // pred_fallthru
          _
        // Predicated region
        $region1535: #{tpu_custom_call.1} parent=47 // pred_check
          _
        $region1536: #{tpu_custom_call.1} parent=47 // pred_check_branch
          %2209 = sbr.rel (0) target = $region1538
        $region1537: #{tpu_custom_call.1} parent=47 // pred_region
          %s2211 = ssub.s32 2, 1
          loop: start=0, step=1, limit=1
          $region1539: #{tpu_custom_call.1} parent=1537 // loop_pre_header
            _
          $region1540: #{tpu_custom_call.1} parent=1537 // loop_header
            %s2213 = sphi 0, %s2217
            %p2214 = scmp.ge.s32.totalorder %s2213, 1
            %s2218 = sphi %s2204, %s2204
            %s2219 = sphi %s2205, %s2205
          $region1541: #{tpu_custom_call.1} parent=1537 // loop_header_branch
            %2216 = sbr.rel (%p2214) target = $region1545
          $region1542: #{tpu_custom_call.1} parent=1537 // loop_body
            %v2220 = vld [vmem:[%s2218] sm:%s2211]
            %2221 = vst [vmem:[%s2219] sm:%s2211] %v2220
          $region1543: #{tpu_custom_call.1} parent=1537 // loop_footer
            %s2217 = sadd.s32 1, %s2213
          $region1544: #{tpu_custom_call.1} parent=1537 // loop_footer_branch
            %2212 = sbr.rel target = $region1540
          $region1545: #{tpu_custom_call.1} parent=1537 // loop_exit
            _
        $region1538: #{tpu_custom_call.1} parent=47 // pred_fallthru
          _
        // Predicated region
        $region1557: #{tpu_custom_call.1} parent=47 // pred_check
          _
        $region1558: #{tpu_custom_call.1} parent=47 // pred_check_branch
          %2238 = sbr.rel (0) target = $region1560
        $region1559: #{tpu_custom_call.1} parent=47 // pred_region
          %2239 = vsyncadd [#allocation3], 16
        $region1560: #{tpu_custom_call.1} parent=47 // pred_fallthru
          _
        %s2240 = sadd.s32 %s2164, 2
        %s2241 = sld [smem:[#allocation5 + %s2240]]
        %s2242 = scalar_lea.vmem %s2, %s2241
        %s2243 = scalar_lea.vmem [#allocation2], 50
        // Predicated region
        $region1561: #{tpu_custom_call.1} parent=47 // pred_check
          _
        $region1562: #{tpu_custom_call.1} parent=47 // pred_check_branch
          %2245 = sbr.rel target = $region1564
        $region1563: #{tpu_custom_call.1} parent=47 // pred_region
          // Predicated region
          $region1576: #{tpu_custom_call.1} parent=1563 // pred_check
            _
          $region1577: #{tpu_custom_call.1} parent=1563 // pred_check_branch
            %2261 = sbr.rel (0) target = $region1579
          $region1578: #{tpu_custom_call.1} parent=1563 // pred_region
            %s2263 = ssub.s32 2, 1
            loop: start=0, step=1, limit=1
            $region1580: #{tpu_custom_call.1} parent=1578 // loop_pre_header
              _
            $region1581: #{tpu_custom_call.1} parent=1578 // loop_header
              %s2265 = sphi 0, %s2269
              %p2266 = scmp.ge.s32.totalorder %s2265, 1
              %s2270 = sphi %s2242, %s2242
              %s2271 = sphi %s2243, %s2243
            $region1582: #{tpu_custom_call.1} parent=1578 // loop_header_branch
              %2268 = sbr.rel (%p2266) target = $region1586
            $region1583: #{tpu_custom_call.1} parent=1578 // loop_body
              %v2272 = vld [vmem:[%s2270] sm:%s2263]
              %2273 = vst [vmem:[%s2271] sm:%s2263] %v2272
            $region1584: #{tpu_custom_call.1} parent=1578 // loop_footer
              %s2269 = sadd.s32 1, %s2265
            $region1585: #{tpu_custom_call.1} parent=1578 // loop_footer_branch
              %2264 = sbr.rel target = $region1581
            $region1586: #{tpu_custom_call.1} parent=1578 // loop_exit
              _
          $region1579: #{tpu_custom_call.1} parent=1563 // pred_fallthru
            _
        $region1564: #{tpu_custom_call.1} parent=47 // pred_fallthru
          _
        // Predicated region
        $region1565: #{tpu_custom_call.1} parent=47 // pred_check
          _
        $region1566: #{tpu_custom_call.1} parent=47 // pred_check_branch
          %2247 = sbr.rel (0) target = $region1568
        $region1567: #{tpu_custom_call.1} parent=47 // pred_region
          %s2249 = ssub.s32 2, 1
          loop: start=0, step=1, limit=1
          $region1569: #{tpu_custom_call.1} parent=1567 // loop_pre_header
            _
          $region1570: #{tpu_custom_call.1} parent=1567 // loop_header
            %s2251 = sphi 0, %s2255
            %p2252 = scmp.ge.s32.totalorder %s2251, 1
            %s2256 = sphi %s2242, %s2242
            %s2257 = sphi %s2243, %s2243
          $region1571: #{tpu_custom_call.1} parent=1567 // loop_header_branch
            %2254 = sbr.rel (%p2252) target = $region1575
          $region1572: #{tpu_custom_call.1} parent=1567 // loop_body
            %v2258 = vld [vmem:[%s2256] sm:%s2249]
            %2259 = vst [vmem:[%s2257] sm:%s2249] %v2258
          $region1573: #{tpu_custom_call.1} parent=1567 // loop_footer
            %s2255 = sadd.s32 1, %s2251
          $region1574: #{tpu_custom_call.1} parent=1567 // loop_footer_branch
            %2250 = sbr.rel target = $region1570
          $region1575: #{tpu_custom_call.1} parent=1567 // loop_exit
            _
        $region1568: #{tpu_custom_call.1} parent=47 // pred_fallthru
          _
        // Predicated region
        $region1587: #{tpu_custom_call.1} parent=47 // pred_check
          _
        $region1588: #{tpu_custom_call.1} parent=47 // pred_check_branch
          %2276 = sbr.rel (0) target = $region1590
        $region1589: #{tpu_custom_call.1} parent=47 // pred_region
          %2277 = vsyncadd [#allocation3], 16
        $region1590: #{tpu_custom_call.1} parent=47 // pred_fallthru
          _
        %s2278 = sadd.s32 %s2164, 3
        %s2279 = sld [smem:[#allocation5 + %s2278]]
        %s2280 = scalar_lea.vmem %s2, %s2279
        %s2281 = scalar_lea.vmem [#allocation2], 51
        // Predicated region
        $region1591: #{tpu_custom_call.1} parent=47 // pred_check
          _
        $region1592: #{tpu_custom_call.1} parent=47 // pred_check_branch
          %2283 = sbr.rel target = $region1594
        $region1593: #{tpu_custom_call.1} parent=47 // pred_region
          // Predicated region
          $region1606: #{tpu_custom_call.1} parent=1593 // pred_check
            _
          $region1607: #{tpu_custom_call.1} parent=1593 // pred_check_branch
            %2299 = sbr.rel (0) target = $region1609
          $region1608: #{tpu_custom_call.1} parent=1593 // pred_region
            %s2301 = ssub.s32 2, 1
            loop: start=0, step=1, limit=1
            $region1610: #{tpu_custom_call.1} parent=1608 // loop_pre_header
              _
            $region1611: #{tpu_custom_call.1} parent=1608 // loop_header
              %s2303 = sphi 0, %s2307
              %p2304 = scmp.ge.s32.totalorder %s2303, 1
              %s2308 = sphi %s2280, %s2280
              %s2309 = sphi %s2281, %s2281
            $region1612: #{tpu_custom_call.1} parent=1608 // loop_header_branch
              %2306 = sbr.rel (%p2304) target = $region1616
            $region1613: #{tpu_custom_call.1} parent=1608 // loop_body
              %v2310 = vld [vmem:[%s2308] sm:%s2301]
              %2311 = vst [vmem:[%s2309] sm:%s2301] %v2310
            $region1614: #{tpu_custom_call.1} parent=1608 // loop_footer
              %s2307 = sadd.s32 1, %s2303
            $region1615: #{tpu_custom_call.1} parent=1608 // loop_footer_branch
              %2302 = sbr.rel target = $region1611
            $region1616: #{tpu_custom_call.1} parent=1608 // loop_exit
              _
          $region1609: #{tpu_custom_call.1} parent=1593 // pred_fallthru
            _
        $region1594: #{tpu_custom_call.1} parent=47 // pred_fallthru
          _
        // Predicated region
        $region1595: #{tpu_custom_call.1} parent=47 // pred_check
          _
        $region1596: #{tpu_custom_call.1} parent=47 // pred_check_branch
          %2285 = sbr.rel (0) target = $region1598
        $region1597: #{tpu_custom_call.1} parent=47 // pred_region
          %s2287 = ssub.s32 2, 1
          loop: start=0, step=1, limit=1
          $region1599: #{tpu_custom_call.1} parent=1597 // loop_pre_header
            _
          $region1600: #{tpu_custom_call.1} parent=1597 // loop_header
            %s2289 = sphi 0, %s2293
            %p2290 = scmp.ge.s32.totalorder %s2289, 1
            %s2294 = sphi %s2280, %s2280
            %s2295 = sphi %s2281, %s2281
          $region1601: #{tpu_custom_call.1} parent=1597 // loop_header_branch
            %2292 = sbr.rel (%p2290) target = $region1605
          $region1602: #{tpu_custom_call.1} parent=1597 // loop_body
            %v2296 = vld [vmem:[%s2294] sm:%s2287]
            %2297 = vst [vmem:[%s2295] sm:%s2287] %v2296
          $region1603: #{tpu_custom_call.1} parent=1597 // loop_footer
            %s2293 = sadd.s32 1, %s2289
          $region1604: #{tpu_custom_call.1} parent=1597 // loop_footer_branch
            %2288 = sbr.rel target = $region1600
          $region1605: #{tpu_custom_call.1} parent=1597 // loop_exit
            _
        $region1598: #{tpu_custom_call.1} parent=47 // pred_fallthru
          _
        // Predicated region
        $region1617: #{tpu_custom_call.1} parent=47 // pred_check
          _
        $region1618: #{tpu_custom_call.1} parent=47 // pred_check_branch
          %2314 = sbr.rel (0) target = $region1620
        $region1619: #{tpu_custom_call.1} parent=47 // pred_region
          %2315 = vsyncadd [#allocation3], 16
        $region1620: #{tpu_custom_call.1} parent=47 // pred_fallthru
          _
        %s2316 = sadd.s32 %s2164, 4
        %s2317 = sld [smem:[#allocation5 + %s2316]]
        %s2318 = scalar_lea.vmem %s2, %s2317
        %s2319 = scalar_lea.vmem [#allocation2], 52
        // Predicated region
        $region1621: #{tpu_custom_call.1} parent=47 // pred_check
          _
        $region1622: #{tpu_custom_call.1} parent=47 // pred_check_branch
          %2321 = sbr.rel target = $region1624
        $region1623: #{tpu_custom_call.1} parent=47 // pred_region
          // Predicated region
          $region1636: #{tpu_custom_call.1} parent=1623 // pred_check
            _
          $region1637: #{tpu_custom_call.1} parent=1623 // pred_check_branch
            %2337 = sbr.rel (0) target = $region1639
          $region1638: #{tpu_custom_call.1} parent=1623 // pred_region
            %s2339 = ssub.s32 2, 1
            loop: start=0, step=1, limit=1
            $region1640: #{tpu_custom_call.1} parent=1638 // loop_pre_header
              _
            $region1641: #{tpu_custom_call.1} parent=1638 // loop_header
              %s2341 = sphi 0, %s2345
              %p2342 = scmp.ge.s32.totalorder %s2341, 1
              %s2346 = sphi %s2318, %s2318
              %s2347 = sphi %s2319, %s2319
            $region1642: #{tpu_custom_call.1} parent=1638 // loop_header_branch
              %2344 = sbr.rel (%p2342) target = $region1646
            $region1643: #{tpu_custom_call.1} parent=1638 // loop_body
              %v2348 = vld [vmem:[%s2346] sm:%s2339]
              %2349 = vst [vmem:[%s2347] sm:%s2339] %v2348
            $region1644: #{tpu_custom_call.1} parent=1638 // loop_footer
              %s2345 = sadd.s32 1, %s2341
            $region1645: #{tpu_custom_call.1} parent=1638 // loop_footer_branch
              %2340 = sbr.rel target = $region1641
            $region1646: #{tpu_custom_call.1} parent=1638 // loop_exit
              _
          $region1639: #{tpu_custom_call.1} parent=1623 // pred_fallthru
            _
        $region1624: #{tpu_custom_call.1} parent=47 // pred_fallthru
          _
        // Predicated region
        $region1625: #{tpu_custom_call.1} parent=47 // pred_check
          _
        $region1626: #{tpu_custom_call.1} parent=47 // pred_check_branch
          %2323 = sbr.rel (0) target = $region1628
        $region1627: #{tpu_custom_call.1} parent=47 // pred_region
          %s2325 = ssub.s32 2, 1
          loop: start=0, step=1, limit=1
          $region1629: #{tpu_custom_call.1} parent=1627 // loop_pre_header
            _
          $region1630: #{tpu_custom_call.1} parent=1627 // loop_header
            %s2327 = sphi 0, %s2331
            %p2328 = scmp.ge.s32.totalorder %s2327, 1
            %s2332 = sphi %s2318, %s2318
            %s2333 = sphi %s2319, %s2319
          $region1631: #{tpu_custom_call.1} parent=1627 // loop_header_branch
            %2330 = sbr.rel (%p2328) target = $region1635
          $region1632: #{tpu_custom_call.1} parent=1627 // loop_body
            %v2334 = vld [vmem:[%s2332] sm:%s2325]
            %2335 = vst [vmem:[%s2333] sm:%s2325] %v2334
          $region1633: #{tpu_custom_call.1} parent=1627 // loop_footer
            %s2331 = sadd.s32 1, %s2327
          $region1634: #{tpu_custom_call.1} parent=1627 // loop_footer_branch
            %2326 = sbr.rel target = $region1630
          $region1635: #{tpu_custom_call.1} parent=1627 // loop_exit
            _
        $region1628: #{tpu_custom_call.1} parent=47 // pred_fallthru
          _
        // Predicated region
        $region1647: #{tpu_custom_call.1} parent=47 // pred_check
          _
        $region1648: #{tpu_custom_call.1} parent=47 // pred_check_branch
          %2352 = sbr.rel (0) target = $region1650
        $region1649: #{tpu_custom_call.1} parent=47 // pred_region
          %2353 = vsyncadd [#allocation3], 16
        $region1650: #{tpu_custom_call.1} parent=47 // pred_fallthru
          _
        %s2354 = sadd.s32 %s2164, 5
        %s2355 = sld [smem:[#allocation5 + %s2354]]
        %s2356 = scalar_lea.vmem %s2, %s2355
        %s2357 = scalar_lea.vmem [#allocation2], 53
        // Predicated region
        $region1651: #{tpu_custom_call.1} parent=47 // pred_check
          _
        $region1652: #{tpu_custom_call.1} parent=47 // pred_check_branch
          %2359 = sbr.rel target = $region1654
        $region1653: #{tpu_custom_call.1} parent=47 // pred_region
          // Predicated region
          $region1666: #{tpu_custom_call.1} parent=1653 // pred_check
            _
          $region1667: #{tpu_custom_call.1} parent=1653 // pred_check_branch
            %2375 = sbr.rel (0) target = $region1669
          $region1668: #{tpu_custom_call.1} parent=1653 // pred_region
            %s2377 = ssub.s32 2, 1
            loop: start=0, step=1, limit=1
            $region1670: #{tpu_custom_call.1} parent=1668 // loop_pre_header
              _
            $region1671: #{tpu_custom_call.1} parent=1668 // loop_header
              %s2379 = sphi 0, %s2383
              %p2380 = scmp.ge.s32.totalorder %s2379, 1
              %s2384 = sphi %s2356, %s2356
              %s2385 = sphi %s2357, %s2357
            $region1672: #{tpu_custom_call.1} parent=1668 // loop_header_branch
              %2382 = sbr.rel (%p2380) target = $region1676
            $region1673: #{tpu_custom_call.1} parent=1668 // loop_body
              %v2386 = vld [vmem:[%s2384] sm:%s2377]
              %2387 = vst [vmem:[%s2385] sm:%s2377] %v2386
            $region1674: #{tpu_custom_call.1} parent=1668 // loop_footer
              %s2383 = sadd.s32 1, %s2379
            $region1675: #{tpu_custom_call.1} parent=1668 // loop_footer_branch
              %2378 = sbr.rel target = $region1671
            $region1676: #{tpu_custom_call.1} parent=1668 // loop_exit
              _
          $region1669: #{tpu_custom_call.1} parent=1653 // pred_fallthru
            _
        $region1654: #{tpu_custom_call.1} parent=47 // pred_fallthru
          _
        // Predicated region
        $region1655: #{tpu_custom_call.1} parent=47 // pred_check
          _
        $region1656: #{tpu_custom_call.1} parent=47 // pred_check_branch
          %2361 = sbr.rel (0) target = $region1658
        $region1657: #{tpu_custom_call.1} parent=47 // pred_region
          %s2363 = ssub.s32 2, 1
          loop: start=0, step=1, limit=1
          $region1659: #{tpu_custom_call.1} parent=1657 // loop_pre_header
            _
          $region1660: #{tpu_custom_call.1} parent=1657 // loop_header
            %s2365 = sphi 0, %s2369
            %p2366 = scmp.ge.s32.totalorder %s2365, 1
            %s2370 = sphi %s2356, %s2356
            %s2371 = sphi %s2357, %s2357
          $region1661: #{tpu_custom_call.1} parent=1657 // loop_header_branch
            %2368 = sbr.rel (%p2366) target = $region1665
          $region1662: #{tpu_custom_call.1} parent=1657 // loop_body
            %v2372 = vld [vmem:[%s2370] sm:%s2363]
            %2373 = vst [vmem:[%s2371] sm:%s2363] %v2372
          $region1663: #{tpu_custom_call.1} parent=1657 // loop_footer
            %s2369 = sadd.s32 1, %s2365
          $region1664: #{tpu_custom_call.1} parent=1657 // loop_footer_branch
            %2364 = sbr.rel target = $region1660
          $region1665: #{tpu_custom_call.1} parent=1657 // loop_exit
            _
        $region1658: #{tpu_custom_call.1} parent=47 // pred_fallthru
          _
        // Predicated region
        $region1677: #{tpu_custom_call.1} parent=47 // pred_check
          _
        $region1678: #{tpu_custom_call.1} parent=47 // pred_check_branch
          %2390 = sbr.rel (0) target = $region1680
        $region1679: #{tpu_custom_call.1} parent=47 // pred_region
          %2391 = vsyncadd [#allocation3], 16
        $region1680: #{tpu_custom_call.1} parent=47 // pred_fallthru
          _
        %s2392 = sadd.s32 %s2164, 6
        %s2393 = sld [smem:[#allocation5 + %s2392]]
        %s2394 = scalar_lea.vmem %s2, %s2393
        %s2395 = scalar_lea.vmem [#allocation2], 54
        // Predicated region
        $region1681: #{tpu_custom_call.1} parent=47 // pred_check
          _
        $region1682: #{tpu_custom_call.1} parent=47 // pred_check_branch
          %2397 = sbr.rel target = $region1684
        $region1683: #{tpu_custom_call.1} parent=47 // pred_region
          // Predicated region
          $region1696: #{tpu_custom_call.1} parent=1683 // pred_check
            _
          $region1697: #{tpu_custom_call.1} parent=1683 // pred_check_branch
            %2413 = sbr.rel (0) target = $region1699
          $region1698: #{tpu_custom_call.1} parent=1683 // pred_region
            %s2415 = ssub.s32 2, 1
            loop: start=0, step=1, limit=1
            $region1700: #{tpu_custom_call.1} parent=1698 // loop_pre_header
              _
            $region1701: #{tpu_custom_call.1} parent=1698 // loop_header
              %s2417 = sphi 0, %s2421
              %p2418 = scmp.ge.s32.totalorder %s2417, 1
              %s2422 = sphi %s2394, %s2394
              %s2423 = sphi %s2395, %s2395
            $region1702: #{tpu_custom_call.1} parent=1698 // loop_header_branch
              %2420 = sbr.rel (%p2418) target = $region1706
            $region1703: #{tpu_custom_call.1} parent=1698 // loop_body
              %v2424 = vld [vmem:[%s2422] sm:%s2415]
              %2425 = vst [vmem:[%s2423] sm:%s2415] %v2424
            $region1704: #{tpu_custom_call.1} parent=1698 // loop_footer
              %s2421 = sadd.s32 1, %s2417
            $region1705: #{tpu_custom_call.1} parent=1698 // loop_footer_branch
              %2416 = sbr.rel target = $region1701
            $region1706: #{tpu_custom_call.1} parent=1698 // loop_exit
              _
          $region1699: #{tpu_custom_call.1} parent=1683 // pred_fallthru
            _
        $region1684: #{tpu_custom_call.1} parent=47 // pred_fallthru
          _
        // Predicated region
        $region1685: #{tpu_custom_call.1} parent=47 // pred_check
          _
        $region1686: #{tpu_custom_call.1} parent=47 // pred_check_branch
          %2399 = sbr.rel (0) target = $region1688
        $region1687: #{tpu_custom_call.1} parent=47 // pred_region
          %s2401 = ssub.s32 2, 1
          loop: start=0, step=1, limit=1
          $region1689: #{tpu_custom_call.1} parent=1687 // loop_pre_header
            _
          $region1690: #{tpu_custom_call.1} parent=1687 // loop_header
            %s2403 = sphi 0, %s2407
            %p2404 = scmp.ge.s32.totalorder %s2403, 1
            %s2408 = sphi %s2394, %s2394
            %s2409 = sphi %s2395, %s2395
          $region1691: #{tpu_custom_call.1} parent=1687 // loop_header_branch
            %2406 = sbr.rel (%p2404) target = $region1695
          $region1692: #{tpu_custom_call.1} parent=1687 // loop_body
            %v2410 = vld [vmem:[%s2408] sm:%s2401]
            %2411 = vst [vmem:[%s2409] sm:%s2401] %v2410
          $region1693: #{tpu_custom_call.1} parent=1687 // loop_footer
            %s2407 = sadd.s32 1, %s2403
          $region1694: #{tpu_custom_call.1} parent=1687 // loop_footer_branch
            %2402 = sbr.rel target = $region1690
          $region1695: #{tpu_custom_call.1} parent=1687 // loop_exit
            _
        $region1688: #{tpu_custom_call.1} parent=47 // pred_fallthru
          _
        // Predicated region
        $region1707: #{tpu_custom_call.1} parent=47 // pred_check
          _
        $region1708: #{tpu_custom_call.1} parent=47 // pred_check_branch
          %2428 = sbr.rel (0) target = $region1710
        $region1709: #{tpu_custom_call.1} parent=47 // pred_region
          %2429 = vsyncadd [#allocation3], 16
        $region1710: #{tpu_custom_call.1} parent=47 // pred_fallthru
          _
        %s2430 = sadd.s32 %s2164, 7
        %s2431 = sld [smem:[#allocation5 + %s2430]]
        %s2432 = scalar_lea.vmem %s2, %s2431
        %s2433 = scalar_lea.vmem [#allocation2], 55
        // Predicated region
        $region1711: #{tpu_custom_call.1} parent=47 // pred_check
          _
        $region1712: #{tpu_custom_call.1} parent=47 // pred_check_branch
          %2435 = sbr.rel target = $region1714
        $region1713: #{tpu_custom_call.1} parent=47 // pred_region
          // Predicated region
          $region1726: #{tpu_custom_call.1} parent=1713 // pred_check
            _
          $region1727: #{tpu_custom_call.1} parent=1713 // pred_check_branch
            %2451 = sbr.rel (0) target = $region1729
          $region1728: #{tpu_custom_call.1} parent=1713 // pred_region
            %s2453 = ssub.s32 2, 1
            loop: start=0, step=1, limit=1
            $region1730: #{tpu_custom_call.1} parent=1728 // loop_pre_header
              _
            $region1731: #{tpu_custom_call.1} parent=1728 // loop_header
              %s2455 = sphi 0, %s2459
              %p2456 = scmp.ge.s32.totalorder %s2455, 1
              %s2460 = sphi %s2432, %s2432
              %s2461 = sphi %s2433, %s2433
            $region1732: #{tpu_custom_call.1} parent=1728 // loop_header_branch
              %2458 = sbr.rel (%p2456) target = $region1736
            $region1733: #{tpu_custom_call.1} parent=1728 // loop_body
              %v2462 = vld [vmem:[%s2460] sm:%s2453]
              %2463 = vst [vmem:[%s2461] sm:%s2453] %v2462
            $region1734: #{tpu_custom_call.1} parent=1728 // loop_footer
              %s2459 = sadd.s32 1, %s2455
            $region1735: #{tpu_custom_call.1} parent=1728 // loop_footer_branch
              %2454 = sbr.rel target = $region1731
            $region1736: #{tpu_custom_call.1} parent=1728 // loop_exit
              _
          $region1729: #{tpu_custom_call.1} parent=1713 // pred_fallthru
            _
        $region1714: #{tpu_custom_call.1} parent=47 // pred_fallthru
          _
        // Predicated region
        $region1715: #{tpu_custom_call.1} parent=47 // pred_check
          _
        $region1716: #{tpu_custom_call.1} parent=47 // pred_check_branch
          %2437 = sbr.rel (0) target = $region1718
        $region1717: #{tpu_custom_call.1} parent=47 // pred_region
          %s2439 = ssub.s32 2, 1
          loop: start=0, step=1, limit=1
          $region1719: #{tpu_custom_call.1} parent=1717 // loop_pre_header
            _
          $region1720: #{tpu_custom_call.1} parent=1717 // loop_header
            %s2441 = sphi 0, %s2445
            %p2442 = scmp.ge.s32.totalorder %s2441, 1
            %s2446 = sphi %s2432, %s2432
            %s2447 = sphi %s2433, %s2433
          $region1721: #{tpu_custom_call.1} parent=1717 // loop_header_branch
            %2444 = sbr.rel (%p2442) target = $region1725
          $region1722: #{tpu_custom_call.1} parent=1717 // loop_body
            %v2448 = vld [vmem:[%s2446] sm:%s2439]
            %2449 = vst [vmem:[%s2447] sm:%s2439] %v2448
          $region1723: #{tpu_custom_call.1} parent=1717 // loop_footer
            %s2445 = sadd.s32 1, %s2441
          $region1724: #{tpu_custom_call.1} parent=1717 // loop_footer_branch
            %2440 = sbr.rel target = $region1720
          $region1725: #{tpu_custom_call.1} parent=1717 // loop_exit
            _
        $region1718: #{tpu_custom_call.1} parent=47 // pred_fallthru
          _
        // Predicated region
        $region1737: #{tpu_custom_call.1} parent=47 // pred_check
          _
        $region1738: #{tpu_custom_call.1} parent=47 // pred_check_branch
          %2466 = sbr.rel (0) target = $region1740
        $region1739: #{tpu_custom_call.1} parent=47 // pred_region
          %2467 = vsyncadd [#allocation3], 16
        $region1740: #{tpu_custom_call.1} parent=47 // pred_fallthru
          _
        %s2468 = sadd.s32 %s334, 7
        %s2469 = smul.u32 %s2468, 128
        %s2470 = sld [smem:[#allocation5 + %s2469]]
        %s2471 = scalar_lea.vmem %s2, %s2470
        %s2472 = scalar_lea.vmem [#allocation2], 56
        // Predicated region
        $region1741: #{tpu_custom_call.1} parent=47 // pred_check
          _
        $region1742: #{tpu_custom_call.1} parent=47 // pred_check_branch
          %2474 = sbr.rel target = $region1744
        $region1743: #{tpu_custom_call.1} parent=47 // pred_region
          // Predicated region
          $region1756: #{tpu_custom_call.1} parent=1743 // pred_check
            _
          $region1757: #{tpu_custom_call.1} parent=1743 // pred_check_branch
            %2490 = sbr.rel (0) target = $region1759
          $region1758: #{tpu_custom_call.1} parent=1743 // pred_region
            %s2492 = ssub.s32 2, 1
            loop: start=0, step=1, limit=1
            $region1760: #{tpu_custom_call.1} parent=1758 // loop_pre_header
              _
            $region1761: #{tpu_custom_call.1} parent=1758 // loop_header
              %s2494 = sphi 0, %s2498
              %p2495 = scmp.ge.s32.totalorder %s2494, 1
              %s2499 = sphi %s2471, %s2471
              %s2500 = sphi %s2472, %s2472
            $region1762: #{tpu_custom_call.1} parent=1758 // loop_header_branch
              %2497 = sbr.rel (%p2495) target = $region1766
            $region1763: #{tpu_custom_call.1} parent=1758 // loop_body
              %v2501 = vld [vmem:[%s2499] sm:%s2492]
              %2502 = vst [vmem:[%s2500] sm:%s2492] %v2501
            $region1764: #{tpu_custom_call.1} parent=1758 // loop_footer
              %s2498 = sadd.s32 1, %s2494
            $region1765: #{tpu_custom_call.1} parent=1758 // loop_footer_branch
              %2493 = sbr.rel target = $region1761
            $region1766: #{tpu_custom_call.1} parent=1758 // loop_exit
              _
          $region1759: #{tpu_custom_call.1} parent=1743 // pred_fallthru
            _
        $region1744: #{tpu_custom_call.1} parent=47 // pred_fallthru
          _
        // Predicated region
        $region1745: #{tpu_custom_call.1} parent=47 // pred_check
          _
        $region1746: #{tpu_custom_call.1} parent=47 // pred_check_branch
          %2476 = sbr.rel (0) target = $region1748
        $region1747: #{tpu_custom_call.1} parent=47 // pred_region
          %s2478 = ssub.s32 2, 1
          loop: start=0, step=1, limit=1
          $region1749: #{tpu_custom_call.1} parent=1747 // loop_pre_header
            _
          $region1750: #{tpu_custom_call.1} parent=1747 // loop_header
            %s2480 = sphi 0, %s2484
            %p2481 = scmp.ge.s32.totalorder %s2480, 1
            %s2485 = sphi %s2471, %s2471
            %s2486 = sphi %s2472, %s2472
          $region1751: #{tpu_custom_call.1} parent=1747 // loop_header_branch
            %2483 = sbr.rel (%p2481) target = $region1755
          $region1752: #{tpu_custom_call.1} parent=1747 // loop_body
            %v2487 = vld [vmem:[%s2485] sm:%s2478]
            %2488 = vst [vmem:[%s2486] sm:%s2478] %v2487
          $region1753: #{tpu_custom_call.1} parent=1747 // loop_footer
            %s2484 = sadd.s32 1, %s2480
          $region1754: #{tpu_custom_call.1} parent=1747 // loop_footer_branch
            %2479 = sbr.rel target = $region1750
          $region1755: #{tpu_custom_call.1} parent=1747 // loop_exit
            _
        $region1748: #{tpu_custom_call.1} parent=47 // pred_fallthru
          _
        // Predicated region
        $region1767: #{tpu_custom_call.1} parent=47 // pred_check
          _
        $region1768: #{tpu_custom_call.1} parent=47 // pred_check_branch
          %2505 = sbr.rel (0) target = $region1770
        $region1769: #{tpu_custom_call.1} parent=47 // pred_region
          %2506 = vsyncadd [#allocation3], 16
        $region1770: #{tpu_custom_call.1} parent=47 // pred_fallthru
          _
        %s2507 = sadd.s32 %s2469, 1
        %s2508 = sld [smem:[#allocation5 + %s2507]]
        %s2509 = scalar_lea.vmem %s2, %s2508
        %s2510 = scalar_lea.vmem [#allocation2], 57
        // Predicated region
        $region1771: #{tpu_custom_call.1} parent=47 // pred_check
          _
        $region1772: #{tpu_custom_call.1} parent=47 // pred_check_branch
          %2512 = sbr.rel target = $region1774
        $region1773: #{tpu_custom_call.1} parent=47 // pred_region
          // Predicated region
          $region1786: #{tpu_custom_call.1} parent=1773 // pred_check
            _
          $region1787: #{tpu_custom_call.1} parent=1773 // pred_check_branch
            %2528 = sbr.rel (0) target = $region1789
          $region1788: #{tpu_custom_call.1} parent=1773 // pred_region
            %s2530 = ssub.s32 2, 1
            loop: start=0, step=1, limit=1
            $region1790: #{tpu_custom_call.1} parent=1788 // loop_pre_header
              _
            $region1791: #{tpu_custom_call.1} parent=1788 // loop_header
              %s2532 = sphi 0, %s2536
              %p2533 = scmp.ge.s32.totalorder %s2532, 1
              %s2537 = sphi %s2509, %s2509
              %s2538 = sphi %s2510, %s2510
            $region1792: #{tpu_custom_call.1} parent=1788 // loop_header_branch
              %2535 = sbr.rel (%p2533) target = $region1796
            $region1793: #{tpu_custom_call.1} parent=1788 // loop_body
              %v2539 = vld [vmem:[%s2537] sm:%s2530]
              %2540 = vst [vmem:[%s2538] sm:%s2530] %v2539
            $region1794: #{tpu_custom_call.1} parent=1788 // loop_footer
              %s2536 = sadd.s32 1, %s2532
            $region1795: #{tpu_custom_call.1} parent=1788 // loop_footer_branch
              %2531 = sbr.rel target = $region1791
            $region1796: #{tpu_custom_call.1} parent=1788 // loop_exit
              _
          $region1789: #{tpu_custom_call.1} parent=1773 // pred_fallthru
            _
        $region1774: #{tpu_custom_call.1} parent=47 // pred_fallthru
          _
        // Predicated region
        $region1775: #{tpu_custom_call.1} parent=47 // pred_check
          _
        $region1776: #{tpu_custom_call.1} parent=47 // pred_check_branch
          %2514 = sbr.rel (0) target = $region1778
        $region1777: #{tpu_custom_call.1} parent=47 // pred_region
          %s2516 = ssub.s32 2, 1
          loop: start=0, step=1, limit=1
          $region1779: #{tpu_custom_call.1} parent=1777 // loop_pre_header
            _
          $region1780: #{tpu_custom_call.1} parent=1777 // loop_header
            %s2518 = sphi 0, %s2522
            %p2519 = scmp.ge.s32.totalorder %s2518, 1
            %s2523 = sphi %s2509, %s2509
            %s2524 = sphi %s2510, %s2510
          $region1781: #{tpu_custom_call.1} parent=1777 // loop_header_branch
            %2521 = sbr.rel (%p2519) target = $region1785
          $region1782: #{tpu_custom_call.1} parent=1777 // loop_body
            %v2525 = vld [vmem:[%s2523] sm:%s2516]
            %2526 = vst [vmem:[%s2524] sm:%s2516] %v2525
          $region1783: #{tpu_custom_call.1} parent=1777 // loop_footer
            %s2522 = sadd.s32 1, %s2518
          $region1784: #{tpu_custom_call.1} parent=1777 // loop_footer_branch
            %2517 = sbr.rel target = $region1780
          $region1785: #{tpu_custom_call.1} parent=1777 // loop_exit
            _
        $region1778: #{tpu_custom_call.1} parent=47 // pred_fallthru
          _
        // Predicated region
        $region1797: #{tpu_custom_call.1} parent=47 // pred_check
          _
        $region1798: #{tpu_custom_call.1} parent=47 // pred_check_branch
          %2543 = sbr.rel (0) target = $region1800
        $region1799: #{tpu_custom_call.1} parent=47 // pred_region
          %2544 = vsyncadd [#allocation3], 16
        $region1800: #{tpu_custom_call.1} parent=47 // pred_fallthru
          _
        %s2545 = sadd.s32 %s2469, 2
        %s2546 = sld [smem:[#allocation5 + %s2545]]
        %s2547 = scalar_lea.vmem %s2, %s2546
        %s2548 = scalar_lea.vmem [#allocation2], 58
        // Predicated region
        $region1801: #{tpu_custom_call.1} parent=47 // pred_check
          _
        $region1802: #{tpu_custom_call.1} parent=47 // pred_check_branch
          %2550 = sbr.rel target = $region1804
        $region1803: #{tpu_custom_call.1} parent=47 // pred_region
          // Predicated region
          $region1816: #{tpu_custom_call.1} parent=1803 // pred_check
            _
          $region1817: #{tpu_custom_call.1} parent=1803 // pred_check_branch
            %2566 = sbr.rel (0) target = $region1819
          $region1818: #{tpu_custom_call.1} parent=1803 // pred_region
            %s2568 = ssub.s32 2, 1
            loop: start=0, step=1, limit=1
            $region1820: #{tpu_custom_call.1} parent=1818 // loop_pre_header
              _
            $region1821: #{tpu_custom_call.1} parent=1818 // loop_header
              %s2570 = sphi 0, %s2574
              %p2571 = scmp.ge.s32.totalorder %s2570, 1
              %s2575 = sphi %s2547, %s2547
              %s2576 = sphi %s2548, %s2548
            $region1822: #{tpu_custom_call.1} parent=1818 // loop_header_branch
              %2573 = sbr.rel (%p2571) target = $region1826
            $region1823: #{tpu_custom_call.1} parent=1818 // loop_body
              %v2577 = vld [vmem:[%s2575] sm:%s2568]
              %2578 = vst [vmem:[%s2576] sm:%s2568] %v2577
            $region1824: #{tpu_custom_call.1} parent=1818 // loop_footer
              %s2574 = sadd.s32 1, %s2570
            $region1825: #{tpu_custom_call.1} parent=1818 // loop_footer_branch
              %2569 = sbr.rel target = $region1821
            $region1826: #{tpu_custom_call.1} parent=1818 // loop_exit
              _
          $region1819: #{tpu_custom_call.1} parent=1803 // pred_fallthru
            _
        $region1804: #{tpu_custom_call.1} parent=47 // pred_fallthru
          _
        // Predicated region
        $region1805: #{tpu_custom_call.1} parent=47 // pred_check
          _
        $region1806: #{tpu_custom_call.1} parent=47 // pred_check_branch
          %2552 = sbr.rel (0) target = $region1808
        $region1807: #{tpu_custom_call.1} parent=47 // pred_region
          %s2554 = ssub.s32 2, 1
          loop: start=0, step=1, limit=1
          $region1809: #{tpu_custom_call.1} parent=1807 // loop_pre_header
            _
          $region1810: #{tpu_custom_call.1} parent=1807 // loop_header
            %s2556 = sphi 0, %s2560
            %p2557 = scmp.ge.s32.totalorder %s2556, 1
            %s2561 = sphi %s2547, %s2547
            %s2562 = sphi %s2548, %s2548
          $region1811: #{tpu_custom_call.1} parent=1807 // loop_header_branch
            %2559 = sbr.rel (%p2557) target = $region1815
          $region1812: #{tpu_custom_call.1} parent=1807 // loop_body
            %v2563 = vld [vmem:[%s2561] sm:%s2554]
            %2564 = vst [vmem:[%s2562] sm:%s2554] %v2563
          $region1813: #{tpu_custom_call.1} parent=1807 // loop_footer
            %s2560 = sadd.s32 1, %s2556
          $region1814: #{tpu_custom_call.1} parent=1807 // loop_footer_branch
            %2555 = sbr.rel target = $region1810
          $region1815: #{tpu_custom_call.1} parent=1807 // loop_exit
            _
        $region1808: #{tpu_custom_call.1} parent=47 // pred_fallthru
          _
        // Predicated region
        $region1827: #{tpu_custom_call.1} parent=47 // pred_check
          _
        $region1828: #{tpu_custom_call.1} parent=47 // pred_check_branch
          %2581 = sbr.rel (0) target = $region1830
        $region1829: #{tpu_custom_call.1} parent=47 // pred_region
          %2582 = vsyncadd [#allocation3], 16
        $region1830: #{tpu_custom_call.1} parent=47 // pred_fallthru
          _
        %s2583 = sadd.s32 %s2469, 3
        %s2584 = sld [smem:[#allocation5 + %s2583]]
        %s2585 = scalar_lea.vmem %s2, %s2584
        %s2586 = scalar_lea.vmem [#allocation2], 59
        // Predicated region
        $region1831: #{tpu_custom_call.1} parent=47 // pred_check
          _
        $region1832: #{tpu_custom_call.1} parent=47 // pred_check_branch
          %2588 = sbr.rel target = $region1834
        $region1833: #{tpu_custom_call.1} parent=47 // pred_region
          // Predicated region
          $region1846: #{tpu_custom_call.1} parent=1833 // pred_check
            _
          $region1847: #{tpu_custom_call.1} parent=1833 // pred_check_branch
            %2604 = sbr.rel (0) target = $region1849
          $region1848: #{tpu_custom_call.1} parent=1833 // pred_region
            %s2606 = ssub.s32 2, 1
            loop: start=0, step=1, limit=1
            $region1850: #{tpu_custom_call.1} parent=1848 // loop_pre_header
              _
            $region1851: #{tpu_custom_call.1} parent=1848 // loop_header
              %s2608 = sphi 0, %s2612
              %p2609 = scmp.ge.s32.totalorder %s2608, 1
              %s2613 = sphi %s2585, %s2585
              %s2614 = sphi %s2586, %s2586
            $region1852: #{tpu_custom_call.1} parent=1848 // loop_header_branch
              %2611 = sbr.rel (%p2609) target = $region1856
            $region1853: #{tpu_custom_call.1} parent=1848 // loop_body
              %v2615 = vld [vmem:[%s2613] sm:%s2606]
              %2616 = vst [vmem:[%s2614] sm:%s2606] %v2615
            $region1854: #{tpu_custom_call.1} parent=1848 // loop_footer
              %s2612 = sadd.s32 1, %s2608
            $region1855: #{tpu_custom_call.1} parent=1848 // loop_footer_branch
              %2607 = sbr.rel target = $region1851
            $region1856: #{tpu_custom_call.1} parent=1848 // loop_exit
              _
          $region1849: #{tpu_custom_call.1} parent=1833 // pred_fallthru
            _
        $region1834: #{tpu_custom_call.1} parent=47 // pred_fallthru
          _
        // Predicated region
        $region1835: #{tpu_custom_call.1} parent=47 // pred_check
          _
        $region1836: #{tpu_custom_call.1} parent=47 // pred_check_branch
          %2590 = sbr.rel (0) target = $region1838
        $region1837: #{tpu_custom_call.1} parent=47 // pred_region
          %s2592 = ssub.s32 2, 1
          loop: start=0, step=1, limit=1
          $region1839: #{tpu_custom_call.1} parent=1837 // loop_pre_header
            _
          $region1840: #{tpu_custom_call.1} parent=1837 // loop_header
            %s2594 = sphi 0, %s2598
            %p2595 = scmp.ge.s32.totalorder %s2594, 1
            %s2599 = sphi %s2585, %s2585
            %s2600 = sphi %s2586, %s2586
          $region1841: #{tpu_custom_call.1} parent=1837 // loop_header_branch
            %2597 = sbr.rel (%p2595) target = $region1845
          $region1842: #{tpu_custom_call.1} parent=1837 // loop_body
            %v2601 = vld [vmem:[%s2599] sm:%s2592]
            %2602 = vst [vmem:[%s2600] sm:%s2592] %v2601
          $region1843: #{tpu_custom_call.1} parent=1837 // loop_footer
            %s2598 = sadd.s32 1, %s2594
          $region1844: #{tpu_custom_call.1} parent=1837 // loop_footer_branch
            %2593 = sbr.rel target = $region1840
          $region1845: #{tpu_custom_call.1} parent=1837 // loop_exit
            _
        $region1838: #{tpu_custom_call.1} parent=47 // pred_fallthru
          _
        // Predicated region
        $region1857: #{tpu_custom_call.1} parent=47 // pred_check
          _
        $region1858: #{tpu_custom_call.1} parent=47 // pred_check_branch
          %2619 = sbr.rel (0) target = $region1860
        $region1859: #{tpu_custom_call.1} parent=47 // pred_region
          %2620 = vsyncadd [#allocation3], 16
        $region1860: #{tpu_custom_call.1} parent=47 // pred_fallthru
          _
        %s2621 = sadd.s32 %s2469, 4
        %s2622 = sld [smem:[#allocation5 + %s2621]]
        %s2623 = scalar_lea.vmem %s2, %s2622
        %s2624 = scalar_lea.vmem [#allocation2], 60
        // Predicated region
        $region1861: #{tpu_custom_call.1} parent=47 // pred_check
          _
        $region1862: #{tpu_custom_call.1} parent=47 // pred_check_branch
          %2626 = sbr.rel target = $region1864
        $region1863: #{tpu_custom_call.1} parent=47 // pred_region
          // Predicated region
          $region1876: #{tpu_custom_call.1} parent=1863 // pred_check
            _
          $region1877: #{tpu_custom_call.1} parent=1863 // pred_check_branch
            %2642 = sbr.rel (0) target = $region1879
          $region1878: #{tpu_custom_call.1} parent=1863 // pred_region
            %s2644 = ssub.s32 2, 1
            loop: start=0, step=1, limit=1
            $region1880: #{tpu_custom_call.1} parent=1878 // loop_pre_header
              _
            $region1881: #{tpu_custom_call.1} parent=1878 // loop_header
              %s2646 = sphi 0, %s2650
              %p2647 = scmp.ge.s32.totalorder %s2646, 1
              %s2651 = sphi %s2623, %s2623
              %s2652 = sphi %s2624, %s2624
            $region1882: #{tpu_custom_call.1} parent=1878 // loop_header_branch
              %2649 = sbr.rel (%p2647) target = $region1886
            $region1883: #{tpu_custom_call.1} parent=1878 // loop_body
              %v2653 = vld [vmem:[%s2651] sm:%s2644]
              %2654 = vst [vmem:[%s2652] sm:%s2644] %v2653
            $region1884: #{tpu_custom_call.1} parent=1878 // loop_footer
              %s2650 = sadd.s32 1, %s2646
            $region1885: #{tpu_custom_call.1} parent=1878 // loop_footer_branch
              %2645 = sbr.rel target = $region1881
            $region1886: #{tpu_custom_call.1} parent=1878 // loop_exit
              _
          $region1879: #{tpu_custom_call.1} parent=1863 // pred_fallthru
            _
        $region1864: #{tpu_custom_call.1} parent=47 // pred_fallthru
          _
        // Predicated region
        $region1865: #{tpu_custom_call.1} parent=47 // pred_check
          _
        $region1866: #{tpu_custom_call.1} parent=47 // pred_check_branch
          %2628 = sbr.rel (0) target = $region1868
        $region1867: #{tpu_custom_call.1} parent=47 // pred_region
          %s2630 = ssub.s32 2, 1
          loop: start=0, step=1, limit=1
          $region1869: #{tpu_custom_call.1} parent=1867 // loop_pre_header
            _
          $region1870: #{tpu_custom_call.1} parent=1867 // loop_header
            %s2632 = sphi 0, %s2636
            %p2633 = scmp.ge.s32.totalorder %s2632, 1
            %s2637 = sphi %s2623, %s2623
            %s2638 = sphi %s2624, %s2624
          $region1871: #{tpu_custom_call.1} parent=1867 // loop_header_branch
            %2635 = sbr.rel (%p2633) target = $region1875
          $region1872: #{tpu_custom_call.1} parent=1867 // loop_body
            %v2639 = vld [vmem:[%s2637] sm:%s2630]
            %2640 = vst [vmem:[%s2638] sm:%s2630] %v2639
          $region1873: #{tpu_custom_call.1} parent=1867 // loop_footer
            %s2636 = sadd.s32 1, %s2632
          $region1874: #{tpu_custom_call.1} parent=1867 // loop_footer_branch
            %2631 = sbr.rel target = $region1870
          $region1875: #{tpu_custom_call.1} parent=1867 // loop_exit
            _
        $region1868: #{tpu_custom_call.1} parent=47 // pred_fallthru
          _
        // Predicated region
        $region1887: #{tpu_custom_call.1} parent=47 // pred_check
          _
        $region1888: #{tpu_custom_call.1} parent=47 // pred_check_branch
          %2657 = sbr.rel (0) target = $region1890
        $region1889: #{tpu_custom_call.1} parent=47 // pred_region
          %2658 = vsyncadd [#allocation3], 16
        $region1890: #{tpu_custom_call.1} parent=47 // pred_fallthru
          _
        %s2659 = sadd.s32 %s2469, 5
        %s2660 = sld [smem:[#allocation5 + %s2659]]
        %s2661 = scalar_lea.vmem %s2, %s2660
        %s2662 = scalar_lea.vmem [#allocation2], 61
        // Predicated region
        $region1891: #{tpu_custom_call.1} parent=47 // pred_check
          _
        $region1892: #{tpu_custom_call.1} parent=47 // pred_check_branch
          %2664 = sbr.rel target = $region1894
        $region1893: #{tpu_custom_call.1} parent=47 // pred_region
          // Predicated region
          $region1906: #{tpu_custom_call.1} parent=1893 // pred_check
            _
          $region1907: #{tpu_custom_call.1} parent=1893 // pred_check_branch
            %2680 = sbr.rel (0) target = $region1909
          $region1908: #{tpu_custom_call.1} parent=1893 // pred_region
            %s2682 = ssub.s32 2, 1
            loop: start=0, step=1, limit=1
            $region1910: #{tpu_custom_call.1} parent=1908 // loop_pre_header
              _
            $region1911: #{tpu_custom_call.1} parent=1908 // loop_header
              %s2684 = sphi 0, %s2688
              %p2685 = scmp.ge.s32.totalorder %s2684, 1
              %s2689 = sphi %s2661, %s2661
              %s2690 = sphi %s2662, %s2662
            $region1912: #{tpu_custom_call.1} parent=1908 // loop_header_branch
              %2687 = sbr.rel (%p2685) target = $region1916
            $region1913: #{tpu_custom_call.1} parent=1908 // loop_body
              %v2691 = vld [vmem:[%s2689] sm:%s2682]
              %2692 = vst [vmem:[%s2690] sm:%s2682] %v2691
            $region1914: #{tpu_custom_call.1} parent=1908 // loop_footer
              %s2688 = sadd.s32 1, %s2684
            $region1915: #{tpu_custom_call.1} parent=1908 // loop_footer_branch
              %2683 = sbr.rel target = $region1911
            $region1916: #{tpu_custom_call.1} parent=1908 // loop_exit
              _
          $region1909: #{tpu_custom_call.1} parent=1893 // pred_fallthru
            _
        $region1894: #{tpu_custom_call.1} parent=47 // pred_fallthru
          _
        // Predicated region
        $region1895: #{tpu_custom_call.1} parent=47 // pred_check
          _
        $region1896: #{tpu_custom_call.1} parent=47 // pred_check_branch
          %2666 = sbr.rel (0) target = $region1898
        $region1897: #{tpu_custom_call.1} parent=47 // pred_region
          %s2668 = ssub.s32 2, 1
          loop: start=0, step=1, limit=1
          $region1899: #{tpu_custom_call.1} parent=1897 // loop_pre_header
            _
          $region1900: #{tpu_custom_call.1} parent=1897 // loop_header
            %s2670 = sphi 0, %s2674
            %p2671 = scmp.ge.s32.totalorder %s2670, 1
            %s2675 = sphi %s2661, %s2661
            %s2676 = sphi %s2662, %s2662
          $region1901: #{tpu_custom_call.1} parent=1897 // loop_header_branch
            %2673 = sbr.rel (%p2671) target = $region1905
          $region1902: #{tpu_custom_call.1} parent=1897 // loop_body
            %v2677 = vld [vmem:[%s2675] sm:%s2668]
            %2678 = vst [vmem:[%s2676] sm:%s2668] %v2677
          $region1903: #{tpu_custom_call.1} parent=1897 // loop_footer
            %s2674 = sadd.s32 1, %s2670
          $region1904: #{tpu_custom_call.1} parent=1897 // loop_footer_branch
            %2669 = sbr.rel target = $region1900
          $region1905: #{tpu_custom_call.1} parent=1897 // loop_exit
            _
        $region1898: #{tpu_custom_call.1} parent=47 // pred_fallthru
          _
        // Predicated region
        $region1917: #{tpu_custom_call.1} parent=47 // pred_check
          _
        $region1918: #{tpu_custom_call.1} parent=47 // pred_check_branch
          %2695 = sbr.rel (0) target = $region1920
        $region1919: #{tpu_custom_call.1} parent=47 // pred_region
          %2696 = vsyncadd [#allocation3], 16
        $region1920: #{tpu_custom_call.1} parent=47 // pred_fallthru
          _
        %s2697 = sadd.s32 %s2469, 6
        %s2698 = sld [smem:[#allocation5 + %s2697]]
        %s2699 = scalar_lea.vmem %s2, %s2698
        %s2700 = scalar_lea.vmem [#allocation2], 62
        // Predicated region
        $region1921: #{tpu_custom_call.1} parent=47 // pred_check
          _
        $region1922: #{tpu_custom_call.1} parent=47 // pred_check_branch
          %2702 = sbr.rel target = $region1924
        $region1923: #{tpu_custom_call.1} parent=47 // pred_region
          // Predicated region
          $region1936: #{tpu_custom_call.1} parent=1923 // pred_check
            _
          $region1937: #{tpu_custom_call.1} parent=1923 // pred_check_branch
            %2718 = sbr.rel (0) target = $region1939
          $region1938: #{tpu_custom_call.1} parent=1923 // pred_region
            %s2720 = ssub.s32 2, 1
            loop: start=0, step=1, limit=1
            $region1940: #{tpu_custom_call.1} parent=1938 // loop_pre_header
              _
            $region1941: #{tpu_custom_call.1} parent=1938 // loop_header
              %s2722 = sphi 0, %s2726
              %p2723 = scmp.ge.s32.totalorder %s2722, 1
              %s2727 = sphi %s2699, %s2699
              %s2728 = sphi %s2700, %s2700
            $region1942: #{tpu_custom_call.1} parent=1938 // loop_header_branch
              %2725 = sbr.rel (%p2723) target = $region1946
            $region1943: #{tpu_custom_call.1} parent=1938 // loop_body
              %v2729 = vld [vmem:[%s2727] sm:%s2720]
              %2730 = vst [vmem:[%s2728] sm:%s2720] %v2729
            $region1944: #{tpu_custom_call.1} parent=1938 // loop_footer
              %s2726 = sadd.s32 1, %s2722
            $region1945: #{tpu_custom_call.1} parent=1938 // loop_footer_branch
              %2721 = sbr.rel target = $region1941
            $region1946: #{tpu_custom_call.1} parent=1938 // loop_exit
              _
          $region1939: #{tpu_custom_call.1} parent=1923 // pred_fallthru
            _
        $region1924: #{tpu_custom_call.1} parent=47 // pred_fallthru
          _
        // Predicated region
        $region1925: #{tpu_custom_call.1} parent=47 // pred_check
          _
        $region1926: #{tpu_custom_call.1} parent=47 // pred_check_branch
          %2704 = sbr.rel (0) target = $region1928
        $region1927: #{tpu_custom_call.1} parent=47 // pred_region
          %s2706 = ssub.s32 2, 1
          loop: start=0, step=1, limit=1
          $region1929: #{tpu_custom_call.1} parent=1927 // loop_pre_header
            _
          $region1930: #{tpu_custom_call.1} parent=1927 // loop_header
            %s2708 = sphi 0, %s2712
            %p2709 = scmp.ge.s32.totalorder %s2708, 1
            %s2713 = sphi %s2699, %s2699
            %s2714 = sphi %s2700, %s2700
          $region1931: #{tpu_custom_call.1} parent=1927 // loop_header_branch
            %2711 = sbr.rel (%p2709) target = $region1935
          $region1932: #{tpu_custom_call.1} parent=1927 // loop_body
            %v2715 = vld [vmem:[%s2713] sm:%s2706]
            %2716 = vst [vmem:[%s2714] sm:%s2706] %v2715
          $region1933: #{tpu_custom_call.1} parent=1927 // loop_footer
            %s2712 = sadd.s32 1, %s2708
          $region1934: #{tpu_custom_call.1} parent=1927 // loop_footer_branch
            %2707 = sbr.rel target = $region1930
          $region1935: #{tpu_custom_call.1} parent=1927 // loop_exit
            _
        $region1928: #{tpu_custom_call.1} parent=47 // pred_fallthru
          _
        // Predicated region
        $region1947: #{tpu_custom_call.1} parent=47 // pred_check
          _
        $region1948: #{tpu_custom_call.1} parent=47 // pred_check_branch
          %2733 = sbr.rel (0) target = $region1950
        $region1949: #{tpu_custom_call.1} parent=47 // pred_region
          %2734 = vsyncadd [#allocation3], 16
        $region1950: #{tpu_custom_call.1} parent=47 // pred_fallthru
          _
        %s2735 = sadd.s32 %s2469, 7
        %s2736 = sld [smem:[#allocation5 + %s2735]]
        %s2737 = scalar_lea.vmem %s2, %s2736
        %s2738 = scalar_lea.vmem [#allocation2], 63
        // Predicated region
        $region1951: #{tpu_custom_call.1} parent=47 // pred_check
          _
        $region1952: #{tpu_custom_call.1} parent=47 // pred_check_branch
          %2740 = sbr.rel target = $region1954
        $region1953: #{tpu_custom_call.1} parent=47 // pred_region
          // Predicated region
          $region1966: #{tpu_custom_call.1} parent=1953 // pred_check
            _
          $region1967: #{tpu_custom_call.1} parent=1953 // pred_check_branch
            %2756 = sbr.rel (0) target = $region1969
          $region1968: #{tpu_custom_call.1} parent=1953 // pred_region
            %s2758 = ssub.s32 2, 1
            loop: start=0, step=1, limit=1
            $region1970: #{tpu_custom_call.1} parent=1968 // loop_pre_header
              _
            $region1971: #{tpu_custom_call.1} parent=1968 // loop_header
              %s2760 = sphi 0, %s2764
              %p2761 = scmp.ge.s32.totalorder %s2760, 1
              %s2765 = sphi %s2737, %s2737
              %s2766 = sphi %s2738, %s2738
            $region1972: #{tpu_custom_call.1} parent=1968 // loop_header_branch
              %2763 = sbr.rel (%p2761) target = $region1976
            $region1973: #{tpu_custom_call.1} parent=1968 // loop_body
              %v2767 = vld [vmem:[%s2765] sm:%s2758]
              %2768 = vst [vmem:[%s2766] sm:%s2758] %v2767
            $region1974: #{tpu_custom_call.1} parent=1968 // loop_footer
              %s2764 = sadd.s32 1, %s2760
            $region1975: #{tpu_custom_call.1} parent=1968 // loop_footer_branch
              %2759 = sbr.rel target = $region1971
            $region1976: #{tpu_custom_call.1} parent=1968 // loop_exit
              _
          $region1969: #{tpu_custom_call.1} parent=1953 // pred_fallthru
            _
        $region1954: #{tpu_custom_call.1} parent=47 // pred_fallthru
          _
        // Predicated region
        $region1955: #{tpu_custom_call.1} parent=47 // pred_check
          _
        $region1956: #{tpu_custom_call.1} parent=47 // pred_check_branch
          %2742 = sbr.rel (0) target = $region1958
        $region1957: #{tpu_custom_call.1} parent=47 // pred_region
          %s2744 = ssub.s32 2, 1
          loop: start=0, step=1, limit=1
          $region1959: #{tpu_custom_call.1} parent=1957 // loop_pre_header
            _
          $region1960: #{tpu_custom_call.1} parent=1957 // loop_header
            %s2746 = sphi 0, %s2750
            %p2747 = scmp.ge.s32.totalorder %s2746, 1
            %s2751 = sphi %s2737, %s2737
            %s2752 = sphi %s2738, %s2738
          $region1961: #{tpu_custom_call.1} parent=1957 // loop_header_branch
            %2749 = sbr.rel (%p2747) target = $region1965
          $region1962: #{tpu_custom_call.1} parent=1957 // loop_body
            %v2753 = vld [vmem:[%s2751] sm:%s2744]
            %2754 = vst [vmem:[%s2752] sm:%s2744] %v2753
          $region1963: #{tpu_custom_call.1} parent=1957 // loop_footer
            %s2750 = sadd.s32 1, %s2746
          $region1964: #{tpu_custom_call.1} parent=1957 // loop_footer_branch
            %2745 = sbr.rel target = $region1960
          $region1965: #{tpu_custom_call.1} parent=1957 // loop_exit
            _
        $region1958: #{tpu_custom_call.1} parent=47 // pred_fallthru
          _
        // Predicated region
        $region1977: #{tpu_custom_call.1} parent=47 // pred_check
          _
        $region1978: #{tpu_custom_call.1} parent=47 // pred_check_branch
          %2771 = sbr.rel (0) target = $region1980
        $region1979: #{tpu_custom_call.1} parent=47 // pred_region
          %2772 = vsyncadd [#allocation3], 16
        $region1980: #{tpu_custom_call.1} parent=47 // pred_fallthru
          _
        %v2773 = vld [vmem:[%s333] sm:$0xff]
        %vm2774 = vcmp.ne.s32.totalorder %v2773, 0
        %v2775 = vsel %vm2774, 1, 0
        %v2776 = vcvt.s32.f32 %v2775
        %vm2777 = vcmask 64512
        %v2778 = vsel %vm2777, %v2776, 0.0
        %2779 = vadd.xlane.f32.xlu0 %v2778
        %v2780 = vpop.xlane.xlu0 %2779
        %v2781 = vmax.f32 %v2780, 1.0
        %v2782 = vrcp.pop %v2781
        %s2783 = smul.u32 1, 1
        %s2784 = sshll.u32 %s2783, 4
        %2785 = dma.done [#allocation3], %s2784
        %s2786 = sshll.u32 %s2783, 4
        %2787 = dma.done [#allocation3], %s2786
        %s2788 = sshll.u32 %s2783, 4
        %2789 = dma.done [#allocation3], %s2788
        %s2790 = sshll.u32 %s2783, 4
        %2791 = dma.done [#allocation3], %s2790
        %s2792 = sshll.u32 %s2783, 4
        %2793 = dma.done [#allocation3], %s2792
        %s2794 = sshll.u32 %s2783, 4
        %2795 = dma.done [#allocation3], %s2794
        %s2796 = sshll.u32 %s2783, 4
        %2797 = dma.done [#allocation3], %s2796
        %s2798 = sshll.u32 %s2783, 4
        %2799 = dma.done [#allocation3], %s2798
        %s2800 = sshll.u32 %s2783, 4
        %2801 = dma.done [#allocation3], %s2800
        %s2802 = sshll.u32 %s2783, 4
        %2803 = dma.done [#allocation3], %s2802
        %s2804 = sshll.u32 %s2783, 4
        %2805 = dma.done [#allocation3], %s2804
        %s2806 = sshll.u32 %s2783, 4
        %2807 = dma.done [#allocation3], %s2806
        %s2808 = sshll.u32 %s2783, 4
        %2809 = dma.done [#allocation3], %s2808
        %s2810 = sshll.u32 %s2783, 4
        %2811 = dma.done [#allocation3], %s2810
        %s2812 = sshll.u32 %s2783, 4
        %2813 = dma.done [#allocation3], %s2812
        %s2814 = sshll.u32 %s2783, 4
        %2815 = dma.done [#allocation3], %s2814
        %s2816 = sshll.u32 %s2783, 4
        %2817 = dma.done [#allocation3], %s2816
        %s2818 = sshll.u32 %s2783, 4
        %2819 = dma.done [#allocation3], %s2818
        %s2820 = sshll.u32 %s2783, 4
        %2821 = dma.done [#allocation3], %s2820
        %s2822 = sshll.u32 %s2783, 4
        %2823 = dma.done [#allocation3], %s2822
        %s2824 = sshll.u32 %s2783, 4
        %2825 = dma.done [#allocation3], %s2824
        %s2826 = sshll.u32 %s2783, 4
        %2827 = dma.done [#allocation3], %s2826
        %s2828 = sshll.u32 %s2783, 4
        %2829 = dma.done [#allocation3], %s2828
        %s2830 = sshll.u32 %s2783, 4
        %2831 = dma.done [#allocation3], %s2830
        %s2832 = sshll.u32 %s2783, 4
        %2833 = dma.done [#allocation3], %s2832
        %s2834 = sshll.u32 %s2783, 4
        %2835 = dma.done [#allocation3], %s2834
        %s2836 = sshll.u32 %s2783, 4
        %2837 = dma.done [#allocation3], %s2836
        %s2838 = sshll.u32 %s2783, 4
        %2839 = dma.done [#allocation3], %s2838
        %s2840 = sshll.u32 %s2783, 4
        %2841 = dma.done [#allocation3], %s2840
        %s2842 = sshll.u32 %s2783, 4
        %2843 = dma.done [#allocation3], %s2842
        %s2844 = sshll.u32 %s2783, 4
        %2845 = dma.done [#allocation3], %s2844
        %s2846 = sshll.u32 %s2783, 4
        %2847 = dma.done [#allocation3], %s2846
        %s2848 = sshll.u32 %s2783, 4
        %2849 = dma.done [#allocation3], %s2848
        %s2850 = sshll.u32 %s2783, 4
        %2851 = dma.done [#allocation3], %s2850
        %s2852 = sshll.u32 %s2783, 4
        %2853 = dma.done [#allocation3], %s2852
        %s2854 = sshll.u32 %s2783, 4
        %2855 = dma.done [#allocation3], %s2854
        %s2856 = sshll.u32 %s2783, 4
        %2857 = dma.done [#allocation3], %s2856
        %s2858 = sshll.u32 %s2783, 4
        %2859 = dma.done [#allocation3], %s2858
        %s2860 = sshll.u32 %s2783, 4
        %2861 = dma.done [#allocation3], %s2860
        %s2862 = sshll.u32 %s2783, 4
        %2863 = dma.done [#allocation3], %s2862
        %s2864 = sshll.u32 %s2783, 4
        %2865 = dma.done [#allocation3], %s2864
        %s2866 = sshll.u32 %s2783, 4
        %2867 = dma.done [#allocation3], %s2866
        %s2868 = sshll.u32 %s2783, 4
        %2869 = dma.done [#allocation3], %s2868
        %s2870 = sshll.u32 %s2783, 4
        %2871 = dma.done [#allocation3], %s2870
        %s2872 = sshll.u32 %s2783, 4
        %2873 = dma.done [#allocation3], %s2872
        %s2874 = sshll.u32 %s2783, 4
        %2875 = dma.done [#allocation3], %s2874
        %s2876 = sshll.u32 %s2783, 4
        %2877 = dma.done [#allocation3], %s2876
        %s2878 = sshll.u32 %s2783, 4
        %2879 = dma.done [#allocation3], %s2878
        %s2880 = sshll.u32 %s2783, 4
        %2881 = dma.done [#allocation3], %s2880
        %s2882 = sshll.u32 %s2783, 4
        %2883 = dma.done [#allocation3], %s2882
        %s2884 = sshll.u32 %s2783, 4
        %2885 = dma.done [#allocation3], %s2884
        %s2886 = sshll.u32 %s2783, 4
        %2887 = dma.done [#allocation3], %s2886
        %s2888 = sshll.u32 %s2783, 4
        %2889 = dma.done [#allocation3], %s2888
        %s2890 = sshll.u32 %s2783, 4
        %2891 = dma.done [#allocation3], %s2890
        %s2892 = sshll.u32 %s2783, 4
        %2893 = dma.done [#allocation3], %s2892
        %s2894 = sshll.u32 %s2783, 4
        %2895 = dma.done [#allocation3], %s2894
        %s2896 = sshll.u32 %s2783, 4
        %2897 = dma.done [#allocation3], %s2896
        %s2898 = sshll.u32 %s2783, 4
        %2899 = dma.done [#allocation3], %s2898
        %s2900 = sshll.u32 %s2783, 4
        %2901 = dma.done [#allocation3], %s2900
        %s2902 = sshll.u32 %s2783, 4
        %2903 = dma.done [#allocation3], %s2902
        %s2904 = sshll.u32 %s2783, 4
        %2905 = dma.done [#allocation3], %s2904
        %s2906 = sshll.u32 %s2783, 4
        %2907 = dma.done [#allocation3], %s2906
        %s2908 = sshll.u32 %s2783, 4
        %2909 = dma.done [#allocation3], %s2908
        %s2910 = sshll.u32 %s2783, 4
        %2911 = dma.done [#allocation3], %s2910
        %v2912 = vld [vmem:[#allocation2] sm:$0xff]
        %v2913 = vld [vmem:[#allocation2 + $0x8] sm:$0xff]
        %v2914 = vld [vmem:[#allocation2 + $0x10] sm:$0xff]
        %v2915 = vld [vmem:[#allocation2 + $0x18] sm:$0xff]
        %v2916 = vld [vmem:[#allocation2 + $0x20] sm:$0xff]
        %v2917 = vld [vmem:[#allocation2 + $0x28] sm:$0xff]
        %v2918 = vld [vmem:[#allocation2 + $0x30] sm:$0xff]
        %v2919 = vld [vmem:[#allocation2 + $0x38] sm:$0xff]
        %v2920 = vperm.slane %v2776, 0
        %v2921 = vlaneseq
        %v2922 = vshrl.u32 %v2921, 7
        %2924 = vset.pattern.permute.xlu0 %v2922
        %2925 = vperm.xlu0 %2924, %v2920
        %v2926 = vpop.permute.xlu0 %2925
        %v2927 = vperm.slane %v2776, 1
        %v2928 = vlaneseq
        %v2929 = vshrl.u32 %v2928, 7
        %2931 = vset.pattern.permute.xlu0 %v2929
        %2932 = vperm.xlu0 %2931, %v2927
        %v2933 = vpop.permute.xlu0 %2932
        %v2934 = vperm.slane %v2776, 2
        %v2935 = vlaneseq
        %v2936 = vshrl.u32 %v2935, 7
        %2938 = vset.pattern.permute.xlu0 %v2936
        %2939 = vperm.xlu0 %2938, %v2934
        %v2940 = vpop.permute.xlu0 %2939
        %v2941 = vperm.slane %v2776, 3
        %v2942 = vlaneseq
        %v2943 = vshrl.u32 %v2942, 7
        %2945 = vset.pattern.permute.xlu0 %v2943
        %2946 = vperm.xlu0 %2945, %v2941
        %v2947 = vpop.permute.xlu0 %2946
        %v2948 = vperm.slane %v2776, 4
        %v2949 = vlaneseq
        %v2950 = vshrl.u32 %v2949, 7
        %2952 = vset.pattern.permute.xlu0 %v2950
        %2953 = vperm.xlu0 %2952, %v2948
        %v2954 = vpop.permute.xlu0 %2953
        %v2955 = vperm.slane %v2776, 5
        %v2956 = vlaneseq
        %v2957 = vshrl.u32 %v2956, 7
        %2959 = vset.pattern.permute.xlu0 %v2957
        %2960 = vperm.xlu0 %2959, %v2955
        %v2961 = vpop.permute.xlu0 %2960
        %v2962 = vperm.slane %v2776, 6
        %v2963 = vlaneseq
        %v2964 = vshrl.u32 %v2963, 7
        %2966 = vset.pattern.permute.xlu0 %v2964
        %2967 = vperm.xlu0 %2966, %v2962
        %v2968 = vpop.permute.xlu0 %2967
        %v2969 = vperm.slane %v2776, 7
        %v2970 = vlaneseq
        %v2971 = vshrl.u32 %v2970, 7
        %2973 = vset.pattern.permute.xlu0 %v2971
        %2974 = vperm.xlu0 %2973, %v2969
        %v2975 = vpop.permute.xlu0 %2974
        %v2976 = vmul.f32 %v2912, %v2926
        %v2977 = vmul.f32 %v2913, %v2933
        %v2978 = vmul.f32 %v2914, %v2940
        %v2979 = vmul.f32 %v2915, %v2947
        %v2980 = vmul.f32 %v2916, %v2954
        %v2981 = vmul.f32 %v2917, %v2961
        %v2982 = vmul.f32 %v2918, %v2968
        %v2983 = vmul.f32 %v2919, %v2975
        %v2984 = vrot.slane %v2976, 4
        %v2985 = vadd.f32 %v2976, %v2984
        %v2986 = vrot.slane %v2985, 2
        %v2987 = vadd.f32 %v2985, %v2986
        %v2988 = vrot.slane %v2987, 1
        %v2989 = vadd.f32 %v2987, %v2988
        %v2990 = vrot.slane %v2977, 4
        %v2991 = vadd.f32 %v2977, %v2990
        %v2992 = vrot.slane %v2991, 2
        %v2993 = vadd.f32 %v2991, %v2992
        %v2994 = vrot.slane %v2993, 1
        %v2995 = vadd.f32 %v2993, %v2994
        %v2996 = vrot.slane %v2978, 4
        %v2997 = vadd.f32 %v2978, %v2996
        %v2998 = vrot.slane %v2997, 2
        %v2999 = vadd.f32 %v2997, %v2998
        %v3000 = vrot.slane %v2999, 1
        %v3001 = vadd.f32 %v2999, %v3000
        %v3002 = vrot.slane %v2979, 4
        %v3003 = vadd.f32 %v2979, %v3002
        %v3004 = vrot.slane %v3003, 2
        %v3005 = vadd.f32 %v3003, %v3004
        %v3006 = vrot.slane %v3005, 1
        %v3007 = vadd.f32 %v3005, %v3006
        %v3008 = vrot.slane %v2980, 4
        %v3009 = vadd.f32 %v2980, %v3008
        %v3010 = vrot.slane %v3009, 2
        %v3011 = vadd.f32 %v3009, %v3010
        %v3012 = vrot.slane %v3011, 1
        %v3013 = vadd.f32 %v3011, %v3012
        %v3014 = vrot.slane %v2981, 4
        %v3015 = vadd.f32 %v2981, %v3014
        %v3016 = vrot.slane %v3015, 2
        %v3017 = vadd.f32 %v3015, %v3016
        %v3018 = vrot.slane %v3017, 1
        %v3019 = vadd.f32 %v3017, %v3018
        %v3020 = vrot.slane %v2982, 4
        %v3021 = vadd.f32 %v2982, %v3020
        %v3022 = vrot.slane %v3021, 2
        %v3023 = vadd.f32 %v3021, %v3022
        %v3024 = vrot.slane %v3023, 1
        %v3025 = vadd.f32 %v3023, %v3024
        %v3026 = vrot.slane %v2983, 4
        %v3027 = vadd.f32 %v2983, %v3026
        %v3028 = vrot.slane %v3027, 2
        %v3029 = vadd.f32 %v3027, %v3028
        %v3030 = vrot.slane %v3029, 1
        %v3031 = vadd.f32 %v3029, %v3030
        %v3033 = vrot.slane %v2782, 1
        %v3034 = vrot.slane %v2782, 2
        %v3035 = vrot.slane %v2782, 3
        %v3036 = vrot.slane %v2782, 4
        %v3037 = vrot.slane %v2782, 5
        %v3038 = vrot.slane %v2782, 6
        %v3039 = vrot.slane %v2782, 7
        %v3048 = vmul.f32 %v2989, %v2782
        %v3049 = vmul.f32 %v2995, %v3033
        %v3050 = vmul.f32 %v3001, %v3034
        %v3051 = vmul.f32 %v3007, %v3035
        %v3052 = vmul.f32 %v3013, %v3036
        %v3053 = vmul.f32 %v3019, %v3037
        %v3054 = vmul.f32 %v3025, %v3038
        %v3055 = vmul.f32 %v3031, %v3039
        %v3056 = vld [vmem:[#allocation6] sm:$0xf]
        %v3057 = vld [vmem:[#allocation6 + $0x4] sm:$0xf]
        %v3058 = vld [vmem:[#allocation6 + $0x8] sm:$0xf]
        %v3059 = vld [vmem:[#allocation6 + $0xc] sm:$0xf]
        %v3060 = vld [vmem:[#allocation6 + $0x10] sm:$0xf]
        %v3061 = vld [vmem:[#allocation6 + $0x14] sm:$0xf]
        %v3062 = vld [vmem:[#allocation6 + $0x18] sm:$0xf]
        %v3063 = vld [vmem:[#allocation6 + $0x1c] sm:$0xf]
        %v3064 = vld [vmem:[#allocation6 + $0x20] sm:$0xf]
        %v3065 = vld [vmem:[#allocation6 + $0x24] sm:$0xf]
        %v3066 = vld [vmem:[#allocation6 + $0x28] sm:$0xf]
        %v3067 = vld [vmem:[#allocation6 + $0x2c] sm:$0xf]
        %v3068 = vld [vmem:[#allocation6 + $0x30] sm:$0xf]
        %v3069 = vld [vmem:[#allocation6 + $0x34] sm:$0xf]
        %v3070 = vld [vmem:[#allocation6 + $0x38] sm:$0xf]
        %v3071 = vld [vmem:[#allocation6 + $0x3c] sm:$0xf]
        %v3072 = vld [vmem:[%s4] sm:$0x1]
        %v3073 = vpack.c.bf16 %v3048, %v3048
        %v3074 = vpack.c.bf16 %v3049, %v3049
        %v3075 = vpack.c.bf16 %v3050, %v3050
        %v3076 = vpack.c.bf16 %v3051, %v3051
        %v3077 = vpack.c.bf16 %v3052, %v3052
        %v3078 = vpack.c.bf16 %v3053, %v3053
        %v3079 = vpack.c.bf16 %v3054, %v3054
        %v3080 = vpack.c.bf16 %v3055, %v3055
        %v3082 = vperm.slane %v3072, 0
        %v3092 = vunpack.c.l.b16 %v3073
        %v3093 = vunpack.c.l.b16 %v3074
        %v3094 = vunpack.c.l.b16 %v3075
        %v3095 = vunpack.c.l.b16 %v3076
        %v3096 = vunpack.c.l.b16 %v3077
        %v3097 = vunpack.c.l.b16 %v3078
        %v3098 = vunpack.c.l.b16 %v3079
        %v3099 = vunpack.c.l.b16 %v3080
        %v3100 = vrot.slane %v3093, 7
        %vm3101 = vcmask 1041409
        %v3102 = vsel %vm3101, %v3100, %v3092
        %v3103 = vrot.slane %v3094, 6
        %vm3104 = vcmask 1042434
        %v3105 = vsel %vm3104, %v3103, %v3102
        %v3106 = vrot.slane %v3095, 5
        %vm3107 = vcmask 1043459
        %v3108 = vsel %vm3107, %v3106, %v3105
        %v3109 = vrot.slane %v3096, 4
        %vm3110 = vcmask 1044484
        %v3111 = vsel %vm3110, %v3109, %v3108
        %v3112 = vrot.slane %v3097, 3
        %vm3113 = vcmask 1045509
        %v3114 = vsel %vm3113, %v3112, %v3111
        %v3115 = vrot.slane %v3098, 2
        %vm3116 = vcmask 1046534
        %v3117 = vsel %vm3116, %v3115, %v3114
        %v3118 = vrot.slane %v3099, 1
        %vm3119 = vcmask 1047559
        %v3120 = vsel %vm3119, %v3118, %v3117
        %v3121 = vpack.c.b16 %v3120, %v3120
        %v3139 = vunpack.c.l.b16 %v3056
        %v3140 = vunpack.c.l.b16 %v3057
        %v3141 = vunpack.c.l.b16 %v3058
        %v3142 = vunpack.c.l.b16 %v3059
        %v3143 = vunpack.c.l.b16 %v3060
        %v3144 = vunpack.c.l.b16 %v3061
        %v3145 = vunpack.c.l.b16 %v3062
        %v3146 = vunpack.c.l.b16 %v3063
        %v3147 = vunpack.c.l.b16 %v3064
        %v3148 = vunpack.c.l.b16 %v3065
        %v3149 = vunpack.c.l.b16 %v3066
        %v3150 = vunpack.c.l.b16 %v3067
        %v3151 = vunpack.c.l.b16 %v3068
        %v3152 = vunpack.c.l.b16 %v3069
        %v3153 = vunpack.c.l.b16 %v3070
        %v3154 = vunpack.c.l.b16 %v3071
        %v3155 = vpack.c.b16 %v3140, %v3139
        %v3156 = vpack.c.b16 %v3142, %v3141
        %v3157 = vpack.c.b16 %v3144, %v3143
        %v3158 = vpack.c.b16 %v3146, %v3145
        %v3159 = vpack.c.b16 %v3148, %v3147
        %v3160 = vpack.c.b16 %v3150, %v3149
        %v3161 = vpack.c.b16 %v3152, %v3151
        %v3162 = vpack.c.b16 %v3154, %v3153
        %3171 = vmatpush.bf16.msra.mxu0 %v3162
        %3172 = vmatpush.bf16.msra.mxu0 %v3161
        %3173 = vmatpush.bf16.msra.mxu0 %v3160
        %3174 = vmatpush.bf16.msra.mxu0 %v3159
        %3175 = vmatpush.bf16.msra.mxu0 %v3158
        %3176 = vmatpush.bf16.msra.mxu0 %v3157
        %3177 = vmatpush.bf16.msra.mxu0 %v3156
        %3178 = vmatpush.bf16.msra.mxu0 %v3155
        %3179 = vmatmul.bf16.gmra.mxu0 %v3121
        %v3180 = vpop.f32.mrf.mxu0
        %v3181 = vadd.f32 %v3082, %v3180
        %v3182 = vpop.f32.mrf.mxu0
        %3183 = vdwg.mxu0
        %v3184 = vmax.f32 %v3181, 0.0
        %v3185 = vld [vmem:[#allocation9] sm:$0xf]
        %v3186 = vld [vmem:[#allocation9 + $0x4] sm:$0xf]
        %v3187 = vld [vmem:[#allocation9 + $0x8] sm:$0xf]
        %v3188 = vld [vmem:[#allocation9 + $0xc] sm:$0xf]
        %v3189 = vld [vmem:[#allocation9 + $0x10] sm:$0xf]
        %v3190 = vld [vmem:[#allocation9 + $0x14] sm:$0xf]
        %v3191 = vld [vmem:[#allocation9 + $0x18] sm:$0xf]
        %v3192 = vld [vmem:[#allocation9 + $0x1c] sm:$0xf]
        %v3193 = vld [vmem:[#allocation9 + $0x20] sm:$0xf]
        %v3194 = vld [vmem:[#allocation9 + $0x24] sm:$0xf]
        %v3195 = vld [vmem:[#allocation9 + $0x28] sm:$0xf]
        %v3196 = vld [vmem:[#allocation9 + $0x2c] sm:$0xf]
        %v3197 = vld [vmem:[#allocation9 + $0x30] sm:$0xf]
        %v3198 = vld [vmem:[#allocation9 + $0x34] sm:$0xf]
        %v3199 = vld [vmem:[#allocation9 + $0x38] sm:$0xf]
        %v3200 = vld [vmem:[#allocation9 + $0x3c] sm:$0xf]
        %v3201 = vld [vmem:[%s6] sm:$0x1]
        %v3202 = vpack.c.bf16 %v3184, %v3184
        %v3204 = vperm.slane %v3201, 0
        %v3222 = vunpack.c.l.b16 %v3185
        %v3223 = vunpack.c.l.b16 %v3186
        %v3224 = vunpack.c.l.b16 %v3187
        %v3225 = vunpack.c.l.b16 %v3188
        %v3226 = vunpack.c.l.b16 %v3189
        %v3227 = vunpack.c.l.b16 %v3190
        %v3228 = vunpack.c.l.b16 %v3191
        %v3229 = vunpack.c.l.b16 %v3192
        %v3230 = vunpack.c.l.b16 %v3193
        %v3231 = vunpack.c.l.b16 %v3194
        %v3232 = vunpack.c.l.b16 %v3195
        %v3233 = vunpack.c.l.b16 %v3196
        %v3234 = vunpack.c.l.b16 %v3197
        %v3235 = vunpack.c.l.b16 %v3198
        %v3236 = vunpack.c.l.b16 %v3199
        %v3237 = vunpack.c.l.b16 %v3200
        %v3238 = vpack.c.b16 %v3223, %v3222
        %v3239 = vpack.c.b16 %v3225, %v3224
        %v3240 = vpack.c.b16 %v3227, %v3226
        %v3241 = vpack.c.b16 %v3229, %v3228
        %v3242 = vpack.c.b16 %v3231, %v3230
        %v3243 = vpack.c.b16 %v3233, %v3232
        %v3244 = vpack.c.b16 %v3235, %v3234
        %v3245 = vpack.c.b16 %v3237, %v3236
        %3254 = vmatpush.bf16.msra.mxu0 %v3245
        %3255 = vmatpush.bf16.msra.mxu0 %v3244
        %3256 = vmatpush.bf16.msra.mxu0 %v3243
        %3257 = vmatpush.bf16.msra.mxu0 %v3242
        %3258 = vmatpush.bf16.msra.mxu0 %v3241
        %3259 = vmatpush.bf16.msra.mxu0 %v3240
        %3260 = vmatpush.bf16.msra.mxu0 %v3239
        %3261 = vmatpush.bf16.msra.mxu0 %v3238
        %3262 = vmatmul.bf16.gmra.mxu0 %v3202
        %v3263 = vpop.f32.mrf.mxu0
        %v3264 = vadd.f32 %v3204, %v3263
        %v3265 = vpop.f32.mrf.mxu0
        %3266 = vdwg.mxu0
        %v3267 = vmax.f32 %v3264, 0.0
        %v3268 = vld [vmem:[#allocation11] sm:$0xf]
        %v3269 = vld [vmem:[#allocation11 + $0x4] sm:$0xf]
        %v3270 = vld [vmem:[#allocation11 + $0x8] sm:$0xf]
        %v3271 = vld [vmem:[#allocation11 + $0xc] sm:$0xf]
        %v3272 = vld [vmem:[#allocation11 + $0x10] sm:$0xf]
        %v3273 = vld [vmem:[#allocation11 + $0x14] sm:$0xf]
        %v3274 = vld [vmem:[#allocation11 + $0x18] sm:$0xf]
        %v3275 = vld [vmem:[#allocation11 + $0x1c] sm:$0xf]
        %v3276 = vld [vmem:[#allocation11 + $0x20] sm:$0xf]
        %v3277 = vld [vmem:[#allocation11 + $0x24] sm:$0xf]
        %v3278 = vld [vmem:[#allocation11 + $0x28] sm:$0xf]
        %v3279 = vld [vmem:[#allocation11 + $0x2c] sm:$0xf]
        %v3280 = vld [vmem:[#allocation11 + $0x30] sm:$0xf]
        %v3281 = vld [vmem:[#allocation11 + $0x34] sm:$0xf]
        %v3282 = vld [vmem:[#allocation11 + $0x38] sm:$0xf]
        %v3283 = vld [vmem:[#allocation11 + $0x3c] sm:$0xf]
        %v3284 = vld [vmem:[%s8] sm:$0x1]
        %v3285 = vpack.c.bf16 %v3267, %v3267
        %v3287 = vperm.slane %v3284, 0
        %v3305 = vunpack.c.l.b16 %v3268
        %v3306 = vunpack.c.l.b16 %v3269
        %v3307 = vunpack.c.l.b16 %v3270
        %v3308 = vunpack.c.l.b16 %v3271
        %v3309 = vunpack.c.l.b16 %v3272
        %v3310 = vunpack.c.l.b16 %v3273
        %v3311 = vunpack.c.l.b16 %v3274
        %v3312 = vunpack.c.l.b16 %v3275
        %v3313 = vunpack.c.l.b16 %v3276
        %v3314 = vunpack.c.l.b16 %v3277
        %v3315 = vunpack.c.l.b16 %v3278
        %v3316 = vunpack.c.l.b16 %v3279
        %v3317 = vunpack.c.l.b16 %v3280
        %v3318 = vunpack.c.l.b16 %v3281
        %v3319 = vunpack.c.l.b16 %v3282
        %v3320 = vunpack.c.l.b16 %v3283
        %v3321 = vpack.c.b16 %v3306, %v3305
        %v3322 = vpack.c.b16 %v3308, %v3307
        %v3323 = vpack.c.b16 %v3310, %v3309
        %v3324 = vpack.c.b16 %v3312, %v3311
        %v3325 = vpack.c.b16 %v3314, %v3313
        %v3326 = vpack.c.b16 %v3316, %v3315
        %v3327 = vpack.c.b16 %v3318, %v3317
        %v3328 = vpack.c.b16 %v3320, %v3319
        %3337 = vmatpush.bf16.msra.mxu0 %v3328
        %3338 = vmatpush.bf16.msra.mxu0 %v3327
        %3339 = vmatpush.bf16.msra.mxu0 %v3326
        %3340 = vmatpush.bf16.msra.mxu0 %v3325
        %3341 = vmatpush.bf16.msra.mxu0 %v3324
        %3342 = vmatpush.bf16.msra.mxu0 %v3323
        %3343 = vmatpush.bf16.msra.mxu0 %v3322
        %3344 = vmatpush.bf16.msra.mxu0 %v3321
        %3345 = vmatmul.bf16.gmra.mxu0 %v3285
        %v3346 = vpop.f32.mrf.mxu0
        %v3347 = vadd.f32 %v3287, %v3346
        %v3348 = vpop.f32.mrf.mxu0
        %3349 = vdwg.mxu0
        %3350 = vst [vmem:[%s329] sm:$0xff] %v3347
        %s3351 = sand.u32 %s193, 1
        %s3352 = scalar_lea.sflag [#allocation8], %s3351
        %s3353 = sand.u32 %s193, 1
        %s3354 = smul.addr %s3353, 8
        %s3355 = scalar_lea.vmem [#allocation12], %s3354
        // Predicated region
        $region1981: #{tpu_custom_call.1} parent=47 // pred_check
          %p3356 = pneg %p203
        $region1982: #{tpu_custom_call.1} parent=47 // pred_check_branch
          %3358 = sbr.rel (%p3356) target = $region1984
        $region1983: #{tpu_custom_call.1} parent=47 // pred_region
          %3360 = vsyncadd %s3352, 0
          %s3361 = smul.addr %s33, 8
          %s3362 = scalar_lea.hbm %s9, %s3361
          %s3364 = sshll.u32 %s3355, 4
          %s3365 = int_to_ptr.vmem [resolvable:$true] %s3364
          %s3366 = sshll.u32 %s3362, 4
          %s3367 = int_to_ptr.hbm [resolvable:$true] %s3366
          %3369 = dma.vmem_to_hbm [thread:$0]  %s3365, 128, %s3367, %s3352
        $region1984: #{tpu_custom_call.1} parent=47 // pred_fallthru
          _
      $region48: #{tpu_custom_call.1} parent=5 // pred_fallthru
        _
      %p3370 = scmp.le.s32.totalorder 2, %s28
      // Predicated region
      $region1985: #{tpu_custom_call.1} parent=5 // pred_check
        %p3371 = pneg %p3370
      $region1986: #{tpu_custom_call.1} parent=5 // pred_check_branch
        %3373 = sbr.rel (%p3371) target = $region1988
      $region1987: #{tpu_custom_call.1} parent=5 // pred_region
        %s3374 = ssub.s32 %s28, 2
        // Predicated region
        $region1989: #{tpu_custom_call.1} parent=1987 // pred_check
          %p3375 = pneg %p209
        $region1990: #{tpu_custom_call.1} parent=1987 // pred_check_branch
          %3377 = sbr.rel (%p3375) target = $region1992
        $region1991: #{tpu_custom_call.1} parent=1987 // pred_region
          %s3378 = sand.u32 %s194, 1
          %s3379 = scalar_lea.sflag [#allocation8], %s3378
          %s3380 = sand.u32 %s194, 1
          %s3381 = smul.addr %s3380, 8
          %s3382 = scalar_lea.vmem [#allocation12], %s3381
          %3384 = dma.done %s3379, 128
        $region1992: #{tpu_custom_call.1} parent=1987 // pred_fallthru
          _
      $region1988: #{tpu_custom_call.1} parent=5 // pred_fallthru
        _
    $region6: #{tpu_custom_call.1} parent=1 // loop_footer
      %s32 = sadd.s32 1, %s28
    $region7: #{tpu_custom_call.1} parent=1 // loop_footer_branch
      %27 = sbr.rel target = $region3
    $region8: #{tpu_custom_call.1} parent=1 // loop_exit
      _
    %3385 = vsyncpa [#allocation7], 1
    %s3386 = scalar_lea.sflag [#allocation7], 1
    %3387 = vsyncpa %s3386, 1
    %3388 = vsyncpa [#allocation10], 1
    %3389 = vsyncpa [#allocation8], 1
    %s3390 = scalar_lea.sflag [#allocation8], 1
    %3391 = vsyncpa %s3390, 1
  %3392 = vsyncmov [#allocation3]
  %s3393 = vpop.sfrf %3392
  %p3394 = scmp.eq.s32.totalorder %s3393, 0
  %p3395 = pneg %p3394
  %3397 = shalt.err (%p3395)

</llo_original>
